<compile_context>
chip_gen: v6e
topology: v6e:2x2x1
jax: 0.10.0
libtpu: 0.0.40
codegen_flags: <defaults>
</compile_context>

<pallas_src>
import numpy as np

import jax
import jax.numpy as jnp
from jax import lax
from jax.experimental import pallas as pl
from jax.experimental.pallas import tpu as pltpu

# Network constants (28x28x1 input implied by fc1's 320 = 20*4*4).
_IMG = 28
_WPAD = 32            # image width padded 28 -> 32 (exact K for the conv1 matmuls)
_C1, _C2 = 10, 20     # conv output channels
_KK = 5               # conv kernel size
_PW1, _PW2 = 12, 4    # pooled spatial sizes after stage 1 / stage 2
_L1 = 128             # h1 lane dim: 12*10 = 120 -> 128
_L2 = 128             # h2 lane dim:  4*20 =  80 -> 128
_HID, _HPAD = 50, 64  # fc1 hidden size, padded
_NCLS = 10

_TB_MAX = 64          # batch tile (sublane dim). 64 keeps per-step VMEM ~10 MB and yields
                      # an even >=2-step grid for batches >= 128 (v7x megacore sharding).


def _round_up(x, m):
    return (x + m - 1) // m * m


# --------------------------------------------------------------------------- #
# The fused forward kernel (one batch tile per grid step)
# --------------------------------------------------------------------------- #
def _net_fwd_kernel(x_ref, b1w_ref, b1b_ref, b2w_ref, b2b_ref,
                    w1_ref, w1b_ref, w2_ref, w2b_ref, o_ref):
    tb = o_ref.shape[0]
    xv = x_ref[...]          # (4, 7, tb, 32): image rows mod-4 split, batch in sublanes
    B1 = b1w_ref[...]        # (5, 2, 32, 128)  banded conv1 weights [ki, pool-col-branch]
    B2 = b2w_ref[...]        # (5, 2, 128, 128) banded conv2 weights [ki, pool-col-branch]
    W1 = w1_ref[...]         # (4, 128, 64)     fc1 weights split by conv2 output-row group

    # ---- conv1 + maxpool(2) + relu.  Needed image row = 4*hh + u with u = 2*e + pi + ki,
    # where e = parity of the pooled row, pi = pool-row branch, ki = kernel row.
    slabs = [xv[u % 4, u // 4:u // 4 + 6].reshape(6 * tb, xv.shape[-1]) for u in range(8)]
    h1 = []                  # h1[e]: (6*tb, 128); row hh*tb + n holds pooled row 2*hh + e
    for e in range(2):
        branches = []
        for pi in range(2):
            for pj in range(2):
                acc = None
                for ki in range(_KK):
                    t = jnp.dot(slabs[2 * e + pi + ki], B1[ki, pj],
                                preferred_element_type=jnp.float32)
                    acc = t if acc is None else acc + t
                branches.append(acc)
        m = jnp.maximum(jnp.maximum(branches[0], branches[1]),
                        jnp.maximum(branches[2], branches[3]))
        h1.append(jnp.maximum(m + b1b_ref[...], 0.0))

    # ---- conv2 (Dropout2d = identity in eval) + maxpool(2) + relu.
    # Needed h1 pooled row = 2*ph2 + pi + ki = 2*(ph2 + s//2) + s%2 with s = pi + ki.
    slabs2 = [h1[s % 2][(s // 2) * tb:(s // 2 + 4) * tb] for s in range(6)]
    branches = []
    for pi in range(2):
        for pj in range(2):
            acc = None
            for ki in range(_KK):
                t = jnp.dot(slabs2[pi + ki], B2[ki, pj],
                            preferred_element_type=jnp.float32)
                acc = t if acc is None else acc + t
            branches.append(acc)
    m = jnp.maximum(jnp.maximum(branches[0], branches[1]),
                    jnp.maximum(branches[2], branches[3]))
    h2 = jnp.maximum(m + b2b_ref[...], 0.0)              # (4*tb, 128); row = ph2*tb + n

    # ---- fc1 + relu (F.dropout = identity in eval); accumulate over the 4 row groups so
    # no activation transpose is needed (the NCHW flatten is folded into W1's columns).
    acc = None
    for p in range(4):
        t = jnp.dot(h2[p * tb:(p + 1) * tb], W1[p], preferred_element_type=jnp.float32)
        acc = t if acc is None else acc + t
    h3 = jnp.maximum(acc + w1b_ref[...], 0.0)            # (tb, 64)

    # ---- fc2 + log_softmax (exact 10-wide logits; no padded logits hit HBM)
    z = jnp.dot(h3, w2_ref[...], preferred_element_type=jnp.float32) + w2b_ref[...]
    zmax = jnp.max(z, axis=-1, keepdims=True)
    lse = jnp.log(jnp.sum(jnp.exp(z - zmax), axis=-1, keepdims=True)) + zmax
    o_ref[...] = (z - lse).astype(o_ref.dtype)


# --------------------------------------------------------------------------- #
# One-time (hoisted) parameter prep on the host
# --------------------------------------------------------------------------- #
def prepare_params(params):
    """Build banded conv weight matrices (fold kernel-column taps + pool-column branch into
    the matmul), permute fc1 columns for the PyTorch NCHW flatten, zero-pad to lane-friendly
    shapes.  Runs once; the results are passed unchanged to every forward call."""
    w1 = np.asarray(params["conv1_w"], np.float32)   # (10, 1, 5, 5)
    b1 = np.asarray(params["conv1_b"], np.float32)
    w2 = np.asarray(params["conv2_w"], np.float32)   # (20, 10, 5, 5)
    b2 = np.asarray(params["conv2_b"], np.float32)
    f1w = np.asarray(params["fc1_w"], np.float32)    # (50, 320)
    f1b = np.asarray(params["fc1_b"], np.float32)
    f2w = np.asarray(params["fc2_w"], np.float32)    # (10, 50)
    f2b = np.asarray(params["fc2_b"], np.float32)

    # conv1: B1[ki, pj, w, pw1*10 + c1] = w1[c1, 0, ki, w - (2*pw1 + pj)]
    B1 = np.zeros((_KK, 2, _WPAD, _L1), np.float32)
    for ki in range(_KK):
        for pj in range(2):
            for pw1 in range(_PW1):
                for kj in range(_KK):
                    w = 2 * pw1 + pj + kj
                    B1[ki, pj, w, pw1 * _C1:(pw1 + 1) * _C1] = w1[:, 0, ki, kj]
    b1l = np.zeros((1, _L1), np.float32)
    for pw1 in range(_PW1):
        b1l[0, pw1 * _C1:(pw1 + 1) * _C1] = b1

    # conv2: B2[ki, pj, pw1*10 + c1, pw2*20 + c2] = w2[c2, c1, ki, pw1 - (2*pw2 + pj)]
    B2 = np.zeros((_KK, 2, _L1, _L2), np.float32)
    for ki in range(_KK):
        for pj in range(2):
            for pw2 in range(_PW2):
                for kj in range(_KK):
                    pw1 = 2 * pw2 + pj + kj
                    B2[ki, pj, pw1 * _C1:(pw1 + 1) * _C1,
                       pw2 * _C2:(pw2 + 1) * _C2] = w2[:, :, ki, kj].T
    b2l = np.zeros((1, _L2), np.float32)
    for pw2 in range(_PW2):
        b2l[0, pw2 * _C2:(pw2 + 1) * _C2] = b2

    # fc1, split by output-row group ph2; columns permuted from the PyTorch NCHW flatten
    # order (feature index = c2*16 + h*4 + w) to our (pw2, c2) lane order.
    W1p = np.zeros((4, _L2, _HPAD), np.float32)
    for ph2 in range(4):
        for pw2 in range(_PW2):
            for c2 in range(_C2):
                W1p[ph2, pw2 * _C2 + c2, :_HID] = f1w[:, c2 * 16 + ph2 * 4 + pw2]
    f1bp = np.zeros((1, _HPAD), np.float32)
    f1bp[0, :_HID] = f1b

    f2wp = np.zeros((_HPAD, _NCLS), np.float32)
    f2wp[:_HID, :] = f2w.T
    f2bp = f2b.reshape(1, _NCLS)

    return dict(B1=jnp.asarray(B1), b1=jnp.asarray(b1l),
                B2=jnp.asarray(B2), b2=jnp.asarray(b2l),
                W1=jnp.asarray(W1p), f1b=jnp.asarray(f1bp),
                W2=jnp.asarray(f2wp), f2b=jnp.asarray(f2bp))


# --------------------------------------------------------------------------- #
# Forward wrapper
# --------------------------------------------------------------------------- #
@jax.jit
def net_forward(x_nchw, prepped):
    n = x_nchw.shape[0]
    tb = min(_TB_MAX, _round_up(n, 8))
    n_pad = _round_up(n, tb)

    # Per-call host prep is only a pad + one tiny transpose of the raw image:
    # mod-4 row split so every in-kernel pooled-row slice is contiguous (no strides).
    x = x_nchw.reshape(n, _IMG, _IMG)
    x = jnp.pad(x, ((0, n_pad - n), (0, 0), (0, _WPAD - _IMG)))
    x4 = x.reshape(n_pad, 7, 4, _WPAD).transpose(2, 1, 0, 3)     # (4, 7, n_pad, 32)

    macs = n_pad * (24 * 24 * 25 * _C1 + 8 * 8 * 25 * _C1 * _C2
                    + 320 * _HID + _HID * _NCLS)
    w_bytes = 4 * sum(int(np.prod(v.shape)) for v in prepped.values())
    cost = pl.CostEstimate(
        flops=2 * macs,
        transcendentals=11 * n_pad,
        bytes_accessed=4 * (n_pad * 4 * 7 * _WPAD + n_pad * _NCLS) + w_bytes)

    out = pl.pallas_call(
        _net_fwd_kernel,
        out_shape=jax.ShapeDtypeStruct((n_pad, _NCLS), jnp.float32),
        grid=(n_pad // tb,),
        in_specs=[
            pl.BlockSpec((4, 7, tb, _WPAD), lambda i: (0, 0, i, 0)),   # image tile
            pl.BlockSpec((_KK, 2, _WPAD, _L1), lambda i: (0, 0, 0, 0)),  # resident weights
            pl.BlockSpec((1, _L1), lambda i: (0, 0)),
            pl.BlockSpec((_KK, 2, _L1, _L2), lambda i: (0, 0, 0, 0)),
            pl.BlockSpec((1, _L2), lambda i: (0, 0)),
            pl.BlockSpec((4, _L2, _HPAD), lambda i: (0, 0, 0)),
            pl.BlockSpec((1, _HPAD), lambda i: (0, 0)),
            pl.BlockSpec((_HPAD, _NCLS), lambda i: (0, 0)),
            pl.BlockSpec((1, _NCLS), lambda i: (0, 0)),
        ],
        out_specs=pl.BlockSpec((tb, _NCLS), lambda i: (i, 0)),
        compiler_params=pltpu.CompilerParams(
            dimension_semantics=("parallel",),
            vmem_limit_bytes=32 * 1024 * 1024),
        cost_estimate=cost,
    )(x4, prepped["B1"], prepped["b1"], prepped["B2"], prepped["b2"],
      prepped["W1"], prepped["f1b"], prepped["W2"], prepped["f2b"])
    return out[:n]


# --------------------------------------------------------------------------- #
# Pure-jnp reference with PyTorch semantics (eval mode), for the self-check
# --------------------------------------------------------------------------- #
def _ref_forward(x_nchw, params):
    n = x_nchw.shape[0]
    x = jnp.transpose(x_nchw, (0, 2, 3, 1))

    def im2col(xin, k):
        _, h, w, _ = xin.shape
        oh, ow = h - k + 1, w - k + 1
        cols = []
        for ki in range(k):
            for kj in range(k):
                cols.append(xin[:, ki:ki + oh, kj:kj + ow, :])
        return jnp.concatenate(cols, axis=-1)

    def conv_pool_relu(xin, w, b):
        k = w.shape[-1]
        cout = w.shape[0]
        patches = im2col(xin, k)
        wm = jnp.transpose(w, (2, 3, 1, 0)).reshape(-1, cout)
        z = jnp.einsum("nhwf,fc->nhwc", patches, wm,
                       precision=lax.Precision.HIGHEST) + b
        z = jnp.maximum(jnp.maximum(z[:, 0::2, 0::2], z[:, 0::2, 1::2]),
                        jnp.maximum(z[:, 1::2, 0::2], z[:, 1::2, 1::2]))
        return jnp.maximum(z, 0.0)

    h1 = conv_pool_relu(x, params["conv1_w"], params["conv1_b"])
    h2 = conv_pool_relu(h1, params["conv2_w"], params["conv2_b"])
    flat = jnp.transpose(h2, (0, 3, 1, 2)).reshape(n, -1)     # PyTorch NCHW flatten
    h3 = jnp.maximum(jnp.dot(flat, params["fc1_w"].T,
                             precision=lax.Precision.HIGHEST) + params["fc1_b"], 0.0)
    z = jnp.dot(h3, params["fc2_w"].T,
                precision=lax.Precision.HIGHEST) + params["fc2_b"]
    return jax.nn.log_softmax(z, axis=1)


# --------------------------------------------------------------------------- #
# Deterministic parameter init (PyTorch shapes; synthetic values)
# --------------------------------------------------------------------------- #
def init_params(key):
    def u(k, shape, fan_in):
        bound = float(fan_in) ** -0.5
        return jax.random.uniform(k, shape, jnp.float32, -bound, bound)

    ks = jax.random.split(key, 8)
    return dict(
        conv1_w=u(ks[0], (10, 1, 5, 5), 1 * 5 * 5),
        conv1_b=u(ks[1], (10,), 1 * 5 * 5),
        conv2_w=u(ks[2], (20, 10, 5, 5), 10 * 5 * 5),
        conv2_b=u(ks[3], (20,), 10 * 5 * 5),
        fc1_w=u(ks[4], (50, 320), 320),
        fc1_b=u(ks[5], (50,), 320),
        fc2_w=u(ks[6], (10, 50), 50),
        fc2_b=u(ks[7], (10,), 50),
    )


if __name__ == "__main__":
    key = jax.random.PRNGKey(0)
    k_param, k_x = jax.random.split(key)
    params = init_params(k_param)
    prepped = prepare_params(params)          # hoisted: runs once, not per forward

    # MNIST-shaped input implied by fc1's 320 = 20*4*4: (N, 1, 28, 28), N small.
    x = jax.random.normal(k_x, (2, 1, 28, 28), dtype=jnp.float32)

    out = jax.block_until_ready(net_forward(x, prepped))

    assert out.shape == (2, 10), out.shape
    assert bool(jnp.all(jnp.isfinite(out)))
    # log_softmax rows must exponentiate-sum to 1
    assert bool(jnp.allclose(jnp.sum(jnp.exp(out), axis=1), 1.0, atol=1e-3))
    # cross-check against a pure-jnp reference with PyTorch conventions
    ref = _ref_forward(x, params)
    assert bool(jnp.allclose(out, ref, atol=1e-2, rtol=1e-2))

    print("KERNEL_OK")
</pallas_src>

<mosaic_0001>
module attributes {stable_mosaic.version = 11 : i64} {
  func.func @_net_fwd_kernel(%arg0: i32, %arg1: memref<4x7x8x32xf32, #tpu.memory_space<vmem>>, %arg2: memref<5x2x32x128xf32, #tpu.memory_space<vmem>>, %arg3: memref<1x128xf32, #tpu.memory_space<vmem>>, %arg4: memref<5x2x128x128xf32, #tpu.memory_space<vmem>>, %arg5: memref<1x128xf32, #tpu.memory_space<vmem>>, %arg6: memref<4x128x64xf32, #tpu.memory_space<vmem>>, %arg7: memref<1x64xf32, #tpu.memory_space<vmem>>, %arg8: memref<64x10xf32, #tpu.memory_space<vmem>>, %arg9: memref<1x10xf32, #tpu.memory_space<vmem>>, %arg10: memref<8x10xf32, #tpu.memory_space<vmem>>) attributes {dimension_semantics = [#tpu.dimension_semantics<parallel>], iteration_bounds = array<i64: 1>, scalar_prefetch = 0 : i64, scratch_operands = 0 : i64, tpu.core_type = #tpu.core_type<tc>, window_params = [{transform_indices = @transform_0, window_bounds = array<i64: 4, 7, 8, 32>}, {pipeline_mode = #tpu.pipeline_mode<synchronous>, transform_indices = @transform_1, window_bounds = array<i64: 5, 2, 32, 128>}, {pipeline_mode = #tpu.pipeline_mode<synchronous>, transform_indices = @transform_2, window_bounds = array<i64: 1, 128>}, {pipeline_mode = #tpu.pipeline_mode<synchronous>, transform_indices = @transform_3, window_bounds = array<i64: 5, 2, 128, 128>}, {pipeline_mode = #tpu.pipeline_mode<synchronous>, transform_indices = @transform_4, window_bounds = array<i64: 1, 128>}, {pipeline_mode = #tpu.pipeline_mode<synchronous>, transform_indices = @transform_5, window_bounds = array<i64: 4, 128, 64>}, {pipeline_mode = #tpu.pipeline_mode<synchronous>, transform_indices = @transform_6, window_bounds = array<i64: 1, 64>}, {pipeline_mode = #tpu.pipeline_mode<synchronous>, transform_indices = @transform_7, window_bounds = array<i64: 64, 10>}, {pipeline_mode = #tpu.pipeline_mode<synchronous>, transform_indices = @transform_8, window_bounds = array<i64: 1, 10>}, {transform_indices = @transform_9, window_bounds = array<i64: 8, 10>}]} {
    %c0 = arith.constant 0 : index
    %c0_0 = arith.constant 0 : index
    %c0_1 = arith.constant 0 : index
    %c0_2 = arith.constant 0 : index
    %0 = vector.load %arg1[%c0, %c0_0, %c0_1, %c0_2] : memref<4x7x8x32xf32, #tpu.memory_space<vmem>>, vector<4x7x8x32xf32>
    %c0_3 = arith.constant 0 : index
    %c0_4 = arith.constant 0 : index
    %c0_5 = arith.constant 0 : index
    %c0_6 = arith.constant 0 : index
    %1 = vector.load %arg2[%c0_3, %c0_4, %c0_5, %c0_6] : memref<5x2x32x128xf32, #tpu.memory_space<vmem>>, vector<5x2x32x128xf32>
    %c0_7 = arith.constant 0 : index
    %c0_8 = arith.constant 0 : index
    %c0_9 = arith.constant 0 : index
    %c0_10 = arith.constant 0 : index
    %2 = vector.load %arg4[%c0_7, %c0_8, %c0_9, %c0_10] : memref<5x2x128x128xf32, #tpu.memory_space<vmem>>, vector<5x2x128x128xf32>
    %c0_11 = arith.constant 0 : index
    %c0_12 = arith.constant 0 : index
    %c0_13 = arith.constant 0 : index
    %3 = vector.load %arg6[%c0_11, %c0_12, %c0_13] : memref<4x128x64xf32, #tpu.memory_space<vmem>>, vector<4x128x64xf32>
    %4 = vector.extract_strided_slice %0 {offsets = [0, 0, 0, 0], sizes = [1, 6, 8, 32], strides = [1, 1, 1, 1]} : vector<4x7x8x32xf32> to vector<1x6x8x32xf32>
    %5 = vector.shape_cast %4 : vector<1x6x8x32xf32> to vector<6x8x32xf32>
    %6 = vector.shape_cast %5 : vector<6x8x32xf32> to vector<48x32xf32>
    %7 = vector.extract_strided_slice %0 {offsets = [1, 0, 0, 0], sizes = [1, 6, 8, 32], strides = [1, 1, 1, 1]} : vector<4x7x8x32xf32> to vector<1x6x8x32xf32>
    %8 = vector.shape_cast %7 : vector<1x6x8x32xf32> to vector<6x8x32xf32>
    %9 = vector.shape_cast %8 : vector<6x8x32xf32> to vector<48x32xf32>
    %10 = vector.extract_strided_slice %0 {offsets = [2, 0, 0, 0], sizes = [1, 6, 8, 32], strides = [1, 1, 1, 1]} : vector<4x7x8x32xf32> to vector<1x6x8x32xf32>
    %11 = vector.shape_cast %10 : vector<1x6x8x32xf32> to vector<6x8x32xf32>
    %12 = vector.shape_cast %11 : vector<6x8x32xf32> to vector<48x32xf32>
    %13 = vector.extract_strided_slice %0 {offsets = [3, 0, 0, 0], sizes = [1, 6, 8, 32], strides = [1, 1, 1, 1]} : vector<4x7x8x32xf32> to vector<1x6x8x32xf32>
    %14 = vector.shape_cast %13 : vector<1x6x8x32xf32> to vector<6x8x32xf32>
    %15 = vector.shape_cast %14 : vector<6x8x32xf32> to vector<48x32xf32>
    %16 = vector.extract_strided_slice %0 {offsets = [0, 1, 0, 0], sizes = [1, 6, 8, 32], strides = [1, 1, 1, 1]} : vector<4x7x8x32xf32> to vector<1x6x8x32xf32>
    %17 = vector.shape_cast %16 : vector<1x6x8x32xf32> to vector<6x8x32xf32>
    %18 = vector.shape_cast %17 : vector<6x8x32xf32> to vector<48x32xf32>
    %19 = vector.extract_strided_slice %0 {offsets = [1, 1, 0, 0], sizes = [1, 6, 8, 32], strides = [1, 1, 1, 1]} : vector<4x7x8x32xf32> to vector<1x6x8x32xf32>
    %20 = vector.shape_cast %19 : vector<1x6x8x32xf32> to vector<6x8x32xf32>
    %21 = vector.shape_cast %20 : vector<6x8x32xf32> to vector<48x32xf32>
    %22 = vector.extract_strided_slice %0 {offsets = [2, 1, 0, 0], sizes = [1, 6, 8, 32], strides = [1, 1, 1, 1]} : vector<4x7x8x32xf32> to vector<1x6x8x32xf32>
    %23 = vector.shape_cast %22 : vector<1x6x8x32xf32> to vector<6x8x32xf32>
    %24 = vector.shape_cast %23 : vector<6x8x32xf32> to vector<48x32xf32>
    %25 = vector.extract_strided_slice %0 {offsets = [3, 1, 0, 0], sizes = [1, 6, 8, 32], strides = [1, 1, 1, 1]} : vector<4x7x8x32xf32> to vector<1x6x8x32xf32>
    %26 = vector.shape_cast %25 : vector<1x6x8x32xf32> to vector<6x8x32xf32>
    %27 = vector.shape_cast %26 : vector<6x8x32xf32> to vector<48x32xf32>
    %28 = vector.extract_strided_slice %1 {offsets = [0, 0, 0, 0], sizes = [1, 1, 32, 128], strides = [1, 1, 1, 1]} : vector<5x2x32x128xf32> to vector<1x1x32x128xf32>
    %29 = vector.shape_cast %28 : vector<1x1x32x128xf32> to vector<32x128xf32>
    %cst = arith.constant dense<0.000000e+00> : vector<48x128xf32>
    %30 = tpu.matmul %6, %29, %cst {dimension_numbers = #tpu.dot_dimension_numbers<[1], [0], [0], [1], [0, 0, 1, 1], [], []>} : vector<48x32xf32>, vector<32x128xf32>, vector<48x128xf32> -> vector<48x128xf32>
    %31 = vector.extract_strided_slice %1 {offsets = [1, 0, 0, 0], sizes = [1, 1, 32, 128], strides = [1, 1, 1, 1]} : vector<5x2x32x128xf32> to vector<1x1x32x128xf32>
    %32 = vector.shape_cast %31 : vector<1x1x32x128xf32> to vector<32x128xf32>
    %cst_14 = arith.constant dense<0.000000e+00> : vector<48x128xf32>
    %33 = tpu.matmul %9, %32, %cst_14 {dimension_numbers = #tpu.dot_dimension_numbers<[1], [0], [0], [1], [0, 0, 1, 1], [], []>} : vector<48x32xf32>, vector<32x128xf32>, vector<48x128xf32> -> vector<48x128xf32>
    %34 = arith.addf %30, %33 : vector<48x128xf32>
    %35 = vector.extract_strided_slice %1 {offsets = [2, 0, 0, 0], sizes = [1, 1, 32, 128], strides = [1, 1, 1, 1]} : vector<5x2x32x128xf32> to vector<1x1x32x128xf32>
    %36 = vector.shape_cast %35 : vector<1x1x32x128xf32> to vector<32x128xf32>
    %cst_15 = arith.constant dense<0.000000e+00> : vector<48x128xf32>
    %37 = tpu.matmul %12, %36, %cst_15 {dimension_numbers = #tpu.dot_dimension_numbers<[1], [0], [0], [1], [0, 0, 1, 1], [], []>} : vector<48x32xf32>, vector<32x128xf32>, vector<48x128xf32> -> vector<48x128xf32>
    %38 = arith.addf %34, %37 : vector<48x128xf32>
    %39 = vector.extract_strided_slice %1 {offsets = [3, 0, 0, 0], sizes = [1, 1, 32, 128], strides = [1, 1, 1, 1]} : vector<5x2x32x128xf32> to vector<1x1x32x128xf32>
    %40 = vector.shape_cast %39 : vector<1x1x32x128xf32> to vector<32x128xf32>
    %cst_16 = arith.constant dense<0.000000e+00> : vector<48x128xf32>
    %41 = tpu.matmul %15, %40, %cst_16 {dimension_numbers = #tpu.dot_dimension_numbers<[1], [0], [0], [1], [0, 0, 1, 1], [], []>} : vector<48x32xf32>, vector<32x128xf32>, vector<48x128xf32> -> vector<48x128xf32>
    %42 = arith.addf %38, %41 : vector<48x128xf32>
    %43 = vector.extract_strided_slice %1 {offsets = [4, 0, 0, 0], sizes = [1, 1, 32, 128], strides = [1, 1, 1, 1]} : vector<5x2x32x128xf32> to vector<1x1x32x128xf32>
    %44 = vector.shape_cast %43 : vector<1x1x32x128xf32> to vector<32x128xf32>
    %cst_17 = arith.constant dense<0.000000e+00> : vector<48x128xf32>
    %45 = tpu.matmul %18, %44, %cst_17 {dimension_numbers = #tpu.dot_dimension_numbers<[1], [0], [0], [1], [0, 0, 1, 1], [], []>} : vector<48x32xf32>, vector<32x128xf32>, vector<48x128xf32> -> vector<48x128xf32>
    %46 = arith.addf %42, %45 : vector<48x128xf32>
    %47 = vector.extract_strided_slice %1 {offsets = [0, 1, 0, 0], sizes = [1, 1, 32, 128], strides = [1, 1, 1, 1]} : vector<5x2x32x128xf32> to vector<1x1x32x128xf32>
    %48 = vector.shape_cast %47 : vector<1x1x32x128xf32> to vector<32x128xf32>
    %cst_18 = arith.constant dense<0.000000e+00> : vector<48x128xf32>
    %49 = tpu.matmul %6, %48, %cst_18 {dimension_numbers = #tpu.dot_dimension_numbers<[1], [0], [0], [1], [0, 0, 1, 1], [], []>} : vector<48x32xf32>, vector<32x128xf32>, vector<48x128xf32> -> vector<48x128xf32>
    %50 = vector.extract_strided_slice %1 {offsets = [1, 1, 0, 0], sizes = [1, 1, 32, 128], strides = [1, 1, 1, 1]} : vector<5x2x32x128xf32> to vector<1x1x32x128xf32>
    %51 = vector.shape_cast %50 : vector<1x1x32x128xf32> to vector<32x128xf32>
    %cst_19 = arith.constant dense<0.000000e+00> : vector<48x128xf32>
    %52 = tpu.matmul %9, %51, %cst_19 {dimension_numbers = #tpu.dot_dimension_numbers<[1], [0], [0], [1], [0, 0, 1, 1], [], []>} : vector<48x32xf32>, vector<32x128xf32>, vector<48x128xf32> -> vector<48x128xf32>
    %53 = arith.addf %49, %52 : vector<48x128xf32>
    %54 = vector.extract_strided_slice %1 {offsets = [2, 1, 0, 0], sizes = [1, 1, 32, 128], strides = [1, 1, 1, 1]} : vector<5x2x32x128xf32> to vector<1x1x32x128xf32>
    %55 = vector.shape_cast %54 : vector<1x1x32x128xf32> to vector<32x128xf32>
    %cst_20 = arith.constant dense<0.000000e+00> : vector<48x128xf32>
    %56 = tpu.matmul %12, %55, %cst_20 {dimension_numbers = #tpu.dot_dimension_numbers<[1], [0], [0], [1], [0, 0, 1, 1], [], []>} : vector<48x32xf32>, vector<32x128xf32>, vector<48x128xf32> -> vector<48x128xf32>
    %57 = arith.addf %53, %56 : vector<48x128xf32>
    %58 = vector.extract_strided_slice %1 {offsets = [3, 1, 0, 0], sizes = [1, 1, 32, 128], strides = [1, 1, 1, 1]} : vector<5x2x32x128xf32> to vector<1x1x32x128xf32>
    %59 = vector.shape_cast %58 : vector<1x1x32x128xf32> to vector<32x128xf32>
    %cst_21 = arith.constant dense<0.000000e+00> : vector<48x128xf32>
    %60 = tpu.matmul %15, %59, %cst_21 {dimension_numbers = #tpu.dot_dimension_numbers<[1], [0], [0], [1], [0, 0, 1, 1], [], []>} : vector<48x32xf32>, vector<32x128xf32>, vector<48x128xf32> -> vector<48x128xf32>
    %61 = arith.addf %57, %60 : vector<48x128xf32>
    %62 = vector.extract_strided_slice %1 {offsets = [4, 1, 0, 0], sizes = [1, 1, 32, 128], strides = [1, 1, 1, 1]} : vector<5x2x32x128xf32> to vector<1x1x32x128xf32>
    %63 = vector.shape_cast %62 : vector<1x1x32x128xf32> to vector<32x128xf32>
    %cst_22 = arith.constant dense<0.000000e+00> : vector<48x128xf32>
    %64 = tpu.matmul %18, %63, %cst_22 {dimension_numbers = #tpu.dot_dimension_numbers<[1], [0], [0], [1], [0, 0, 1, 1], [], []>} : vector<48x32xf32>, vector<32x128xf32>, vector<48x128xf32> -> vector<48x128xf32>
    %65 = arith.addf %61, %64 : vector<48x128xf32>
    %66 = vector.extract_strided_slice %1 {offsets = [0, 0, 0, 0], sizes = [1, 1, 32, 128], strides = [1, 1, 1, 1]} : vector<5x2x32x128xf32> to vector<1x1x32x128xf32>
    %67 = vector.shape_cast %66 : vector<1x1x32x128xf32> to vector<32x128xf32>
    %cst_23 = arith.constant dense<0.000000e+00> : vector<48x128xf32>
    %68 = tpu.matmul %9, %67, %cst_23 {dimension_numbers = #tpu.dot_dimension_numbers<[1], [0], [0], [1], [0, 0, 1, 1], [], []>} : vector<48x32xf32>, vector<32x128xf32>, vector<48x128xf32> -> vector<48x128xf32>
    %69 = vector.extract_strided_slice %1 {offsets = [1, 0, 0, 0], sizes = [1, 1, 32, 128], strides = [1, 1, 1, 1]} : vector<5x2x32x128xf32> to vector<1x1x32x128xf32>
    %70 = vector.shape_cast %69 : vector<1x1x32x128xf32> to vector<32x128xf32>
    %cst_24 = arith.constant dense<0.000000e+00> : vector<48x128xf32>
    %71 = tpu.matmul %12, %70, %cst_24 {dimension_numbers = #tpu.dot_dimension_numbers<[1], [0], [0], [1], [0, 0, 1, 1], [], []>} : vector<48x32xf32>, vector<32x128xf32>, vector<48x128xf32> -> vector<48x128xf32>
    %72 = arith.addf %68, %71 : vector<48x128xf32>
    %73 = vector.extract_strided_slice %1 {offsets = [2, 0, 0, 0], sizes = [1, 1, 32, 128], strides = [1, 1, 1, 1]} : vector<5x2x32x128xf32> to vector<1x1x32x128xf32>
    %74 = vector.shape_cast %73 : vector<1x1x32x128xf32> to vector<32x128xf32>
    %cst_25 = arith.constant dense<0.000000e+00> : vector<48x128xf32>
    %75 = tpu.matmul %15, %74, %cst_25 {dimension_numbers = #tpu.dot_dimension_numbers<[1], [0], [0], [1], [0, 0, 1, 1], [], []>} : vector<48x32xf32>, vector<32x128xf32>, vector<48x128xf32> -> vector<48x128xf32>
    %76 = arith.addf %72, %75 : vector<48x128xf32>
    %77 = vector.extract_strided_slice %1 {offsets = [3, 0, 0, 0], sizes = [1, 1, 32, 128], strides = [1, 1, 1, 1]} : vector<5x2x32x128xf32> to vector<1x1x32x128xf32>
    %78 = vector.shape_cast %77 : vector<1x1x32x128xf32> to vector<32x128xf32>
    %cst_26 = arith.constant dense<0.000000e+00> : vector<48x128xf32>
    %79 = tpu.matmul %18, %78, %cst_26 {dimension_numbers = #tpu.dot_dimension_numbers<[1], [0], [0], [1], [0, 0, 1, 1], [], []>} : vector<48x32xf32>, vector<32x128xf32>, vector<48x128xf32> -> vector<48x128xf32>
    %80 = arith.addf %76, %79 : vector<48x128xf32>
    %81 = vector.extract_strided_slice %1 {offsets = [4, 0, 0, 0], sizes = [1, 1, 32, 128], strides = [1, 1, 1, 1]} : vector<5x2x32x128xf32> to vector<1x1x32x128xf32>
    %82 = vector.shape_cast %81 : vector<1x1x32x128xf32> to vector<32x128xf32>
    %cst_27 = arith.constant dense<0.000000e+00> : vector<48x128xf32>
    %83 = tpu.matmul %21, %82, %cst_27 {dimension_numbers = #tpu.dot_dimension_numbers<[1], [0], [0], [1], [0, 0, 1, 1], [], []>} : vector<48x32xf32>, vector<32x128xf32>, vector<48x128xf32> -> vector<48x128xf32>
    %84 = arith.addf %80, %83 : vector<48x128xf32>
    %85 = vector.extract_strided_slice %1 {offsets = [0, 1, 0, 0], sizes = [1, 1, 32, 128], strides = [1, 1, 1, 1]} : vector<5x2x32x128xf32> to vector<1x1x32x128xf32>
    %86 = vector.shape_cast %85 : vector<1x1x32x128xf32> to vector<32x128xf32>
    %cst_28 = arith.constant dense<0.000000e+00> : vector<48x128xf32>
    %87 = tpu.matmul %9, %86, %cst_28 {dimension_numbers = #tpu.dot_dimension_numbers<[1], [0], [0], [1], [0, 0, 1, 1], [], []>} : vector<48x32xf32>, vector<32x128xf32>, vector<48x128xf32> -> vector<48x128xf32>
    %88 = vector.extract_strided_slice %1 {offsets = [1, 1, 0, 0], sizes = [1, 1, 32, 128], strides = [1, 1, 1, 1]} : vector<5x2x32x128xf32> to vector<1x1x32x128xf32>
    %89 = vector.shape_cast %88 : vector<1x1x32x128xf32> to vector<32x128xf32>
    %cst_29 = arith.constant dense<0.000000e+00> : vector<48x128xf32>
    %90 = tpu.matmul %12, %89, %cst_29 {dimension_numbers = #tpu.dot_dimension_numbers<[1], [0], [0], [1], [0, 0, 1, 1], [], []>} : vector<48x32xf32>, vector<32x128xf32>, vector<48x128xf32> -> vector<48x128xf32>
    %91 = arith.addf %87, %90 : vector<48x128xf32>
    %92 = vector.extract_strided_slice %1 {offsets = [2, 1, 0, 0], sizes = [1, 1, 32, 128], strides = [1, 1, 1, 1]} : vector<5x2x32x128xf32> to vector<1x1x32x128xf32>
    %93 = vector.shape_cast %92 : vector<1x1x32x128xf32> to vector<32x128xf32>
    %cst_30 = arith.constant dense<0.000000e+00> : vector<48x128xf32>
    %94 = tpu.matmul %15, %93, %cst_30 {dimension_numbers = #tpu.dot_dimension_numbers<[1], [0], [0], [1], [0, 0, 1, 1], [], []>} : vector<48x32xf32>, vector<32x128xf32>, vector<48x128xf32> -> vector<48x128xf32>
    %95 = arith.addf %91, %94 : vector<48x128xf32>
    %96 = vector.extract_strided_slice %1 {offsets = [3, 1, 0, 0], sizes = [1, 1, 32, 128], strides = [1, 1, 1, 1]} : vector<5x2x32x128xf32> to vector<1x1x32x128xf32>
    %97 = vector.shape_cast %96 : vector<1x1x32x128xf32> to vector<32x128xf32>
    %cst_31 = arith.constant dense<0.000000e+00> : vector<48x128xf32>
    %98 = tpu.matmul %18, %97, %cst_31 {dimension_numbers = #tpu.dot_dimension_numbers<[1], [0], [0], [1], [0, 0, 1, 1], [], []>} : vector<48x32xf32>, vector<32x128xf32>, vector<48x128xf32> -> vector<48x128xf32>
    %99 = arith.addf %95, %98 : vector<48x128xf32>
    %100 = vector.extract_strided_slice %1 {offsets = [4, 1, 0, 0], sizes = [1, 1, 32, 128], strides = [1, 1, 1, 1]} : vector<5x2x32x128xf32> to vector<1x1x32x128xf32>
    %101 = vector.shape_cast %100 : vector<1x1x32x128xf32> to vector<32x128xf32>
    %cst_32 = arith.constant dense<0.000000e+00> : vector<48x128xf32>
    %102 = tpu.matmul %21, %101, %cst_32 {dimension_numbers = #tpu.dot_dimension_numbers<[1], [0], [0], [1], [0, 0, 1, 1], [], []>} : vector<48x32xf32>, vector<32x128xf32>, vector<48x128xf32> -> vector<48x128xf32>
    %103 = arith.addf %99, %102 : vector<48x128xf32>
    %104 = arith.maximumf %46, %65 : vector<48x128xf32>
    %105 = arith.maximumf %84, %103 : vector<48x128xf32>
    %106 = arith.maximumf %104, %105 : vector<48x128xf32>
    %c0_33 = arith.constant 0 : index
    %c0_34 = arith.constant 0 : index
    %107 = vector.load %arg3[%c0_33, %c0_34] : memref<1x128xf32, #tpu.memory_space<vmem>>, vector<1x128xf32>
    %108 = vector.broadcast %107 : vector<1x128xf32> to vector<48x128xf32>
    %109 = arith.addf %106, %108 : vector<48x128xf32>
    %cst_35 = arith.constant 0.000000e+00 : f32
    %110 = vector.broadcast %cst_35 : f32 to vector<48x128xf32>
    %111 = arith.maximumf %109, %110 : vector<48x128xf32>
    %112 = vector.extract_strided_slice %1 {offsets = [0, 0, 0, 0], sizes = [1, 1, 32, 128], strides = [1, 1, 1, 1]} : vector<5x2x32x128xf32> to vector<1x1x32x128xf32>
    %113 = vector.shape_cast %112 : vector<1x1x32x128xf32> to vector<32x128xf32>
    %cst_36 = arith.constant dense<0.000000e+00> : vector<48x128xf32>
    %114 = tpu.matmul %12, %113, %cst_36 {dimension_numbers = #tpu.dot_dimension_numbers<[1], [0], [0], [1], [0, 0, 1, 1], [], []>} : vector<48x32xf32>, vector<32x128xf32>, vector<48x128xf32> -> vector<48x128xf32>
    %115 = vector.extract_strided_slice %1 {offsets = [1, 0, 0, 0], sizes = [1, 1, 32, 128], strides = [1, 1, 1, 1]} : vector<5x2x32x128xf32> to vector<1x1x32x128xf32>
    %116 = vector.shape_cast %115 : vector<1x1x32x128xf32> to vector<32x128xf32>
    %cst_37 = arith.constant dense<0.000000e+00> : vector<48x128xf32>
    %117 = tpu.matmul %15, %116, %cst_37 {dimension_numbers = #tpu.dot_dimension_numbers<[1], [0], [0], [1], [0, 0, 1, 1], [], []>} : vector<48x32xf32>, vector<32x128xf32>, vector<48x128xf32> -> vector<48x128xf32>
    %118 = arith.addf %114, %117 : vector<48x128xf32>
    %119 = vector.extract_strided_slice %1 {offsets = [2, 0, 0, 0], sizes = [1, 1, 32, 128], strides = [1, 1, 1, 1]} : vector<5x2x32x128xf32> to vector<1x1x32x128xf32>
    %120 = vector.shape_cast %119 : vector<1x1x32x128xf32> to vector<32x128xf32>
    %cst_38 = arith.constant dense<0.000000e+00> : vector<48x128xf32>
    %121 = tpu.matmul %18, %120, %cst_38 {dimension_numbers = #tpu.dot_dimension_numbers<[1], [0], [0], [1], [0, 0, 1, 1], [], []>} : vector<48x32xf32>, vector<32x128xf32>, vector<48x128xf32> -> vector<48x128xf32>
    %122 = arith.addf %118, %121 : vector<48x128xf32>
    %123 = vector.extract_strided_slice %1 {offsets = [3, 0, 0, 0], sizes = [1, 1, 32, 128], strides = [1, 1, 1, 1]} : vector<5x2x32x128xf32> to vector<1x1x32x128xf32>
    %124 = vector.shape_cast %123 : vector<1x1x32x128xf32> to vector<32x128xf32>
    %cst_39 = arith.constant dense<0.000000e+00> : vector<48x128xf32>
    %125 = tpu.matmul %21, %124, %cst_39 {dimension_numbers = #tpu.dot_dimension_numbers<[1], [0], [0], [1], [0, 0, 1, 1], [], []>} : vector<48x32xf32>, vector<32x128xf32>, vector<48x128xf32> -> vector<48x128xf32>
    %126 = arith.addf %122, %125 : vector<48x128xf32>
    %127 = vector.extract_strided_slice %1 {offsets = [4, 0, 0, 0], sizes = [1, 1, 32, 128], strides = [1, 1, 1, 1]} : vector<5x2x32x128xf32> to vector<1x1x32x128xf32>
    %128 = vector.shape_cast %127 : vector<1x1x32x128xf32> to vector<32x128xf32>
    %cst_40 = arith.constant dense<0.000000e+00> : vector<48x128xf32>
    %129 = tpu.matmul %24, %128, %cst_40 {dimension_numbers = #tpu.dot_dimension_numbers<[1], [0], [0], [1], [0, 0, 1, 1], [], []>} : vector<48x32xf32>, vector<32x128xf32>, vector<48x128xf32> -> vector<48x128xf32>
    %130 = arith.addf %126, %129 : vector<48x128xf32>
    %131 = vector.extract_strided_slice %1 {offsets = [0, 1, 0, 0], sizes = [1, 1, 32, 128], strides = [1, 1, 1, 1]} : vector<5x2x32x128xf32> to vector<1x1x32x128xf32>
    %132 = vector.shape_cast %131 : vector<1x1x32x128xf32> to vector<32x128xf32>
    %cst_41 = arith.constant dense<0.000000e+00> : vector<48x128xf32>
    %133 = tpu.matmul %12, %132, %cst_41 {dimension_numbers = #tpu.dot_dimension_numbers<[1], [0], [0], [1], [0, 0, 1, 1], [], []>} : vector<48x32xf32>, vector<32x128xf32>, vector<48x128xf32> -> vector<48x128xf32>
    %134 = vector.extract_strided_slice %1 {offsets = [1, 1, 0, 0], sizes = [1, 1, 32, 128], strides = [1, 1, 1, 1]} : vector<5x2x32x128xf32> to vector<1x1x32x128xf32>
    %135 = vector.shape_cast %134 : vector<1x1x32x128xf32> to vector<32x128xf32>
    %cst_42 = arith.constant dense<0.000000e+00> : vector<48x128xf32>
    %136 = tpu.matmul %15, %135, %cst_42 {dimension_numbers = #tpu.dot_dimension_numbers<[1], [0], [0], [1], [0, 0, 1, 1], [], []>} : vector<48x32xf32>, vector<32x128xf32>, vector<48x128xf32> -> vector<48x128xf32>
    %137 = arith.addf %133, %136 : vector<48x128xf32>
    %138 = vector.extract_strided_slice %1 {offsets = [2, 1, 0, 0], sizes = [1, 1, 32, 128], strides = [1, 1, 1, 1]} : vector<5x2x32x128xf32> to vector<1x1x32x128xf32>
    %139 = vector.shape_cast %138 : vector<1x1x32x128xf32> to vector<32x128xf32>
    %cst_43 = arith.constant dense<0.000000e+00> : vector<48x128xf32>
    %140 = tpu.matmul %18, %139, %cst_43 {dimension_numbers = #tpu.dot_dimension_numbers<[1], [0], [0], [1], [0, 0, 1, 1], [], []>} : vector<48x32xf32>, vector<32x128xf32>, vector<48x128xf32> -> vector<48x128xf32>
    %141 = arith.addf %137, %140 : vector<48x128xf32>
    %142 = vector.extract_strided_slice %1 {offsets = [3, 1, 0, 0], sizes = [1, 1, 32, 128], strides = [1, 1, 1, 1]} : vector<5x2x32x128xf32> to vector<1x1x32x128xf32>
    %143 = vector.shape_cast %142 : vector<1x1x32x128xf32> to vector<32x128xf32>
    %cst_44 = arith.constant dense<0.000000e+00> : vector<48x128xf32>
    %144 = tpu.matmul %21, %143, %cst_44 {dimension_numbers = #tpu.dot_dimension_numbers<[1], [0], [0], [1], [0, 0, 1, 1], [], []>} : vector<48x32xf32>, vector<32x128xf32>, vector<48x128xf32> -> vector<48x128xf32>
    %145 = arith.addf %141, %144 : vector<48x128xf32>
    %146 = vector.extract_strided_slice %1 {offsets = [4, 1, 0, 0], sizes = [1, 1, 32, 128], strides = [1, 1, 1, 1]} : vector<5x2x32x128xf32> to vector<1x1x32x128xf32>
    %147 = vector.shape_cast %146 : vector<1x1x32x128xf32> to vector<32x128xf32>
    %cst_45 = arith.constant dense<0.000000e+00> : vector<48x128xf32>
    %148 = tpu.matmul %24, %147, %cst_45 {dimension_numbers = #tpu.dot_dimension_numbers<[1], [0], [0], [1], [0, 0, 1, 1], [], []>} : vector<48x32xf32>, vector<32x128xf32>, vector<48x128xf32> -> vector<48x128xf32>
    %149 = arith.addf %145, %148 : vector<48x128xf32>
    %150 = vector.extract_strided_slice %1 {offsets = [0, 0, 0, 0], sizes = [1, 1, 32, 128], strides = [1, 1, 1, 1]} : vector<5x2x32x128xf32> to vector<1x1x32x128xf32>
    %151 = vector.shape_cast %150 : vector<1x1x32x128xf32> to vector<32x128xf32>
    %cst_46 = arith.constant dense<0.000000e+00> : vector<48x128xf32>
    %152 = tpu.matmul %15, %151, %cst_46 {dimension_numbers = #tpu.dot_dimension_numbers<[1], [0], [0], [1], [0, 0, 1, 1], [], []>} : vector<48x32xf32>, vector<32x128xf32>, vector<48x128xf32> -> vector<48x128xf32>
    %153 = vector.extract_strided_slice %1 {offsets = [1, 0, 0, 0], sizes = [1, 1, 32, 128], strides = [1, 1, 1, 1]} : vector<5x2x32x128xf32> to vector<1x1x32x128xf32>
    %154 = vector.shape_cast %153 : vector<1x1x32x128xf32> to vector<32x128xf32>
    %cst_47 = arith.constant dense<0.000000e+00> : vector<48x128xf32>
    %155 = tpu.matmul %18, %154, %cst_47 {dimension_numbers = #tpu.dot_dimension_numbers<[1], [0], [0], [1], [0, 0, 1, 1], [], []>} : vector<48x32xf32>, vector<32x128xf32>, vector<48x128xf32> -> vector<48x128xf32>
    %156 = arith.addf %152, %155 : vector<48x128xf32>
    %157 = vector.extract_strided_slice %1 {offsets = [2, 0, 0, 0], sizes = [1, 1, 32, 128], strides = [1, 1, 1, 1]} : vector<5x2x32x128xf32> to vector<1x1x32x128xf32>
    %158 = vector.shape_cast %157 : vector<1x1x32x128xf32> to vector<32x128xf32>
    %cst_48 = arith.constant dense<0.000000e+00> : vector<48x128xf32>
    %159 = tpu.matmul %21, %158, %cst_48 {dimension_numbers = #tpu.dot_dimension_numbers<[1], [0], [0], [1], [0, 0, 1, 1], [], []>} : vector<48x32xf32>, vector<32x128xf32>, vector<48x128xf32> -> vector<48x128xf32>
    %160 = arith.addf %156, %159 : vector<48x128xf32>
    %161 = vector.extract_strided_slice %1 {offsets = [3, 0, 0, 0], sizes = [1, 1, 32, 128], strides = [1, 1, 1, 1]} : vector<5x2x32x128xf32> to vector<1x1x32x128xf32>
    %162 = vector.shape_cast %161 : vector<1x1x32x128xf32> to vector<32x128xf32>
    %cst_49 = arith.constant dense<0.000000e+00> : vector<48x128xf32>
    %163 = tpu.matmul %24, %162, %cst_49 {dimension_numbers = #tpu.dot_dimension_numbers<[1], [0], [0], [1], [0, 0, 1, 1], [], []>} : vector<48x32xf32>, vector<32x128xf32>, vector<48x128xf32> -> vector<48x128xf32>
    %164 = arith.addf %160, %163 : vector<48x128xf32>
    %165 = vector.extract_strided_slice %1 {offsets = [4, 0, 0, 0], sizes = [1, 1, 32, 128], strides = [1, 1, 1, 1]} : vector<5x2x32x128xf32> to vector<1x1x32x128xf32>
    %166 = vector.shape_cast %165 : vector<1x1x32x128xf32> to vector<32x128xf32>
    %cst_50 = arith.constant dense<0.000000e+00> : vector<48x128xf32>
    %167 = tpu.matmul %27, %166, %cst_50 {dimension_numbers = #tpu.dot_dimension_numbers<[1], [0], [0], [1], [0, 0, 1, 1], [], []>} : vector<48x32xf32>, vector<32x128xf32>, vector<48x128xf32> -> vector<48x128xf32>
    %168 = arith.addf %164, %167 : vector<48x128xf32>
    %169 = vector.extract_strided_slice %1 {offsets = [0, 1, 0, 0], sizes = [1, 1, 32, 128], strides = [1, 1, 1, 1]} : vector<5x2x32x128xf32> to vector<1x1x32x128xf32>
    %170 = vector.shape_cast %169 : vector<1x1x32x128xf32> to vector<32x128xf32>
    %cst_51 = arith.constant dense<0.000000e+00> : vector<48x128xf32>
    %171 = tpu.matmul %15, %170, %cst_51 {dimension_numbers = #tpu.dot_dimension_numbers<[1], [0], [0], [1], [0, 0, 1, 1], [], []>} : vector<48x32xf32>, vector<32x128xf32>, vector<48x128xf32> -> vector<48x128xf32>
    %172 = vector.extract_strided_slice %1 {offsets = [1, 1, 0, 0], sizes = [1, 1, 32, 128], strides = [1, 1, 1, 1]} : vector<5x2x32x128xf32> to vector<1x1x32x128xf32>
    %173 = vector.shape_cast %172 : vector<1x1x32x128xf32> to vector<32x128xf32>
    %cst_52 = arith.constant dense<0.000000e+00> : vector<48x128xf32>
    %174 = tpu.matmul %18, %173, %cst_52 {dimension_numbers = #tpu.dot_dimension_numbers<[1], [0], [0], [1], [0, 0, 1, 1], [], []>} : vector<48x32xf32>, vector<32x128xf32>, vector<48x128xf32> -> vector<48x128xf32>
    %175 = arith.addf %171, %174 : vector<48x128xf32>
    %176 = vector.extract_strided_slice %1 {offsets = [2, 1, 0, 0], sizes = [1, 1, 32, 128], strides = [1, 1, 1, 1]} : vector<5x2x32x128xf32> to vector<1x1x32x128xf32>
    %177 = vector.shape_cast %176 : vector<1x1x32x128xf32> to vector<32x128xf32>
    %cst_53 = arith.constant dense<0.000000e+00> : vector<48x128xf32>
    %178 = tpu.matmul %21, %177, %cst_53 {dimension_numbers = #tpu.dot_dimension_numbers<[1], [0], [0], [1], [0, 0, 1, 1], [], []>} : vector<48x32xf32>, vector<32x128xf32>, vector<48x128xf32> -> vector<48x128xf32>
    %179 = arith.addf %175, %178 : vector<48x128xf32>
    %180 = vector.extract_strided_slice %1 {offsets = [3, 1, 0, 0], sizes = [1, 1, 32, 128], strides = [1, 1, 1, 1]} : vector<5x2x32x128xf32> to vector<1x1x32x128xf32>
    %181 = vector.shape_cast %180 : vector<1x1x32x128xf32> to vector<32x128xf32>
    %cst_54 = arith.constant dense<0.000000e+00> : vector<48x128xf32>
    %182 = tpu.matmul %24, %181, %cst_54 {dimension_numbers = #tpu.dot_dimension_numbers<[1], [0], [0], [1], [0, 0, 1, 1], [], []>} : vector<48x32xf32>, vector<32x128xf32>, vector<48x128xf32> -> vector<48x128xf32>
    %183 = arith.addf %179, %182 : vector<48x128xf32>
    %184 = vector.extract_strided_slice %1 {offsets = [4, 1, 0, 0], sizes = [1, 1, 32, 128], strides = [1, 1, 1, 1]} : vector<5x2x32x128xf32> to vector<1x1x32x128xf32>
    %185 = vector.shape_cast %184 : vector<1x1x32x128xf32> to vector<32x128xf32>
    %cst_55 = arith.constant dense<0.000000e+00> : vector<48x128xf32>
    %186 = tpu.matmul %27, %185, %cst_55 {dimension_numbers = #tpu.dot_dimension_numbers<[1], [0], [0], [1], [0, 0, 1, 1], [], []>} : vector<48x32xf32>, vector<32x128xf32>, vector<48x128xf32> -> vector<48x128xf32>
    %187 = arith.addf %183, %186 : vector<48x128xf32>
    %188 = arith.maximumf %130, %149 : vector<48x128xf32>
    %189 = arith.maximumf %168, %187 : vector<48x128xf32>
    %190 = arith.maximumf %188, %189 : vector<48x128xf32>
    %c0_56 = arith.constant 0 : index
    %c0_57 = arith.constant 0 : index
    %191 = vector.load %arg3[%c0_56, %c0_57] : memref<1x128xf32, #tpu.memory_space<vmem>>, vector<1x128xf32>
    %192 = vector.broadcast %191 : vector<1x128xf32> to vector<48x128xf32>
    %193 = arith.addf %190, %192 : vector<48x128xf32>
    %cst_58 = arith.constant 0.000000e+00 : f32
    %194 = vector.broadcast %cst_58 : f32 to vector<48x128xf32>
    %195 = arith.maximumf %193, %194 : vector<48x128xf32>
    %196 = vector.extract_strided_slice %111 {offsets = [0, 0], sizes = [32, 128], strides = [1, 1]} : vector<48x128xf32> to vector<32x128xf32>
    %197 = vector.extract_strided_slice %195 {offsets = [0, 0], sizes = [32, 128], strides = [1, 1]} : vector<48x128xf32> to vector<32x128xf32>
    %198 = vector.extract_strided_slice %111 {offsets = [8, 0], sizes = [32, 128], strides = [1, 1]} : vector<48x128xf32> to vector<32x128xf32>
    %199 = vector.extract_strided_slice %195 {offsets = [8, 0], sizes = [32, 128], strides = [1, 1]} : vector<48x128xf32> to vector<32x128xf32>
    %200 = vector.extract_strided_slice %111 {offsets = [16, 0], sizes = [32, 128], strides = [1, 1]} : vector<48x128xf32> to vector<32x128xf32>
    %201 = vector.extract_strided_slice %195 {offsets = [16, 0], sizes = [32, 128], strides = [1, 1]} : vector<48x128xf32> to vector<32x128xf32>
    %202 = vector.extract_strided_slice %2 {offsets = [0, 0, 0, 0], sizes = [1, 1, 128, 128], strides = [1, 1, 1, 1]} : vector<5x2x128x128xf32> to vector<1x1x128x128xf32>
    %203 = vector.shape_cast %202 : vector<1x1x128x128xf32> to vector<128x128xf32>
    %cst_59 = arith.constant dense<0.000000e+00> : vector<32x128xf32>
    %204 = tpu.matmul %196, %203, %cst_59 {dimension_numbers = #tpu.dot_dimension_numbers<[1], [0], [0], [1], [0, 0, 1, 1], [], []>} : vector<32x128xf32>, vector<128x128xf32>, vector<32x128xf32> -> vector<32x128xf32>
    %205 = vector.extract_strided_slice %2 {offsets = [1, 0, 0, 0], sizes = [1, 1, 128, 128], strides = [1, 1, 1, 1]} : vector<5x2x128x128xf32> to vector<1x1x128x128xf32>
    %206 = vector.shape_cast %205 : vector<1x1x128x128xf32> to vector<128x128xf32>
    %cst_60 = arith.constant dense<0.000000e+00> : vector<32x128xf32>
    %207 = tpu.matmul %197, %206, %cst_60 {dimension_numbers = #tpu.dot_dimension_numbers<[1], [0], [0], [1], [0, 0, 1, 1], [], []>} : vector<32x128xf32>, vector<128x128xf32>, vector<32x128xf32> -> vector<32x128xf32>
    %208 = arith.addf %204, %207 : vector<32x128xf32>
    %209 = vector.extract_strided_slice %2 {offsets = [2, 0, 0, 0], sizes = [1, 1, 128, 128], strides = [1, 1, 1, 1]} : vector<5x2x128x128xf32> to vector<1x1x128x128xf32>
    %210 = vector.shape_cast %209 : vector<1x1x128x128xf32> to vector<128x128xf32>
    %cst_61 = arith.constant dense<0.000000e+00> : vector<32x128xf32>
    %211 = tpu.matmul %198, %210, %cst_61 {dimension_numbers = #tpu.dot_dimension_numbers<[1], [0], [0], [1], [0, 0, 1, 1], [], []>} : vector<32x128xf32>, vector<128x128xf32>, vector<32x128xf32> -> vector<32x128xf32>
    %212 = arith.addf %208, %211 : vector<32x128xf32>
    %213 = vector.extract_strided_slice %2 {offsets = [3, 0, 0, 0], sizes = [1, 1, 128, 128], strides = [1, 1, 1, 1]} : vector<5x2x128x128xf32> to vector<1x1x128x128xf32>
    %214 = vector.shape_cast %213 : vector<1x1x128x128xf32> to vector<128x128xf32>
    %cst_62 = arith.constant dense<0.000000e+00> : vector<32x128xf32>
    %215 = tpu.matmul %199, %214, %cst_62 {dimension_numbers = #tpu.dot_dimension_numbers<[1], [0], [0], [1], [0, 0, 1, 1], [], []>} : vector<32x128xf32>, vector<128x128xf32>, vector<32x128xf32> -> vector<32x128xf32>
    %216 = arith.addf %212, %215 : vector<32x128xf32>
    %217 = vector.extract_strided_slice %2 {offsets = [4, 0, 0, 0], sizes = [1, 1, 128, 128], strides = [1, 1, 1, 1]} : vector<5x2x128x128xf32> to vector<1x1x128x128xf32>
    %218 = vector.shape_cast %217 : vector<1x1x128x128xf32> to vector<128x128xf32>
    %cst_63 = arith.constant dense<0.000000e+00> : vector<32x128xf32>
    %219 = tpu.matmul %200, %218, %cst_63 {dimension_numbers = #tpu.dot_dimension_numbers<[1], [0], [0], [1], [0, 0, 1, 1], [], []>} : vector<32x128xf32>, vector<128x128xf32>, vector<32x128xf32> -> vector<32x128xf32>
    %220 = arith.addf %216, %219 : vector<32x128xf32>
    %221 = vector.extract_strided_slice %2 {offsets = [0, 1, 0, 0], sizes = [1, 1, 128, 128], strides = [1, 1, 1, 1]} : vector<5x2x128x128xf32> to vector<1x1x128x128xf32>
    %222 = vector.shape_cast %221 : vector<1x1x128x128xf32> to vector<128x128xf32>
    %cst_64 = arith.constant dense<0.000000e+00> : vector<32x128xf32>
    %223 = tpu.matmul %196, %222, %cst_64 {dimension_numbers = #tpu.dot_dimension_numbers<[1], [0], [0], [1], [0, 0, 1, 1], [], []>} : vector<32x128xf32>, vector<128x128xf32>, vector<32x128xf32> -> vector<32x128xf32>
    %224 = vector.extract_strided_slice %2 {offsets = [1, 1, 0, 0], sizes = [1, 1, 128, 128], strides = [1, 1, 1, 1]} : vector<5x2x128x128xf32> to vector<1x1x128x128xf32>
    %225 = vector.shape_cast %224 : vector<1x1x128x128xf32> to vector<128x128xf32>
    %cst_65 = arith.constant dense<0.000000e+00> : vector<32x128xf32>
    %226 = tpu.matmul %197, %225, %cst_65 {dimension_numbers = #tpu.dot_dimension_numbers<[1], [0], [0], [1], [0, 0, 1, 1], [], []>} : vector<32x128xf32>, vector<128x128xf32>, vector<32x128xf32> -> vector<32x128xf32>
    %227 = arith.addf %223, %226 : vector<32x128xf32>
    %228 = vector.extract_strided_slice %2 {offsets = [2, 1, 0, 0], sizes = [1, 1, 128, 128], strides = [1, 1, 1, 1]} : vector<5x2x128x128xf32> to vector<1x1x128x128xf32>
    %229 = vector.shape_cast %228 : vector<1x1x128x128xf32> to vector<128x128xf32>
    %cst_66 = arith.constant dense<0.000000e+00> : vector<32x128xf32>
    %230 = tpu.matmul %198, %229, %cst_66 {dimension_numbers = #tpu.dot_dimension_numbers<[1], [0], [0], [1], [0, 0, 1, 1], [], []>} : vector<32x128xf32>, vector<128x128xf32>, vector<32x128xf32> -> vector<32x128xf32>
    %231 = arith.addf %227, %230 : vector<32x128xf32>
    %232 = vector.extract_strided_slice %2 {offsets = [3, 1, 0, 0], sizes = [1, 1, 128, 128], strides = [1, 1, 1, 1]} : vector<5x2x128x128xf32> to vector<1x1x128x128xf32>
    %233 = vector.shape_cast %232 : vector<1x1x128x128xf32> to vector<128x128xf32>
    %cst_67 = arith.constant dense<0.000000e+00> : vector<32x128xf32>
    %234 = tpu.matmul %199, %233, %cst_67 {dimension_numbers = #tpu.dot_dimension_numbers<[1], [0], [0], [1], [0, 0, 1, 1], [], []>} : vector<32x128xf32>, vector<128x128xf32>, vector<32x128xf32> -> vector<32x128xf32>
    %235 = arith.addf %231, %234 : vector<32x128xf32>
    %236 = vector.extract_strided_slice %2 {offsets = [4, 1, 0, 0], sizes = [1, 1, 128, 128], strides = [1, 1, 1, 1]} : vector<5x2x128x128xf32> to vector<1x1x128x128xf32>
    %237 = vector.shape_cast %236 : vector<1x1x128x128xf32> to vector<128x128xf32>
    %cst_68 = arith.constant dense<0.000000e+00> : vector<32x128xf32>
    %238 = tpu.matmul %200, %237, %cst_68 {dimension_numbers = #tpu.dot_dimension_numbers<[1], [0], [0], [1], [0, 0, 1, 1], [], []>} : vector<32x128xf32>, vector<128x128xf32>, vector<32x128xf32> -> vector<32x128xf32>
    %239 = arith.addf %235, %238 : vector<32x128xf32>
    %240 = vector.extract_strided_slice %2 {offsets = [0, 0, 0, 0], sizes = [1, 1, 128, 128], strides = [1, 1, 1, 1]} : vector<5x2x128x128xf32> to vector<1x1x128x128xf32>
    %241 = vector.shape_cast %240 : vector<1x1x128x128xf32> to vector<128x128xf32>
    %cst_69 = arith.constant dense<0.000000e+00> : vector<32x128xf32>
    %242 = tpu.matmul %197, %241, %cst_69 {dimension_numbers = #tpu.dot_dimension_numbers<[1], [0], [0], [1], [0, 0, 1, 1], [], []>} : vector<32x128xf32>, vector<128x128xf32>, vector<32x128xf32> -> vector<32x128xf32>
    %243 = vector.extract_strided_slice %2 {offsets = [1, 0, 0, 0], sizes = [1, 1, 128, 128], strides = [1, 1, 1, 1]} : vector<5x2x128x128xf32> to vector<1x1x128x128xf32>
    %244 = vector.shape_cast %243 : vector<1x1x128x128xf32> to vector<128x128xf32>
    %cst_70 = arith.constant dense<0.000000e+00> : vector<32x128xf32>
    %245 = tpu.matmul %198, %244, %cst_70 {dimension_numbers = #tpu.dot_dimension_numbers<[1], [0], [0], [1], [0, 0, 1, 1], [], []>} : vector<32x128xf32>, vector<128x128xf32>, vector<32x128xf32> -> vector<32x128xf32>
    %246 = arith.addf %242, %245 : vector<32x128xf32>
    %247 = vector.extract_strided_slice %2 {offsets = [2, 0, 0, 0], sizes = [1, 1, 128, 128], strides = [1, 1, 1, 1]} : vector<5x2x128x128xf32> to vector<1x1x128x128xf32>
    %248 = vector.shape_cast %247 : vector<1x1x128x128xf32> to vector<128x128xf32>
    %cst_71 = arith.constant dense<0.000000e+00> : vector<32x128xf32>
    %249 = tpu.matmul %199, %248, %cst_71 {dimension_numbers = #tpu.dot_dimension_numbers<[1], [0], [0], [1], [0, 0, 1, 1], [], []>} : vector<32x128xf32>, vector<128x128xf32>, vector<32x128xf32> -> vector<32x128xf32>
    %250 = arith.addf %246, %249 : vector<32x128xf32>
    %251 = vector.extract_strided_slice %2 {offsets = [3, 0, 0, 0], sizes = [1, 1, 128, 128], strides = [1, 1, 1, 1]} : vector<5x2x128x128xf32> to vector<1x1x128x128xf32>
    %252 = vector.shape_cast %251 : vector<1x1x128x128xf32> to vector<128x128xf32>
    %cst_72 = arith.constant dense<0.000000e+00> : vector<32x128xf32>
    %253 = tpu.matmul %200, %252, %cst_72 {dimension_numbers = #tpu.dot_dimension_numbers<[1], [0], [0], [1], [0, 0, 1, 1], [], []>} : vector<32x128xf32>, vector<128x128xf32>, vector<32x128xf32> -> vector<32x128xf32>
    %254 = arith.addf %250, %253 : vector<32x128xf32>
    %255 = vector.extract_strided_slice %2 {offsets = [4, 0, 0, 0], sizes = [1, 1, 128, 128], strides = [1, 1, 1, 1]} : vector<5x2x128x128xf32> to vector<1x1x128x128xf32>
    %256 = vector.shape_cast %255 : vector<1x1x128x128xf32> to vector<128x128xf32>
    %cst_73 = arith.constant dense<0.000000e+00> : vector<32x128xf32>
    %257 = tpu.matmul %201, %256, %cst_73 {dimension_numbers = #tpu.dot_dimension_numbers<[1], [0], [0], [1], [0, 0, 1, 1], [], []>} : vector<32x128xf32>, vector<128x128xf32>, vector<32x128xf32> -> vector<32x128xf32>
    %258 = arith.addf %254, %257 : vector<32x128xf32>
    %259 = vector.extract_strided_slice %2 {offsets = [0, 1, 0, 0], sizes = [1, 1, 128, 128], strides = [1, 1, 1, 1]} : vector<5x2x128x128xf32> to vector<1x1x128x128xf32>
    %260 = vector.shape_cast %259 : vector<1x1x128x128xf32> to vector<128x128xf32>
    %cst_74 = arith.constant dense<0.000000e+00> : vector<32x128xf32>
    %261 = tpu.matmul %197, %260, %cst_74 {dimension_numbers = #tpu.dot_dimension_numbers<[1], [0], [0], [1], [0, 0, 1, 1], [], []>} : vector<32x128xf32>, vector<128x128xf32>, vector<32x128xf32> -> vector<32x128xf32>
    %262 = vector.extract_strided_slice %2 {offsets = [1, 1, 0, 0], sizes = [1, 1, 128, 128], strides = [1, 1, 1, 1]} : vector<5x2x128x128xf32> to vector<1x1x128x128xf32>
    %263 = vector.shape_cast %262 : vector<1x1x128x128xf32> to vector<128x128xf32>
    %cst_75 = arith.constant dense<0.000000e+00> : vector<32x128xf32>
    %264 = tpu.matmul %198, %263, %cst_75 {dimension_numbers = #tpu.dot_dimension_numbers<[1], [0], [0], [1], [0, 0, 1, 1], [], []>} : vector<32x128xf32>, vector<128x128xf32>, vector<32x128xf32> -> vector<32x128xf32>
    %265 = arith.addf %261, %264 : vector<32x128xf32>
    %266 = vector.extract_strided_slice %2 {offsets = [2, 1, 0, 0], sizes = [1, 1, 128, 128], strides = [1, 1, 1, 1]} : vector<5x2x128x128xf32> to vector<1x1x128x128xf32>
    %267 = vector.shape_cast %266 : vector<1x1x128x128xf32> to vector<128x128xf32>
    %cst_76 = arith.constant dense<0.000000e+00> : vector<32x128xf32>
    %268 = tpu.matmul %199, %267, %cst_76 {dimension_numbers = #tpu.dot_dimension_numbers<[1], [0], [0], [1], [0, 0, 1, 1], [], []>} : vector<32x128xf32>, vector<128x128xf32>, vector<32x128xf32> -> vector<32x128xf32>
    %269 = arith.addf %265, %268 : vector<32x128xf32>
    %270 = vector.extract_strided_slice %2 {offsets = [3, 1, 0, 0], sizes = [1, 1, 128, 128], strides = [1, 1, 1, 1]} : vector<5x2x128x128xf32> to vector<1x1x128x128xf32>
    %271 = vector.shape_cast %270 : vector<1x1x128x128xf32> to vector<128x128xf32>
    %cst_77 = arith.constant dense<0.000000e+00> : vector<32x128xf32>
    %272 = tpu.matmul %200, %271, %cst_77 {dimension_numbers = #tpu.dot_dimension_numbers<[1], [0], [0], [1], [0, 0, 1, 1], [], []>} : vector<32x128xf32>, vector<128x128xf32>, vector<32x128xf32> -> vector<32x128xf32>
    %273 = arith.addf %269, %272 : vector<32x128xf32>
    %274 = vector.extract_strided_slice %2 {offsets = [4, 1, 0, 0], sizes = [1, 1, 128, 128], strides = [1, 1, 1, 1]} : vector<5x2x128x128xf32> to vector<1x1x128x128xf32>
    %275 = vector.shape_cast %274 : vector<1x1x128x128xf32> to vector<128x128xf32>
    %cst_78 = arith.constant dense<0.000000e+00> : vector<32x128xf32>
    %276 = tpu.matmul %201, %275, %cst_78 {dimension_numbers = #tpu.dot_dimension_numbers<[1], [0], [0], [1], [0, 0, 1, 1], [], []>} : vector<32x128xf32>, vector<128x128xf32>, vector<32x128xf32> -> vector<32x128xf32>
    %277 = arith.addf %273, %276 : vector<32x128xf32>
    %278 = arith.maximumf %220, %239 : vector<32x128xf32>
    %279 = arith.maximumf %258, %277 : vector<32x128xf32>
    %280 = arith.maximumf %278, %279 : vector<32x128xf32>
    %c0_79 = arith.constant 0 : index
    %c0_80 = arith.constant 0 : index
    %281 = vector.load %arg5[%c0_79, %c0_80] : memref<1x128xf32, #tpu.memory_space<vmem>>, vector<1x128xf32>
    %282 = vector.broadcast %281 : vector<1x128xf32> to vector<32x128xf32>
    %283 = arith.addf %280, %282 : vector<32x128xf32>
    %cst_81 = arith.constant 0.000000e+00 : f32
    %284 = vector.broadcast %cst_81 : f32 to vector<32x128xf32>
    %285 = arith.maximumf %283, %284 : vector<32x128xf32>
    %286 = vector.extract_strided_slice %285 {offsets = [0, 0], sizes = [8, 128], strides = [1, 1]} : vector<32x128xf32> to vector<8x128xf32>
    %287 = vector.extract_strided_slice %3 {offsets = [0, 0, 0], sizes = [1, 128, 64], strides = [1, 1, 1]} : vector<4x128x64xf32> to vector<1x128x64xf32>
    %288 = vector.shape_cast %287 : vector<1x128x64xf32> to vector<128x64xf32>
    %cst_82 = arith.constant dense<0.000000e+00> : vector<8x64xf32>
    %289 = tpu.matmul %286, %288, %cst_82 {dimension_numbers = #tpu.dot_dimension_numbers<[1], [0], [0], [1], [0, 0, 1, 1], [], []>} : vector<8x128xf32>, vector<128x64xf32>, vector<8x64xf32> -> vector<8x64xf32>
    %290 = vector.extract_strided_slice %285 {offsets = [8, 0], sizes = [8, 128], strides = [1, 1]} : vector<32x128xf32> to vector<8x128xf32>
    %291 = vector.extract_strided_slice %3 {offsets = [1, 0, 0], sizes = [1, 128, 64], strides = [1, 1, 1]} : vector<4x128x64xf32> to vector<1x128x64xf32>
    %292 = vector.shape_cast %291 : vector<1x128x64xf32> to vector<128x64xf32>
    %cst_83 = arith.constant dense<0.000000e+00> : vector<8x64xf32>
    %293 = tpu.matmul %290, %292, %cst_83 {dimension_numbers = #tpu.dot_dimension_numbers<[1], [0], [0], [1], [0, 0, 1, 1], [], []>} : vector<8x128xf32>, vector<128x64xf32>, vector<8x64xf32> -> vector<8x64xf32>
    %294 = arith.addf %289, %293 : vector<8x64xf32>
    %295 = vector.extract_strided_slice %285 {offsets = [16, 0], sizes = [8, 128], strides = [1, 1]} : vector<32x128xf32> to vector<8x128xf32>
    %296 = vector.extract_strided_slice %3 {offsets = [2, 0, 0], sizes = [1, 128, 64], strides = [1, 1, 1]} : vector<4x128x64xf32> to vector<1x128x64xf32>
    %297 = vector.shape_cast %296 : vector<1x128x64xf32> to vector<128x64xf32>
    %cst_84 = arith.constant dense<0.000000e+00> : vector<8x64xf32>
    %298 = tpu.matmul %295, %297, %cst_84 {dimension_numbers = #tpu.dot_dimension_numbers<[1], [0], [0], [1], [0, 0, 1, 1], [], []>} : vector<8x128xf32>, vector<128x64xf32>, vector<8x64xf32> -> vector<8x64xf32>
    %299 = arith.addf %294, %298 : vector<8x64xf32>
    %300 = vector.extract_strided_slice %285 {offsets = [24, 0], sizes = [8, 128], strides = [1, 1]} : vector<32x128xf32> to vector<8x128xf32>
    %301 = vector.extract_strided_slice %3 {offsets = [3, 0, 0], sizes = [1, 128, 64], strides = [1, 1, 1]} : vector<4x128x64xf32> to vector<1x128x64xf32>
    %302 = vector.shape_cast %301 : vector<1x128x64xf32> to vector<128x64xf32>
    %cst_85 = arith.constant dense<0.000000e+00> : vector<8x64xf32>
    %303 = tpu.matmul %300, %302, %cst_85 {dimension_numbers = #tpu.dot_dimension_numbers<[1], [0], [0], [1], [0, 0, 1, 1], [], []>} : vector<8x128xf32>, vector<128x64xf32>, vector<8x64xf32> -> vector<8x64xf32>
    %304 = arith.addf %299, %303 : vector<8x64xf32>
    %c0_86 = arith.constant 0 : index
    %c0_87 = arith.constant 0 : index
    %305 = vector.load %arg7[%c0_86, %c0_87] : memref<1x64xf32, #tpu.memory_space<vmem>>, vector<1x64xf32>
    %306 = vector.broadcast %305 : vector<1x64xf32> to vector<8x64xf32>
    %307 = arith.addf %304, %306 : vector<8x64xf32>
    %cst_88 = arith.constant 0.000000e+00 : f32
    %308 = vector.broadcast %cst_88 : f32 to vector<8x64xf32>
    %309 = arith.maximumf %307, %308 : vector<8x64xf32>
    %c0_89 = arith.constant 0 : index
    %c0_90 = arith.constant 0 : index
    %310 = vector.load %arg8[%c0_89, %c0_90] : memref<64x10xf32, #tpu.memory_space<vmem>>, vector<64x10xf32>
    %cst_91 = arith.constant dense<0.000000e+00> : vector<8x10xf32>
    %311 = tpu.matmul %309, %310, %cst_91 {dimension_numbers = #tpu.dot_dimension_numbers<[1], [0], [0], [1], [0, 0, 1, 1], [], []>} : vector<8x64xf32>, vector<64x10xf32>, vector<8x10xf32> -> vector<8x10xf32>
    %c0_92 = arith.constant 0 : index
    %c0_93 = arith.constant 0 : index
    %312 = vector.load %arg9[%c0_92, %c0_93] : memref<1x10xf32, #tpu.memory_space<vmem>>, vector<1x10xf32>
    %313 = vector.broadcast %312 : vector<1x10xf32> to vector<8x10xf32>
    %314 = arith.addf %311, %313 : vector<8x10xf32>
    %cst_94 = arith.constant dense<0xFF800000> : vector<8xf32>
    %315 = vector.multi_reduction <maximumf>, %314, %cst_94 [1] : vector<8x10xf32> to vector<8xf32>
    %316 = vector.shape_cast %315 : vector<8xf32> to vector<8x1xf32>
    %317 = vector.broadcast %316 : vector<8x1xf32> to vector<8x10xf32>
    %318 = arith.subf %314, %317 : vector<8x10xf32>
    %319 = math.exp %318 : vector<8x10xf32>
    %cst_95 = arith.constant dense<0.000000e+00> : vector<8xf32>
    %320 = vector.multi_reduction <add>, %319, %cst_95 [1] : vector<8x10xf32> to vector<8xf32>
    %321 = vector.shape_cast %320 : vector<8xf32> to vector<8x1xf32>
    %322 = math.log %321 : vector<8x1xf32>
    %323 = arith.addf %322, %316 : vector<8x1xf32>
    %324 = vector.broadcast %323 : vector<8x1xf32> to vector<8x10xf32>
    %325 = arith.subf %314, %324 : vector<8x10xf32>
    %c0_96 = arith.constant 0 : index
    %c0_97 = arith.constant 0 : index
    %326 = vector.load %arg10[%c0_96, %c0_97] : memref<8x10xf32, #tpu.memory_space<vmem>>, vector<8x10xf32>
    tpu.vector_store %arg10[%c0_96, %c0_97], %325 {strides = array<i32>} : memref<8x10xf32, #tpu.memory_space<vmem>>, vector<8x10xf32>,
    return
  }
  func.func @transform_0(%arg0: i32) -> (i32, i32, i32, i32) {
    %c0_i32 = arith.constant 0 : i32
    %c0_i32_0 = arith.constant 0 : i32
    %c0_i32_1 = arith.constant 0 : i32
    %c0_i32_2 = arith.constant 0 : i32
    return %c0_i32, %c0_i32_0, %arg0, %c0_i32_1 : i32, i32, i32, i32
  }
  func.func @transform_1(%arg0: i32) -> (i32, i32, i32, i32) {
    %c0_i32 = arith.constant 0 : i32
    %c0_i32_0 = arith.constant 0 : i32
    %c0_i32_1 = arith.constant 0 : i32
    %c0_i32_2 = arith.constant 0 : i32
    %c0_i32_3 = arith.constant 0 : i32
    return %c0_i32, %c0_i32_0, %c0_i32_1, %c0_i32_2 : i32, i32, i32, i32
  }
  func.func @transform_2(%arg0: i32) -> (i32, i32) {
    %c0_i32 = arith.constant 0 : i32
    %c0_i32_0 = arith.constant 0 : i32
    %c0_i32_1 = arith.constant 0 : i32
    return %c0_i32, %c0_i32_0 : i32, i32
  }
  func.func @transform_3(%arg0: i32) -> (i32, i32, i32, i32) {
    %c0_i32 = arith.constant 0 : i32
    %c0_i32_0 = arith.constant 0 : i32
    %c0_i32_1 = arith.constant 0 : i32
    %c0_i32_2 = arith.constant 0 : i32
    %c0_i32_3 = arith.constant 0 : i32
    return %c0_i32, %c0_i32_0, %c0_i32_1, %c0_i32_2 : i32, i32, i32, i32
  }
  func.func @transform_4(%arg0: i32) -> (i32, i32) {
    %c0_i32 = arith.constant 0 : i32
    %c0_i32_0 = arith.constant 0 : i32
    %c0_i32_1 = arith.constant 0 : i32
    return %c0_i32, %c0_i32_0 : i32, i32
  }
  func.func @transform_5(%arg0: i32) -> (i32, i32, i32) {
    %c0_i32 = arith.constant 0 : i32
    %c0_i32_0 = arith.constant 0 : i32
    %c0_i32_1 = arith.constant 0 : i32
    %c0_i32_2 = arith.constant 0 : i32
    return %c0_i32, %c0_i32_0, %c0_i32_1 : i32, i32, i32
  }
  func.func @transform_6(%arg0: i32) -> (i32, i32) {
    %c0_i32 = arith.constant 0 : i32
    %c0_i32_0 = arith.constant 0 : i32
    %c0_i32_1 = arith.constant 0 : i32
    return %c0_i32, %c0_i32_0 : i32, i32
  }
  func.func @transform_7(%arg0: i32) -> (i32, i32) {
    %c0_i32 = arith.constant 0 : i32
    %c0_i32_0 = arith.constant 0 : i32
    %c0_i32_1 = arith.constant 0 : i32
    return %c0_i32, %c0_i32_0 : i32, i32
  }
  func.func @transform_8(%arg0: i32) -> (i32, i32) {
    %c0_i32 = arith.constant 0 : i32
    %c0_i32_0 = arith.constant 0 : i32
    %c0_i32_1 = arith.constant 0 : i32
    return %c0_i32, %c0_i32_0 : i32, i32
  }
  func.func @transform_9(%arg0: i32) -> (i32, i32) {
    %c0_i32 = arith.constant 0 : i32
    %c0_i32_0 = arith.constant 0 : i32
    return %arg0, %c0_i32 : i32, i32
  }
}

</mosaic_0001>

<llo_original>
// kernel: net_forward.1
$region0: #{net_forward.1}
  #allocation0 [shape = 'u32[]', space=smem, size = 0x4, offset = 0x4, fixed_abs, tag = 'smem constant byte address 0x4 - core index']
  #allocation1 [shape = 'u32[144,128]{1,0:T(1,128)}', space=vmem, size = 0x12000, scoped, tag = 'internal scratch']
  %s0 = inlined_call_operand.vmem [shape: f32[4,7,8,32], index: 0, kind: input, shape index: {}]
  %s1 = inlined_call_operand.vmem [shape: f32[5,2,32,128], index: 1, kind: input, shape index: {}]
  %s2 = inlined_call_operand.vmem [shape: f32[1,128], index: 2, kind: input, shape index: {}]
  %s3 = inlined_call_operand.vmem [shape: f32[5,2,128,128], index: 3, kind: input, shape index: {}]
  %s4 = inlined_call_operand.vmem [shape: f32[1,128], index: 4, kind: input, shape index: {}]
  %s5 = inlined_call_operand.vmem [shape: f32[4,128,64], index: 5, kind: input, shape index: {}]
  %s6 = inlined_call_operand.vmem [shape: f32[1,64], index: 6, kind: input, shape index: {}]
  %s7 = inlined_call_operand.vmem [shape: f32[64,10], index: 7, kind: input, shape index: {}]
  %s8 = inlined_call_operand.vmem [shape: f32[1,10], index: 8, kind: input, shape index: {}]
  %s9 = inlined_call_operand.vmem [shape: f32[8,10], index: 9, kind: output, shape index: {}]
  %s10 = sld [smem:[#allocation0]]
  $region46: #{net_forward.1} parent=0
    _
  %s12 = ssub.s32 1, %s10
  %s13 = scalar_select 0, %s12, %s10
  // Predicated region
  $region2: #{net_forward.1} parent=0 // pred_check
    _
  $region3: #{net_forward.1} parent=0 // pred_check_branch
    %15 = sbr.rel (0) target = $region5
  $region4: #{net_forward.1} parent=0 // pred_region
    _
  $region5: #{net_forward.1} parent=0 // pred_fallthru
    _
  // Predicated region
  $region6: #{net_forward.1} parent=0 // pred_check
    _
  $region7: #{net_forward.1} parent=0 // pred_check_branch
    %17 = sbr.rel (0) target = $region9
  $region8: #{net_forward.1} parent=0 // pred_region
    _
  $region9: #{net_forward.1} parent=0 // pred_fallthru
    _
  // Predicated region
  $region10: #{net_forward.1} parent=0 // pred_check
    _
  $region11: #{net_forward.1} parent=0 // pred_check_branch
    %19 = sbr.rel (0) target = $region13
  $region12: #{net_forward.1} parent=0 // pred_region
    _
  $region13: #{net_forward.1} parent=0 // pred_fallthru
    _
  // Predicated region
  $region14: #{net_forward.1} parent=0 // pred_check
    _
  $region15: #{net_forward.1} parent=0 // pred_check_branch
    %21 = sbr.rel (0) target = $region17
  $region16: #{net_forward.1} parent=0 // pred_region
    _
  $region17: #{net_forward.1} parent=0 // pred_fallthru
    _
  // Predicated region
  $region18: #{net_forward.1} parent=0 // pred_check
    _
  $region19: #{net_forward.1} parent=0 // pred_check_branch
    %23 = sbr.rel (0) target = $region21
  $region20: #{net_forward.1} parent=0 // pred_region
    _
  $region21: #{net_forward.1} parent=0 // pred_fallthru
    _
  // Predicated region
  $region22: #{net_forward.1} parent=0 // pred_check
    _
  $region23: #{net_forward.1} parent=0 // pred_check_branch
    %25 = sbr.rel (0) target = $region25
  $region24: #{net_forward.1} parent=0 // pred_region
    _
  $region25: #{net_forward.1} parent=0 // pred_fallthru
    _
  // Predicated region
  $region26: #{net_forward.1} parent=0 // pred_check
    _
  $region27: #{net_forward.1} parent=0 // pred_check_branch
    %27 = sbr.rel (0) target = $region29
  $region28: #{net_forward.1} parent=0 // pred_region
    _
  $region29: #{net_forward.1} parent=0 // pred_fallthru
    _
  // Predicated region
  $region30: #{net_forward.1} parent=0 // pred_check
    _
  $region31: #{net_forward.1} parent=0 // pred_check_branch
    %29 = sbr.rel (0) target = $region33
  $region32: #{net_forward.1} parent=0 // pred_region
    _
  $region33: #{net_forward.1} parent=0 // pred_fallthru
    _
  // Predicated region
  $region34: #{net_forward.1} parent=0 // pred_check
    _
  $region35: #{net_forward.1} parent=0 // pred_check_branch
    %31 = sbr.rel (0) target = $region37
  $region36: #{net_forward.1} parent=0 // pred_region
    _
  $region37: #{net_forward.1} parent=0 // pred_fallthru
    _
  %v32 = vld [vmem:[%s0] sm:$0xff]
  %v33 = vld [vmem:[%s0 + $0x8] sm:$0xff]
  %v34 = vld [vmem:[%s0 + $0x10] sm:$0xff]
  %v35 = vld [vmem:[%s0 + $0x18] sm:$0xff]
  %v36 = vld [vmem:[%s0 + $0x20] sm:$0xff]
  %v37 = vld [vmem:[%s0 + $0x28] sm:$0xff]
  %v38 = vld [vmem:[%s0 + $0x30] sm:$0xff]
  %v39 = vld [vmem:[%s0 + $0x38] sm:$0xff]
  %v40 = vld [vmem:[%s0 + $0x40] sm:$0xff]
  %v41 = vld [vmem:[%s0 + $0x48] sm:$0xff]
  %v42 = vld [vmem:[%s0 + $0x50] sm:$0xff]
  %v43 = vld [vmem:[%s0 + $0x58] sm:$0xff]
  %v44 = vld [vmem:[%s0 + $0x60] sm:$0xff]
  %v45 = vld [vmem:[%s0 + $0x68] sm:$0xff]
  %v46 = vld [vmem:[%s0 + $0x70] sm:$0xff]
  %v47 = vld [vmem:[%s0 + $0x78] sm:$0xff]
  %v48 = vld [vmem:[%s0 + $0x80] sm:$0xff]
  %v49 = vld [vmem:[%s0 + $0x88] sm:$0xff]
  %v50 = vld [vmem:[%s0 + $0x90] sm:$0xff]
  %v51 = vld [vmem:[%s0 + $0x98] sm:$0xff]
  %v52 = vld [vmem:[%s0 + $0xa0] sm:$0xff]
  %v53 = vld [vmem:[%s0 + $0xa8] sm:$0xff]
  %v54 = vld [vmem:[%s0 + $0xb0] sm:$0xff]
  %v55 = vld [vmem:[%s0 + $0xb8] sm:$0xff]
  %v56 = vld [vmem:[%s0 + $0xc0] sm:$0xff]
  %v57 = vld [vmem:[%s0 + $0xc8] sm:$0xff]
  %v58 = vld [vmem:[%s0 + $0xd0] sm:$0xff]
  %v59 = vld [vmem:[%s0 + $0xd8] sm:$0xff]
  %v60 = vld [vmem:[%s1] sm:$0xff]
  %v61 = vld [vmem:[%s1 + $0x8] sm:$0xff]
  %v62 = vld [vmem:[%s1 + $0x10] sm:$0xff]
  %v63 = vld [vmem:[%s1 + $0x18] sm:$0xff]
  %v64 = vld [vmem:[%s1 + $0x20] sm:$0xff]
  %v65 = vld [vmem:[%s1 + $0x28] sm:$0xff]
  %v66 = vld [vmem:[%s1 + $0x30] sm:$0xff]
  %v67 = vld [vmem:[%s1 + $0x38] sm:$0xff]
  %v68 = vld [vmem:[%s1 + $0x40] sm:$0xff]
  %v69 = vld [vmem:[%s1 + $0x48] sm:$0xff]
  %v70 = vld [vmem:[%s1 + $0x50] sm:$0xff]
  %v71 = vld [vmem:[%s1 + $0x58] sm:$0xff]
  %v72 = vld [vmem:[%s1 + $0x60] sm:$0xff]
  %v73 = vld [vmem:[%s1 + $0x68] sm:$0xff]
  %v74 = vld [vmem:[%s1 + $0x70] sm:$0xff]
  %v75 = vld [vmem:[%s1 + $0x78] sm:$0xff]
  %v76 = vld [vmem:[%s1 + $0x80] sm:$0xff]
  %v77 = vld [vmem:[%s1 + $0x88] sm:$0xff]
  %v78 = vld [vmem:[%s1 + $0x90] sm:$0xff]
  %v79 = vld [vmem:[%s1 + $0x98] sm:$0xff]
  %v80 = vld [vmem:[%s1 + $0xa0] sm:$0xff]
  %v81 = vld [vmem:[%s1 + $0xa8] sm:$0xff]
  %v82 = vld [vmem:[%s1 + $0xb0] sm:$0xff]
  %v83 = vld [vmem:[%s1 + $0xb8] sm:$0xff]
  %v84 = vld [vmem:[%s1 + $0xc0] sm:$0xff]
  %v85 = vld [vmem:[%s1 + $0xc8] sm:$0xff]
  %v86 = vld [vmem:[%s1 + $0xd0] sm:$0xff]
  %v87 = vld [vmem:[%s1 + $0xd8] sm:$0xff]
  %v88 = vld [vmem:[%s1 + $0xe0] sm:$0xff]
  %v89 = vld [vmem:[%s1 + $0xe8] sm:$0xff]
  %v90 = vld [vmem:[%s1 + $0xf0] sm:$0xff]
  %v91 = vld [vmem:[%s1 + $0xf8] sm:$0xff]
  %v92 = vld [vmem:[%s1 + $0x100] sm:$0xff]
  %v93 = vld [vmem:[%s1 + $0x108] sm:$0xff]
  %v94 = vld [vmem:[%s1 + $0x110] sm:$0xff]
  %v95 = vld [vmem:[%s1 + $0x118] sm:$0xff]
  %v96 = vld [vmem:[%s1 + $0x120] sm:$0xff]
  %v97 = vld [vmem:[%s1 + $0x128] sm:$0xff]
  %v98 = vld [vmem:[%s1 + $0x130] sm:$0xff]
  %v99 = vld [vmem:[%s1 + $0x138] sm:$0xff]
  %v100 = vld [vmem:[%s3] sm:$0xff]
  %v101 = vld [vmem:[%s3 + $0x8] sm:$0xff]
  %v102 = vld [vmem:[%s3 + $0x10] sm:$0xff]
  %v103 = vld [vmem:[%s3 + $0x18] sm:$0xff]
  %v104 = vld [vmem:[%s3 + $0x20] sm:$0xff]
  %v105 = vld [vmem:[%s3 + $0x28] sm:$0xff]
  %v106 = vld [vmem:[%s3 + $0x30] sm:$0xff]
  %v107 = vld [vmem:[%s3 + $0x38] sm:$0xff]
  %v108 = vld [vmem:[%s3 + $0x40] sm:$0xff]
  %v109 = vld [vmem:[%s3 + $0x48] sm:$0xff]
  %v110 = vld [vmem:[%s3 + $0x50] sm:$0xff]
  %v111 = vld [vmem:[%s3 + $0x58] sm:$0xff]
  %v112 = vld [vmem:[%s3 + $0x60] sm:$0xff]
  %v113 = vld [vmem:[%s3 + $0x68] sm:$0xff]
  %v114 = vld [vmem:[%s3 + $0x70] sm:$0xff]
  %v115 = vld [vmem:[%s3 + $0x78] sm:$0xff]
  %v116 = vld [vmem:[%s3 + $0x80] sm:$0xff]
  %v117 = vld [vmem:[%s3 + $0x88] sm:$0xff]
  %v118 = vld [vmem:[%s3 + $0x90] sm:$0xff]
  %v119 = vld [vmem:[%s3 + $0x98] sm:$0xff]
  %v120 = vld [vmem:[%s3 + $0xa0] sm:$0xff]
  %v121 = vld [vmem:[%s3 + $0xa8] sm:$0xff]
  %v122 = vld [vmem:[%s3 + $0xb0] sm:$0xff]
  %v123 = vld [vmem:[%s3 + $0xb8] sm:$0xff]
  %v124 = vld [vmem:[%s3 + $0xc0] sm:$0xff]
  %v125 = vld [vmem:[%s3 + $0xc8] sm:$0xff]
  %v126 = vld [vmem:[%s3 + $0xd0] sm:$0xff]
  %v127 = vld [vmem:[%s3 + $0xd8] sm:$0xff]
  %v128 = vld [vmem:[%s3 + $0xe0] sm:$0xff]
  %v129 = vld [vmem:[%s3 + $0xe8] sm:$0xff]
  %v130 = vld [vmem:[%s3 + $0xf0] sm:$0xff]
  %v131 = vld [vmem:[%s3 + $0xf8] sm:$0xff]
  %v132 = vld [vmem:[%s3 + $0x100] sm:$0xff]
  %v133 = vld [vmem:[%s3 + $0x108] sm:$0xff]
  %v134 = vld [vmem:[%s3 + $0x110] sm:$0xff]
  %v135 = vld [vmem:[%s3 + $0x118] sm:$0xff]
  %v136 = vld [vmem:[%s3 + $0x120] sm:$0xff]
  %v137 = vld [vmem:[%s3 + $0x128] sm:$0xff]
  %v138 = vld [vmem:[%s3 + $0x130] sm:$0xff]
  %v139 = vld [vmem:[%s3 + $0x138] sm:$0xff]
  %v140 = vld [vmem:[%s3 + $0x140] sm:$0xff]
  %v141 = vld [vmem:[%s3 + $0x148] sm:$0xff]
  %v142 = vld [vmem:[%s3 + $0x150] sm:$0xff]
  %v143 = vld [vmem:[%s3 + $0x158] sm:$0xff]
  %v144 = vld [vmem:[%s3 + $0x160] sm:$0xff]
  %v145 = vld [vmem:[%s3 + $0x168] sm:$0xff]
  %v146 = vld [vmem:[%s3 + $0x170] sm:$0xff]
  %v147 = vld [vmem:[%s3 + $0x178] sm:$0xff]
  %v148 = vld [vmem:[%s3 + $0x180] sm:$0xff]
  %v149 = vld [vmem:[%s3 + $0x188] sm:$0xff]
  %v150 = vld [vmem:[%s3 + $0x190] sm:$0xff]
  %v151 = vld [vmem:[%s3 + $0x198] sm:$0xff]
  %v152 = vld [vmem:[%s3 + $0x1a0] sm:$0xff]
  %v153 = vld [vmem:[%s3 + $0x1a8] sm:$0xff]
  %v154 = vld [vmem:[%s3 + $0x1b0] sm:$0xff]
  %v155 = vld [vmem:[%s3 + $0x1b8] sm:$0xff]
  %v156 = vld [vmem:[%s3 + $0x1c0] sm:$0xff]
  %v157 = vld [vmem:[%s3 + $0x1c8] sm:$0xff]
  %v158 = vld [vmem:[%s3 + $0x1d0] sm:$0xff]
  %v159 = vld [vmem:[%s3 + $0x1d8] sm:$0xff]
  %v160 = vld [vmem:[%s3 + $0x1e0] sm:$0xff]
  %v161 = vld [vmem:[%s3 + $0x1e8] sm:$0xff]
  %v162 = vld [vmem:[%s3 + $0x1f0] sm:$0xff]
  %v163 = vld [vmem:[%s3 + $0x1f8] sm:$0xff]
  %v164 = vld [vmem:[%s3 + $0x200] sm:$0xff]
  %v165 = vld [vmem:[%s3 + $0x208] sm:$0xff]
  %v166 = vld [vmem:[%s3 + $0x210] sm:$0xff]
  %v167 = vld [vmem:[%s3 + $0x218] sm:$0xff]
  %v168 = vld [vmem:[%s3 + $0x220] sm:$0xff]
  %v169 = vld [vmem:[%s3 + $0x228] sm:$0xff]
  %v170 = vld [vmem:[%s3 + $0x230] sm:$0xff]
  %v171 = vld [vmem:[%s3 + $0x238] sm:$0xff]
  %v172 = vld [vmem:[%s3 + $0x240] sm:$0xff]
  %v173 = vld [vmem:[%s3 + $0x248] sm:$0xff]
  %v174 = vld [vmem:[%s3 + $0x250] sm:$0xff]
  %v175 = vld [vmem:[%s3 + $0x258] sm:$0xff]
  %v176 = vld [vmem:[%s3 + $0x260] sm:$0xff]
  %v177 = vld [vmem:[%s3 + $0x268] sm:$0xff]
  %v178 = vld [vmem:[%s3 + $0x270] sm:$0xff]
  %v179 = vld [vmem:[%s3 + $0x278] sm:$0xff]
  %v180 = vld [vmem:[%s3 + $0x280] sm:$0xff]
  %v181 = vld [vmem:[%s3 + $0x288] sm:$0xff]
  %v182 = vld [vmem:[%s3 + $0x290] sm:$0xff]
  %v183 = vld [vmem:[%s3 + $0x298] sm:$0xff]
  %v184 = vld [vmem:[%s3 + $0x2a0] sm:$0xff]
  %v185 = vld [vmem:[%s3 + $0x2a8] sm:$0xff]
  %v186 = vld [vmem:[%s3 + $0x2b0] sm:$0xff]
  %v187 = vld [vmem:[%s3 + $0x2b8] sm:$0xff]
  %v188 = vld [vmem:[%s3 + $0x2c0] sm:$0xff]
  %v189 = vld [vmem:[%s3 + $0x2c8] sm:$0xff]
  %v190 = vld [vmem:[%s3 + $0x2d0] sm:$0xff]
  %v191 = vld [vmem:[%s3 + $0x2d8] sm:$0xff]
  %v192 = vld [vmem:[%s3 + $0x2e0] sm:$0xff]
  %v193 = vld [vmem:[%s3 + $0x2e8] sm:$0xff]
  %v194 = vld [vmem:[%s3 + $0x2f0] sm:$0xff]
  %v195 = vld [vmem:[%s3 + $0x2f8] sm:$0xff]
  %v196 = vld [vmem:[%s3 + $0x300] sm:$0xff]
  %v197 = vld [vmem:[%s3 + $0x308] sm:$0xff]
  %v198 = vld [vmem:[%s3 + $0x310] sm:$0xff]
  %v199 = vld [vmem:[%s3 + $0x318] sm:$0xff]
  %v200 = vld [vmem:[%s3 + $0x320] sm:$0xff]
  %v201 = vld [vmem:[%s3 + $0x328] sm:$0xff]
  %v202 = vld [vmem:[%s3 + $0x330] sm:$0xff]
  %v203 = vld [vmem:[%s3 + $0x338] sm:$0xff]
  %v204 = vld [vmem:[%s3 + $0x340] sm:$0xff]
  %v205 = vld [vmem:[%s3 + $0x348] sm:$0xff]
  %v206 = vld [vmem:[%s3 + $0x350] sm:$0xff]
  %v207 = vld [vmem:[%s3 + $0x358] sm:$0xff]
  %v208 = vld [vmem:[%s3 + $0x360] sm:$0xff]
  %v209 = vld [vmem:[%s3 + $0x368] sm:$0xff]
  %v210 = vld [vmem:[%s3 + $0x370] sm:$0xff]
  %v211 = vld [vmem:[%s3 + $0x378] sm:$0xff]
  %v212 = vld [vmem:[%s3 + $0x380] sm:$0xff]
  %v213 = vld [vmem:[%s3 + $0x388] sm:$0xff]
  %v214 = vld [vmem:[%s3 + $0x390] sm:$0xff]
  %v215 = vld [vmem:[%s3 + $0x398] sm:$0xff]
  %v216 = vld [vmem:[%s3 + $0x3a0] sm:$0xff]
  %v217 = vld [vmem:[%s3 + $0x3a8] sm:$0xff]
  %v218 = vld [vmem:[%s3 + $0x3b0] sm:$0xff]
  %v219 = vld [vmem:[%s3 + $0x3b8] sm:$0xff]
  %v220 = vld [vmem:[%s3 + $0x3c0] sm:$0xff]
  %v221 = vld [vmem:[%s3 + $0x3c8] sm:$0xff]
  %v222 = vld [vmem:[%s3 + $0x3d0] sm:$0xff]
  %v223 = vld [vmem:[%s3 + $0x3d8] sm:$0xff]
  %v224 = vld [vmem:[%s3 + $0x3e0] sm:$0xff]
  %v225 = vld [vmem:[%s3 + $0x3e8] sm:$0xff]
  %v226 = vld [vmem:[%s3 + $0x3f0] sm:$0xff]
  %v227 = vld [vmem:[%s3 + $0x3f8] sm:$0xff]
  %v228 = vld [vmem:[%s3 + $0x400] sm:$0xff]
  %v229 = vld [vmem:[%s3 + $0x408] sm:$0xff]
  %v230 = vld [vmem:[%s3 + $0x410] sm:$0xff]
  %v231 = vld [vmem:[%s3 + $0x418] sm:$0xff]
  %v232 = vld [vmem:[%s3 + $0x420] sm:$0xff]
  %v233 = vld [vmem:[%s3 + $0x428] sm:$0xff]
  %v234 = vld [vmem:[%s3 + $0x430] sm:$0xff]
  %v235 = vld [vmem:[%s3 + $0x438] sm:$0xff]
  %v236 = vld [vmem:[%s3 + $0x440] sm:$0xff]
  %v237 = vld [vmem:[%s3 + $0x448] sm:$0xff]
  %v238 = vld [vmem:[%s3 + $0x450] sm:$0xff]
  %v239 = vld [vmem:[%s3 + $0x458] sm:$0xff]
  %v240 = vld [vmem:[%s3 + $0x460] sm:$0xff]
  %v241 = vld [vmem:[%s3 + $0x468] sm:$0xff]
  %v242 = vld [vmem:[%s3 + $0x470] sm:$0xff]
  %v243 = vld [vmem:[%s3 + $0x478] sm:$0xff]
  %v244 = vld [vmem:[%s3 + $0x480] sm:$0xff]
  %v245 = vld [vmem:[%s3 + $0x488] sm:$0xff]
  %v246 = vld [vmem:[%s3 + $0x490] sm:$0xff]
  %v247 = vld [vmem:[%s3 + $0x498] sm:$0xff]
  %v248 = vld [vmem:[%s3 + $0x4a0] sm:$0xff]
  %v249 = vld [vmem:[%s3 + $0x4a8] sm:$0xff]
  %v250 = vld [vmem:[%s3 + $0x4b0] sm:$0xff]
  %v251 = vld [vmem:[%s3 + $0x4b8] sm:$0xff]
  %v252 = vld [vmem:[%s3 + $0x4c0] sm:$0xff]
  %v253 = vld [vmem:[%s3 + $0x4c8] sm:$0xff]
  %v254 = vld [vmem:[%s3 + $0x4d0] sm:$0xff]
  %v255 = vld [vmem:[%s3 + $0x4d8] sm:$0xff]
  %v256 = vld [vmem:[%s3 + $0x4e0] sm:$0xff]
  %v257 = vld [vmem:[%s3 + $0x4e8] sm:$0xff]
  %v258 = vld [vmem:[%s3 + $0x4f0] sm:$0xff]
  %v259 = vld [vmem:[%s3 + $0x4f8] sm:$0xff]
  %v260 = vld [vmem:[%s5] sm:$0xff]
  %v261 = vld [vmem:[%s5 + $0x8] sm:$0xff]
  %v262 = vld [vmem:[%s5 + $0x10] sm:$0xff]
  %v263 = vld [vmem:[%s5 + $0x18] sm:$0xff]
  %v264 = vld [vmem:[%s5 + $0x20] sm:$0xff]
  %v265 = vld [vmem:[%s5 + $0x28] sm:$0xff]
  %v266 = vld [vmem:[%s5 + $0x30] sm:$0xff]
  %v267 = vld [vmem:[%s5 + $0x38] sm:$0xff]
  %v268 = vld [vmem:[%s5 + $0x40] sm:$0xff]
  %v269 = vld [vmem:[%s5 + $0x48] sm:$0xff]
  %v270 = vld [vmem:[%s5 + $0x50] sm:$0xff]
  %v271 = vld [vmem:[%s5 + $0x58] sm:$0xff]
  %v272 = vld [vmem:[%s5 + $0x60] sm:$0xff]
  %v273 = vld [vmem:[%s5 + $0x68] sm:$0xff]
  %v274 = vld [vmem:[%s5 + $0x70] sm:$0xff]
  %v275 = vld [vmem:[%s5 + $0x78] sm:$0xff]
  %v276 = vld [vmem:[%s5 + $0x80] sm:$0xff]
  %v277 = vld [vmem:[%s5 + $0x88] sm:$0xff]
  %v278 = vld [vmem:[%s5 + $0x90] sm:$0xff]
  %v279 = vld [vmem:[%s5 + $0x98] sm:$0xff]
  %v280 = vld [vmem:[%s5 + $0xa0] sm:$0xff]
  %v281 = vld [vmem:[%s5 + $0xa8] sm:$0xff]
  %v282 = vld [vmem:[%s5 + $0xb0] sm:$0xff]
  %v283 = vld [vmem:[%s5 + $0xb8] sm:$0xff]
  %v284 = vld [vmem:[%s5 + $0xc0] sm:$0xff]
  %v285 = vld [vmem:[%s5 + $0xc8] sm:$0xff]
  %v286 = vld [vmem:[%s5 + $0xd0] sm:$0xff]
  %v287 = vld [vmem:[%s5 + $0xd8] sm:$0xff]
  %v288 = vld [vmem:[%s5 + $0xe0] sm:$0xff]
  %v289 = vld [vmem:[%s5 + $0xe8] sm:$0xff]
  %v290 = vld [vmem:[%s5 + $0xf0] sm:$0xff]
  %v291 = vld [vmem:[%s5 + $0xf8] sm:$0xff]
  %v292 = vld [vmem:[%s5 + $0x100] sm:$0xff]
  %v293 = vld [vmem:[%s5 + $0x108] sm:$0xff]
  %v294 = vld [vmem:[%s5 + $0x110] sm:$0xff]
  %v295 = vld [vmem:[%s5 + $0x118] sm:$0xff]
  %v296 = vld [vmem:[%s5 + $0x120] sm:$0xff]
  %v297 = vld [vmem:[%s5 + $0x128] sm:$0xff]
  %v298 = vld [vmem:[%s5 + $0x130] sm:$0xff]
  %v299 = vld [vmem:[%s5 + $0x138] sm:$0xff]
  %v300 = vld [vmem:[%s5 + $0x140] sm:$0xff]
  %v301 = vld [vmem:[%s5 + $0x148] sm:$0xff]
  %v302 = vld [vmem:[%s5 + $0x150] sm:$0xff]
  %v303 = vld [vmem:[%s5 + $0x158] sm:$0xff]
  %v304 = vld [vmem:[%s5 + $0x160] sm:$0xff]
  %v305 = vld [vmem:[%s5 + $0x168] sm:$0xff]
  %v306 = vld [vmem:[%s5 + $0x170] sm:$0xff]
  %v307 = vld [vmem:[%s5 + $0x178] sm:$0xff]
  %v308 = vld [vmem:[%s5 + $0x180] sm:$0xff]
  %v309 = vld [vmem:[%s5 + $0x188] sm:$0xff]
  %v310 = vld [vmem:[%s5 + $0x190] sm:$0xff]
  %v311 = vld [vmem:[%s5 + $0x198] sm:$0xff]
  %v312 = vld [vmem:[%s5 + $0x1a0] sm:$0xff]
  %v313 = vld [vmem:[%s5 + $0x1a8] sm:$0xff]
  %v314 = vld [vmem:[%s5 + $0x1b0] sm:$0xff]
  %v315 = vld [vmem:[%s5 + $0x1b8] sm:$0xff]
  %v316 = vld [vmem:[%s5 + $0x1c0] sm:$0xff]
  %v317 = vld [vmem:[%s5 + $0x1c8] sm:$0xff]
  %v318 = vld [vmem:[%s5 + $0x1d0] sm:$0xff]
  %v319 = vld [vmem:[%s5 + $0x1d8] sm:$0xff]
  %v320 = vld [vmem:[%s5 + $0x1e0] sm:$0xff]
  %v321 = vld [vmem:[%s5 + $0x1e8] sm:$0xff]
  %v322 = vld [vmem:[%s5 + $0x1f0] sm:$0xff]
  %v323 = vld [vmem:[%s5 + $0x1f8] sm:$0xff]
  %vm324 = vcmask 261120
  %v326 = vsel %vm324, %v39, 0
  %v329 = vsel %vm324, %v40, 0
  %v332 = vsel %vm324, %v41, 0
  %v335 = vsel %vm324, %v42, 0
  %v338 = vsel %vm324, %v43, 0
  %v341 = vsel %vm324, %v44, 0
  %343 = vmatprep.subr.mxu0 0.0
  %344 = vmatpush1.msra.mxu0 0.0
  %345 = vmatprep.subr.mxu0 0.0
  %346 = vmatpush1.msra.mxu0 0.0
  %347 = vmatprep.subr.mxu0 0.0
  %348 = vmatpush1.msra.mxu0 0.0
  %349 = vmatprep.subr.mxu0 0.0
  %350 = vmatpush1.msra.mxu0 0.0
  %351 = vmatprep.subr.mxu0 0.0
  %352 = vmatpush1.msra.mxu0 0.0
  %353 = vmatprep.subr.mxu0 0.0
  %354 = vmatpush1.msra.mxu0 0.0
  %355 = vmatprep.subr.mxu0 0.0
  %356 = vmatpush1.msra.mxu0 0.0
  %357 = vmatprep.subr.mxu0 0.0
  %358 = vmatpush1.msra.mxu0 0.0
  %359 = vmatprep.subr.mxu0 0.0
  %360 = vmatpush1.msra.mxu0 0.0
  %361 = vmatprep.subr.mxu0 0.0
  %362 = vmatpush1.msra.mxu0 0.0
  %363 = vmatprep.subr.mxu0 0.0
  %364 = vmatpush1.msra.mxu0 0.0
  %365 = vmatprep.subr.mxu0 0.0
  %366 = vmatpush1.msra.mxu0 0.0
  %367 = vmatprep.subr.mxu0 0.0
  %368 = vmatpush1.msra.mxu0 %v71
  %369 = vmatprep.subr.mxu0 0.0
  %370 = vmatpush1.msra.mxu0 %v70
  %371 = vmatprep.subr.mxu0 0.0
  %372 = vmatpush1.msra.mxu0 %v69
  %373 = vmatprep.subr.mxu0 0.0
  %374 = vmatpush1.msra.mxu0 %v68
  %375 = vmatprep.subr.mxu0 0.0
  %376 = vmatpush2.msra.mxu0 0.0
  %377 = vmatprep.subr.mxu0 0.0
  %378 = vmatpush2.msra.mxu0 0.0
  %379 = vmatprep.subr.mxu0 0.0
  %380 = vmatpush2.msra.mxu0 0.0
  %381 = vmatprep.subr.mxu0 0.0
  %382 = vmatpush2.msra.mxu0 0.0
  %383 = vmatprep.subr.mxu0 0.0
  %384 = vmatpush2.msra.mxu0 0.0
  %385 = vmatprep.subr.mxu0 0.0
  %386 = vmatpush2.msra.mxu0 0.0
  %387 = vmatprep.subr.mxu0 0.0
  %388 = vmatpush2.msra.mxu0 0.0
  %389 = vmatprep.subr.mxu0 0.0
  %390 = vmatpush2.msra.mxu0 0.0
  %391 = vmatprep.subr.mxu0 0.0
  %392 = vmatpush2.msra.mxu0 0.0
  %393 = vmatprep.subr.mxu0 0.0
  %394 = vmatpush2.msra.mxu0 0.0
  %395 = vmatprep.subr.mxu0 0.0
  %396 = vmatpush2.msra.mxu0 0.0
  %397 = vmatprep.subr.mxu0 0.0
  %398 = vmatpush2.msra.mxu0 0.0
  %399 = vmatprep.subr.mxu0 0.0
  %400 = vmatpush2.msra.mxu0 0.0
  %401 = vmatprep.subr.mxu0 0.0
  %402 = vmatpush2.msra.mxu0 0.0
  %403 = vmatprep.subr.mxu0 0.0
  %404 = vmatpush2.msra.mxu0 0.0
  %405 = vmatprep.subr.mxu0 0.0
  %406 = vmatpush2.msra.mxu0 0.0
  %407 = vmatprep.mubr.f32.mxu0 0.0
  %408 = vmatmul.mubr.f32.gmra.mxu0 %v326
  %v409 = vpop.f32.mrf.mxu0
  %v410 = vadd.f32 0.0, %v409
  %v411 = vpop.f32.mrf.mxu0
  %412 = vmatprep.mubr.f32.mxu0 0.0
  %413 = vmatmul.mubr.f32.gmra.mxu0 %v329
  %v414 = vpop.f32.mrf.mxu0
  %v415 = vadd.f32 0.0, %v414
  %v416 = vpop.f32.mrf.mxu0
  %417 = vmatprep.mubr.f32.mxu0 0.0
  %418 = vmatmul.mubr.f32.gmra.mxu0 %v332
  %v419 = vpop.f32.mrf.mxu0
  %v420 = vadd.f32 0.0, %v419
  %v421 = vpop.f32.mrf.mxu0
  %422 = vmatprep.mubr.f32.mxu0 0.0
  %423 = vmatmul.mubr.f32.gmra.mxu0 %v335
  %v424 = vpop.f32.mrf.mxu0
  %v425 = vadd.f32 0.0, %v424
  %v426 = vpop.f32.mrf.mxu0
  %427 = vmatprep.mubr.f32.mxu0 0.0
  %428 = vmatmul.mubr.f32.gmra.mxu0 %v338
  %v429 = vpop.f32.mrf.mxu0
  %v430 = vadd.f32 0.0, %v429
  %v431 = vpop.f32.mrf.mxu0
  %432 = vmatprep.mubr.f32.mxu0 0.0
  %433 = vmatmul.mubr.f32.gmra.mxu0 %v341
  %v434 = vpop.f32.mrf.mxu0
  %v435 = vadd.f32 0.0, %v434
  %v436 = vpop.f32.mrf.mxu0
  %437 = vdwg.mxu0
  %v439 = vsel %vm324, %v32, 0
  %v442 = vsel %vm324, %v33, 0
  %v445 = vsel %vm324, %v34, 0
  %v448 = vsel %vm324, %v35, 0
  %v451 = vsel %vm324, %v36, 0
  %v454 = vsel %vm324, %v37, 0
  %456 = vmatprep.subr.mxu0 0.0
  %457 = vmatpush1.msra.mxu0 0.0
  %458 = vmatprep.subr.mxu0 0.0
  %459 = vmatpush1.msra.mxu0 0.0
  %460 = vmatprep.subr.mxu0 0.0
  %461 = vmatpush1.msra.mxu0 0.0
  %462 = vmatprep.subr.mxu0 0.0
  %463 = vmatpush1.msra.mxu0 0.0
  %464 = vmatprep.subr.mxu0 0.0
  %465 = vmatpush1.msra.mxu0 0.0
  %466 = vmatprep.subr.mxu0 0.0
  %467 = vmatpush1.msra.mxu0 0.0
  %468 = vmatprep.subr.mxu0 0.0
  %469 = vmatpush1.msra.mxu0 0.0
  %470 = vmatprep.subr.mxu0 0.0
  %471 = vmatpush1.msra.mxu0 0.0
  %472 = vmatprep.subr.mxu0 0.0
  %473 = vmatpush1.msra.mxu0 0.0
  %474 = vmatprep.subr.mxu0 0.0
  %475 = vmatpush1.msra.mxu0 0.0
  %476 = vmatprep.subr.mxu0 0.0
  %477 = vmatpush1.msra.mxu0 0.0
  %478 = vmatprep.subr.mxu0 0.0
  %479 = vmatpush1.msra.mxu0 0.0
  %480 = vmatprep.subr.mxu0 0.0
  %481 = vmatpush1.msra.mxu0 %v63
  %482 = vmatprep.subr.mxu0 0.0
  %483 = vmatpush1.msra.mxu0 %v62
  %484 = vmatprep.subr.mxu0 0.0
  %485 = vmatpush1.msra.mxu0 %v61
  %486 = vmatprep.subr.mxu0 0.0
  %487 = vmatpush1.msra.mxu0 %v60
  %488 = vmatprep.subr.mxu0 0.0
  %489 = vmatpush2.msra.mxu0 0.0
  %490 = vmatprep.subr.mxu0 0.0
  %491 = vmatpush2.msra.mxu0 0.0
  %492 = vmatprep.subr.mxu0 0.0
  %493 = vmatpush2.msra.mxu0 0.0
  %494 = vmatprep.subr.mxu0 0.0
  %495 = vmatpush2.msra.mxu0 0.0
  %496 = vmatprep.subr.mxu0 0.0
  %497 = vmatpush2.msra.mxu0 0.0
  %498 = vmatprep.subr.mxu0 0.0
  %499 = vmatpush2.msra.mxu0 0.0
  %500 = vmatprep.subr.mxu0 0.0
  %501 = vmatpush2.msra.mxu0 0.0
  %502 = vmatprep.subr.mxu0 0.0
  %503 = vmatpush2.msra.mxu0 0.0
  %504 = vmatprep.subr.mxu0 0.0
  %505 = vmatpush2.msra.mxu0 0.0
  %506 = vmatprep.subr.mxu0 0.0
  %507 = vmatpush2.msra.mxu0 0.0
  %508 = vmatprep.subr.mxu0 0.0
  %509 = vmatpush2.msra.mxu0 0.0
  %510 = vmatprep.subr.mxu0 0.0
  %511 = vmatpush2.msra.mxu0 0.0
  %512 = vmatprep.subr.mxu0 0.0
  %513 = vmatpush2.msra.mxu0 0.0
  %514 = vmatprep.subr.mxu0 0.0
  %515 = vmatpush2.msra.mxu0 0.0
  %516 = vmatprep.subr.mxu0 0.0
  %517 = vmatpush2.msra.mxu0 0.0
  %518 = vmatprep.subr.mxu0 0.0
  %519 = vmatpush2.msra.mxu0 0.0
  %520 = vmatprep.mubr.f32.mxu0 0.0
  %521 = vmatmul.mubr.f32.gmra.mxu0 %v439
  %v522 = vpop.f32.mrf.mxu0
  %v523 = vadd.f32 %v410, %v522
  %v524 = vpop.f32.mrf.mxu0
  %525 = vmatprep.mubr.f32.mxu0 0.0
  %526 = vmatmul.mubr.f32.gmra.mxu0 %v442
  %v527 = vpop.f32.mrf.mxu0
  %v528 = vadd.f32 %v415, %v527
  %v529 = vpop.f32.mrf.mxu0
  %530 = vmatprep.mubr.f32.mxu0 0.0
  %531 = vmatmul.mubr.f32.gmra.mxu0 %v445
  %v532 = vpop.f32.mrf.mxu0
  %v533 = vadd.f32 %v420, %v532
  %v534 = vpop.f32.mrf.mxu0
  %535 = vmatprep.mubr.f32.mxu0 0.0
  %536 = vmatmul.mubr.f32.gmra.mxu0 %v448
  %v537 = vpop.f32.mrf.mxu0
  %v538 = vadd.f32 %v425, %v537
  %v539 = vpop.f32.mrf.mxu0
  %540 = vmatprep.mubr.f32.mxu0 0.0
  %541 = vmatmul.mubr.f32.gmra.mxu0 %v451
  %v542 = vpop.f32.mrf.mxu0
  %v543 = vadd.f32 %v430, %v542
  %v544 = vpop.f32.mrf.mxu0
  %545 = vmatprep.mubr.f32.mxu0 0.0
  %546 = vmatmul.mubr.f32.gmra.mxu0 %v454
  %v547 = vpop.f32.mrf.mxu0
  %v548 = vadd.f32 %v435, %v547
  %v549 = vpop.f32.mrf.mxu0
  %550 = vdwg.mxu0
  %v552 = vsel %vm324, %v46, 0
  %v555 = vsel %vm324, %v47, 0
  %v558 = vsel %vm324, %v48, 0
  %v561 = vsel %vm324, %v49, 0
  %v564 = vsel %vm324, %v50, 0
  %v567 = vsel %vm324, %v51, 0
  %569 = vmatprep.subr.mxu0 0.0
  %570 = vmatpush1.msra.mxu0 0.0
  %571 = vmatprep.subr.mxu0 0.0
  %572 = vmatpush1.msra.mxu0 0.0
  %573 = vmatprep.subr.mxu0 0.0
  %574 = vmatpush1.msra.mxu0 0.0
  %575 = vmatprep.subr.mxu0 0.0
  %576 = vmatpush1.msra.mxu0 0.0
  %577 = vmatprep.subr.mxu0 0.0
  %578 = vmatpush1.msra.mxu0 0.0
  %579 = vmatprep.subr.mxu0 0.0
  %580 = vmatpush1.msra.mxu0 0.0
  %581 = vmatprep.subr.mxu0 0.0
  %582 = vmatpush1.msra.mxu0 0.0
  %583 = vmatprep.subr.mxu0 0.0
  %584 = vmatpush1.msra.mxu0 0.0
  %585 = vmatprep.subr.mxu0 0.0
  %586 = vmatpush1.msra.mxu0 0.0
  %587 = vmatprep.subr.mxu0 0.0
  %588 = vmatpush1.msra.mxu0 0.0
  %589 = vmatprep.subr.mxu0 0.0
  %590 = vmatpush1.msra.mxu0 0.0
  %591 = vmatprep.subr.mxu0 0.0
  %592 = vmatpush1.msra.mxu0 0.0
  %593 = vmatprep.subr.mxu0 0.0
  %594 = vmatpush1.msra.mxu0 %v79
  %595 = vmatprep.subr.mxu0 0.0
  %596 = vmatpush1.msra.mxu0 %v78
  %597 = vmatprep.subr.mxu0 0.0
  %598 = vmatpush1.msra.mxu0 %v77
  %599 = vmatprep.subr.mxu0 0.0
  %600 = vmatpush1.msra.mxu0 %v76
  %601 = vmatprep.subr.mxu0 0.0
  %602 = vmatpush2.msra.mxu0 0.0
  %603 = vmatprep.subr.mxu0 0.0
  %604 = vmatpush2.msra.mxu0 0.0
  %605 = vmatprep.subr.mxu0 0.0
  %606 = vmatpush2.msra.mxu0 0.0
  %607 = vmatprep.subr.mxu0 0.0
  %608 = vmatpush2.msra.mxu0 0.0
  %609 = vmatprep.subr.mxu0 0.0
  %610 = vmatpush2.msra.mxu0 0.0
  %611 = vmatprep.subr.mxu0 0.0
  %612 = vmatpush2.msra.mxu0 0.0
  %613 = vmatprep.subr.mxu0 0.0
  %614 = vmatpush2.msra.mxu0 0.0
  %615 = vmatprep.subr.mxu0 0.0
  %616 = vmatpush2.msra.mxu0 0.0
  %617 = vmatprep.subr.mxu0 0.0
  %618 = vmatpush2.msra.mxu0 0.0
  %619 = vmatprep.subr.mxu0 0.0
  %620 = vmatpush2.msra.mxu0 0.0
  %621 = vmatprep.subr.mxu0 0.0
  %622 = vmatpush2.msra.mxu0 0.0
  %623 = vmatprep.subr.mxu0 0.0
  %624 = vmatpush2.msra.mxu0 0.0
  %625 = vmatprep.subr.mxu0 0.0
  %626 = vmatpush2.msra.mxu0 0.0
  %627 = vmatprep.subr.mxu0 0.0
  %628 = vmatpush2.msra.mxu0 0.0
  %629 = vmatprep.subr.mxu0 0.0
  %630 = vmatpush2.msra.mxu0 0.0
  %631 = vmatprep.subr.mxu0 0.0
  %632 = vmatpush2.msra.mxu0 0.0
  %633 = vmatprep.mubr.f32.mxu0 0.0
  %634 = vmatmul.mubr.f32.gmra.mxu0 %v552
  %v635 = vpop.f32.mrf.mxu0
  %v636 = vadd.f32 0.0, %v635
  %v637 = vpop.f32.mrf.mxu0
  %638 = vmatprep.mubr.f32.mxu0 0.0
  %639 = vmatmul.mubr.f32.gmra.mxu0 %v555
  %v640 = vpop.f32.mrf.mxu0
  %v641 = vadd.f32 0.0, %v640
  %v642 = vpop.f32.mrf.mxu0
  %643 = vmatprep.mubr.f32.mxu0 0.0
  %644 = vmatmul.mubr.f32.gmra.mxu0 %v558
  %v645 = vpop.f32.mrf.mxu0
  %v646 = vadd.f32 0.0, %v645
  %v647 = vpop.f32.mrf.mxu0
  %648 = vmatprep.mubr.f32.mxu0 0.0
  %649 = vmatmul.mubr.f32.gmra.mxu0 %v561
  %v650 = vpop.f32.mrf.mxu0
  %v651 = vadd.f32 0.0, %v650
  %v652 = vpop.f32.mrf.mxu0
  %653 = vmatprep.mubr.f32.mxu0 0.0
  %654 = vmatmul.mubr.f32.gmra.mxu0 %v564
  %v655 = vpop.f32.mrf.mxu0
  %v656 = vadd.f32 0.0, %v655
  %v657 = vpop.f32.mrf.mxu0
  %658 = vmatprep.mubr.f32.mxu0 0.0
  %659 = vmatmul.mubr.f32.gmra.mxu0 %v567
  %v660 = vpop.f32.mrf.mxu0
  %v661 = vadd.f32 0.0, %v660
  %v662 = vpop.f32.mrf.mxu0
  %663 = vdwg.mxu0
  %v664 = vadd.f32 %v523, %v636
  %v665 = vadd.f32 %v528, %v641
  %v666 = vadd.f32 %v533, %v646
  %v667 = vadd.f32 %v538, %v651
  %v668 = vadd.f32 %v543, %v656
  %v669 = vadd.f32 %v548, %v661
  %v671 = vsel %vm324, %v53, 0
  %v674 = vsel %vm324, %v54, 0
  %v677 = vsel %vm324, %v55, 0
  %v680 = vsel %vm324, %v56, 0
  %v683 = vsel %vm324, %v57, 0
  %v686 = vsel %vm324, %v58, 0
  %688 = vmatprep.subr.mxu0 0.0
  %689 = vmatpush1.msra.mxu0 0.0
  %690 = vmatprep.subr.mxu0 0.0
  %691 = vmatpush1.msra.mxu0 0.0
  %692 = vmatprep.subr.mxu0 0.0
  %693 = vmatpush1.msra.mxu0 0.0
  %694 = vmatprep.subr.mxu0 0.0
  %695 = vmatpush1.msra.mxu0 0.0
  %696 = vmatprep.subr.mxu0 0.0
  %697 = vmatpush1.msra.mxu0 0.0
  %698 = vmatprep.subr.mxu0 0.0
  %699 = vmatpush1.msra.mxu0 0.0
  %700 = vmatprep.subr.mxu0 0.0
  %701 = vmatpush1.msra.mxu0 0.0
  %702 = vmatprep.subr.mxu0 0.0
  %703 = vmatpush1.msra.mxu0 0.0
  %704 = vmatprep.subr.mxu0 0.0
  %705 = vmatpush1.msra.mxu0 0.0
  %706 = vmatprep.subr.mxu0 0.0
  %707 = vmatpush1.msra.mxu0 0.0
  %708 = vmatprep.subr.mxu0 0.0
  %709 = vmatpush1.msra.mxu0 0.0
  %710 = vmatprep.subr.mxu0 0.0
  %711 = vmatpush1.msra.mxu0 0.0
  %712 = vmatprep.subr.mxu0 0.0
  %713 = vmatpush1.msra.mxu0 %v87
  %714 = vmatprep.subr.mxu0 0.0
  %715 = vmatpush1.msra.mxu0 %v86
  %716 = vmatprep.subr.mxu0 0.0
  %717 = vmatpush1.msra.mxu0 %v85
  %718 = vmatprep.subr.mxu0 0.0
  %719 = vmatpush1.msra.mxu0 %v84
  %720 = vmatprep.subr.mxu0 0.0
  %721 = vmatpush2.msra.mxu0 0.0
  %722 = vmatprep.subr.mxu0 0.0
  %723 = vmatpush2.msra.mxu0 0.0
  %724 = vmatprep.subr.mxu0 0.0
  %725 = vmatpush2.msra.mxu0 0.0
  %726 = vmatprep.subr.mxu0 0.0
  %727 = vmatpush2.msra.mxu0 0.0
  %728 = vmatprep.subr.mxu0 0.0
  %729 = vmatpush2.msra.mxu0 0.0
  %730 = vmatprep.subr.mxu0 0.0
  %731 = vmatpush2.msra.mxu0 0.0
  %732 = vmatprep.subr.mxu0 0.0
  %733 = vmatpush2.msra.mxu0 0.0
  %734 = vmatprep.subr.mxu0 0.0
  %735 = vmatpush2.msra.mxu0 0.0
  %736 = vmatprep.subr.mxu0 0.0
  %737 = vmatpush2.msra.mxu0 0.0
  %738 = vmatprep.subr.mxu0 0.0
  %739 = vmatpush2.msra.mxu0 0.0
  %740 = vmatprep.subr.mxu0 0.0
  %741 = vmatpush2.msra.mxu0 0.0
  %742 = vmatprep.subr.mxu0 0.0
  %743 = vmatpush2.msra.mxu0 0.0
  %744 = vmatprep.subr.mxu0 0.0
  %745 = vmatpush2.msra.mxu0 0.0
  %746 = vmatprep.subr.mxu0 0.0
  %747 = vmatpush2.msra.mxu0 0.0
  %748 = vmatprep.subr.mxu0 0.0
  %749 = vmatpush2.msra.mxu0 0.0
  %750 = vmatprep.subr.mxu0 0.0
  %751 = vmatpush2.msra.mxu0 0.0
  %752 = vmatprep.mubr.f32.mxu0 0.0
  %753 = vmatmul.mubr.f32.gmra.mxu0 %v671
  %v754 = vpop.f32.mrf.mxu0
  %v755 = vadd.f32 0.0, %v754
  %v756 = vpop.f32.mrf.mxu0
  %757 = vmatprep.mubr.f32.mxu0 0.0
  %758 = vmatmul.mubr.f32.gmra.mxu0 %v674
  %v759 = vpop.f32.mrf.mxu0
  %v760 = vadd.f32 0.0, %v759
  %v761 = vpop.f32.mrf.mxu0
  %762 = vmatprep.mubr.f32.mxu0 0.0
  %763 = vmatmul.mubr.f32.gmra.mxu0 %v677
  %v764 = vpop.f32.mrf.mxu0
  %v765 = vadd.f32 0.0, %v764
  %v766 = vpop.f32.mrf.mxu0
  %767 = vmatprep.mubr.f32.mxu0 0.0
  %768 = vmatmul.mubr.f32.gmra.mxu0 %v680
  %v769 = vpop.f32.mrf.mxu0
  %v770 = vadd.f32 0.0, %v769
  %v771 = vpop.f32.mrf.mxu0
  %772 = vmatprep.mubr.f32.mxu0 0.0
  %773 = vmatmul.mubr.f32.gmra.mxu0 %v683
  %v774 = vpop.f32.mrf.mxu0
  %v775 = vadd.f32 0.0, %v774
  %v776 = vpop.f32.mrf.mxu0
  %777 = vmatprep.mubr.f32.mxu0 0.0
  %778 = vmatmul.mubr.f32.gmra.mxu0 %v686
  %v779 = vpop.f32.mrf.mxu0
  %v780 = vadd.f32 0.0, %v779
  %v781 = vpop.f32.mrf.mxu0
  %782 = vdwg.mxu0
  %v783 = vadd.f32 %v664, %v755
  %v784 = vadd.f32 %v665, %v760
  %v785 = vadd.f32 %v666, %v765
  %v786 = vadd.f32 %v667, %v770
  %v787 = vadd.f32 %v668, %v775
  %v788 = vadd.f32 %v669, %v780
  %v790 = vsel %vm324, %v38, 0
  %792 = vmatprep.subr.mxu0 0.0
  %793 = vmatpush1.msra.mxu0 0.0
  %794 = vmatprep.subr.mxu0 0.0
  %795 = vmatpush1.msra.mxu0 0.0
  %796 = vmatprep.subr.mxu0 0.0
  %797 = vmatpush1.msra.mxu0 0.0
  %798 = vmatprep.subr.mxu0 0.0
  %799 = vmatpush1.msra.mxu0 0.0
  %800 = vmatprep.subr.mxu0 0.0
  %801 = vmatpush1.msra.mxu0 0.0
  %802 = vmatprep.subr.mxu0 0.0
  %803 = vmatpush1.msra.mxu0 0.0
  %804 = vmatprep.subr.mxu0 0.0
  %805 = vmatpush1.msra.mxu0 0.0
  %806 = vmatprep.subr.mxu0 0.0
  %807 = vmatpush1.msra.mxu0 0.0
  %808 = vmatprep.subr.mxu0 0.0
  %809 = vmatpush1.msra.mxu0 0.0
  %810 = vmatprep.subr.mxu0 0.0
  %811 = vmatpush1.msra.mxu0 0.0
  %812 = vmatprep.subr.mxu0 0.0
  %813 = vmatpush1.msra.mxu0 0.0
  %814 = vmatprep.subr.mxu0 0.0
  %815 = vmatpush1.msra.mxu0 0.0
  %816 = vmatprep.subr.mxu0 0.0
  %817 = vmatpush1.msra.mxu0 %v95
  %818 = vmatprep.subr.mxu0 0.0
  %819 = vmatpush1.msra.mxu0 %v94
  %820 = vmatprep.subr.mxu0 0.0
  %821 = vmatpush1.msra.mxu0 %v93
  %822 = vmatprep.subr.mxu0 0.0
  %823 = vmatpush1.msra.mxu0 %v92
  %824 = vmatprep.subr.mxu0 0.0
  %825 = vmatpush2.msra.mxu0 0.0
  %826 = vmatprep.subr.mxu0 0.0
  %827 = vmatpush2.msra.mxu0 0.0
  %828 = vmatprep.subr.mxu0 0.0
  %829 = vmatpush2.msra.mxu0 0.0
  %830 = vmatprep.subr.mxu0 0.0
  %831 = vmatpush2.msra.mxu0 0.0
  %832 = vmatprep.subr.mxu0 0.0
  %833 = vmatpush2.msra.mxu0 0.0
  %834 = vmatprep.subr.mxu0 0.0
  %835 = vmatpush2.msra.mxu0 0.0
  %836 = vmatprep.subr.mxu0 0.0
  %837 = vmatpush2.msra.mxu0 0.0
  %838 = vmatprep.subr.mxu0 0.0
  %839 = vmatpush2.msra.mxu0 0.0
  %840 = vmatprep.subr.mxu0 0.0
  %841 = vmatpush2.msra.mxu0 0.0
  %842 = vmatprep.subr.mxu0 0.0
  %843 = vmatpush2.msra.mxu0 0.0
  %844 = vmatprep.subr.mxu0 0.0
  %845 = vmatpush2.msra.mxu0 0.0
  %846 = vmatprep.subr.mxu0 0.0
  %847 = vmatpush2.msra.mxu0 0.0
  %848 = vmatprep.subr.mxu0 0.0
  %849 = vmatpush2.msra.mxu0 0.0
  %850 = vmatprep.subr.mxu0 0.0
  %851 = vmatpush2.msra.mxu0 0.0
  %852 = vmatprep.subr.mxu0 0.0
  %853 = vmatpush2.msra.mxu0 0.0
  %854 = vmatprep.subr.mxu0 0.0
  %855 = vmatpush2.msra.mxu0 0.0
  %856 = vmatprep.mubr.f32.mxu0 0.0
  %857 = vmatmul.mubr.f32.gmra.mxu0 %v442
  %v858 = vpop.f32.mrf.mxu0
  %v859 = vadd.f32 0.0, %v858
  %v860 = vpop.f32.mrf.mxu0
  %861 = vmatprep.mubr.f32.mxu0 0.0
  %862 = vmatmul.mubr.f32.gmra.mxu0 %v445
  %v863 = vpop.f32.mrf.mxu0
  %v864 = vadd.f32 0.0, %v863
  %v865 = vpop.f32.mrf.mxu0
  %866 = vmatprep.mubr.f32.mxu0 0.0
  %867 = vmatmul.mubr.f32.gmra.mxu0 %v448
  %v868 = vpop.f32.mrf.mxu0
  %v869 = vadd.f32 0.0, %v868
  %v870 = vpop.f32.mrf.mxu0
  %871 = vmatprep.mubr.f32.mxu0 0.0
  %872 = vmatmul.mubr.f32.gmra.mxu0 %v451
  %v873 = vpop.f32.mrf.mxu0
  %v874 = vadd.f32 0.0, %v873
  %v875 = vpop.f32.mrf.mxu0
  %876 = vmatprep.mubr.f32.mxu0 0.0
  %877 = vmatmul.mubr.f32.gmra.mxu0 %v454
  %v878 = vpop.f32.mrf.mxu0
  %v879 = vadd.f32 0.0, %v878
  %v880 = vpop.f32.mrf.mxu0
  %881 = vmatprep.mubr.f32.mxu0 0.0
  %882 = vmatmul.mubr.f32.gmra.mxu0 %v790
  %v883 = vpop.f32.mrf.mxu0
  %v884 = vadd.f32 0.0, %v883
  %v885 = vpop.f32.mrf.mxu0
  %886 = vdwg.mxu0
  %v887 = vadd.f32 %v783, %v859
  %v888 = vadd.f32 %v784, %v864
  %v889 = vadd.f32 %v785, %v869
  %v890 = vadd.f32 %v786, %v874
  %v891 = vadd.f32 %v787, %v879
  %v892 = vadd.f32 %v788, %v884
  %893 = vmatprep.subr.mxu0 0.0
  %894 = vmatpush1.msra.mxu0 0.0
  %895 = vmatprep.subr.mxu0 0.0
  %896 = vmatpush1.msra.mxu0 0.0
  %897 = vmatprep.subr.mxu0 0.0
  %898 = vmatpush1.msra.mxu0 0.0
  %899 = vmatprep.subr.mxu0 0.0
  %900 = vmatpush1.msra.mxu0 0.0
  %901 = vmatprep.subr.mxu0 0.0
  %902 = vmatpush1.msra.mxu0 0.0
  %903 = vmatprep.subr.mxu0 0.0
  %904 = vmatpush1.msra.mxu0 0.0
  %905 = vmatprep.subr.mxu0 0.0
  %906 = vmatpush1.msra.mxu0 0.0
  %907 = vmatprep.subr.mxu0 0.0
  %908 = vmatpush1.msra.mxu0 0.0
  %909 = vmatprep.subr.mxu0 0.0
  %910 = vmatpush1.msra.mxu0 0.0
  %911 = vmatprep.subr.mxu0 0.0
  %912 = vmatpush1.msra.mxu0 0.0
  %913 = vmatprep.subr.mxu0 0.0
  %914 = vmatpush1.msra.mxu0 0.0
  %915 = vmatprep.subr.mxu0 0.0
  %916 = vmatpush1.msra.mxu0 0.0
  %917 = vmatprep.subr.mxu0 0.0
  %918 = vmatpush1.msra.mxu0 %v75
  %919 = vmatprep.subr.mxu0 0.0
  %920 = vmatpush1.msra.mxu0 %v74
  %921 = vmatprep.subr.mxu0 0.0
  %922 = vmatpush1.msra.mxu0 %v73
  %923 = vmatprep.subr.mxu0 0.0
  %924 = vmatpush1.msra.mxu0 %v72
  %925 = vmatprep.subr.mxu0 0.0
  %926 = vmatpush2.msra.mxu0 0.0
  %927 = vmatprep.subr.mxu0 0.0
  %928 = vmatpush2.msra.mxu0 0.0
  %929 = vmatprep.subr.mxu0 0.0
  %930 = vmatpush2.msra.mxu0 0.0
  %931 = vmatprep.subr.mxu0 0.0
  %932 = vmatpush2.msra.mxu0 0.0
  %933 = vmatprep.subr.mxu0 0.0
  %934 = vmatpush2.msra.mxu0 0.0
  %935 = vmatprep.subr.mxu0 0.0
  %936 = vmatpush2.msra.mxu0 0.0
  %937 = vmatprep.subr.mxu0 0.0
  %938 = vmatpush2.msra.mxu0 0.0
  %939 = vmatprep.subr.mxu0 0.0
  %940 = vmatpush2.msra.mxu0 0.0
  %941 = vmatprep.subr.mxu0 0.0
  %942 = vmatpush2.msra.mxu0 0.0
  %943 = vmatprep.subr.mxu0 0.0
  %944 = vmatpush2.msra.mxu0 0.0
  %945 = vmatprep.subr.mxu0 0.0
  %946 = vmatpush2.msra.mxu0 0.0
  %947 = vmatprep.subr.mxu0 0.0
  %948 = vmatpush2.msra.mxu0 0.0
  %949 = vmatprep.subr.mxu0 0.0
  %950 = vmatpush2.msra.mxu0 0.0
  %951 = vmatprep.subr.mxu0 0.0
  %952 = vmatpush2.msra.mxu0 0.0
  %953 = vmatprep.subr.mxu0 0.0
  %954 = vmatpush2.msra.mxu0 0.0
  %955 = vmatprep.subr.mxu0 0.0
  %956 = vmatpush2.msra.mxu0 0.0
  %957 = vmatprep.mubr.f32.mxu0 0.0
  %958 = vmatmul.mubr.f32.gmra.mxu0 %v326
  %v959 = vpop.f32.mrf.mxu0
  %v960 = vadd.f32 0.0, %v959
  %v961 = vpop.f32.mrf.mxu0
  %962 = vmatprep.mubr.f32.mxu0 0.0
  %963 = vmatmul.mubr.f32.gmra.mxu0 %v329
  %v964 = vpop.f32.mrf.mxu0
  %v965 = vadd.f32 0.0, %v964
  %v966 = vpop.f32.mrf.mxu0
  %967 = vmatprep.mubr.f32.mxu0 0.0
  %968 = vmatmul.mubr.f32.gmra.mxu0 %v332
  %v969 = vpop.f32.mrf.mxu0
  %v970 = vadd.f32 0.0, %v969
  %v971 = vpop.f32.mrf.mxu0
  %972 = vmatprep.mubr.f32.mxu0 0.0
  %973 = vmatmul.mubr.f32.gmra.mxu0 %v335
  %v974 = vpop.f32.mrf.mxu0
  %v975 = vadd.f32 0.0, %v974
  %v976 = vpop.f32.mrf.mxu0
  %977 = vmatprep.mubr.f32.mxu0 0.0
  %978 = vmatmul.mubr.f32.gmra.mxu0 %v338
  %v979 = vpop.f32.mrf.mxu0
  %v980 = vadd.f32 0.0, %v979
  %v981 = vpop.f32.mrf.mxu0
  %982 = vmatprep.mubr.f32.mxu0 0.0
  %983 = vmatmul.mubr.f32.gmra.mxu0 %v341
  %v984 = vpop.f32.mrf.mxu0
  %v985 = vadd.f32 0.0, %v984
  %v986 = vpop.f32.mrf.mxu0
  %987 = vdwg.mxu0
  %988 = vmatprep.subr.mxu0 0.0
  %989 = vmatpush1.msra.mxu0 0.0
  %990 = vmatprep.subr.mxu0 0.0
  %991 = vmatpush1.msra.mxu0 0.0
  %992 = vmatprep.subr.mxu0 0.0
  %993 = vmatpush1.msra.mxu0 0.0
  %994 = vmatprep.subr.mxu0 0.0
  %995 = vmatpush1.msra.mxu0 0.0
  %996 = vmatprep.subr.mxu0 0.0
  %997 = vmatpush1.msra.mxu0 0.0
  %998 = vmatprep.subr.mxu0 0.0
  %999 = vmatpush1.msra.mxu0 0.0
  %1000 = vmatprep.subr.mxu0 0.0
  %1001 = vmatpush1.msra.mxu0 0.0
  %1002 = vmatprep.subr.mxu0 0.0
  %1003 = vmatpush1.msra.mxu0 0.0
  %1004 = vmatprep.subr.mxu0 0.0
  %1005 = vmatpush1.msra.mxu0 0.0
  %1006 = vmatprep.subr.mxu0 0.0
  %1007 = vmatpush1.msra.mxu0 0.0
  %1008 = vmatprep.subr.mxu0 0.0
  %1009 = vmatpush1.msra.mxu0 0.0
  %1010 = vmatprep.subr.mxu0 0.0
  %1011 = vmatpush1.msra.mxu0 0.0
  %1012 = vmatprep.subr.mxu0 0.0
  %1013 = vmatpush1.msra.mxu0 %v67
  %1014 = vmatprep.subr.mxu0 0.0
  %1015 = vmatpush1.msra.mxu0 %v66
  %1016 = vmatprep.subr.mxu0 0.0
  %1017 = vmatpush1.msra.mxu0 %v65
  %1018 = vmatprep.subr.mxu0 0.0
  %1019 = vmatpush1.msra.mxu0 %v64
  %1020 = vmatprep.subr.mxu0 0.0
  %1021 = vmatpush2.msra.mxu0 0.0
  %1022 = vmatprep.subr.mxu0 0.0
  %1023 = vmatpush2.msra.mxu0 0.0
  %1024 = vmatprep.subr.mxu0 0.0
  %1025 = vmatpush2.msra.mxu0 0.0
  %1026 = vmatprep.subr.mxu0 0.0
  %1027 = vmatpush2.msra.mxu0 0.0
  %1028 = vmatprep.subr.mxu0 0.0
  %1029 = vmatpush2.msra.mxu0 0.0
  %1030 = vmatprep.subr.mxu0 0.0
  %1031 = vmatpush2.msra.mxu0 0.0
  %1032 = vmatprep.subr.mxu0 0.0
  %1033 = vmatpush2.msra.mxu0 0.0
  %1034 = vmatprep.subr.mxu0 0.0
  %1035 = vmatpush2.msra.mxu0 0.0
  %1036 = vmatprep.subr.mxu0 0.0
  %1037 = vmatpush2.msra.mxu0 0.0
  %1038 = vmatprep.subr.mxu0 0.0
  %1039 = vmatpush2.msra.mxu0 0.0
  %1040 = vmatprep.subr.mxu0 0.0
  %1041 = vmatpush2.msra.mxu0 0.0
  %1042 = vmatprep.subr.mxu0 0.0
  %1043 = vmatpush2.msra.mxu0 0.0
  %1044 = vmatprep.subr.mxu0 0.0
  %1045 = vmatpush2.msra.mxu0 0.0
  %1046 = vmatprep.subr.mxu0 0.0
  %1047 = vmatpush2.msra.mxu0 0.0
  %1048 = vmatprep.subr.mxu0 0.0
  %1049 = vmatpush2.msra.mxu0 0.0
  %1050 = vmatprep.subr.mxu0 0.0
  %1051 = vmatpush2.msra.mxu0 0.0
  %1052 = vmatprep.mubr.f32.mxu0 0.0
  %1053 = vmatmul.mubr.f32.gmra.mxu0 %v439
  %v1054 = vpop.f32.mrf.mxu0
  %v1055 = vadd.f32 %v960, %v1054
  %v1056 = vpop.f32.mrf.mxu0
  %1057 = vmatprep.mubr.f32.mxu0 0.0
  %1058 = vmatmul.mubr.f32.gmra.mxu0 %v442
  %v1059 = vpop.f32.mrf.mxu0
  %v1060 = vadd.f32 %v965, %v1059
  %v1061 = vpop.f32.mrf.mxu0
  %1062 = vmatprep.mubr.f32.mxu0 0.0
  %1063 = vmatmul.mubr.f32.gmra.mxu0 %v445
  %v1064 = vpop.f32.mrf.mxu0
  %v1065 = vadd.f32 %v970, %v1064
  %v1066 = vpop.f32.mrf.mxu0
  %1067 = vmatprep.mubr.f32.mxu0 0.0
  %1068 = vmatmul.mubr.f32.gmra.mxu0 %v448
  %v1069 = vpop.f32.mrf.mxu0
  %v1070 = vadd.f32 %v975, %v1069
  %v1071 = vpop.f32.mrf.mxu0
  %1072 = vmatprep.mubr.f32.mxu0 0.0
  %1073 = vmatmul.mubr.f32.gmra.mxu0 %v451
  %v1074 = vpop.f32.mrf.mxu0
  %v1075 = vadd.f32 %v980, %v1074
  %v1076 = vpop.f32.mrf.mxu0
  %1077 = vmatprep.mubr.f32.mxu0 0.0
  %1078 = vmatmul.mubr.f32.gmra.mxu0 %v454
  %v1079 = vpop.f32.mrf.mxu0
  %v1080 = vadd.f32 %v985, %v1079
  %v1081 = vpop.f32.mrf.mxu0
  %1082 = vdwg.mxu0
  %1083 = vmatprep.subr.mxu0 0.0
  %1084 = vmatpush1.msra.mxu0 0.0
  %1085 = vmatprep.subr.mxu0 0.0
  %1086 = vmatpush1.msra.mxu0 0.0
  %1087 = vmatprep.subr.mxu0 0.0
  %1088 = vmatpush1.msra.mxu0 0.0
  %1089 = vmatprep.subr.mxu0 0.0
  %1090 = vmatpush1.msra.mxu0 0.0
  %1091 = vmatprep.subr.mxu0 0.0
  %1092 = vmatpush1.msra.mxu0 0.0
  %1093 = vmatprep.subr.mxu0 0.0
  %1094 = vmatpush1.msra.mxu0 0.0
  %1095 = vmatprep.subr.mxu0 0.0
  %1096 = vmatpush1.msra.mxu0 0.0
  %1097 = vmatprep.subr.mxu0 0.0
  %1098 = vmatpush1.msra.mxu0 0.0
  %1099 = vmatprep.subr.mxu0 0.0
  %1100 = vmatpush1.msra.mxu0 0.0
  %1101 = vmatprep.subr.mxu0 0.0
  %1102 = vmatpush1.msra.mxu0 0.0
  %1103 = vmatprep.subr.mxu0 0.0
  %1104 = vmatpush1.msra.mxu0 0.0
  %1105 = vmatprep.subr.mxu0 0.0
  %1106 = vmatpush1.msra.mxu0 0.0
  %1107 = vmatprep.subr.mxu0 0.0
  %1108 = vmatpush1.msra.mxu0 %v83
  %1109 = vmatprep.subr.mxu0 0.0
  %1110 = vmatpush1.msra.mxu0 %v82
  %1111 = vmatprep.subr.mxu0 0.0
  %1112 = vmatpush1.msra.mxu0 %v81
  %1113 = vmatprep.subr.mxu0 0.0
  %1114 = vmatpush1.msra.mxu0 %v80
  %1115 = vmatprep.subr.mxu0 0.0
  %1116 = vmatpush2.msra.mxu0 0.0
  %1117 = vmatprep.subr.mxu0 0.0
  %1118 = vmatpush2.msra.mxu0 0.0
  %1119 = vmatprep.subr.mxu0 0.0
  %1120 = vmatpush2.msra.mxu0 0.0
  %1121 = vmatprep.subr.mxu0 0.0
  %1122 = vmatpush2.msra.mxu0 0.0
  %1123 = vmatprep.subr.mxu0 0.0
  %1124 = vmatpush2.msra.mxu0 0.0
  %1125 = vmatprep.subr.mxu0 0.0
  %1126 = vmatpush2.msra.mxu0 0.0
  %1127 = vmatprep.subr.mxu0 0.0
  %1128 = vmatpush2.msra.mxu0 0.0
  %1129 = vmatprep.subr.mxu0 0.0
  %1130 = vmatpush2.msra.mxu0 0.0
  %1131 = vmatprep.subr.mxu0 0.0
  %1132 = vmatpush2.msra.mxu0 0.0
  %1133 = vmatprep.subr.mxu0 0.0
  %1134 = vmatpush2.msra.mxu0 0.0
  %1135 = vmatprep.subr.mxu0 0.0
  %1136 = vmatpush2.msra.mxu0 0.0
  %1137 = vmatprep.subr.mxu0 0.0
  %1138 = vmatpush2.msra.mxu0 0.0
  %1139 = vmatprep.subr.mxu0 0.0
  %1140 = vmatpush2.msra.mxu0 0.0
  %1141 = vmatprep.subr.mxu0 0.0
  %1142 = vmatpush2.msra.mxu0 0.0
  %1143 = vmatprep.subr.mxu0 0.0
  %1144 = vmatpush2.msra.mxu0 0.0
  %1145 = vmatprep.subr.mxu0 0.0
  %1146 = vmatpush2.msra.mxu0 0.0
  %1147 = vmatprep.mubr.f32.mxu0 0.0
  %1148 = vmatmul.mubr.f32.gmra.mxu0 %v552
  %v1149 = vpop.f32.mrf.mxu0
  %v1150 = vadd.f32 0.0, %v1149
  %v1151 = vpop.f32.mrf.mxu0
  %1152 = vmatprep.mubr.f32.mxu0 0.0
  %1153 = vmatmul.mubr.f32.gmra.mxu0 %v555
  %v1154 = vpop.f32.mrf.mxu0
  %v1155 = vadd.f32 0.0, %v1154
  %v1156 = vpop.f32.mrf.mxu0
  %1157 = vmatprep.mubr.f32.mxu0 0.0
  %1158 = vmatmul.mubr.f32.gmra.mxu0 %v558
  %v1159 = vpop.f32.mrf.mxu0
  %v1160 = vadd.f32 0.0, %v1159
  %v1161 = vpop.f32.mrf.mxu0
  %1162 = vmatprep.mubr.f32.mxu0 0.0
  %1163 = vmatmul.mubr.f32.gmra.mxu0 %v561
  %v1164 = vpop.f32.mrf.mxu0
  %v1165 = vadd.f32 0.0, %v1164
  %v1166 = vpop.f32.mrf.mxu0
  %1167 = vmatprep.mubr.f32.mxu0 0.0
  %1168 = vmatmul.mubr.f32.gmra.mxu0 %v564
  %v1169 = vpop.f32.mrf.mxu0
  %v1170 = vadd.f32 0.0, %v1169
  %v1171 = vpop.f32.mrf.mxu0
  %1172 = vmatprep.mubr.f32.mxu0 0.0
  %1173 = vmatmul.mubr.f32.gmra.mxu0 %v567
  %v1174 = vpop.f32.mrf.mxu0
  %v1175 = vadd.f32 0.0, %v1174
  %v1176 = vpop.f32.mrf.mxu0
  %1177 = vdwg.mxu0
  %v1178 = vadd.f32 %v1055, %v1150
  %v1179 = vadd.f32 %v1060, %v1155
  %v1180 = vadd.f32 %v1065, %v1160
  %v1181 = vadd.f32 %v1070, %v1165
  %v1182 = vadd.f32 %v1075, %v1170
  %v1183 = vadd.f32 %v1080, %v1175
  %1184 = vmatprep.subr.mxu0 0.0
  %1185 = vmatpush1.msra.mxu0 0.0
  %1186 = vmatprep.subr.mxu0 0.0
  %1187 = vmatpush1.msra.mxu0 0.0
  %1188 = vmatprep.subr.mxu0 0.0
  %1189 = vmatpush1.msra.mxu0 0.0
  %1190 = vmatprep.subr.mxu0 0.0
  %1191 = vmatpush1.msra.mxu0 0.0
  %1192 = vmatprep.subr.mxu0 0.0
  %1193 = vmatpush1.msra.mxu0 0.0
  %1194 = vmatprep.subr.mxu0 0.0
  %1195 = vmatpush1.msra.mxu0 0.0
  %1196 = vmatprep.subr.mxu0 0.0
  %1197 = vmatpush1.msra.mxu0 0.0
  %1198 = vmatprep.subr.mxu0 0.0
  %1199 = vmatpush1.msra.mxu0 0.0
  %1200 = vmatprep.subr.mxu0 0.0
  %1201 = vmatpush1.msra.mxu0 0.0
  %1202 = vmatprep.subr.mxu0 0.0
  %1203 = vmatpush1.msra.mxu0 0.0
  %1204 = vmatprep.subr.mxu0 0.0
  %1205 = vmatpush1.msra.mxu0 0.0
  %1206 = vmatprep.subr.mxu0 0.0
  %1207 = vmatpush1.msra.mxu0 0.0
  %1208 = vmatprep.subr.mxu0 0.0
  %1209 = vmatpush1.msra.mxu0 %v91
  %1210 = vmatprep.subr.mxu0 0.0
  %1211 = vmatpush1.msra.mxu0 %v90
  %1212 = vmatprep.subr.mxu0 0.0
  %1213 = vmatpush1.msra.mxu0 %v89
  %1214 = vmatprep.subr.mxu0 0.0
  %1215 = vmatpush1.msra.mxu0 %v88
  %1216 = vmatprep.subr.mxu0 0.0
  %1217 = vmatpush2.msra.mxu0 0.0
  %1218 = vmatprep.subr.mxu0 0.0
  %1219 = vmatpush2.msra.mxu0 0.0
  %1220 = vmatprep.subr.mxu0 0.0
  %1221 = vmatpush2.msra.mxu0 0.0
  %1222 = vmatprep.subr.mxu0 0.0
  %1223 = vmatpush2.msra.mxu0 0.0
  %1224 = vmatprep.subr.mxu0 0.0
  %1225 = vmatpush2.msra.mxu0 0.0
  %1226 = vmatprep.subr.mxu0 0.0
  %1227 = vmatpush2.msra.mxu0 0.0
  %1228 = vmatprep.subr.mxu0 0.0
  %1229 = vmatpush2.msra.mxu0 0.0
  %1230 = vmatprep.subr.mxu0 0.0
  %1231 = vmatpush2.msra.mxu0 0.0
  %1232 = vmatprep.subr.mxu0 0.0
  %1233 = vmatpush2.msra.mxu0 0.0
  %1234 = vmatprep.subr.mxu0 0.0
  %1235 = vmatpush2.msra.mxu0 0.0
  %1236 = vmatprep.subr.mxu0 0.0
  %1237 = vmatpush2.msra.mxu0 0.0
  %1238 = vmatprep.subr.mxu0 0.0
  %1239 = vmatpush2.msra.mxu0 0.0
  %1240 = vmatprep.subr.mxu0 0.0
  %1241 = vmatpush2.msra.mxu0 0.0
  %1242 = vmatprep.subr.mxu0 0.0
  %1243 = vmatpush2.msra.mxu0 0.0
  %1244 = vmatprep.subr.mxu0 0.0
  %1245 = vmatpush2.msra.mxu0 0.0
  %1246 = vmatprep.subr.mxu0 0.0
  %1247 = vmatpush2.msra.mxu0 0.0
  %1248 = vmatprep.mubr.f32.mxu0 0.0
  %1249 = vmatmul.mubr.f32.gmra.mxu0 %v671
  %v1250 = vpop.f32.mrf.mxu0
  %v1251 = vadd.f32 0.0, %v1250
  %v1252 = vpop.f32.mrf.mxu0
  %1253 = vmatprep.mubr.f32.mxu0 0.0
  %1254 = vmatmul.mubr.f32.gmra.mxu0 %v674
  %v1255 = vpop.f32.mrf.mxu0
  %v1256 = vadd.f32 0.0, %v1255
  %v1257 = vpop.f32.mrf.mxu0
  %1258 = vmatprep.mubr.f32.mxu0 0.0
  %1259 = vmatmul.mubr.f32.gmra.mxu0 %v677
  %v1260 = vpop.f32.mrf.mxu0
  %v1261 = vadd.f32 0.0, %v1260
  %v1262 = vpop.f32.mrf.mxu0
  %1263 = vmatprep.mubr.f32.mxu0 0.0
  %1264 = vmatmul.mubr.f32.gmra.mxu0 %v680
  %v1265 = vpop.f32.mrf.mxu0
  %v1266 = vadd.f32 0.0, %v1265
  %v1267 = vpop.f32.mrf.mxu0
  %1268 = vmatprep.mubr.f32.mxu0 0.0
  %1269 = vmatmul.mubr.f32.gmra.mxu0 %v683
  %v1270 = vpop.f32.mrf.mxu0
  %v1271 = vadd.f32 0.0, %v1270
  %v1272 = vpop.f32.mrf.mxu0
  %1273 = vmatprep.mubr.f32.mxu0 0.0
  %1274 = vmatmul.mubr.f32.gmra.mxu0 %v686
  %v1275 = vpop.f32.mrf.mxu0
  %v1276 = vadd.f32 0.0, %v1275
  %v1277 = vpop.f32.mrf.mxu0
  %1278 = vdwg.mxu0
  %v1279 = vadd.f32 %v1178, %v1251
  %v1280 = vadd.f32 %v1179, %v1256
  %v1281 = vadd.f32 %v1180, %v1261
  %v1282 = vadd.f32 %v1181, %v1266
  %v1283 = vadd.f32 %v1182, %v1271
  %v1284 = vadd.f32 %v1183, %v1276
  %1285 = vmatprep.subr.mxu0 0.0
  %1286 = vmatpush1.msra.mxu0 0.0
  %1287 = vmatprep.subr.mxu0 0.0
  %1288 = vmatpush1.msra.mxu0 0.0
  %1289 = vmatprep.subr.mxu0 0.0
  %1290 = vmatpush1.msra.mxu0 0.0
  %1291 = vmatprep.subr.mxu0 0.0
  %1292 = vmatpush1.msra.mxu0 0.0
  %1293 = vmatprep.subr.mxu0 0.0
  %1294 = vmatpush1.msra.mxu0 0.0
  %1295 = vmatprep.subr.mxu0 0.0
  %1296 = vmatpush1.msra.mxu0 0.0
  %1297 = vmatprep.subr.mxu0 0.0
  %1298 = vmatpush1.msra.mxu0 0.0
  %1299 = vmatprep.subr.mxu0 0.0
  %1300 = vmatpush1.msra.mxu0 0.0
  %1301 = vmatprep.subr.mxu0 0.0
  %1302 = vmatpush1.msra.mxu0 0.0
  %1303 = vmatprep.subr.mxu0 0.0
  %1304 = vmatpush1.msra.mxu0 0.0
  %1305 = vmatprep.subr.mxu0 0.0
  %1306 = vmatpush1.msra.mxu0 0.0
  %1307 = vmatprep.subr.mxu0 0.0
  %1308 = vmatpush1.msra.mxu0 0.0
  %1309 = vmatprep.subr.mxu0 0.0
  %1310 = vmatpush1.msra.mxu0 %v99
  %1311 = vmatprep.subr.mxu0 0.0
  %1312 = vmatpush1.msra.mxu0 %v98
  %1313 = vmatprep.subr.mxu0 0.0
  %1314 = vmatpush1.msra.mxu0 %v97
  %1315 = vmatprep.subr.mxu0 0.0
  %1316 = vmatpush1.msra.mxu0 %v96
  %1317 = vmatprep.subr.mxu0 0.0
  %1318 = vmatpush2.msra.mxu0 0.0
  %1319 = vmatprep.subr.mxu0 0.0
  %1320 = vmatpush2.msra.mxu0 0.0
  %1321 = vmatprep.subr.mxu0 0.0
  %1322 = vmatpush2.msra.mxu0 0.0
  %1323 = vmatprep.subr.mxu0 0.0
  %1324 = vmatpush2.msra.mxu0 0.0
  %1325 = vmatprep.subr.mxu0 0.0
  %1326 = vmatpush2.msra.mxu0 0.0
  %1327 = vmatprep.subr.mxu0 0.0
  %1328 = vmatpush2.msra.mxu0 0.0
  %1329 = vmatprep.subr.mxu0 0.0
  %1330 = vmatpush2.msra.mxu0 0.0
  %1331 = vmatprep.subr.mxu0 0.0
  %1332 = vmatpush2.msra.mxu0 0.0
  %1333 = vmatprep.subr.mxu0 0.0
  %1334 = vmatpush2.msra.mxu0 0.0
  %1335 = vmatprep.subr.mxu0 0.0
  %1336 = vmatpush2.msra.mxu0 0.0
  %1337 = vmatprep.subr.mxu0 0.0
  %1338 = vmatpush2.msra.mxu0 0.0
  %1339 = vmatprep.subr.mxu0 0.0
  %1340 = vmatpush2.msra.mxu0 0.0
  %1341 = vmatprep.subr.mxu0 0.0
  %1342 = vmatpush2.msra.mxu0 0.0
  %1343 = vmatprep.subr.mxu0 0.0
  %1344 = vmatpush2.msra.mxu0 0.0
  %1345 = vmatprep.subr.mxu0 0.0
  %1346 = vmatpush2.msra.mxu0 0.0
  %1347 = vmatprep.subr.mxu0 0.0
  %1348 = vmatpush2.msra.mxu0 0.0
  %1349 = vmatprep.mubr.f32.mxu0 0.0
  %1350 = vmatmul.mubr.f32.gmra.mxu0 %v442
  %v1351 = vpop.f32.mrf.mxu0
  %v1352 = vadd.f32 0.0, %v1351
  %v1353 = vpop.f32.mrf.mxu0
  %1354 = vmatprep.mubr.f32.mxu0 0.0
  %1355 = vmatmul.mubr.f32.gmra.mxu0 %v445
  %v1356 = vpop.f32.mrf.mxu0
  %v1357 = vadd.f32 0.0, %v1356
  %v1358 = vpop.f32.mrf.mxu0
  %1359 = vmatprep.mubr.f32.mxu0 0.0
  %1360 = vmatmul.mubr.f32.gmra.mxu0 %v448
  %v1361 = vpop.f32.mrf.mxu0
  %v1362 = vadd.f32 0.0, %v1361
  %v1363 = vpop.f32.mrf.mxu0
  %1364 = vmatprep.mubr.f32.mxu0 0.0
  %1365 = vmatmul.mubr.f32.gmra.mxu0 %v451
  %v1366 = vpop.f32.mrf.mxu0
  %v1367 = vadd.f32 0.0, %v1366
  %v1368 = vpop.f32.mrf.mxu0
  %1369 = vmatprep.mubr.f32.mxu0 0.0
  %1370 = vmatmul.mubr.f32.gmra.mxu0 %v454
  %v1371 = vpop.f32.mrf.mxu0
  %v1372 = vadd.f32 0.0, %v1371
  %v1373 = vpop.f32.mrf.mxu0
  %1374 = vmatprep.mubr.f32.mxu0 0.0
  %1375 = vmatmul.mubr.f32.gmra.mxu0 %v790
  %v1376 = vpop.f32.mrf.mxu0
  %v1377 = vadd.f32 0.0, %v1376
  %v1378 = vpop.f32.mrf.mxu0
  %1379 = vdwg.mxu0
  %v1380 = vadd.f32 %v1279, %v1352
  %v1381 = vadd.f32 %v1280, %v1357
  %v1382 = vadd.f32 %v1281, %v1362
  %v1383 = vadd.f32 %v1282, %v1367
  %v1384 = vadd.f32 %v1283, %v1372
  %v1385 = vadd.f32 %v1284, %v1377
  %1386 = vmatprep.subr.mxu0 0.0
  %1387 = vmatpush1.msra.mxu0 0.0
  %1388 = vmatprep.subr.mxu0 0.0
  %1389 = vmatpush1.msra.mxu0 0.0
  %1390 = vmatprep.subr.mxu0 0.0
  %1391 = vmatpush1.msra.mxu0 0.0
  %1392 = vmatprep.subr.mxu0 0.0
  %1393 = vmatpush1.msra.mxu0 0.0
  %1394 = vmatprep.subr.mxu0 0.0
  %1395 = vmatpush1.msra.mxu0 0.0
  %1396 = vmatprep.subr.mxu0 0.0
  %1397 = vmatpush1.msra.mxu0 0.0
  %1398 = vmatprep.subr.mxu0 0.0
  %1399 = vmatpush1.msra.mxu0 0.0
  %1400 = vmatprep.subr.mxu0 0.0
  %1401 = vmatpush1.msra.mxu0 0.0
  %1402 = vmatprep.subr.mxu0 0.0
  %1403 = vmatpush1.msra.mxu0 0.0
  %1404 = vmatprep.subr.mxu0 0.0
  %1405 = vmatpush1.msra.mxu0 0.0
  %1406 = vmatprep.subr.mxu0 0.0
  %1407 = vmatpush1.msra.mxu0 0.0
  %1408 = vmatprep.subr.mxu0 0.0
  %1409 = vmatpush1.msra.mxu0 0.0
  %1410 = vmatprep.subr.mxu0 0.0
  %1411 = vmatpush1.msra.mxu0 %v71
  %1412 = vmatprep.subr.mxu0 0.0
  %1413 = vmatpush1.msra.mxu0 %v70
  %1414 = vmatprep.subr.mxu0 0.0
  %1415 = vmatpush1.msra.mxu0 %v69
  %1416 = vmatprep.subr.mxu0 0.0
  %1417 = vmatpush1.msra.mxu0 %v68
  %1418 = vmatprep.subr.mxu0 0.0
  %1419 = vmatpush2.msra.mxu0 0.0
  %1420 = vmatprep.subr.mxu0 0.0
  %1421 = vmatpush2.msra.mxu0 0.0
  %1422 = vmatprep.subr.mxu0 0.0
  %1423 = vmatpush2.msra.mxu0 0.0
  %1424 = vmatprep.subr.mxu0 0.0
  %1425 = vmatpush2.msra.mxu0 0.0
  %1426 = vmatprep.subr.mxu0 0.0
  %1427 = vmatpush2.msra.mxu0 0.0
  %1428 = vmatprep.subr.mxu0 0.0
  %1429 = vmatpush2.msra.mxu0 0.0
  %1430 = vmatprep.subr.mxu0 0.0
  %1431 = vmatpush2.msra.mxu0 0.0
  %1432 = vmatprep.subr.mxu0 0.0
  %1433 = vmatpush2.msra.mxu0 0.0
  %1434 = vmatprep.subr.mxu0 0.0
  %1435 = vmatpush2.msra.mxu0 0.0
  %1436 = vmatprep.subr.mxu0 0.0
  %1437 = vmatpush2.msra.mxu0 0.0
  %1438 = vmatprep.subr.mxu0 0.0
  %1439 = vmatpush2.msra.mxu0 0.0
  %1440 = vmatprep.subr.mxu0 0.0
  %1441 = vmatpush2.msra.mxu0 0.0
  %1442 = vmatprep.subr.mxu0 0.0
  %1443 = vmatpush2.msra.mxu0 0.0
  %1444 = vmatprep.subr.mxu0 0.0
  %1445 = vmatpush2.msra.mxu0 0.0
  %1446 = vmatprep.subr.mxu0 0.0
  %1447 = vmatpush2.msra.mxu0 0.0
  %1448 = vmatprep.subr.mxu0 0.0
  %1449 = vmatpush2.msra.mxu0 0.0
  %1450 = vmatprep.mubr.f32.mxu0 0.0
  %1451 = vmatmul.mubr.f32.gmra.mxu0 %v552
  %v1452 = vpop.f32.mrf.mxu0
  %v1453 = vadd.f32 0.0, %v1452
  %v1454 = vpop.f32.mrf.mxu0
  %1455 = vmatprep.mubr.f32.mxu0 0.0
  %1456 = vmatmul.mubr.f32.gmra.mxu0 %v555
  %v1457 = vpop.f32.mrf.mxu0
  %v1458 = vadd.f32 0.0, %v1457
  %v1459 = vpop.f32.mrf.mxu0
  %1460 = vmatprep.mubr.f32.mxu0 0.0
  %1461 = vmatmul.mubr.f32.gmra.mxu0 %v558
  %v1462 = vpop.f32.mrf.mxu0
  %v1463 = vadd.f32 0.0, %v1462
  %v1464 = vpop.f32.mrf.mxu0
  %1465 = vmatprep.mubr.f32.mxu0 0.0
  %1466 = vmatmul.mubr.f32.gmra.mxu0 %v561
  %v1467 = vpop.f32.mrf.mxu0
  %v1468 = vadd.f32 0.0, %v1467
  %v1469 = vpop.f32.mrf.mxu0
  %1470 = vmatprep.mubr.f32.mxu0 0.0
  %1471 = vmatmul.mubr.f32.gmra.mxu0 %v564
  %v1472 = vpop.f32.mrf.mxu0
  %v1473 = vadd.f32 0.0, %v1472
  %v1474 = vpop.f32.mrf.mxu0
  %1475 = vmatprep.mubr.f32.mxu0 0.0
  %1476 = vmatmul.mubr.f32.gmra.mxu0 %v567
  %v1477 = vpop.f32.mrf.mxu0
  %v1478 = vadd.f32 0.0, %v1477
  %v1479 = vpop.f32.mrf.mxu0
  %1480 = vdwg.mxu0
  %1481 = vmatprep.subr.mxu0 0.0
  %1482 = vmatpush1.msra.mxu0 0.0
  %1483 = vmatprep.subr.mxu0 0.0
  %1484 = vmatpush1.msra.mxu0 0.0
  %1485 = vmatprep.subr.mxu0 0.0
  %1486 = vmatpush1.msra.mxu0 0.0
  %1487 = vmatprep.subr.mxu0 0.0
  %1488 = vmatpush1.msra.mxu0 0.0
  %1489 = vmatprep.subr.mxu0 0.0
  %1490 = vmatpush1.msra.mxu0 0.0
  %1491 = vmatprep.subr.mxu0 0.0
  %1492 = vmatpush1.msra.mxu0 0.0
  %1493 = vmatprep.subr.mxu0 0.0
  %1494 = vmatpush1.msra.mxu0 0.0
  %1495 = vmatprep.subr.mxu0 0.0
  %1496 = vmatpush1.msra.mxu0 0.0
  %1497 = vmatprep.subr.mxu0 0.0
  %1498 = vmatpush1.msra.mxu0 0.0
  %1499 = vmatprep.subr.mxu0 0.0
  %1500 = vmatpush1.msra.mxu0 0.0
  %1501 = vmatprep.subr.mxu0 0.0
  %1502 = vmatpush1.msra.mxu0 0.0
  %1503 = vmatprep.subr.mxu0 0.0
  %1504 = vmatpush1.msra.mxu0 0.0
  %1505 = vmatprep.subr.mxu0 0.0
  %1506 = vmatpush1.msra.mxu0 %v63
  %1507 = vmatprep.subr.mxu0 0.0
  %1508 = vmatpush1.msra.mxu0 %v62
  %1509 = vmatprep.subr.mxu0 0.0
  %1510 = vmatpush1.msra.mxu0 %v61
  %1511 = vmatprep.subr.mxu0 0.0
  %1512 = vmatpush1.msra.mxu0 %v60
  %1513 = vmatprep.subr.mxu0 0.0
  %1514 = vmatpush2.msra.mxu0 0.0
  %1515 = vmatprep.subr.mxu0 0.0
  %1516 = vmatpush2.msra.mxu0 0.0
  %1517 = vmatprep.subr.mxu0 0.0
  %1518 = vmatpush2.msra.mxu0 0.0
  %1519 = vmatprep.subr.mxu0 0.0
  %1520 = vmatpush2.msra.mxu0 0.0
  %1521 = vmatprep.subr.mxu0 0.0
  %1522 = vmatpush2.msra.mxu0 0.0
  %1523 = vmatprep.subr.mxu0 0.0
  %1524 = vmatpush2.msra.mxu0 0.0
  %1525 = vmatprep.subr.mxu0 0.0
  %1526 = vmatpush2.msra.mxu0 0.0
  %1527 = vmatprep.subr.mxu0 0.0
  %1528 = vmatpush2.msra.mxu0 0.0
  %1529 = vmatprep.subr.mxu0 0.0
  %1530 = vmatpush2.msra.mxu0 0.0
  %1531 = vmatprep.subr.mxu0 0.0
  %1532 = vmatpush2.msra.mxu0 0.0
  %1533 = vmatprep.subr.mxu0 0.0
  %1534 = vmatpush2.msra.mxu0 0.0
  %1535 = vmatprep.subr.mxu0 0.0
  %1536 = vmatpush2.msra.mxu0 0.0
  %1537 = vmatprep.subr.mxu0 0.0
  %1538 = vmatpush2.msra.mxu0 0.0
  %1539 = vmatprep.subr.mxu0 0.0
  %1540 = vmatpush2.msra.mxu0 0.0
  %1541 = vmatprep.subr.mxu0 0.0
  %1542 = vmatpush2.msra.mxu0 0.0
  %1543 = vmatprep.subr.mxu0 0.0
  %1544 = vmatpush2.msra.mxu0 0.0
  %1545 = vmatprep.mubr.f32.mxu0 0.0
  %1546 = vmatmul.mubr.f32.gmra.mxu0 %v326
  %v1547 = vpop.f32.mrf.mxu0
  %v1548 = vadd.f32 %v1453, %v1547
  %v1549 = vpop.f32.mrf.mxu0
  %1550 = vmatprep.mubr.f32.mxu0 0.0
  %1551 = vmatmul.mubr.f32.gmra.mxu0 %v329
  %v1552 = vpop.f32.mrf.mxu0
  %v1553 = vadd.f32 %v1458, %v1552
  %v1554 = vpop.f32.mrf.mxu0
  %1555 = vmatprep.mubr.f32.mxu0 0.0
  %1556 = vmatmul.mubr.f32.gmra.mxu0 %v332
  %v1557 = vpop.f32.mrf.mxu0
  %v1558 = vadd.f32 %v1463, %v1557
  %v1559 = vpop.f32.mrf.mxu0
  %1560 = vmatprep.mubr.f32.mxu0 0.0
  %1561 = vmatmul.mubr.f32.gmra.mxu0 %v335
  %v1562 = vpop.f32.mrf.mxu0
  %v1563 = vadd.f32 %v1468, %v1562
  %v1564 = vpop.f32.mrf.mxu0
  %1565 = vmatprep.mubr.f32.mxu0 0.0
  %1566 = vmatmul.mubr.f32.gmra.mxu0 %v338
  %v1567 = vpop.f32.mrf.mxu0
  %v1568 = vadd.f32 %v1473, %v1567
  %v1569 = vpop.f32.mrf.mxu0
  %1570 = vmatprep.mubr.f32.mxu0 0.0
  %1571 = vmatmul.mubr.f32.gmra.mxu0 %v341
  %v1572 = vpop.f32.mrf.mxu0
  %v1573 = vadd.f32 %v1478, %v1572
  %v1574 = vpop.f32.mrf.mxu0
  %1575 = vdwg.mxu0
  %1576 = vmatprep.subr.mxu0 0.0
  %1577 = vmatpush1.msra.mxu0 0.0
  %1578 = vmatprep.subr.mxu0 0.0
  %1579 = vmatpush1.msra.mxu0 0.0
  %1580 = vmatprep.subr.mxu0 0.0
  %1581 = vmatpush1.msra.mxu0 0.0
  %1582 = vmatprep.subr.mxu0 0.0
  %1583 = vmatpush1.msra.mxu0 0.0
  %1584 = vmatprep.subr.mxu0 0.0
  %1585 = vmatpush1.msra.mxu0 0.0
  %1586 = vmatprep.subr.mxu0 0.0
  %1587 = vmatpush1.msra.mxu0 0.0
  %1588 = vmatprep.subr.mxu0 0.0
  %1589 = vmatpush1.msra.mxu0 0.0
  %1590 = vmatprep.subr.mxu0 0.0
  %1591 = vmatpush1.msra.mxu0 0.0
  %1592 = vmatprep.subr.mxu0 0.0
  %1593 = vmatpush1.msra.mxu0 0.0
  %1594 = vmatprep.subr.mxu0 0.0
  %1595 = vmatpush1.msra.mxu0 0.0
  %1596 = vmatprep.subr.mxu0 0.0
  %1597 = vmatpush1.msra.mxu0 0.0
  %1598 = vmatprep.subr.mxu0 0.0
  %1599 = vmatpush1.msra.mxu0 0.0
  %1600 = vmatprep.subr.mxu0 0.0
  %1601 = vmatpush1.msra.mxu0 %v79
  %1602 = vmatprep.subr.mxu0 0.0
  %1603 = vmatpush1.msra.mxu0 %v78
  %1604 = vmatprep.subr.mxu0 0.0
  %1605 = vmatpush1.msra.mxu0 %v77
  %1606 = vmatprep.subr.mxu0 0.0
  %1607 = vmatpush1.msra.mxu0 %v76
  %1608 = vmatprep.subr.mxu0 0.0
  %1609 = vmatpush2.msra.mxu0 0.0
  %1610 = vmatprep.subr.mxu0 0.0
  %1611 = vmatpush2.msra.mxu0 0.0
  %1612 = vmatprep.subr.mxu0 0.0
  %1613 = vmatpush2.msra.mxu0 0.0
  %1614 = vmatprep.subr.mxu0 0.0
  %1615 = vmatpush2.msra.mxu0 0.0
  %1616 = vmatprep.subr.mxu0 0.0
  %1617 = vmatpush2.msra.mxu0 0.0
  %1618 = vmatprep.subr.mxu0 0.0
  %1619 = vmatpush2.msra.mxu0 0.0
  %1620 = vmatprep.subr.mxu0 0.0
  %1621 = vmatpush2.msra.mxu0 0.0
  %1622 = vmatprep.subr.mxu0 0.0
  %1623 = vmatpush2.msra.mxu0 0.0
  %1624 = vmatprep.subr.mxu0 0.0
  %1625 = vmatpush2.msra.mxu0 0.0
  %1626 = vmatprep.subr.mxu0 0.0
  %1627 = vmatpush2.msra.mxu0 0.0
  %1628 = vmatprep.subr.mxu0 0.0
  %1629 = vmatpush2.msra.mxu0 0.0
  %1630 = vmatprep.subr.mxu0 0.0
  %1631 = vmatpush2.msra.mxu0 0.0
  %1632 = vmatprep.subr.mxu0 0.0
  %1633 = vmatpush2.msra.mxu0 0.0
  %1634 = vmatprep.subr.mxu0 0.0
  %1635 = vmatpush2.msra.mxu0 0.0
  %1636 = vmatprep.subr.mxu0 0.0
  %1637 = vmatpush2.msra.mxu0 0.0
  %1638 = vmatprep.subr.mxu0 0.0
  %1639 = vmatpush2.msra.mxu0 0.0
  %1640 = vmatprep.mubr.f32.mxu0 0.0
  %1641 = vmatmul.mubr.f32.gmra.mxu0 %v671
  %v1642 = vpop.f32.mrf.mxu0
  %v1643 = vadd.f32 0.0, %v1642
  %v1644 = vpop.f32.mrf.mxu0
  %1645 = vmatprep.mubr.f32.mxu0 0.0
  %1646 = vmatmul.mubr.f32.gmra.mxu0 %v674
  %v1647 = vpop.f32.mrf.mxu0
  %v1648 = vadd.f32 0.0, %v1647
  %v1649 = vpop.f32.mrf.mxu0
  %1650 = vmatprep.mubr.f32.mxu0 0.0
  %1651 = vmatmul.mubr.f32.gmra.mxu0 %v677
  %v1652 = vpop.f32.mrf.mxu0
  %v1653 = vadd.f32 0.0, %v1652
  %v1654 = vpop.f32.mrf.mxu0
  %1655 = vmatprep.mubr.f32.mxu0 0.0
  %1656 = vmatmul.mubr.f32.gmra.mxu0 %v680
  %v1657 = vpop.f32.mrf.mxu0
  %v1658 = vadd.f32 0.0, %v1657
  %v1659 = vpop.f32.mrf.mxu0
  %1660 = vmatprep.mubr.f32.mxu0 0.0
  %1661 = vmatmul.mubr.f32.gmra.mxu0 %v683
  %v1662 = vpop.f32.mrf.mxu0
  %v1663 = vadd.f32 0.0, %v1662
  %v1664 = vpop.f32.mrf.mxu0
  %1665 = vmatprep.mubr.f32.mxu0 0.0
  %1666 = vmatmul.mubr.f32.gmra.mxu0 %v686
  %v1667 = vpop.f32.mrf.mxu0
  %v1668 = vadd.f32 0.0, %v1667
  %v1669 = vpop.f32.mrf.mxu0
  %1670 = vdwg.mxu0
  %v1671 = vadd.f32 %v1548, %v1643
  %v1672 = vadd.f32 %v1553, %v1648
  %v1673 = vadd.f32 %v1558, %v1653
  %v1674 = vadd.f32 %v1563, %v1658
  %v1675 = vadd.f32 %v1568, %v1663
  %v1676 = vadd.f32 %v1573, %v1668
  %1677 = vmatprep.subr.mxu0 0.0
  %1678 = vmatpush1.msra.mxu0 0.0
  %1679 = vmatprep.subr.mxu0 0.0
  %1680 = vmatpush1.msra.mxu0 0.0
  %1681 = vmatprep.subr.mxu0 0.0
  %1682 = vmatpush1.msra.mxu0 0.0
  %1683 = vmatprep.subr.mxu0 0.0
  %1684 = vmatpush1.msra.mxu0 0.0
  %1685 = vmatprep.subr.mxu0 0.0
  %1686 = vmatpush1.msra.mxu0 0.0
  %1687 = vmatprep.subr.mxu0 0.0
  %1688 = vmatpush1.msra.mxu0 0.0
  %1689 = vmatprep.subr.mxu0 0.0
  %1690 = vmatpush1.msra.mxu0 0.0
  %1691 = vmatprep.subr.mxu0 0.0
  %1692 = vmatpush1.msra.mxu0 0.0
  %1693 = vmatprep.subr.mxu0 0.0
  %1694 = vmatpush1.msra.mxu0 0.0
  %1695 = vmatprep.subr.mxu0 0.0
  %1696 = vmatpush1.msra.mxu0 0.0
  %1697 = vmatprep.subr.mxu0 0.0
  %1698 = vmatpush1.msra.mxu0 0.0
  %1699 = vmatprep.subr.mxu0 0.0
  %1700 = vmatpush1.msra.mxu0 0.0
  %1701 = vmatprep.subr.mxu0 0.0
  %1702 = vmatpush1.msra.mxu0 %v87
  %1703 = vmatprep.subr.mxu0 0.0
  %1704 = vmatpush1.msra.mxu0 %v86
  %1705 = vmatprep.subr.mxu0 0.0
  %1706 = vmatpush1.msra.mxu0 %v85
  %1707 = vmatprep.subr.mxu0 0.0
  %1708 = vmatpush1.msra.mxu0 %v84
  %1709 = vmatprep.subr.mxu0 0.0
  %1710 = vmatpush2.msra.mxu0 0.0
  %1711 = vmatprep.subr.mxu0 0.0
  %1712 = vmatpush2.msra.mxu0 0.0
  %1713 = vmatprep.subr.mxu0 0.0
  %1714 = vmatpush2.msra.mxu0 0.0
  %1715 = vmatprep.subr.mxu0 0.0
  %1716 = vmatpush2.msra.mxu0 0.0
  %1717 = vmatprep.subr.mxu0 0.0
  %1718 = vmatpush2.msra.mxu0 0.0
  %1719 = vmatprep.subr.mxu0 0.0
  %1720 = vmatpush2.msra.mxu0 0.0
  %1721 = vmatprep.subr.mxu0 0.0
  %1722 = vmatpush2.msra.mxu0 0.0
  %1723 = vmatprep.subr.mxu0 0.0
  %1724 = vmatpush2.msra.mxu0 0.0
  %1725 = vmatprep.subr.mxu0 0.0
  %1726 = vmatpush2.msra.mxu0 0.0
  %1727 = vmatprep.subr.mxu0 0.0
  %1728 = vmatpush2.msra.mxu0 0.0
  %1729 = vmatprep.subr.mxu0 0.0
  %1730 = vmatpush2.msra.mxu0 0.0
  %1731 = vmatprep.subr.mxu0 0.0
  %1732 = vmatpush2.msra.mxu0 0.0
  %1733 = vmatprep.subr.mxu0 0.0
  %1734 = vmatpush2.msra.mxu0 0.0
  %1735 = vmatprep.subr.mxu0 0.0
  %1736 = vmatpush2.msra.mxu0 0.0
  %1737 = vmatprep.subr.mxu0 0.0
  %1738 = vmatpush2.msra.mxu0 0.0
  %1739 = vmatprep.subr.mxu0 0.0
  %1740 = vmatpush2.msra.mxu0 0.0
  %1741 = vmatprep.mubr.f32.mxu0 0.0
  %1742 = vmatmul.mubr.f32.gmra.mxu0 %v442
  %v1743 = vpop.f32.mrf.mxu0
  %v1744 = vadd.f32 0.0, %v1743
  %v1745 = vpop.f32.mrf.mxu0
  %1746 = vmatprep.mubr.f32.mxu0 0.0
  %1747 = vmatmul.mubr.f32.gmra.mxu0 %v445
  %v1748 = vpop.f32.mrf.mxu0
  %v1749 = vadd.f32 0.0, %v1748
  %v1750 = vpop.f32.mrf.mxu0
  %1751 = vmatprep.mubr.f32.mxu0 0.0
  %1752 = vmatmul.mubr.f32.gmra.mxu0 %v448
  %v1753 = vpop.f32.mrf.mxu0
  %v1754 = vadd.f32 0.0, %v1753
  %v1755 = vpop.f32.mrf.mxu0
  %1756 = vmatprep.mubr.f32.mxu0 0.0
  %1757 = vmatmul.mubr.f32.gmra.mxu0 %v451
  %v1758 = vpop.f32.mrf.mxu0
  %v1759 = vadd.f32 0.0, %v1758
  %v1760 = vpop.f32.mrf.mxu0
  %1761 = vmatprep.mubr.f32.mxu0 0.0
  %1762 = vmatmul.mubr.f32.gmra.mxu0 %v454
  %v1763 = vpop.f32.mrf.mxu0
  %v1764 = vadd.f32 0.0, %v1763
  %v1765 = vpop.f32.mrf.mxu0
  %1766 = vmatprep.mubr.f32.mxu0 0.0
  %1767 = vmatmul.mubr.f32.gmra.mxu0 %v790
  %v1768 = vpop.f32.mrf.mxu0
  %v1769 = vadd.f32 0.0, %v1768
  %v1770 = vpop.f32.mrf.mxu0
  %1771 = vdwg.mxu0
  %v1772 = vadd.f32 %v1671, %v1744
  %v1773 = vadd.f32 %v1672, %v1749
  %v1774 = vadd.f32 %v1673, %v1754
  %v1775 = vadd.f32 %v1674, %v1759
  %v1776 = vadd.f32 %v1675, %v1764
  %v1777 = vadd.f32 %v1676, %v1769
  %v1779 = vsel %vm324, %v45, 0
  %1781 = vmatprep.subr.mxu0 0.0
  %1782 = vmatpush1.msra.mxu0 0.0
  %1783 = vmatprep.subr.mxu0 0.0
  %1784 = vmatpush1.msra.mxu0 0.0
  %1785 = vmatprep.subr.mxu0 0.0
  %1786 = vmatpush1.msra.mxu0 0.0
  %1787 = vmatprep.subr.mxu0 0.0
  %1788 = vmatpush1.msra.mxu0 0.0
  %1789 = vmatprep.subr.mxu0 0.0
  %1790 = vmatpush1.msra.mxu0 0.0
  %1791 = vmatprep.subr.mxu0 0.0
  %1792 = vmatpush1.msra.mxu0 0.0
  %1793 = vmatprep.subr.mxu0 0.0
  %1794 = vmatpush1.msra.mxu0 0.0
  %1795 = vmatprep.subr.mxu0 0.0
  %1796 = vmatpush1.msra.mxu0 0.0
  %1797 = vmatprep.subr.mxu0 0.0
  %1798 = vmatpush1.msra.mxu0 0.0
  %1799 = vmatprep.subr.mxu0 0.0
  %1800 = vmatpush1.msra.mxu0 0.0
  %1801 = vmatprep.subr.mxu0 0.0
  %1802 = vmatpush1.msra.mxu0 0.0
  %1803 = vmatprep.subr.mxu0 0.0
  %1804 = vmatpush1.msra.mxu0 0.0
  %1805 = vmatprep.subr.mxu0 0.0
  %1806 = vmatpush1.msra.mxu0 %v95
  %1807 = vmatprep.subr.mxu0 0.0
  %1808 = vmatpush1.msra.mxu0 %v94
  %1809 = vmatprep.subr.mxu0 0.0
  %1810 = vmatpush1.msra.mxu0 %v93
  %1811 = vmatprep.subr.mxu0 0.0
  %1812 = vmatpush1.msra.mxu0 %v92
  %1813 = vmatprep.subr.mxu0 0.0
  %1814 = vmatpush2.msra.mxu0 0.0
  %1815 = vmatprep.subr.mxu0 0.0
  %1816 = vmatpush2.msra.mxu0 0.0
  %1817 = vmatprep.subr.mxu0 0.0
  %1818 = vmatpush2.msra.mxu0 0.0
  %1819 = vmatprep.subr.mxu0 0.0
  %1820 = vmatpush2.msra.mxu0 0.0
  %1821 = vmatprep.subr.mxu0 0.0
  %1822 = vmatpush2.msra.mxu0 0.0
  %1823 = vmatprep.subr.mxu0 0.0
  %1824 = vmatpush2.msra.mxu0 0.0
  %1825 = vmatprep.subr.mxu0 0.0
  %1826 = vmatpush2.msra.mxu0 0.0
  %1827 = vmatprep.subr.mxu0 0.0
  %1828 = vmatpush2.msra.mxu0 0.0
  %1829 = vmatprep.subr.mxu0 0.0
  %1830 = vmatpush2.msra.mxu0 0.0
  %1831 = vmatprep.subr.mxu0 0.0
  %1832 = vmatpush2.msra.mxu0 0.0
  %1833 = vmatprep.subr.mxu0 0.0
  %1834 = vmatpush2.msra.mxu0 0.0
  %1835 = vmatprep.subr.mxu0 0.0
  %1836 = vmatpush2.msra.mxu0 0.0
  %1837 = vmatprep.subr.mxu0 0.0
  %1838 = vmatpush2.msra.mxu0 0.0
  %1839 = vmatprep.subr.mxu0 0.0
  %1840 = vmatpush2.msra.mxu0 0.0
  %1841 = vmatprep.subr.mxu0 0.0
  %1842 = vmatpush2.msra.mxu0 0.0
  %1843 = vmatprep.subr.mxu0 0.0
  %1844 = vmatpush2.msra.mxu0 0.0
  %1845 = vmatprep.mubr.f32.mxu0 0.0
  %1846 = vmatmul.mubr.f32.gmra.mxu0 %v329
  %v1847 = vpop.f32.mrf.mxu0
  %v1848 = vadd.f32 0.0, %v1847
  %v1849 = vpop.f32.mrf.mxu0
  %1850 = vmatprep.mubr.f32.mxu0 0.0
  %1851 = vmatmul.mubr.f32.gmra.mxu0 %v332
  %v1852 = vpop.f32.mrf.mxu0
  %v1853 = vadd.f32 0.0, %v1852
  %v1854 = vpop.f32.mrf.mxu0
  %1855 = vmatprep.mubr.f32.mxu0 0.0
  %1856 = vmatmul.mubr.f32.gmra.mxu0 %v335
  %v1857 = vpop.f32.mrf.mxu0
  %v1858 = vadd.f32 0.0, %v1857
  %v1859 = vpop.f32.mrf.mxu0
  %1860 = vmatprep.mubr.f32.mxu0 0.0
  %1861 = vmatmul.mubr.f32.gmra.mxu0 %v338
  %v1862 = vpop.f32.mrf.mxu0
  %v1863 = vadd.f32 0.0, %v1862
  %v1864 = vpop.f32.mrf.mxu0
  %1865 = vmatprep.mubr.f32.mxu0 0.0
  %1866 = vmatmul.mubr.f32.gmra.mxu0 %v341
  %v1867 = vpop.f32.mrf.mxu0
  %v1868 = vadd.f32 0.0, %v1867
  %v1869 = vpop.f32.mrf.mxu0
  %1870 = vmatprep.mubr.f32.mxu0 0.0
  %1871 = vmatmul.mubr.f32.gmra.mxu0 %v1779
  %v1872 = vpop.f32.mrf.mxu0
  %v1873 = vadd.f32 0.0, %v1872
  %v1874 = vpop.f32.mrf.mxu0
  %1875 = vdwg.mxu0
  %v1876 = vadd.f32 %v1772, %v1848
  %v1877 = vadd.f32 %v1773, %v1853
  %v1878 = vadd.f32 %v1774, %v1858
  %v1879 = vadd.f32 %v1775, %v1863
  %v1880 = vadd.f32 %v1776, %v1868
  %v1881 = vadd.f32 %v1777, %v1873
  %1882 = vmatprep.subr.mxu0 0.0
  %1883 = vmatpush1.msra.mxu0 0.0
  %1884 = vmatprep.subr.mxu0 0.0
  %1885 = vmatpush1.msra.mxu0 0.0
  %1886 = vmatprep.subr.mxu0 0.0
  %1887 = vmatpush1.msra.mxu0 0.0
  %1888 = vmatprep.subr.mxu0 0.0
  %1889 = vmatpush1.msra.mxu0 0.0
  %1890 = vmatprep.subr.mxu0 0.0
  %1891 = vmatpush1.msra.mxu0 0.0
  %1892 = vmatprep.subr.mxu0 0.0
  %1893 = vmatpush1.msra.mxu0 0.0
  %1894 = vmatprep.subr.mxu0 0.0
  %1895 = vmatpush1.msra.mxu0 0.0
  %1896 = vmatprep.subr.mxu0 0.0
  %1897 = vmatpush1.msra.mxu0 0.0
  %1898 = vmatprep.subr.mxu0 0.0
  %1899 = vmatpush1.msra.mxu0 0.0
  %1900 = vmatprep.subr.mxu0 0.0
  %1901 = vmatpush1.msra.mxu0 0.0
  %1902 = vmatprep.subr.mxu0 0.0
  %1903 = vmatpush1.msra.mxu0 0.0
  %1904 = vmatprep.subr.mxu0 0.0
  %1905 = vmatpush1.msra.mxu0 0.0
  %1906 = vmatprep.subr.mxu0 0.0
  %1907 = vmatpush1.msra.mxu0 %v75
  %1908 = vmatprep.subr.mxu0 0.0
  %1909 = vmatpush1.msra.mxu0 %v74
  %1910 = vmatprep.subr.mxu0 0.0
  %1911 = vmatpush1.msra.mxu0 %v73
  %1912 = vmatprep.subr.mxu0 0.0
  %1913 = vmatpush1.msra.mxu0 %v72
  %1914 = vmatprep.subr.mxu0 0.0
  %1915 = vmatpush2.msra.mxu0 0.0
  %1916 = vmatprep.subr.mxu0 0.0
  %1917 = vmatpush2.msra.mxu0 0.0
  %1918 = vmatprep.subr.mxu0 0.0
  %1919 = vmatpush2.msra.mxu0 0.0
  %1920 = vmatprep.subr.mxu0 0.0
  %1921 = vmatpush2.msra.mxu0 0.0
  %1922 = vmatprep.subr.mxu0 0.0
  %1923 = vmatpush2.msra.mxu0 0.0
  %1924 = vmatprep.subr.mxu0 0.0
  %1925 = vmatpush2.msra.mxu0 0.0
  %1926 = vmatprep.subr.mxu0 0.0
  %1927 = vmatpush2.msra.mxu0 0.0
  %1928 = vmatprep.subr.mxu0 0.0
  %1929 = vmatpush2.msra.mxu0 0.0
  %1930 = vmatprep.subr.mxu0 0.0
  %1931 = vmatpush2.msra.mxu0 0.0
  %1932 = vmatprep.subr.mxu0 0.0
  %1933 = vmatpush2.msra.mxu0 0.0
  %1934 = vmatprep.subr.mxu0 0.0
  %1935 = vmatpush2.msra.mxu0 0.0
  %1936 = vmatprep.subr.mxu0 0.0
  %1937 = vmatpush2.msra.mxu0 0.0
  %1938 = vmatprep.subr.mxu0 0.0
  %1939 = vmatpush2.msra.mxu0 0.0
  %1940 = vmatprep.subr.mxu0 0.0
  %1941 = vmatpush2.msra.mxu0 0.0
  %1942 = vmatprep.subr.mxu0 0.0
  %1943 = vmatpush2.msra.mxu0 0.0
  %1944 = vmatprep.subr.mxu0 0.0
  %1945 = vmatpush2.msra.mxu0 0.0
  %1946 = vmatprep.mubr.f32.mxu0 0.0
  %1947 = vmatmul.mubr.f32.gmra.mxu0 %v552
  %v1948 = vpop.f32.mrf.mxu0
  %v1949 = vadd.f32 0.0, %v1948
  %v1950 = vpop.f32.mrf.mxu0
  %1951 = vmatprep.mubr.f32.mxu0 0.0
  %1952 = vmatmul.mubr.f32.gmra.mxu0 %v555
  %v1953 = vpop.f32.mrf.mxu0
  %v1954 = vadd.f32 0.0, %v1953
  %v1955 = vpop.f32.mrf.mxu0
  %1956 = vmatprep.mubr.f32.mxu0 0.0
  %1957 = vmatmul.mubr.f32.gmra.mxu0 %v558
  %v1958 = vpop.f32.mrf.mxu0
  %v1959 = vadd.f32 0.0, %v1958
  %v1960 = vpop.f32.mrf.mxu0
  %1961 = vmatprep.mubr.f32.mxu0 0.0
  %1962 = vmatmul.mubr.f32.gmra.mxu0 %v561
  %v1963 = vpop.f32.mrf.mxu0
  %v1964 = vadd.f32 0.0, %v1963
  %v1965 = vpop.f32.mrf.mxu0
  %1966 = vmatprep.mubr.f32.mxu0 0.0
  %1967 = vmatmul.mubr.f32.gmra.mxu0 %v564
  %v1968 = vpop.f32.mrf.mxu0
  %v1969 = vadd.f32 0.0, %v1968
  %v1970 = vpop.f32.mrf.mxu0
  %1971 = vmatprep.mubr.f32.mxu0 0.0
  %1972 = vmatmul.mubr.f32.gmra.mxu0 %v567
  %v1973 = vpop.f32.mrf.mxu0
  %v1974 = vadd.f32 0.0, %v1973
  %v1975 = vpop.f32.mrf.mxu0
  %1976 = vdwg.mxu0
  %1977 = vmatprep.subr.mxu0 0.0
  %1978 = vmatpush1.msra.mxu0 0.0
  %1979 = vmatprep.subr.mxu0 0.0
  %1980 = vmatpush1.msra.mxu0 0.0
  %1981 = vmatprep.subr.mxu0 0.0
  %1982 = vmatpush1.msra.mxu0 0.0
  %1983 = vmatprep.subr.mxu0 0.0
  %1984 = vmatpush1.msra.mxu0 0.0
  %1985 = vmatprep.subr.mxu0 0.0
  %1986 = vmatpush1.msra.mxu0 0.0
  %1987 = vmatprep.subr.mxu0 0.0
  %1988 = vmatpush1.msra.mxu0 0.0
  %1989 = vmatprep.subr.mxu0 0.0
  %1990 = vmatpush1.msra.mxu0 0.0
  %1991 = vmatprep.subr.mxu0 0.0
  %1992 = vmatpush1.msra.mxu0 0.0
  %1993 = vmatprep.subr.mxu0 0.0
  %1994 = vmatpush1.msra.mxu0 0.0
  %1995 = vmatprep.subr.mxu0 0.0
  %1996 = vmatpush1.msra.mxu0 0.0
  %1997 = vmatprep.subr.mxu0 0.0
  %1998 = vmatpush1.msra.mxu0 0.0
  %1999 = vmatprep.subr.mxu0 0.0
  %2000 = vmatpush1.msra.mxu0 0.0
  %2001 = vmatprep.subr.mxu0 0.0
  %2002 = vmatpush1.msra.mxu0 %v67
  %2003 = vmatprep.subr.mxu0 0.0
  %2004 = vmatpush1.msra.mxu0 %v66
  %2005 = vmatprep.subr.mxu0 0.0
  %2006 = vmatpush1.msra.mxu0 %v65
  %2007 = vmatprep.subr.mxu0 0.0
  %2008 = vmatpush1.msra.mxu0 %v64
  %2009 = vmatprep.subr.mxu0 0.0
  %2010 = vmatpush2.msra.mxu0 0.0
  %2011 = vmatprep.subr.mxu0 0.0
  %2012 = vmatpush2.msra.mxu0 0.0
  %2013 = vmatprep.subr.mxu0 0.0
  %2014 = vmatpush2.msra.mxu0 0.0
  %2015 = vmatprep.subr.mxu0 0.0
  %2016 = vmatpush2.msra.mxu0 0.0
  %2017 = vmatprep.subr.mxu0 0.0
  %2018 = vmatpush2.msra.mxu0 0.0
  %2019 = vmatprep.subr.mxu0 0.0
  %2020 = vmatpush2.msra.mxu0 0.0
  %2021 = vmatprep.subr.mxu0 0.0
  %2022 = vmatpush2.msra.mxu0 0.0
  %2023 = vmatprep.subr.mxu0 0.0
  %2024 = vmatpush2.msra.mxu0 0.0
  %2025 = vmatprep.subr.mxu0 0.0
  %2026 = vmatpush2.msra.mxu0 0.0
  %2027 = vmatprep.subr.mxu0 0.0
  %2028 = vmatpush2.msra.mxu0 0.0
  %2029 = vmatprep.subr.mxu0 0.0
  %2030 = vmatpush2.msra.mxu0 0.0
  %2031 = vmatprep.subr.mxu0 0.0
  %2032 = vmatpush2.msra.mxu0 0.0
  %2033 = vmatprep.subr.mxu0 0.0
  %2034 = vmatpush2.msra.mxu0 0.0
  %2035 = vmatprep.subr.mxu0 0.0
  %2036 = vmatpush2.msra.mxu0 0.0
  %2037 = vmatprep.subr.mxu0 0.0
  %2038 = vmatpush2.msra.mxu0 0.0
  %2039 = vmatprep.subr.mxu0 0.0
  %2040 = vmatpush2.msra.mxu0 0.0
  %2041 = vmatprep.mubr.f32.mxu0 0.0
  %2042 = vmatmul.mubr.f32.gmra.mxu0 %v326
  %v2043 = vpop.f32.mrf.mxu0
  %v2044 = vadd.f32 %v1949, %v2043
  %v2045 = vpop.f32.mrf.mxu0
  %2046 = vmatprep.mubr.f32.mxu0 0.0
  %2047 = vmatmul.mubr.f32.gmra.mxu0 %v329
  %v2048 = vpop.f32.mrf.mxu0
  %v2049 = vadd.f32 %v1954, %v2048
  %v2050 = vpop.f32.mrf.mxu0
  %2051 = vmatprep.mubr.f32.mxu0 0.0
  %2052 = vmatmul.mubr.f32.gmra.mxu0 %v332
  %v2053 = vpop.f32.mrf.mxu0
  %v2054 = vadd.f32 %v1959, %v2053
  %v2055 = vpop.f32.mrf.mxu0
  %2056 = vmatprep.mubr.f32.mxu0 0.0
  %2057 = vmatmul.mubr.f32.gmra.mxu0 %v335
  %v2058 = vpop.f32.mrf.mxu0
  %v2059 = vadd.f32 %v1964, %v2058
  %v2060 = vpop.f32.mrf.mxu0
  %2061 = vmatprep.mubr.f32.mxu0 0.0
  %2062 = vmatmul.mubr.f32.gmra.mxu0 %v338
  %v2063 = vpop.f32.mrf.mxu0
  %v2064 = vadd.f32 %v1969, %v2063
  %v2065 = vpop.f32.mrf.mxu0
  %2066 = vmatprep.mubr.f32.mxu0 0.0
  %2067 = vmatmul.mubr.f32.gmra.mxu0 %v341
  %v2068 = vpop.f32.mrf.mxu0
  %v2069 = vadd.f32 %v1974, %v2068
  %v2070 = vpop.f32.mrf.mxu0
  %2071 = vdwg.mxu0
  %2072 = vmatprep.subr.mxu0 0.0
  %2073 = vmatpush1.msra.mxu0 0.0
  %2074 = vmatprep.subr.mxu0 0.0
  %2075 = vmatpush1.msra.mxu0 0.0
  %2076 = vmatprep.subr.mxu0 0.0
  %2077 = vmatpush1.msra.mxu0 0.0
  %2078 = vmatprep.subr.mxu0 0.0
  %2079 = vmatpush1.msra.mxu0 0.0
  %2080 = vmatprep.subr.mxu0 0.0
  %2081 = vmatpush1.msra.mxu0 0.0
  %2082 = vmatprep.subr.mxu0 0.0
  %2083 = vmatpush1.msra.mxu0 0.0
  %2084 = vmatprep.subr.mxu0 0.0
  %2085 = vmatpush1.msra.mxu0 0.0
  %2086 = vmatprep.subr.mxu0 0.0
  %2087 = vmatpush1.msra.mxu0 0.0
  %2088 = vmatprep.subr.mxu0 0.0
  %2089 = vmatpush1.msra.mxu0 0.0
  %2090 = vmatprep.subr.mxu0 0.0
  %2091 = vmatpush1.msra.mxu0 0.0
  %2092 = vmatprep.subr.mxu0 0.0
  %2093 = vmatpush1.msra.mxu0 0.0
  %2094 = vmatprep.subr.mxu0 0.0
  %2095 = vmatpush1.msra.mxu0 0.0
  %2096 = vmatprep.subr.mxu0 0.0
  %2097 = vmatpush1.msra.mxu0 %v83
  %2098 = vmatprep.subr.mxu0 0.0
  %2099 = vmatpush1.msra.mxu0 %v82
  %2100 = vmatprep.subr.mxu0 0.0
  %2101 = vmatpush1.msra.mxu0 %v81
  %2102 = vmatprep.subr.mxu0 0.0
  %2103 = vmatpush1.msra.mxu0 %v80
  %2104 = vmatprep.subr.mxu0 0.0
  %2105 = vmatpush2.msra.mxu0 0.0
  %2106 = vmatprep.subr.mxu0 0.0
  %2107 = vmatpush2.msra.mxu0 0.0
  %2108 = vmatprep.subr.mxu0 0.0
  %2109 = vmatpush2.msra.mxu0 0.0
  %2110 = vmatprep.subr.mxu0 0.0
  %2111 = vmatpush2.msra.mxu0 0.0
  %2112 = vmatprep.subr.mxu0 0.0
  %2113 = vmatpush2.msra.mxu0 0.0
  %2114 = vmatprep.subr.mxu0 0.0
  %2115 = vmatpush2.msra.mxu0 0.0
  %2116 = vmatprep.subr.mxu0 0.0
  %2117 = vmatpush2.msra.mxu0 0.0
  %2118 = vmatprep.subr.mxu0 0.0
  %2119 = vmatpush2.msra.mxu0 0.0
  %2120 = vmatprep.subr.mxu0 0.0
  %2121 = vmatpush2.msra.mxu0 0.0
  %2122 = vmatprep.subr.mxu0 0.0
  %2123 = vmatpush2.msra.mxu0 0.0
  %2124 = vmatprep.subr.mxu0 0.0
  %2125 = vmatpush2.msra.mxu0 0.0
  %2126 = vmatprep.subr.mxu0 0.0
  %2127 = vmatpush2.msra.mxu0 0.0
  %2128 = vmatprep.subr.mxu0 0.0
  %2129 = vmatpush2.msra.mxu0 0.0
  %2130 = vmatprep.subr.mxu0 0.0
  %2131 = vmatpush2.msra.mxu0 0.0
  %2132 = vmatprep.subr.mxu0 0.0
  %2133 = vmatpush2.msra.mxu0 0.0
  %2134 = vmatprep.subr.mxu0 0.0
  %2135 = vmatpush2.msra.mxu0 0.0
  %2136 = vmatprep.mubr.f32.mxu0 0.0
  %2137 = vmatmul.mubr.f32.gmra.mxu0 %v671
  %v2138 = vpop.f32.mrf.mxu0
  %v2139 = vadd.f32 0.0, %v2138
  %v2140 = vpop.f32.mrf.mxu0
  %2141 = vmatprep.mubr.f32.mxu0 0.0
  %2142 = vmatmul.mubr.f32.gmra.mxu0 %v674
  %v2143 = vpop.f32.mrf.mxu0
  %v2144 = vadd.f32 0.0, %v2143
  %v2145 = vpop.f32.mrf.mxu0
  %2146 = vmatprep.mubr.f32.mxu0 0.0
  %2147 = vmatmul.mubr.f32.gmra.mxu0 %v677
  %v2148 = vpop.f32.mrf.mxu0
  %v2149 = vadd.f32 0.0, %v2148
  %v2150 = vpop.f32.mrf.mxu0
  %2151 = vmatprep.mubr.f32.mxu0 0.0
  %2152 = vmatmul.mubr.f32.gmra.mxu0 %v680
  %v2153 = vpop.f32.mrf.mxu0
  %v2154 = vadd.f32 0.0, %v2153
  %v2155 = vpop.f32.mrf.mxu0
  %2156 = vmatprep.mubr.f32.mxu0 0.0
  %2157 = vmatmul.mubr.f32.gmra.mxu0 %v683
  %v2158 = vpop.f32.mrf.mxu0
  %v2159 = vadd.f32 0.0, %v2158
  %v2160 = vpop.f32.mrf.mxu0
  %2161 = vmatprep.mubr.f32.mxu0 0.0
  %2162 = vmatmul.mubr.f32.gmra.mxu0 %v686
  %v2163 = vpop.f32.mrf.mxu0
  %v2164 = vadd.f32 0.0, %v2163
  %v2165 = vpop.f32.mrf.mxu0
  %2166 = vdwg.mxu0
  %v2167 = vadd.f32 %v2044, %v2139
  %v2168 = vadd.f32 %v2049, %v2144
  %v2169 = vadd.f32 %v2054, %v2149
  %v2170 = vadd.f32 %v2059, %v2154
  %v2171 = vadd.f32 %v2064, %v2159
  %v2172 = vadd.f32 %v2069, %v2164
  %2173 = vmatprep.subr.mxu0 0.0
  %2174 = vmatpush1.msra.mxu0 0.0
  %2175 = vmatprep.subr.mxu0 0.0
  %2176 = vmatpush1.msra.mxu0 0.0
  %2177 = vmatprep.subr.mxu0 0.0
  %2178 = vmatpush1.msra.mxu0 0.0
  %2179 = vmatprep.subr.mxu0 0.0
  %2180 = vmatpush1.msra.mxu0 0.0
  %2181 = vmatprep.subr.mxu0 0.0
  %2182 = vmatpush1.msra.mxu0 0.0
  %2183 = vmatprep.subr.mxu0 0.0
  %2184 = vmatpush1.msra.mxu0 0.0
  %2185 = vmatprep.subr.mxu0 0.0
  %2186 = vmatpush1.msra.mxu0 0.0
  %2187 = vmatprep.subr.mxu0 0.0
  %2188 = vmatpush1.msra.mxu0 0.0
  %2189 = vmatprep.subr.mxu0 0.0
  %2190 = vmatpush1.msra.mxu0 0.0
  %2191 = vmatprep.subr.mxu0 0.0
  %2192 = vmatpush1.msra.mxu0 0.0
  %2193 = vmatprep.subr.mxu0 0.0
  %2194 = vmatpush1.msra.mxu0 0.0
  %2195 = vmatprep.subr.mxu0 0.0
  %2196 = vmatpush1.msra.mxu0 0.0
  %2197 = vmatprep.subr.mxu0 0.0
  %2198 = vmatpush1.msra.mxu0 %v91
  %2199 = vmatprep.subr.mxu0 0.0
  %2200 = vmatpush1.msra.mxu0 %v90
  %2201 = vmatprep.subr.mxu0 0.0
  %2202 = vmatpush1.msra.mxu0 %v89
  %2203 = vmatprep.subr.mxu0 0.0
  %2204 = vmatpush1.msra.mxu0 %v88
  %2205 = vmatprep.subr.mxu0 0.0
  %2206 = vmatpush2.msra.mxu0 0.0
  %2207 = vmatprep.subr.mxu0 0.0
  %2208 = vmatpush2.msra.mxu0 0.0
  %2209 = vmatprep.subr.mxu0 0.0
  %2210 = vmatpush2.msra.mxu0 0.0
  %2211 = vmatprep.subr.mxu0 0.0
  %2212 = vmatpush2.msra.mxu0 0.0
  %2213 = vmatprep.subr.mxu0 0.0
  %2214 = vmatpush2.msra.mxu0 0.0
  %2215 = vmatprep.subr.mxu0 0.0
  %2216 = vmatpush2.msra.mxu0 0.0
  %2217 = vmatprep.subr.mxu0 0.0
  %2218 = vmatpush2.msra.mxu0 0.0
  %2219 = vmatprep.subr.mxu0 0.0
  %2220 = vmatpush2.msra.mxu0 0.0
  %2221 = vmatprep.subr.mxu0 0.0
  %2222 = vmatpush2.msra.mxu0 0.0
  %2223 = vmatprep.subr.mxu0 0.0
  %2224 = vmatpush2.msra.mxu0 0.0
  %2225 = vmatprep.subr.mxu0 0.0
  %2226 = vmatpush2.msra.mxu0 0.0
  %2227 = vmatprep.subr.mxu0 0.0
  %2228 = vmatpush2.msra.mxu0 0.0
  %2229 = vmatprep.subr.mxu0 0.0
  %2230 = vmatpush2.msra.mxu0 0.0
  %2231 = vmatprep.subr.mxu0 0.0
  %2232 = vmatpush2.msra.mxu0 0.0
  %2233 = vmatprep.subr.mxu0 0.0
  %2234 = vmatpush2.msra.mxu0 0.0
  %2235 = vmatprep.subr.mxu0 0.0
  %2236 = vmatpush2.msra.mxu0 0.0
  %2237 = vmatprep.mubr.f32.mxu0 0.0
  %2238 = vmatmul.mubr.f32.gmra.mxu0 %v442
  %v2239 = vpop.f32.mrf.mxu0
  %v2240 = vadd.f32 0.0, %v2239
  %v2241 = vpop.f32.mrf.mxu0
  %2242 = vmatprep.mubr.f32.mxu0 0.0
  %2243 = vmatmul.mubr.f32.gmra.mxu0 %v445
  %v2244 = vpop.f32.mrf.mxu0
  %v2245 = vadd.f32 0.0, %v2244
  %v2246 = vpop.f32.mrf.mxu0
  %2247 = vmatprep.mubr.f32.mxu0 0.0
  %2248 = vmatmul.mubr.f32.gmra.mxu0 %v448
  %v2249 = vpop.f32.mrf.mxu0
  %v2250 = vadd.f32 0.0, %v2249
  %v2251 = vpop.f32.mrf.mxu0
  %2252 = vmatprep.mubr.f32.mxu0 0.0
  %2253 = vmatmul.mubr.f32.gmra.mxu0 %v451
  %v2254 = vpop.f32.mrf.mxu0
  %v2255 = vadd.f32 0.0, %v2254
  %v2256 = vpop.f32.mrf.mxu0
  %2257 = vmatprep.mubr.f32.mxu0 0.0
  %2258 = vmatmul.mubr.f32.gmra.mxu0 %v454
  %v2259 = vpop.f32.mrf.mxu0
  %v2260 = vadd.f32 0.0, %v2259
  %v2261 = vpop.f32.mrf.mxu0
  %2262 = vmatprep.mubr.f32.mxu0 0.0
  %2263 = vmatmul.mubr.f32.gmra.mxu0 %v790
  %v2264 = vpop.f32.mrf.mxu0
  %v2265 = vadd.f32 0.0, %v2264
  %v2266 = vpop.f32.mrf.mxu0
  %2267 = vdwg.mxu0
  %v2268 = vadd.f32 %v2167, %v2240
  %v2269 = vadd.f32 %v2168, %v2245
  %v2270 = vadd.f32 %v2169, %v2250
  %v2271 = vadd.f32 %v2170, %v2255
  %v2272 = vadd.f32 %v2171, %v2260
  %v2273 = vadd.f32 %v2172, %v2265
  %2274 = vmatprep.subr.mxu0 0.0
  %2275 = vmatpush1.msra.mxu0 0.0
  %2276 = vmatprep.subr.mxu0 0.0
  %2277 = vmatpush1.msra.mxu0 0.0
  %2278 = vmatprep.subr.mxu0 0.0
  %2279 = vmatpush1.msra.mxu0 0.0
  %2280 = vmatprep.subr.mxu0 0.0
  %2281 = vmatpush1.msra.mxu0 0.0
  %2282 = vmatprep.subr.mxu0 0.0
  %2283 = vmatpush1.msra.mxu0 0.0
  %2284 = vmatprep.subr.mxu0 0.0
  %2285 = vmatpush1.msra.mxu0 0.0
  %2286 = vmatprep.subr.mxu0 0.0
  %2287 = vmatpush1.msra.mxu0 0.0
  %2288 = vmatprep.subr.mxu0 0.0
  %2289 = vmatpush1.msra.mxu0 0.0
  %2290 = vmatprep.subr.mxu0 0.0
  %2291 = vmatpush1.msra.mxu0 0.0
  %2292 = vmatprep.subr.mxu0 0.0
  %2293 = vmatpush1.msra.mxu0 0.0
  %2294 = vmatprep.subr.mxu0 0.0
  %2295 = vmatpush1.msra.mxu0 0.0
  %2296 = vmatprep.subr.mxu0 0.0
  %2297 = vmatpush1.msra.mxu0 0.0
  %2298 = vmatprep.subr.mxu0 0.0
  %2299 = vmatpush1.msra.mxu0 %v99
  %2300 = vmatprep.subr.mxu0 0.0
  %2301 = vmatpush1.msra.mxu0 %v98
  %2302 = vmatprep.subr.mxu0 0.0
  %2303 = vmatpush1.msra.mxu0 %v97
  %2304 = vmatprep.subr.mxu0 0.0
  %2305 = vmatpush1.msra.mxu0 %v96
  %2306 = vmatprep.subr.mxu0 0.0
  %2307 = vmatpush2.msra.mxu0 0.0
  %2308 = vmatprep.subr.mxu0 0.0
  %2309 = vmatpush2.msra.mxu0 0.0
  %2310 = vmatprep.subr.mxu0 0.0
  %2311 = vmatpush2.msra.mxu0 0.0
  %2312 = vmatprep.subr.mxu0 0.0
  %2313 = vmatpush2.msra.mxu0 0.0
  %2314 = vmatprep.subr.mxu0 0.0
  %2315 = vmatpush2.msra.mxu0 0.0
  %2316 = vmatprep.subr.mxu0 0.0
  %2317 = vmatpush2.msra.mxu0 0.0
  %2318 = vmatprep.subr.mxu0 0.0
  %2319 = vmatpush2.msra.mxu0 0.0
  %2320 = vmatprep.subr.mxu0 0.0
  %2321 = vmatpush2.msra.mxu0 0.0
  %2322 = vmatprep.subr.mxu0 0.0
  %2323 = vmatpush2.msra.mxu0 0.0
  %2324 = vmatprep.subr.mxu0 0.0
  %2325 = vmatpush2.msra.mxu0 0.0
  %2326 = vmatprep.subr.mxu0 0.0
  %2327 = vmatpush2.msra.mxu0 0.0
  %2328 = vmatprep.subr.mxu0 0.0
  %2329 = vmatpush2.msra.mxu0 0.0
  %2330 = vmatprep.subr.mxu0 0.0
  %2331 = vmatpush2.msra.mxu0 0.0
  %2332 = vmatprep.subr.mxu0 0.0
  %2333 = vmatpush2.msra.mxu0 0.0
  %2334 = vmatprep.subr.mxu0 0.0
  %2335 = vmatpush2.msra.mxu0 0.0
  %2336 = vmatprep.subr.mxu0 0.0
  %2337 = vmatpush2.msra.mxu0 0.0
  %2338 = vmatprep.mubr.f32.mxu0 0.0
  %2339 = vmatmul.mubr.f32.gmra.mxu0 %v329
  %v2340 = vpop.f32.mrf.mxu0
  %v2341 = vadd.f32 0.0, %v2340
  %v2342 = vpop.f32.mrf.mxu0
  %2343 = vmatprep.mubr.f32.mxu0 0.0
  %2344 = vmatmul.mubr.f32.gmra.mxu0 %v332
  %v2345 = vpop.f32.mrf.mxu0
  %v2346 = vadd.f32 0.0, %v2345
  %v2347 = vpop.f32.mrf.mxu0
  %2348 = vmatprep.mubr.f32.mxu0 0.0
  %2349 = vmatmul.mubr.f32.gmra.mxu0 %v335
  %v2350 = vpop.f32.mrf.mxu0
  %v2351 = vadd.f32 0.0, %v2350
  %v2352 = vpop.f32.mrf.mxu0
  %2353 = vmatprep.mubr.f32.mxu0 0.0
  %2354 = vmatmul.mubr.f32.gmra.mxu0 %v338
  %v2355 = vpop.f32.mrf.mxu0
  %v2356 = vadd.f32 0.0, %v2355
  %v2357 = vpop.f32.mrf.mxu0
  %2358 = vmatprep.mubr.f32.mxu0 0.0
  %2359 = vmatmul.mubr.f32.gmra.mxu0 %v341
  %v2360 = vpop.f32.mrf.mxu0
  %v2361 = vadd.f32 0.0, %v2360
  %v2362 = vpop.f32.mrf.mxu0
  %2363 = vmatprep.mubr.f32.mxu0 0.0
  %2364 = vmatmul.mubr.f32.gmra.mxu0 %v1779
  %v2365 = vpop.f32.mrf.mxu0
  %v2366 = vadd.f32 0.0, %v2365
  %v2367 = vpop.f32.mrf.mxu0
  %2368 = vdwg.mxu0
  %v2369 = vadd.f32 %v2268, %v2341
  %v2370 = vadd.f32 %v2269, %v2346
  %v2371 = vadd.f32 %v2270, %v2351
  %v2372 = vadd.f32 %v2271, %v2356
  %v2373 = vadd.f32 %v2272, %v2361
  %v2374 = vadd.f32 %v2273, %v2366
  %v2375 = vmax.f32 %v887, %v1380
  %v2376 = vmax.f32 %v888, %v1381
  %v2377 = vmax.f32 %v889, %v1382
  %v2378 = vmax.f32 %v890, %v1383
  %v2379 = vmax.f32 %v891, %v1384
  %v2380 = vmax.f32 %v892, %v1385
  %v2381 = vmax.f32 %v1876, %v2369
  %v2382 = vmax.f32 %v1877, %v2370
  %v2383 = vmax.f32 %v1878, %v2371
  %v2384 = vmax.f32 %v1879, %v2372
  %v2385 = vmax.f32 %v1880, %v2373
  %v2386 = vmax.f32 %v1881, %v2374
  %v2387 = vmax.f32 %v2375, %v2381
  %v2388 = vmax.f32 %v2376, %v2382
  %v2389 = vmax.f32 %v2377, %v2383
  %v2390 = vmax.f32 %v2378, %v2384
  %v2391 = vmax.f32 %v2379, %v2385
  %v2392 = vmax.f32 %v2380, %v2386
  %v2393 = vld [vmem:[%s2] sm:$0x1]
  %v2395 = vlaneseq
  %v2396 = vshrl.u32 %v2395, 7
  %v2397 = vsub.s32 0, %v2396
  %v2398 = vrot.slane %v2393, %v2397
  %v2400 = vadd.f32 %v2387, %v2398
  %v2401 = vadd.f32 %v2388, %v2398
  %v2402 = vadd.f32 %v2389, %v2398
  %v2403 = vadd.f32 %v2390, %v2398
  %v2404 = vadd.f32 %v2391, %v2398
  %v2405 = vadd.f32 %v2392, %v2398
  %v2406 = vmax.f32 %v2400, 0.0
  %v2407 = vmax.f32 %v2401, 0.0
  %v2408 = vmax.f32 %v2402, 0.0
  %v2409 = vmax.f32 %v2403, 0.0
  %v2410 = vmax.f32 %v2404, 0.0
  %v2411 = vmax.f32 %v2405, 0.0
  %2412 = vmatprep.subr.mxu0 0.0
  %2413 = vmatpush1.msra.mxu0 0.0
  %2414 = vmatprep.subr.mxu0 0.0
  %2415 = vmatpush1.msra.mxu0 0.0
  %2416 = vmatprep.subr.mxu0 0.0
  %2417 = vmatpush1.msra.mxu0 0.0
  %2418 = vmatprep.subr.mxu0 0.0
  %2419 = vmatpush1.msra.mxu0 0.0
  %2420 = vmatprep.subr.mxu0 0.0
  %2421 = vmatpush1.msra.mxu0 0.0
  %2422 = vmatprep.subr.mxu0 0.0
  %2423 = vmatpush1.msra.mxu0 0.0
  %2424 = vmatprep.subr.mxu0 0.0
  %2425 = vmatpush1.msra.mxu0 0.0
  %2426 = vmatprep.subr.mxu0 0.0
  %2427 = vmatpush1.msra.mxu0 0.0
  %2428 = vmatprep.subr.mxu0 0.0
  %2429 = vmatpush1.msra.mxu0 0.0
  %2430 = vmatprep.subr.mxu0 0.0
  %2431 = vmatpush1.msra.mxu0 0.0
  %2432 = vmatprep.subr.mxu0 0.0
  %2433 = vmatpush1.msra.mxu0 0.0
  %2434 = vmatprep.subr.mxu0 0.0
  %2435 = vmatpush1.msra.mxu0 0.0
  %2436 = vmatprep.subr.mxu0 0.0
  %2437 = vmatpush1.msra.mxu0 %v71
  %2438 = vmatprep.subr.mxu0 0.0
  %2439 = vmatpush1.msra.mxu0 %v70
  %2440 = vmatprep.subr.mxu0 0.0
  %2441 = vmatpush1.msra.mxu0 %v69
  %2442 = vmatprep.subr.mxu0 0.0
  %2443 = vmatpush1.msra.mxu0 %v68
  %2444 = vmatprep.subr.mxu0 0.0
  %2445 = vmatpush2.msra.mxu0 0.0
  %2446 = vmatprep.subr.mxu0 0.0
  %2447 = vmatpush2.msra.mxu0 0.0
  %2448 = vmatprep.subr.mxu0 0.0
  %2449 = vmatpush2.msra.mxu0 0.0
  %2450 = vmatprep.subr.mxu0 0.0
  %2451 = vmatpush2.msra.mxu0 0.0
  %2452 = vmatprep.subr.mxu0 0.0
  %2453 = vmatpush2.msra.mxu0 0.0
  %2454 = vmatprep.subr.mxu0 0.0
  %2455 = vmatpush2.msra.mxu0 0.0
  %2456 = vmatprep.subr.mxu0 0.0
  %2457 = vmatpush2.msra.mxu0 0.0
  %2458 = vmatprep.subr.mxu0 0.0
  %2459 = vmatpush2.msra.mxu0 0.0
  %2460 = vmatprep.subr.mxu0 0.0
  %2461 = vmatpush2.msra.mxu0 0.0
  %2462 = vmatprep.subr.mxu0 0.0
  %2463 = vmatpush2.msra.mxu0 0.0
  %2464 = vmatprep.subr.mxu0 0.0
  %2465 = vmatpush2.msra.mxu0 0.0
  %2466 = vmatprep.subr.mxu0 0.0
  %2467 = vmatpush2.msra.mxu0 0.0
  %2468 = vmatprep.subr.mxu0 0.0
  %2469 = vmatpush2.msra.mxu0 0.0
  %2470 = vmatprep.subr.mxu0 0.0
  %2471 = vmatpush2.msra.mxu0 0.0
  %2472 = vmatprep.subr.mxu0 0.0
  %2473 = vmatpush2.msra.mxu0 0.0
  %2474 = vmatprep.subr.mxu0 0.0
  %2475 = vmatpush2.msra.mxu0 0.0
  %2476 = vmatprep.mubr.f32.mxu0 0.0
  %2477 = vmatmul.mubr.f32.gmra.mxu0 %v671
  %v2478 = vpop.f32.mrf.mxu0
  %v2479 = vadd.f32 0.0, %v2478
  %v2480 = vpop.f32.mrf.mxu0
  %2481 = vmatprep.mubr.f32.mxu0 0.0
  %2482 = vmatmul.mubr.f32.gmra.mxu0 %v674
  %v2483 = vpop.f32.mrf.mxu0
  %v2484 = vadd.f32 0.0, %v2483
  %v2485 = vpop.f32.mrf.mxu0
  %2486 = vmatprep.mubr.f32.mxu0 0.0
  %2487 = vmatmul.mubr.f32.gmra.mxu0 %v677
  %v2488 = vpop.f32.mrf.mxu0
  %v2489 = vadd.f32 0.0, %v2488
  %v2490 = vpop.f32.mrf.mxu0
  %2491 = vmatprep.mubr.f32.mxu0 0.0
  %2492 = vmatmul.mubr.f32.gmra.mxu0 %v680
  %v2493 = vpop.f32.mrf.mxu0
  %v2494 = vadd.f32 0.0, %v2493
  %v2495 = vpop.f32.mrf.mxu0
  %2496 = vmatprep.mubr.f32.mxu0 0.0
  %2497 = vmatmul.mubr.f32.gmra.mxu0 %v683
  %v2498 = vpop.f32.mrf.mxu0
  %v2499 = vadd.f32 0.0, %v2498
  %v2500 = vpop.f32.mrf.mxu0
  %2501 = vmatprep.mubr.f32.mxu0 0.0
  %2502 = vmatmul.mubr.f32.gmra.mxu0 %v686
  %v2503 = vpop.f32.mrf.mxu0
  %v2504 = vadd.f32 0.0, %v2503
  %v2505 = vpop.f32.mrf.mxu0
  %2506 = vdwg.mxu0
  %2507 = vmatprep.subr.mxu0 0.0
  %2508 = vmatpush1.msra.mxu0 0.0
  %2509 = vmatprep.subr.mxu0 0.0
  %2510 = vmatpush1.msra.mxu0 0.0
  %2511 = vmatprep.subr.mxu0 0.0
  %2512 = vmatpush1.msra.mxu0 0.0
  %2513 = vmatprep.subr.mxu0 0.0
  %2514 = vmatpush1.msra.mxu0 0.0
  %2515 = vmatprep.subr.mxu0 0.0
  %2516 = vmatpush1.msra.mxu0 0.0
  %2517 = vmatprep.subr.mxu0 0.0
  %2518 = vmatpush1.msra.mxu0 0.0
  %2519 = vmatprep.subr.mxu0 0.0
  %2520 = vmatpush1.msra.mxu0 0.0
  %2521 = vmatprep.subr.mxu0 0.0
  %2522 = vmatpush1.msra.mxu0 0.0
  %2523 = vmatprep.subr.mxu0 0.0
  %2524 = vmatpush1.msra.mxu0 0.0
  %2525 = vmatprep.subr.mxu0 0.0
  %2526 = vmatpush1.msra.mxu0 0.0
  %2527 = vmatprep.subr.mxu0 0.0
  %2528 = vmatpush1.msra.mxu0 0.0
  %2529 = vmatprep.subr.mxu0 0.0
  %2530 = vmatpush1.msra.mxu0 0.0
  %2531 = vmatprep.subr.mxu0 0.0
  %2532 = vmatpush1.msra.mxu0 %v63
  %2533 = vmatprep.subr.mxu0 0.0
  %2534 = vmatpush1.msra.mxu0 %v62
  %2535 = vmatprep.subr.mxu0 0.0
  %2536 = vmatpush1.msra.mxu0 %v61
  %2537 = vmatprep.subr.mxu0 0.0
  %2538 = vmatpush1.msra.mxu0 %v60
  %2539 = vmatprep.subr.mxu0 0.0
  %2540 = vmatpush2.msra.mxu0 0.0
  %2541 = vmatprep.subr.mxu0 0.0
  %2542 = vmatpush2.msra.mxu0 0.0
  %2543 = vmatprep.subr.mxu0 0.0
  %2544 = vmatpush2.msra.mxu0 0.0
  %2545 = vmatprep.subr.mxu0 0.0
  %2546 = vmatpush2.msra.mxu0 0.0
  %2547 = vmatprep.subr.mxu0 0.0
  %2548 = vmatpush2.msra.mxu0 0.0
  %2549 = vmatprep.subr.mxu0 0.0
  %2550 = vmatpush2.msra.mxu0 0.0
  %2551 = vmatprep.subr.mxu0 0.0
  %2552 = vmatpush2.msra.mxu0 0.0
  %2553 = vmatprep.subr.mxu0 0.0
  %2554 = vmatpush2.msra.mxu0 0.0
  %2555 = vmatprep.subr.mxu0 0.0
  %2556 = vmatpush2.msra.mxu0 0.0
  %2557 = vmatprep.subr.mxu0 0.0
  %2558 = vmatpush2.msra.mxu0 0.0
  %2559 = vmatprep.subr.mxu0 0.0
  %2560 = vmatpush2.msra.mxu0 0.0
  %2561 = vmatprep.subr.mxu0 0.0
  %2562 = vmatpush2.msra.mxu0 0.0
  %2563 = vmatprep.subr.mxu0 0.0
  %2564 = vmatpush2.msra.mxu0 0.0
  %2565 = vmatprep.subr.mxu0 0.0
  %2566 = vmatpush2.msra.mxu0 0.0
  %2567 = vmatprep.subr.mxu0 0.0
  %2568 = vmatpush2.msra.mxu0 0.0
  %2569 = vmatprep.subr.mxu0 0.0
  %2570 = vmatpush2.msra.mxu0 0.0
  %2571 = vmatprep.mubr.f32.mxu0 0.0
  %2572 = vmatmul.mubr.f32.gmra.mxu0 %v552
  %v2573 = vpop.f32.mrf.mxu0
  %v2574 = vadd.f32 %v2479, %v2573
  %v2575 = vpop.f32.mrf.mxu0
  %2576 = vmatprep.mubr.f32.mxu0 0.0
  %2577 = vmatmul.mubr.f32.gmra.mxu0 %v555
  %v2578 = vpop.f32.mrf.mxu0
  %v2579 = vadd.f32 %v2484, %v2578
  %v2580 = vpop.f32.mrf.mxu0
  %2581 = vmatprep.mubr.f32.mxu0 0.0
  %2582 = vmatmul.mubr.f32.gmra.mxu0 %v558
  %v2583 = vpop.f32.mrf.mxu0
  %v2584 = vadd.f32 %v2489, %v2583
  %v2585 = vpop.f32.mrf.mxu0
  %2586 = vmatprep.mubr.f32.mxu0 0.0
  %2587 = vmatmul.mubr.f32.gmra.mxu0 %v561
  %v2588 = vpop.f32.mrf.mxu0
  %v2589 = vadd.f32 %v2494, %v2588
  %v2590 = vpop.f32.mrf.mxu0
  %2591 = vmatprep.mubr.f32.mxu0 0.0
  %2592 = vmatmul.mubr.f32.gmra.mxu0 %v564
  %v2593 = vpop.f32.mrf.mxu0
  %v2594 = vadd.f32 %v2499, %v2593
  %v2595 = vpop.f32.mrf.mxu0
  %2596 = vmatprep.mubr.f32.mxu0 0.0
  %2597 = vmatmul.mubr.f32.gmra.mxu0 %v567
  %v2598 = vpop.f32.mrf.mxu0
  %v2599 = vadd.f32 %v2504, %v2598
  %v2600 = vpop.f32.mrf.mxu0
  %2601 = vdwg.mxu0
  %2602 = vmatprep.subr.mxu0 0.0
  %2603 = vmatpush1.msra.mxu0 0.0
  %2604 = vmatprep.subr.mxu0 0.0
  %2605 = vmatpush1.msra.mxu0 0.0
  %2606 = vmatprep.subr.mxu0 0.0
  %2607 = vmatpush1.msra.mxu0 0.0
  %2608 = vmatprep.subr.mxu0 0.0
  %2609 = vmatpush1.msra.mxu0 0.0
  %2610 = vmatprep.subr.mxu0 0.0
  %2611 = vmatpush1.msra.mxu0 0.0
  %2612 = vmatprep.subr.mxu0 0.0
  %2613 = vmatpush1.msra.mxu0 0.0
  %2614 = vmatprep.subr.mxu0 0.0
  %2615 = vmatpush1.msra.mxu0 0.0
  %2616 = vmatprep.subr.mxu0 0.0
  %2617 = vmatpush1.msra.mxu0 0.0
  %2618 = vmatprep.subr.mxu0 0.0
  %2619 = vmatpush1.msra.mxu0 0.0
  %2620 = vmatprep.subr.mxu0 0.0
  %2621 = vmatpush1.msra.mxu0 0.0
  %2622 = vmatprep.subr.mxu0 0.0
  %2623 = vmatpush1.msra.mxu0 0.0
  %2624 = vmatprep.subr.mxu0 0.0
  %2625 = vmatpush1.msra.mxu0 0.0
  %2626 = vmatprep.subr.mxu0 0.0
  %2627 = vmatpush1.msra.mxu0 %v79
  %2628 = vmatprep.subr.mxu0 0.0
  %2629 = vmatpush1.msra.mxu0 %v78
  %2630 = vmatprep.subr.mxu0 0.0
  %2631 = vmatpush1.msra.mxu0 %v77
  %2632 = vmatprep.subr.mxu0 0.0
  %2633 = vmatpush1.msra.mxu0 %v76
  %2634 = vmatprep.subr.mxu0 0.0
  %2635 = vmatpush2.msra.mxu0 0.0
  %2636 = vmatprep.subr.mxu0 0.0
  %2637 = vmatpush2.msra.mxu0 0.0
  %2638 = vmatprep.subr.mxu0 0.0
  %2639 = vmatpush2.msra.mxu0 0.0
  %2640 = vmatprep.subr.mxu0 0.0
  %2641 = vmatpush2.msra.mxu0 0.0
  %2642 = vmatprep.subr.mxu0 0.0
  %2643 = vmatpush2.msra.mxu0 0.0
  %2644 = vmatprep.subr.mxu0 0.0
  %2645 = vmatpush2.msra.mxu0 0.0
  %2646 = vmatprep.subr.mxu0 0.0
  %2647 = vmatpush2.msra.mxu0 0.0
  %2648 = vmatprep.subr.mxu0 0.0
  %2649 = vmatpush2.msra.mxu0 0.0
  %2650 = vmatprep.subr.mxu0 0.0
  %2651 = vmatpush2.msra.mxu0 0.0
  %2652 = vmatprep.subr.mxu0 0.0
  %2653 = vmatpush2.msra.mxu0 0.0
  %2654 = vmatprep.subr.mxu0 0.0
  %2655 = vmatpush2.msra.mxu0 0.0
  %2656 = vmatprep.subr.mxu0 0.0
  %2657 = vmatpush2.msra.mxu0 0.0
  %2658 = vmatprep.subr.mxu0 0.0
  %2659 = vmatpush2.msra.mxu0 0.0
  %2660 = vmatprep.subr.mxu0 0.0
  %2661 = vmatpush2.msra.mxu0 0.0
  %2662 = vmatprep.subr.mxu0 0.0
  %2663 = vmatpush2.msra.mxu0 0.0
  %2664 = vmatprep.subr.mxu0 0.0
  %2665 = vmatpush2.msra.mxu0 0.0
  %2666 = vmatprep.mubr.f32.mxu0 0.0
  %2667 = vmatmul.mubr.f32.gmra.mxu0 %v442
  %v2668 = vpop.f32.mrf.mxu0
  %v2669 = vadd.f32 0.0, %v2668
  %v2670 = vpop.f32.mrf.mxu0
  %2671 = vmatprep.mubr.f32.mxu0 0.0
  %2672 = vmatmul.mubr.f32.gmra.mxu0 %v445
  %v2673 = vpop.f32.mrf.mxu0
  %v2674 = vadd.f32 0.0, %v2673
  %v2675 = vpop.f32.mrf.mxu0
  %2676 = vmatprep.mubr.f32.mxu0 0.0
  %2677 = vmatmul.mubr.f32.gmra.mxu0 %v448
  %v2678 = vpop.f32.mrf.mxu0
  %v2679 = vadd.f32 0.0, %v2678
  %v2680 = vpop.f32.mrf.mxu0
  %2681 = vmatprep.mubr.f32.mxu0 0.0
  %2682 = vmatmul.mubr.f32.gmra.mxu0 %v451
  %v2683 = vpop.f32.mrf.mxu0
  %v2684 = vadd.f32 0.0, %v2683
  %v2685 = vpop.f32.mrf.mxu0
  %2686 = vmatprep.mubr.f32.mxu0 0.0
  %2687 = vmatmul.mubr.f32.gmra.mxu0 %v454
  %v2688 = vpop.f32.mrf.mxu0
  %v2689 = vadd.f32 0.0, %v2688
  %v2690 = vpop.f32.mrf.mxu0
  %2691 = vmatprep.mubr.f32.mxu0 0.0
  %2692 = vmatmul.mubr.f32.gmra.mxu0 %v790
  %v2693 = vpop.f32.mrf.mxu0
  %v2694 = vadd.f32 0.0, %v2693
  %v2695 = vpop.f32.mrf.mxu0
  %2696 = vdwg.mxu0
  %v2697 = vadd.f32 %v2574, %v2669
  %v2698 = vadd.f32 %v2579, %v2674
  %v2699 = vadd.f32 %v2584, %v2679
  %v2700 = vadd.f32 %v2589, %v2684
  %v2701 = vadd.f32 %v2594, %v2689
  %v2702 = vadd.f32 %v2599, %v2694
  %2703 = vmatprep.subr.mxu0 0.0
  %2704 = vmatpush1.msra.mxu0 0.0
  %2705 = vmatprep.subr.mxu0 0.0
  %2706 = vmatpush1.msra.mxu0 0.0
  %2707 = vmatprep.subr.mxu0 0.0
  %2708 = vmatpush1.msra.mxu0 0.0
  %2709 = vmatprep.subr.mxu0 0.0
  %2710 = vmatpush1.msra.mxu0 0.0
  %2711 = vmatprep.subr.mxu0 0.0
  %2712 = vmatpush1.msra.mxu0 0.0
  %2713 = vmatprep.subr.mxu0 0.0
  %2714 = vmatpush1.msra.mxu0 0.0
  %2715 = vmatprep.subr.mxu0 0.0
  %2716 = vmatpush1.msra.mxu0 0.0
  %2717 = vmatprep.subr.mxu0 0.0
  %2718 = vmatpush1.msra.mxu0 0.0
  %2719 = vmatprep.subr.mxu0 0.0
  %2720 = vmatpush1.msra.mxu0 0.0
  %2721 = vmatprep.subr.mxu0 0.0
  %2722 = vmatpush1.msra.mxu0 0.0
  %2723 = vmatprep.subr.mxu0 0.0
  %2724 = vmatpush1.msra.mxu0 0.0
  %2725 = vmatprep.subr.mxu0 0.0
  %2726 = vmatpush1.msra.mxu0 0.0
  %2727 = vmatprep.subr.mxu0 0.0
  %2728 = vmatpush1.msra.mxu0 %v87
  %2729 = vmatprep.subr.mxu0 0.0
  %2730 = vmatpush1.msra.mxu0 %v86
  %2731 = vmatprep.subr.mxu0 0.0
  %2732 = vmatpush1.msra.mxu0 %v85
  %2733 = vmatprep.subr.mxu0 0.0
  %2734 = vmatpush1.msra.mxu0 %v84
  %2735 = vmatprep.subr.mxu0 0.0
  %2736 = vmatpush2.msra.mxu0 0.0
  %2737 = vmatprep.subr.mxu0 0.0
  %2738 = vmatpush2.msra.mxu0 0.0
  %2739 = vmatprep.subr.mxu0 0.0
  %2740 = vmatpush2.msra.mxu0 0.0
  %2741 = vmatprep.subr.mxu0 0.0
  %2742 = vmatpush2.msra.mxu0 0.0
  %2743 = vmatprep.subr.mxu0 0.0
  %2744 = vmatpush2.msra.mxu0 0.0
  %2745 = vmatprep.subr.mxu0 0.0
  %2746 = vmatpush2.msra.mxu0 0.0
  %2747 = vmatprep.subr.mxu0 0.0
  %2748 = vmatpush2.msra.mxu0 0.0
  %2749 = vmatprep.subr.mxu0 0.0
  %2750 = vmatpush2.msra.mxu0 0.0
  %2751 = vmatprep.subr.mxu0 0.0
  %2752 = vmatpush2.msra.mxu0 0.0
  %2753 = vmatprep.subr.mxu0 0.0
  %2754 = vmatpush2.msra.mxu0 0.0
  %2755 = vmatprep.subr.mxu0 0.0
  %2756 = vmatpush2.msra.mxu0 0.0
  %2757 = vmatprep.subr.mxu0 0.0
  %2758 = vmatpush2.msra.mxu0 0.0
  %2759 = vmatprep.subr.mxu0 0.0
  %2760 = vmatpush2.msra.mxu0 0.0
  %2761 = vmatprep.subr.mxu0 0.0
  %2762 = vmatpush2.msra.mxu0 0.0
  %2763 = vmatprep.subr.mxu0 0.0
  %2764 = vmatpush2.msra.mxu0 0.0
  %2765 = vmatprep.subr.mxu0 0.0
  %2766 = vmatpush2.msra.mxu0 0.0
  %2767 = vmatprep.mubr.f32.mxu0 0.0
  %2768 = vmatmul.mubr.f32.gmra.mxu0 %v329
  %v2769 = vpop.f32.mrf.mxu0
  %v2770 = vadd.f32 0.0, %v2769
  %v2771 = vpop.f32.mrf.mxu0
  %2772 = vmatprep.mubr.f32.mxu0 0.0
  %2773 = vmatmul.mubr.f32.gmra.mxu0 %v332
  %v2774 = vpop.f32.mrf.mxu0
  %v2775 = vadd.f32 0.0, %v2774
  %v2776 = vpop.f32.mrf.mxu0
  %2777 = vmatprep.mubr.f32.mxu0 0.0
  %2778 = vmatmul.mubr.f32.gmra.mxu0 %v335
  %v2779 = vpop.f32.mrf.mxu0
  %v2780 = vadd.f32 0.0, %v2779
  %v2781 = vpop.f32.mrf.mxu0
  %2782 = vmatprep.mubr.f32.mxu0 0.0
  %2783 = vmatmul.mubr.f32.gmra.mxu0 %v338
  %v2784 = vpop.f32.mrf.mxu0
  %v2785 = vadd.f32 0.0, %v2784
  %v2786 = vpop.f32.mrf.mxu0
  %2787 = vmatprep.mubr.f32.mxu0 0.0
  %2788 = vmatmul.mubr.f32.gmra.mxu0 %v341
  %v2789 = vpop.f32.mrf.mxu0
  %v2790 = vadd.f32 0.0, %v2789
  %v2791 = vpop.f32.mrf.mxu0
  %2792 = vmatprep.mubr.f32.mxu0 0.0
  %2793 = vmatmul.mubr.f32.gmra.mxu0 %v1779
  %v2794 = vpop.f32.mrf.mxu0
  %v2795 = vadd.f32 0.0, %v2794
  %v2796 = vpop.f32.mrf.mxu0
  %2797 = vdwg.mxu0
  %v2798 = vadd.f32 %v2697, %v2770
  %v2799 = vadd.f32 %v2698, %v2775
  %v2800 = vadd.f32 %v2699, %v2780
  %v2801 = vadd.f32 %v2700, %v2785
  %v2802 = vadd.f32 %v2701, %v2790
  %v2803 = vadd.f32 %v2702, %v2795
  %v2805 = vsel %vm324, %v52, 0
  %2807 = vmatprep.subr.mxu0 0.0
  %2808 = vmatpush1.msra.mxu0 0.0
  %2809 = vmatprep.subr.mxu0 0.0
  %2810 = vmatpush1.msra.mxu0 0.0
  %2811 = vmatprep.subr.mxu0 0.0
  %2812 = vmatpush1.msra.mxu0 0.0
  %2813 = vmatprep.subr.mxu0 0.0
  %2814 = vmatpush1.msra.mxu0 0.0
  %2815 = vmatprep.subr.mxu0 0.0
  %2816 = vmatpush1.msra.mxu0 0.0
  %2817 = vmatprep.subr.mxu0 0.0
  %2818 = vmatpush1.msra.mxu0 0.0
  %2819 = vmatprep.subr.mxu0 0.0
  %2820 = vmatpush1.msra.mxu0 0.0
  %2821 = vmatprep.subr.mxu0 0.0
  %2822 = vmatpush1.msra.mxu0 0.0
  %2823 = vmatprep.subr.mxu0 0.0
  %2824 = vmatpush1.msra.mxu0 0.0
  %2825 = vmatprep.subr.mxu0 0.0
  %2826 = vmatpush1.msra.mxu0 0.0
  %2827 = vmatprep.subr.mxu0 0.0
  %2828 = vmatpush1.msra.mxu0 0.0
  %2829 = vmatprep.subr.mxu0 0.0
  %2830 = vmatpush1.msra.mxu0 0.0
  %2831 = vmatprep.subr.mxu0 0.0
  %2832 = vmatpush1.msra.mxu0 %v95
  %2833 = vmatprep.subr.mxu0 0.0
  %2834 = vmatpush1.msra.mxu0 %v94
  %2835 = vmatprep.subr.mxu0 0.0
  %2836 = vmatpush1.msra.mxu0 %v93
  %2837 = vmatprep.subr.mxu0 0.0
  %2838 = vmatpush1.msra.mxu0 %v92
  %2839 = vmatprep.subr.mxu0 0.0
  %2840 = vmatpush2.msra.mxu0 0.0
  %2841 = vmatprep.subr.mxu0 0.0
  %2842 = vmatpush2.msra.mxu0 0.0
  %2843 = vmatprep.subr.mxu0 0.0
  %2844 = vmatpush2.msra.mxu0 0.0
  %2845 = vmatprep.subr.mxu0 0.0
  %2846 = vmatpush2.msra.mxu0 0.0
  %2847 = vmatprep.subr.mxu0 0.0
  %2848 = vmatpush2.msra.mxu0 0.0
  %2849 = vmatprep.subr.mxu0 0.0
  %2850 = vmatpush2.msra.mxu0 0.0
  %2851 = vmatprep.subr.mxu0 0.0
  %2852 = vmatpush2.msra.mxu0 0.0
  %2853 = vmatprep.subr.mxu0 0.0
  %2854 = vmatpush2.msra.mxu0 0.0
  %2855 = vmatprep.subr.mxu0 0.0
  %2856 = vmatpush2.msra.mxu0 0.0
  %2857 = vmatprep.subr.mxu0 0.0
  %2858 = vmatpush2.msra.mxu0 0.0
  %2859 = vmatprep.subr.mxu0 0.0
  %2860 = vmatpush2.msra.mxu0 0.0
  %2861 = vmatprep.subr.mxu0 0.0
  %2862 = vmatpush2.msra.mxu0 0.0
  %2863 = vmatprep.subr.mxu0 0.0
  %2864 = vmatpush2.msra.mxu0 0.0
  %2865 = vmatprep.subr.mxu0 0.0
  %2866 = vmatpush2.msra.mxu0 0.0
  %2867 = vmatprep.subr.mxu0 0.0
  %2868 = vmatpush2.msra.mxu0 0.0
  %2869 = vmatprep.subr.mxu0 0.0
  %2870 = vmatpush2.msra.mxu0 0.0
  %2871 = vmatprep.mubr.f32.mxu0 0.0
  %2872 = vmatmul.mubr.f32.gmra.mxu0 %v555
  %v2873 = vpop.f32.mrf.mxu0
  %v2874 = vadd.f32 0.0, %v2873
  %v2875 = vpop.f32.mrf.mxu0
  %2876 = vmatprep.mubr.f32.mxu0 0.0
  %2877 = vmatmul.mubr.f32.gmra.mxu0 %v558
  %v2878 = vpop.f32.mrf.mxu0
  %v2879 = vadd.f32 0.0, %v2878
  %v2880 = vpop.f32.mrf.mxu0
  %2881 = vmatprep.mubr.f32.mxu0 0.0
  %2882 = vmatmul.mubr.f32.gmra.mxu0 %v561
  %v2883 = vpop.f32.mrf.mxu0
  %v2884 = vadd.f32 0.0, %v2883
  %v2885 = vpop.f32.mrf.mxu0
  %2886 = vmatprep.mubr.f32.mxu0 0.0
  %2887 = vmatmul.mubr.f32.gmra.mxu0 %v564
  %v2888 = vpop.f32.mrf.mxu0
  %v2889 = vadd.f32 0.0, %v2888
  %v2890 = vpop.f32.mrf.mxu0
  %2891 = vmatprep.mubr.f32.mxu0 0.0
  %2892 = vmatmul.mubr.f32.gmra.mxu0 %v567
  %v2893 = vpop.f32.mrf.mxu0
  %v2894 = vadd.f32 0.0, %v2893
  %v2895 = vpop.f32.mrf.mxu0
  %2896 = vmatprep.mubr.f32.mxu0 0.0
  %2897 = vmatmul.mubr.f32.gmra.mxu0 %v2805
  %v2898 = vpop.f32.mrf.mxu0
  %v2899 = vadd.f32 0.0, %v2898
  %v2900 = vpop.f32.mrf.mxu0
  %2901 = vdwg.mxu0
  %v2902 = vadd.f32 %v2798, %v2874
  %v2903 = vadd.f32 %v2799, %v2879
  %v2904 = vadd.f32 %v2800, %v2884
  %v2905 = vadd.f32 %v2801, %v2889
  %v2906 = vadd.f32 %v2802, %v2894
  %v2907 = vadd.f32 %v2803, %v2899
  %2908 = vmatprep.subr.mxu0 0.0
  %2909 = vmatpush1.msra.mxu0 0.0
  %2910 = vmatprep.subr.mxu0 0.0
  %2911 = vmatpush1.msra.mxu0 0.0
  %2912 = vmatprep.subr.mxu0 0.0
  %2913 = vmatpush1.msra.mxu0 0.0
  %2914 = vmatprep.subr.mxu0 0.0
  %2915 = vmatpush1.msra.mxu0 0.0
  %2916 = vmatprep.subr.mxu0 0.0
  %2917 = vmatpush1.msra.mxu0 0.0
  %2918 = vmatprep.subr.mxu0 0.0
  %2919 = vmatpush1.msra.mxu0 0.0
  %2920 = vmatprep.subr.mxu0 0.0
  %2921 = vmatpush1.msra.mxu0 0.0
  %2922 = vmatprep.subr.mxu0 0.0
  %2923 = vmatpush1.msra.mxu0 0.0
  %2924 = vmatprep.subr.mxu0 0.0
  %2925 = vmatpush1.msra.mxu0 0.0
  %2926 = vmatprep.subr.mxu0 0.0
  %2927 = vmatpush1.msra.mxu0 0.0
  %2928 = vmatprep.subr.mxu0 0.0
  %2929 = vmatpush1.msra.mxu0 0.0
  %2930 = vmatprep.subr.mxu0 0.0
  %2931 = vmatpush1.msra.mxu0 0.0
  %2932 = vmatprep.subr.mxu0 0.0
  %2933 = vmatpush1.msra.mxu0 %v75
  %2934 = vmatprep.subr.mxu0 0.0
  %2935 = vmatpush1.msra.mxu0 %v74
  %2936 = vmatprep.subr.mxu0 0.0
  %2937 = vmatpush1.msra.mxu0 %v73
  %2938 = vmatprep.subr.mxu0 0.0
  %2939 = vmatpush1.msra.mxu0 %v72
  %2940 = vmatprep.subr.mxu0 0.0
  %2941 = vmatpush2.msra.mxu0 0.0
  %2942 = vmatprep.subr.mxu0 0.0
  %2943 = vmatpush2.msra.mxu0 0.0
  %2944 = vmatprep.subr.mxu0 0.0
  %2945 = vmatpush2.msra.mxu0 0.0
  %2946 = vmatprep.subr.mxu0 0.0
  %2947 = vmatpush2.msra.mxu0 0.0
  %2948 = vmatprep.subr.mxu0 0.0
  %2949 = vmatpush2.msra.mxu0 0.0
  %2950 = vmatprep.subr.mxu0 0.0
  %2951 = vmatpush2.msra.mxu0 0.0
  %2952 = vmatprep.subr.mxu0 0.0
  %2953 = vmatpush2.msra.mxu0 0.0
  %2954 = vmatprep.subr.mxu0 0.0
  %2955 = vmatpush2.msra.mxu0 0.0
  %2956 = vmatprep.subr.mxu0 0.0
  %2957 = vmatpush2.msra.mxu0 0.0
  %2958 = vmatprep.subr.mxu0 0.0
  %2959 = vmatpush2.msra.mxu0 0.0
  %2960 = vmatprep.subr.mxu0 0.0
  %2961 = vmatpush2.msra.mxu0 0.0
  %2962 = vmatprep.subr.mxu0 0.0
  %2963 = vmatpush2.msra.mxu0 0.0
  %2964 = vmatprep.subr.mxu0 0.0
  %2965 = vmatpush2.msra.mxu0 0.0
  %2966 = vmatprep.subr.mxu0 0.0
  %2967 = vmatpush2.msra.mxu0 0.0
  %2968 = vmatprep.subr.mxu0 0.0
  %2969 = vmatpush2.msra.mxu0 0.0
  %2970 = vmatprep.subr.mxu0 0.0
  %2971 = vmatpush2.msra.mxu0 0.0
  %2972 = vmatprep.mubr.f32.mxu0 0.0
  %2973 = vmatmul.mubr.f32.gmra.mxu0 %v671
  %v2974 = vpop.f32.mrf.mxu0
  %v2975 = vadd.f32 0.0, %v2974
  %v2976 = vpop.f32.mrf.mxu0
  %2977 = vmatprep.mubr.f32.mxu0 0.0
  %2978 = vmatmul.mubr.f32.gmra.mxu0 %v674
  %v2979 = vpop.f32.mrf.mxu0
  %v2980 = vadd.f32 0.0, %v2979
  %v2981 = vpop.f32.mrf.mxu0
  %2982 = vmatprep.mubr.f32.mxu0 0.0
  %2983 = vmatmul.mubr.f32.gmra.mxu0 %v677
  %v2984 = vpop.f32.mrf.mxu0
  %v2985 = vadd.f32 0.0, %v2984
  %v2986 = vpop.f32.mrf.mxu0
  %2987 = vmatprep.mubr.f32.mxu0 0.0
  %2988 = vmatmul.mubr.f32.gmra.mxu0 %v680
  %v2989 = vpop.f32.mrf.mxu0
  %v2990 = vadd.f32 0.0, %v2989
  %v2991 = vpop.f32.mrf.mxu0
  %2992 = vmatprep.mubr.f32.mxu0 0.0
  %2993 = vmatmul.mubr.f32.gmra.mxu0 %v683
  %v2994 = vpop.f32.mrf.mxu0
  %v2995 = vadd.f32 0.0, %v2994
  %v2996 = vpop.f32.mrf.mxu0
  %2997 = vmatprep.mubr.f32.mxu0 0.0
  %2998 = vmatmul.mubr.f32.gmra.mxu0 %v686
  %v2999 = vpop.f32.mrf.mxu0
  %v3000 = vadd.f32 0.0, %v2999
  %v3001 = vpop.f32.mrf.mxu0
  %3002 = vdwg.mxu0
  %3003 = vmatprep.subr.mxu0 0.0
  %3004 = vmatpush1.msra.mxu0 0.0
  %3005 = vmatprep.subr.mxu0 0.0
  %3006 = vmatpush1.msra.mxu0 0.0
  %3007 = vmatprep.subr.mxu0 0.0
  %3008 = vmatpush1.msra.mxu0 0.0
  %3009 = vmatprep.subr.mxu0 0.0
  %3010 = vmatpush1.msra.mxu0 0.0
  %3011 = vmatprep.subr.mxu0 0.0
  %3012 = vmatpush1.msra.mxu0 0.0
  %3013 = vmatprep.subr.mxu0 0.0
  %3014 = vmatpush1.msra.mxu0 0.0
  %3015 = vmatprep.subr.mxu0 0.0
  %3016 = vmatpush1.msra.mxu0 0.0
  %3017 = vmatprep.subr.mxu0 0.0
  %3018 = vmatpush1.msra.mxu0 0.0
  %3019 = vmatprep.subr.mxu0 0.0
  %3020 = vmatpush1.msra.mxu0 0.0
  %3021 = vmatprep.subr.mxu0 0.0
  %3022 = vmatpush1.msra.mxu0 0.0
  %3023 = vmatprep.subr.mxu0 0.0
  %3024 = vmatpush1.msra.mxu0 0.0
  %3025 = vmatprep.subr.mxu0 0.0
  %3026 = vmatpush1.msra.mxu0 0.0
  %3027 = vmatprep.subr.mxu0 0.0
  %3028 = vmatpush1.msra.mxu0 %v67
  %3029 = vmatprep.subr.mxu0 0.0
  %3030 = vmatpush1.msra.mxu0 %v66
  %3031 = vmatprep.subr.mxu0 0.0
  %3032 = vmatpush1.msra.mxu0 %v65
  %3033 = vmatprep.subr.mxu0 0.0
  %3034 = vmatpush1.msra.mxu0 %v64
  %3035 = vmatprep.subr.mxu0 0.0
  %3036 = vmatpush2.msra.mxu0 0.0
  %3037 = vmatprep.subr.mxu0 0.0
  %3038 = vmatpush2.msra.mxu0 0.0
  %3039 = vmatprep.subr.mxu0 0.0
  %3040 = vmatpush2.msra.mxu0 0.0
  %3041 = vmatprep.subr.mxu0 0.0
  %3042 = vmatpush2.msra.mxu0 0.0
  %3043 = vmatprep.subr.mxu0 0.0
  %3044 = vmatpush2.msra.mxu0 0.0
  %3045 = vmatprep.subr.mxu0 0.0
  %3046 = vmatpush2.msra.mxu0 0.0
  %3047 = vmatprep.subr.mxu0 0.0
  %3048 = vmatpush2.msra.mxu0 0.0
  %3049 = vmatprep.subr.mxu0 0.0
  %3050 = vmatpush2.msra.mxu0 0.0
  %3051 = vmatprep.subr.mxu0 0.0
  %3052 = vmatpush2.msra.mxu0 0.0
  %3053 = vmatprep.subr.mxu0 0.0
  %3054 = vmatpush2.msra.mxu0 0.0
  %3055 = vmatprep.subr.mxu0 0.0
  %3056 = vmatpush2.msra.mxu0 0.0
  %3057 = vmatprep.subr.mxu0 0.0
  %3058 = vmatpush2.msra.mxu0 0.0
  %3059 = vmatprep.subr.mxu0 0.0
  %3060 = vmatpush2.msra.mxu0 0.0
  %3061 = vmatprep.subr.mxu0 0.0
  %3062 = vmatpush2.msra.mxu0 0.0
  %3063 = vmatprep.subr.mxu0 0.0
  %3064 = vmatpush2.msra.mxu0 0.0
  %3065 = vmatprep.subr.mxu0 0.0
  %3066 = vmatpush2.msra.mxu0 0.0
  %3067 = vmatprep.mubr.f32.mxu0 0.0
  %3068 = vmatmul.mubr.f32.gmra.mxu0 %v552
  %v3069 = vpop.f32.mrf.mxu0
  %v3070 = vadd.f32 %v2975, %v3069
  %v3071 = vpop.f32.mrf.mxu0
  %3072 = vmatprep.mubr.f32.mxu0 0.0
  %3073 = vmatmul.mubr.f32.gmra.mxu0 %v555
  %v3074 = vpop.f32.mrf.mxu0
  %v3075 = vadd.f32 %v2980, %v3074
  %v3076 = vpop.f32.mrf.mxu0
  %3077 = vmatprep.mubr.f32.mxu0 0.0
  %3078 = vmatmul.mubr.f32.gmra.mxu0 %v558
  %v3079 = vpop.f32.mrf.mxu0
  %v3080 = vadd.f32 %v2985, %v3079
  %v3081 = vpop.f32.mrf.mxu0
  %3082 = vmatprep.mubr.f32.mxu0 0.0
  %3083 = vmatmul.mubr.f32.gmra.mxu0 %v561
  %v3084 = vpop.f32.mrf.mxu0
  %v3085 = vadd.f32 %v2990, %v3084
  %v3086 = vpop.f32.mrf.mxu0
  %3087 = vmatprep.mubr.f32.mxu0 0.0
  %3088 = vmatmul.mubr.f32.gmra.mxu0 %v564
  %v3089 = vpop.f32.mrf.mxu0
  %v3090 = vadd.f32 %v2995, %v3089
  %v3091 = vpop.f32.mrf.mxu0
  %3092 = vmatprep.mubr.f32.mxu0 0.0
  %3093 = vmatmul.mubr.f32.gmra.mxu0 %v567
  %v3094 = vpop.f32.mrf.mxu0
  %v3095 = vadd.f32 %v3000, %v3094
  %v3096 = vpop.f32.mrf.mxu0
  %3097 = vdwg.mxu0
  %3098 = vmatprep.subr.mxu0 0.0
  %3099 = vmatpush1.msra.mxu0 0.0
  %3100 = vmatprep.subr.mxu0 0.0
  %3101 = vmatpush1.msra.mxu0 0.0
  %3102 = vmatprep.subr.mxu0 0.0
  %3103 = vmatpush1.msra.mxu0 0.0
  %3104 = vmatprep.subr.mxu0 0.0
  %3105 = vmatpush1.msra.mxu0 0.0
  %3106 = vmatprep.subr.mxu0 0.0
  %3107 = vmatpush1.msra.mxu0 0.0
  %3108 = vmatprep.subr.mxu0 0.0
  %3109 = vmatpush1.msra.mxu0 0.0
  %3110 = vmatprep.subr.mxu0 0.0
  %3111 = vmatpush1.msra.mxu0 0.0
  %3112 = vmatprep.subr.mxu0 0.0
  %3113 = vmatpush1.msra.mxu0 0.0
  %3114 = vmatprep.subr.mxu0 0.0
  %3115 = vmatpush1.msra.mxu0 0.0
  %3116 = vmatprep.subr.mxu0 0.0
  %3117 = vmatpush1.msra.mxu0 0.0
  %3118 = vmatprep.subr.mxu0 0.0
  %3119 = vmatpush1.msra.mxu0 0.0
  %3120 = vmatprep.subr.mxu0 0.0
  %3121 = vmatpush1.msra.mxu0 0.0
  %3122 = vmatprep.subr.mxu0 0.0
  %3123 = vmatpush1.msra.mxu0 %v83
  %3124 = vmatprep.subr.mxu0 0.0
  %3125 = vmatpush1.msra.mxu0 %v82
  %3126 = vmatprep.subr.mxu0 0.0
  %3127 = vmatpush1.msra.mxu0 %v81
  %3128 = vmatprep.subr.mxu0 0.0
  %3129 = vmatpush1.msra.mxu0 %v80
  %3130 = vmatprep.subr.mxu0 0.0
  %3131 = vmatpush2.msra.mxu0 0.0
  %3132 = vmatprep.subr.mxu0 0.0
  %3133 = vmatpush2.msra.mxu0 0.0
  %3134 = vmatprep.subr.mxu0 0.0
  %3135 = vmatpush2.msra.mxu0 0.0
  %3136 = vmatprep.subr.mxu0 0.0
  %3137 = vmatpush2.msra.mxu0 0.0
  %3138 = vmatprep.subr.mxu0 0.0
  %3139 = vmatpush2.msra.mxu0 0.0
  %3140 = vmatprep.subr.mxu0 0.0
  %3141 = vmatpush2.msra.mxu0 0.0
  %3142 = vmatprep.subr.mxu0 0.0
  %3143 = vmatpush2.msra.mxu0 0.0
  %3144 = vmatprep.subr.mxu0 0.0
  %3145 = vmatpush2.msra.mxu0 0.0
  %3146 = vmatprep.subr.mxu0 0.0
  %3147 = vmatpush2.msra.mxu0 0.0
  %3148 = vmatprep.subr.mxu0 0.0
  %3149 = vmatpush2.msra.mxu0 0.0
  %3150 = vmatprep.subr.mxu0 0.0
  %3151 = vmatpush2.msra.mxu0 0.0
  %3152 = vmatprep.subr.mxu0 0.0
  %3153 = vmatpush2.msra.mxu0 0.0
  %3154 = vmatprep.subr.mxu0 0.0
  %3155 = vmatpush2.msra.mxu0 0.0
  %3156 = vmatprep.subr.mxu0 0.0
  %3157 = vmatpush2.msra.mxu0 0.0
  %3158 = vmatprep.subr.mxu0 0.0
  %3159 = vmatpush2.msra.mxu0 0.0
  %3160 = vmatprep.subr.mxu0 0.0
  %3161 = vmatpush2.msra.mxu0 0.0
  %3162 = vmatprep.mubr.f32.mxu0 0.0
  %3163 = vmatmul.mubr.f32.gmra.mxu0 %v442
  %v3164 = vpop.f32.mrf.mxu0
  %v3165 = vadd.f32 0.0, %v3164
  %v3166 = vpop.f32.mrf.mxu0
  %3167 = vmatprep.mubr.f32.mxu0 0.0
  %3168 = vmatmul.mubr.f32.gmra.mxu0 %v445
  %v3169 = vpop.f32.mrf.mxu0
  %v3170 = vadd.f32 0.0, %v3169
  %v3171 = vpop.f32.mrf.mxu0
  %3172 = vmatprep.mubr.f32.mxu0 0.0
  %3173 = vmatmul.mubr.f32.gmra.mxu0 %v448
  %v3174 = vpop.f32.mrf.mxu0
  %v3175 = vadd.f32 0.0, %v3174
  %v3176 = vpop.f32.mrf.mxu0
  %3177 = vmatprep.mubr.f32.mxu0 0.0
  %3178 = vmatmul.mubr.f32.gmra.mxu0 %v451
  %v3179 = vpop.f32.mrf.mxu0
  %v3180 = vadd.f32 0.0, %v3179
  %v3181 = vpop.f32.mrf.mxu0
  %3182 = vmatprep.mubr.f32.mxu0 0.0
  %3183 = vmatmul.mubr.f32.gmra.mxu0 %v454
  %v3184 = vpop.f32.mrf.mxu0
  %v3185 = vadd.f32 0.0, %v3184
  %v3186 = vpop.f32.mrf.mxu0
  %3187 = vmatprep.mubr.f32.mxu0 0.0
  %3188 = vmatmul.mubr.f32.gmra.mxu0 %v790
  %v3189 = vpop.f32.mrf.mxu0
  %v3190 = vadd.f32 0.0, %v3189
  %v3191 = vpop.f32.mrf.mxu0
  %3192 = vdwg.mxu0
  %v3193 = vadd.f32 %v3070, %v3165
  %v3194 = vadd.f32 %v3075, %v3170
  %v3195 = vadd.f32 %v3080, %v3175
  %v3196 = vadd.f32 %v3085, %v3180
  %v3197 = vadd.f32 %v3090, %v3185
  %v3198 = vadd.f32 %v3095, %v3190
  %3199 = vmatprep.subr.mxu0 0.0
  %3200 = vmatpush1.msra.mxu0 0.0
  %3201 = vmatprep.subr.mxu0 0.0
  %3202 = vmatpush1.msra.mxu0 0.0
  %3203 = vmatprep.subr.mxu0 0.0
  %3204 = vmatpush1.msra.mxu0 0.0
  %3205 = vmatprep.subr.mxu0 0.0
  %3206 = vmatpush1.msra.mxu0 0.0
  %3207 = vmatprep.subr.mxu0 0.0
  %3208 = vmatpush1.msra.mxu0 0.0
  %3209 = vmatprep.subr.mxu0 0.0
  %3210 = vmatpush1.msra.mxu0 0.0
  %3211 = vmatprep.subr.mxu0 0.0
  %3212 = vmatpush1.msra.mxu0 0.0
  %3213 = vmatprep.subr.mxu0 0.0
  %3214 = vmatpush1.msra.mxu0 0.0
  %3215 = vmatprep.subr.mxu0 0.0
  %3216 = vmatpush1.msra.mxu0 0.0
  %3217 = vmatprep.subr.mxu0 0.0
  %3218 = vmatpush1.msra.mxu0 0.0
  %3219 = vmatprep.subr.mxu0 0.0
  %3220 = vmatpush1.msra.mxu0 0.0
  %3221 = vmatprep.subr.mxu0 0.0
  %3222 = vmatpush1.msra.mxu0 0.0
  %3223 = vmatprep.subr.mxu0 0.0
  %3224 = vmatpush1.msra.mxu0 %v91
  %3225 = vmatprep.subr.mxu0 0.0
  %3226 = vmatpush1.msra.mxu0 %v90
  %3227 = vmatprep.subr.mxu0 0.0
  %3228 = vmatpush1.msra.mxu0 %v89
  %3229 = vmatprep.subr.mxu0 0.0
  %3230 = vmatpush1.msra.mxu0 %v88
  %3231 = vmatprep.subr.mxu0 0.0
  %3232 = vmatpush2.msra.mxu0 0.0
  %3233 = vmatprep.subr.mxu0 0.0
  %3234 = vmatpush2.msra.mxu0 0.0
  %3235 = vmatprep.subr.mxu0 0.0
  %3236 = vmatpush2.msra.mxu0 0.0
  %3237 = vmatprep.subr.mxu0 0.0
  %3238 = vmatpush2.msra.mxu0 0.0
  %3239 = vmatprep.subr.mxu0 0.0
  %3240 = vmatpush2.msra.mxu0 0.0
  %3241 = vmatprep.subr.mxu0 0.0
  %3242 = vmatpush2.msra.mxu0 0.0
  %3243 = vmatprep.subr.mxu0 0.0
  %3244 = vmatpush2.msra.mxu0 0.0
  %3245 = vmatprep.subr.mxu0 0.0
  %3246 = vmatpush2.msra.mxu0 0.0
  %3247 = vmatprep.subr.mxu0 0.0
  %3248 = vmatpush2.msra.mxu0 0.0
  %3249 = vmatprep.subr.mxu0 0.0
  %3250 = vmatpush2.msra.mxu0 0.0
  %3251 = vmatprep.subr.mxu0 0.0
  %3252 = vmatpush2.msra.mxu0 0.0
  %3253 = vmatprep.subr.mxu0 0.0
  %3254 = vmatpush2.msra.mxu0 0.0
  %3255 = vmatprep.subr.mxu0 0.0
  %3256 = vmatpush2.msra.mxu0 0.0
  %3257 = vmatprep.subr.mxu0 0.0
  %3258 = vmatpush2.msra.mxu0 0.0
  %3259 = vmatprep.subr.mxu0 0.0
  %3260 = vmatpush2.msra.mxu0 0.0
  %3261 = vmatprep.subr.mxu0 0.0
  %3262 = vmatpush2.msra.mxu0 0.0
  %3263 = vmatprep.mubr.f32.mxu0 0.0
  %3264 = vmatmul.mubr.f32.gmra.mxu0 %v329
  %v3265 = vpop.f32.mrf.mxu0
  %v3266 = vadd.f32 0.0, %v3265
  %v3267 = vpop.f32.mrf.mxu0
  %3268 = vmatprep.mubr.f32.mxu0 0.0
  %3269 = vmatmul.mubr.f32.gmra.mxu0 %v332
  %v3270 = vpop.f32.mrf.mxu0
  %v3271 = vadd.f32 0.0, %v3270
  %v3272 = vpop.f32.mrf.mxu0
  %3273 = vmatprep.mubr.f32.mxu0 0.0
  %3274 = vmatmul.mubr.f32.gmra.mxu0 %v335
  %v3275 = vpop.f32.mrf.mxu0
  %v3276 = vadd.f32 0.0, %v3275
  %v3277 = vpop.f32.mrf.mxu0
  %3278 = vmatprep.mubr.f32.mxu0 0.0
  %3279 = vmatmul.mubr.f32.gmra.mxu0 %v338
  %v3280 = vpop.f32.mrf.mxu0
  %v3281 = vadd.f32 0.0, %v3280
  %v3282 = vpop.f32.mrf.mxu0
  %3283 = vmatprep.mubr.f32.mxu0 0.0
  %3284 = vmatmul.mubr.f32.gmra.mxu0 %v341
  %v3285 = vpop.f32.mrf.mxu0
  %v3286 = vadd.f32 0.0, %v3285
  %v3287 = vpop.f32.mrf.mxu0
  %3288 = vmatprep.mubr.f32.mxu0 0.0
  %3289 = vmatmul.mubr.f32.gmra.mxu0 %v1779
  %v3290 = vpop.f32.mrf.mxu0
  %v3291 = vadd.f32 0.0, %v3290
  %v3292 = vpop.f32.mrf.mxu0
  %3293 = vdwg.mxu0
  %v3294 = vadd.f32 %v3193, %v3266
  %v3295 = vadd.f32 %v3194, %v3271
  %v3296 = vadd.f32 %v3195, %v3276
  %v3297 = vadd.f32 %v3196, %v3281
  %v3298 = vadd.f32 %v3197, %v3286
  %v3299 = vadd.f32 %v3198, %v3291
  %3300 = vmatprep.subr.mxu0 0.0
  %3301 = vmatpush1.msra.mxu0 0.0
  %3302 = vmatprep.subr.mxu0 0.0
  %3303 = vmatpush1.msra.mxu0 0.0
  %3304 = vmatprep.subr.mxu0 0.0
  %3305 = vmatpush1.msra.mxu0 0.0
  %3306 = vmatprep.subr.mxu0 0.0
  %3307 = vmatpush1.msra.mxu0 0.0
  %3308 = vmatprep.subr.mxu0 0.0
  %3309 = vmatpush1.msra.mxu0 0.0
  %3310 = vmatprep.subr.mxu0 0.0
  %3311 = vmatpush1.msra.mxu0 0.0
  %3312 = vmatprep.subr.mxu0 0.0
  %3313 = vmatpush1.msra.mxu0 0.0
  %3314 = vmatprep.subr.mxu0 0.0
  %3315 = vmatpush1.msra.mxu0 0.0
  %3316 = vmatprep.subr.mxu0 0.0
  %3317 = vmatpush1.msra.mxu0 0.0
  %3318 = vmatprep.subr.mxu0 0.0
  %3319 = vmatpush1.msra.mxu0 0.0
  %3320 = vmatprep.subr.mxu0 0.0
  %3321 = vmatpush1.msra.mxu0 0.0
  %3322 = vmatprep.subr.mxu0 0.0
  %3323 = vmatpush1.msra.mxu0 0.0
  %3324 = vmatprep.subr.mxu0 0.0
  %3325 = vmatpush1.msra.mxu0 %v99
  %3326 = vmatprep.subr.mxu0 0.0
  %3327 = vmatpush1.msra.mxu0 %v98
  %3328 = vmatprep.subr.mxu0 0.0
  %3329 = vmatpush1.msra.mxu0 %v97
  %3330 = vmatprep.subr.mxu0 0.0
  %3331 = vmatpush1.msra.mxu0 %v96
  %3332 = vmatprep.subr.mxu0 0.0
  %3333 = vmatpush2.msra.mxu0 0.0
  %3334 = vmatprep.subr.mxu0 0.0
  %3335 = vmatpush2.msra.mxu0 0.0
  %3336 = vmatprep.subr.mxu0 0.0
  %3337 = vmatpush2.msra.mxu0 0.0
  %3338 = vmatprep.subr.mxu0 0.0
  %3339 = vmatpush2.msra.mxu0 0.0
  %3340 = vmatprep.subr.mxu0 0.0
  %3341 = vmatpush2.msra.mxu0 0.0
  %3342 = vmatprep.subr.mxu0 0.0
  %3343 = vmatpush2.msra.mxu0 0.0
  %3344 = vmatprep.subr.mxu0 0.0
  %3345 = vmatpush2.msra.mxu0 0.0
  %3346 = vmatprep.subr.mxu0 0.0
  %3347 = vmatpush2.msra.mxu0 0.0
  %3348 = vmatprep.subr.mxu0 0.0
  %3349 = vmatpush2.msra.mxu0 0.0
  %3350 = vmatprep.subr.mxu0 0.0
  %3351 = vmatpush2.msra.mxu0 0.0
  %3352 = vmatprep.subr.mxu0 0.0
  %3353 = vmatpush2.msra.mxu0 0.0
  %3354 = vmatprep.subr.mxu0 0.0
  %3355 = vmatpush2.msra.mxu0 0.0
  %3356 = vmatprep.subr.mxu0 0.0
  %3357 = vmatpush2.msra.mxu0 0.0
  %3358 = vmatprep.subr.mxu0 0.0
  %3359 = vmatpush2.msra.mxu0 0.0
  %3360 = vmatprep.subr.mxu0 0.0
  %3361 = vmatpush2.msra.mxu0 0.0
  %3362 = vmatprep.subr.mxu0 0.0
  %3363 = vmatpush2.msra.mxu0 0.0
  %3364 = vmatprep.mubr.f32.mxu0 0.0
  %3365 = vmatmul.mubr.f32.gmra.mxu0 %v555
  %v3366 = vpop.f32.mrf.mxu0
  %v3367 = vadd.f32 0.0, %v3366
  %v3368 = vpop.f32.mrf.mxu0
  %3369 = vmatprep.mubr.f32.mxu0 0.0
  %3370 = vmatmul.mubr.f32.gmra.mxu0 %v558
  %v3371 = vpop.f32.mrf.mxu0
  %v3372 = vadd.f32 0.0, %v3371
  %v3373 = vpop.f32.mrf.mxu0
  %3374 = vmatprep.mubr.f32.mxu0 0.0
  %3375 = vmatmul.mubr.f32.gmra.mxu0 %v561
  %v3376 = vpop.f32.mrf.mxu0
  %v3377 = vadd.f32 0.0, %v3376
  %v3378 = vpop.f32.mrf.mxu0
  %3379 = vmatprep.mubr.f32.mxu0 0.0
  %3380 = vmatmul.mubr.f32.gmra.mxu0 %v564
  %v3381 = vpop.f32.mrf.mxu0
  %v3382 = vadd.f32 0.0, %v3381
  %v3383 = vpop.f32.mrf.mxu0
  %3384 = vmatprep.mubr.f32.mxu0 0.0
  %3385 = vmatmul.mubr.f32.gmra.mxu0 %v567
  %v3386 = vpop.f32.mrf.mxu0
  %v3387 = vadd.f32 0.0, %v3386
  %v3388 = vpop.f32.mrf.mxu0
  %3389 = vmatprep.mubr.f32.mxu0 0.0
  %3390 = vmatmul.mubr.f32.gmra.mxu0 %v2805
  %v3391 = vpop.f32.mrf.mxu0
  %v3392 = vadd.f32 0.0, %v3391
  %v3393 = vpop.f32.mrf.mxu0
  %3394 = vdwg.mxu0
  %v3395 = vadd.f32 %v3294, %v3367
  %v3396 = vadd.f32 %v3295, %v3372
  %v3397 = vadd.f32 %v3296, %v3377
  %v3398 = vadd.f32 %v3297, %v3382
  %v3399 = vadd.f32 %v3298, %v3387
  %v3400 = vadd.f32 %v3299, %v3392
  %3401 = vmatprep.subr.mxu0 0.0
  %3402 = vmatpush1.msra.mxu0 0.0
  %3403 = vmatprep.subr.mxu0 0.0
  %3404 = vmatpush1.msra.mxu0 0.0
  %3405 = vmatprep.subr.mxu0 0.0
  %3406 = vmatpush1.msra.mxu0 0.0
  %3407 = vmatprep.subr.mxu0 0.0
  %3408 = vmatpush1.msra.mxu0 0.0
  %3409 = vmatprep.subr.mxu0 0.0
  %3410 = vmatpush1.msra.mxu0 0.0
  %3411 = vmatprep.subr.mxu0 0.0
  %3412 = vmatpush1.msra.mxu0 0.0
  %3413 = vmatprep.subr.mxu0 0.0
  %3414 = vmatpush1.msra.mxu0 0.0
  %3415 = vmatprep.subr.mxu0 0.0
  %3416 = vmatpush1.msra.mxu0 0.0
  %3417 = vmatprep.subr.mxu0 0.0
  %3418 = vmatpush1.msra.mxu0 0.0
  %3419 = vmatprep.subr.mxu0 0.0
  %3420 = vmatpush1.msra.mxu0 0.0
  %3421 = vmatprep.subr.mxu0 0.0
  %3422 = vmatpush1.msra.mxu0 0.0
  %3423 = vmatprep.subr.mxu0 0.0
  %3424 = vmatpush1.msra.mxu0 0.0
  %3425 = vmatprep.subr.mxu0 0.0
  %3426 = vmatpush1.msra.mxu0 %v71
  %3427 = vmatprep.subr.mxu0 0.0
  %3428 = vmatpush1.msra.mxu0 %v70
  %3429 = vmatprep.subr.mxu0 0.0
  %3430 = vmatpush1.msra.mxu0 %v69
  %3431 = vmatprep.subr.mxu0 0.0
  %3432 = vmatpush1.msra.mxu0 %v68
  %3433 = vmatprep.subr.mxu0 0.0
  %3434 = vmatpush2.msra.mxu0 0.0
  %3435 = vmatprep.subr.mxu0 0.0
  %3436 = vmatpush2.msra.mxu0 0.0
  %3437 = vmatprep.subr.mxu0 0.0
  %3438 = vmatpush2.msra.mxu0 0.0
  %3439 = vmatprep.subr.mxu0 0.0
  %3440 = vmatpush2.msra.mxu0 0.0
  %3441 = vmatprep.subr.mxu0 0.0
  %3442 = vmatpush2.msra.mxu0 0.0
  %3443 = vmatprep.subr.mxu0 0.0
  %3444 = vmatpush2.msra.mxu0 0.0
  %3445 = vmatprep.subr.mxu0 0.0
  %3446 = vmatpush2.msra.mxu0 0.0
  %3447 = vmatprep.subr.mxu0 0.0
  %3448 = vmatpush2.msra.mxu0 0.0
  %3449 = vmatprep.subr.mxu0 0.0
  %3450 = vmatpush2.msra.mxu0 0.0
  %3451 = vmatprep.subr.mxu0 0.0
  %3452 = vmatpush2.msra.mxu0 0.0
  %3453 = vmatprep.subr.mxu0 0.0
  %3454 = vmatpush2.msra.mxu0 0.0
  %3455 = vmatprep.subr.mxu0 0.0
  %3456 = vmatpush2.msra.mxu0 0.0
  %3457 = vmatprep.subr.mxu0 0.0
  %3458 = vmatpush2.msra.mxu0 0.0
  %3459 = vmatprep.subr.mxu0 0.0
  %3460 = vmatpush2.msra.mxu0 0.0
  %3461 = vmatprep.subr.mxu0 0.0
  %3462 = vmatpush2.msra.mxu0 0.0
  %3463 = vmatprep.subr.mxu0 0.0
  %3464 = vmatpush2.msra.mxu0 0.0
  %3465 = vmatprep.mubr.f32.mxu0 0.0
  %3466 = vmatmul.mubr.f32.gmra.mxu0 %v442
  %v3467 = vpop.f32.mrf.mxu0
  %v3468 = vadd.f32 0.0, %v3467
  %v3469 = vpop.f32.mrf.mxu0
  %3470 = vmatprep.mubr.f32.mxu0 0.0
  %3471 = vmatmul.mubr.f32.gmra.mxu0 %v445
  %v3472 = vpop.f32.mrf.mxu0
  %v3473 = vadd.f32 0.0, %v3472
  %v3474 = vpop.f32.mrf.mxu0
  %3475 = vmatprep.mubr.f32.mxu0 0.0
  %3476 = vmatmul.mubr.f32.gmra.mxu0 %v448
  %v3477 = vpop.f32.mrf.mxu0
  %v3478 = vadd.f32 0.0, %v3477
  %v3479 = vpop.f32.mrf.mxu0
  %3480 = vmatprep.mubr.f32.mxu0 0.0
  %3481 = vmatmul.mubr.f32.gmra.mxu0 %v451
  %v3482 = vpop.f32.mrf.mxu0
  %v3483 = vadd.f32 0.0, %v3482
  %v3484 = vpop.f32.mrf.mxu0
  %3485 = vmatprep.mubr.f32.mxu0 0.0
  %3486 = vmatmul.mubr.f32.gmra.mxu0 %v454
  %v3487 = vpop.f32.mrf.mxu0
  %v3488 = vadd.f32 0.0, %v3487
  %v3489 = vpop.f32.mrf.mxu0
  %3490 = vmatprep.mubr.f32.mxu0 0.0
  %3491 = vmatmul.mubr.f32.gmra.mxu0 %v790
  %v3492 = vpop.f32.mrf.mxu0
  %v3493 = vadd.f32 0.0, %v3492
  %v3494 = vpop.f32.mrf.mxu0
  %3495 = vdwg.mxu0
  %3496 = vmatprep.subr.mxu0 0.0
  %3497 = vmatpush1.msra.mxu0 0.0
  %3498 = vmatprep.subr.mxu0 0.0
  %3499 = vmatpush1.msra.mxu0 0.0
  %3500 = vmatprep.subr.mxu0 0.0
  %3501 = vmatpush1.msra.mxu0 0.0
  %3502 = vmatprep.subr.mxu0 0.0
  %3503 = vmatpush1.msra.mxu0 0.0
  %3504 = vmatprep.subr.mxu0 0.0
  %3505 = vmatpush1.msra.mxu0 0.0
  %3506 = vmatprep.subr.mxu0 0.0
  %3507 = vmatpush1.msra.mxu0 0.0
  %3508 = vmatprep.subr.mxu0 0.0
  %3509 = vmatpush1.msra.mxu0 0.0
  %3510 = vmatprep.subr.mxu0 0.0
  %3511 = vmatpush1.msra.mxu0 0.0
  %3512 = vmatprep.subr.mxu0 0.0
  %3513 = vmatpush1.msra.mxu0 0.0
  %3514 = vmatprep.subr.mxu0 0.0
  %3515 = vmatpush1.msra.mxu0 0.0
  %3516 = vmatprep.subr.mxu0 0.0
  %3517 = vmatpush1.msra.mxu0 0.0
  %3518 = vmatprep.subr.mxu0 0.0
  %3519 = vmatpush1.msra.mxu0 0.0
  %3520 = vmatprep.subr.mxu0 0.0
  %3521 = vmatpush1.msra.mxu0 %v63
  %3522 = vmatprep.subr.mxu0 0.0
  %3523 = vmatpush1.msra.mxu0 %v62
  %3524 = vmatprep.subr.mxu0 0.0
  %3525 = vmatpush1.msra.mxu0 %v61
  %3526 = vmatprep.subr.mxu0 0.0
  %3527 = vmatpush1.msra.mxu0 %v60
  %3528 = vmatprep.subr.mxu0 0.0
  %3529 = vmatpush2.msra.mxu0 0.0
  %3530 = vmatprep.subr.mxu0 0.0
  %3531 = vmatpush2.msra.mxu0 0.0
  %3532 = vmatprep.subr.mxu0 0.0
  %3533 = vmatpush2.msra.mxu0 0.0
  %3534 = vmatprep.subr.mxu0 0.0
  %3535 = vmatpush2.msra.mxu0 0.0
  %3536 = vmatprep.subr.mxu0 0.0
  %3537 = vmatpush2.msra.mxu0 0.0
  %3538 = vmatprep.subr.mxu0 0.0
  %3539 = vmatpush2.msra.mxu0 0.0
  %3540 = vmatprep.subr.mxu0 0.0
  %3541 = vmatpush2.msra.mxu0 0.0
  %3542 = vmatprep.subr.mxu0 0.0
  %3543 = vmatpush2.msra.mxu0 0.0
  %3544 = vmatprep.subr.mxu0 0.0
  %3545 = vmatpush2.msra.mxu0 0.0
  %3546 = vmatprep.subr.mxu0 0.0
  %3547 = vmatpush2.msra.mxu0 0.0
  %3548 = vmatprep.subr.mxu0 0.0
  %3549 = vmatpush2.msra.mxu0 0.0
  %3550 = vmatprep.subr.mxu0 0.0
  %3551 = vmatpush2.msra.mxu0 0.0
  %3552 = vmatprep.subr.mxu0 0.0
  %3553 = vmatpush2.msra.mxu0 0.0
  %3554 = vmatprep.subr.mxu0 0.0
  %3555 = vmatpush2.msra.mxu0 0.0
  %3556 = vmatprep.subr.mxu0 0.0
  %3557 = vmatpush2.msra.mxu0 0.0
  %3558 = vmatprep.subr.mxu0 0.0
  %3559 = vmatpush2.msra.mxu0 0.0
  %3560 = vmatprep.mubr.f32.mxu0 0.0
  %3561 = vmatmul.mubr.f32.gmra.mxu0 %v671
  %v3562 = vpop.f32.mrf.mxu0
  %v3563 = vadd.f32 %v3468, %v3562
  %v3564 = vpop.f32.mrf.mxu0
  %3565 = vmatprep.mubr.f32.mxu0 0.0
  %3566 = vmatmul.mubr.f32.gmra.mxu0 %v674
  %v3567 = vpop.f32.mrf.mxu0
  %v3568 = vadd.f32 %v3473, %v3567
  %v3569 = vpop.f32.mrf.mxu0
  %3570 = vmatprep.mubr.f32.mxu0 0.0
  %3571 = vmatmul.mubr.f32.gmra.mxu0 %v677
  %v3572 = vpop.f32.mrf.mxu0
  %v3573 = vadd.f32 %v3478, %v3572
  %v3574 = vpop.f32.mrf.mxu0
  %3575 = vmatprep.mubr.f32.mxu0 0.0
  %3576 = vmatmul.mubr.f32.gmra.mxu0 %v680
  %v3577 = vpop.f32.mrf.mxu0
  %v3578 = vadd.f32 %v3483, %v3577
  %v3579 = vpop.f32.mrf.mxu0
  %3580 = vmatprep.mubr.f32.mxu0 0.0
  %3581 = vmatmul.mubr.f32.gmra.mxu0 %v683
  %v3582 = vpop.f32.mrf.mxu0
  %v3583 = vadd.f32 %v3488, %v3582
  %v3584 = vpop.f32.mrf.mxu0
  %3585 = vmatprep.mubr.f32.mxu0 0.0
  %3586 = vmatmul.mubr.f32.gmra.mxu0 %v686
  %v3587 = vpop.f32.mrf.mxu0
  %v3588 = vadd.f32 %v3493, %v3587
  %v3589 = vpop.f32.mrf.mxu0
  %3590 = vdwg.mxu0
  %3591 = vmatprep.subr.mxu0 0.0
  %3592 = vmatpush1.msra.mxu0 0.0
  %3593 = vmatprep.subr.mxu0 0.0
  %3594 = vmatpush1.msra.mxu0 0.0
  %3595 = vmatprep.subr.mxu0 0.0
  %3596 = vmatpush1.msra.mxu0 0.0
  %3597 = vmatprep.subr.mxu0 0.0
  %3598 = vmatpush1.msra.mxu0 0.0
  %3599 = vmatprep.subr.mxu0 0.0
  %3600 = vmatpush1.msra.mxu0 0.0
  %3601 = vmatprep.subr.mxu0 0.0
  %3602 = vmatpush1.msra.mxu0 0.0
  %3603 = vmatprep.subr.mxu0 0.0
  %3604 = vmatpush1.msra.mxu0 0.0
  %3605 = vmatprep.subr.mxu0 0.0
  %3606 = vmatpush1.msra.mxu0 0.0
  %3607 = vmatprep.subr.mxu0 0.0
  %3608 = vmatpush1.msra.mxu0 0.0
  %3609 = vmatprep.subr.mxu0 0.0
  %3610 = vmatpush1.msra.mxu0 0.0
  %3611 = vmatprep.subr.mxu0 0.0
  %3612 = vmatpush1.msra.mxu0 0.0
  %3613 = vmatprep.subr.mxu0 0.0
  %3614 = vmatpush1.msra.mxu0 0.0
  %3615 = vmatprep.subr.mxu0 0.0
  %3616 = vmatpush1.msra.mxu0 %v79
  %3617 = vmatprep.subr.mxu0 0.0
  %3618 = vmatpush1.msra.mxu0 %v78
  %3619 = vmatprep.subr.mxu0 0.0
  %3620 = vmatpush1.msra.mxu0 %v77
  %3621 = vmatprep.subr.mxu0 0.0
  %3622 = vmatpush1.msra.mxu0 %v76
  %3623 = vmatprep.subr.mxu0 0.0
  %3624 = vmatpush2.msra.mxu0 0.0
  %3625 = vmatprep.subr.mxu0 0.0
  %3626 = vmatpush2.msra.mxu0 0.0
  %3627 = vmatprep.subr.mxu0 0.0
  %3628 = vmatpush2.msra.mxu0 0.0
  %3629 = vmatprep.subr.mxu0 0.0
  %3630 = vmatpush2.msra.mxu0 0.0
  %3631 = vmatprep.subr.mxu0 0.0
  %3632 = vmatpush2.msra.mxu0 0.0
  %3633 = vmatprep.subr.mxu0 0.0
  %3634 = vmatpush2.msra.mxu0 0.0
  %3635 = vmatprep.subr.mxu0 0.0
  %3636 = vmatpush2.msra.mxu0 0.0
  %3637 = vmatprep.subr.mxu0 0.0
  %3638 = vmatpush2.msra.mxu0 0.0
  %3639 = vmatprep.subr.mxu0 0.0
  %3640 = vmatpush2.msra.mxu0 0.0
  %3641 = vmatprep.subr.mxu0 0.0
  %3642 = vmatpush2.msra.mxu0 0.0
  %3643 = vmatprep.subr.mxu0 0.0
  %3644 = vmatpush2.msra.mxu0 0.0
  %3645 = vmatprep.subr.mxu0 0.0
  %3646 = vmatpush2.msra.mxu0 0.0
  %3647 = vmatprep.subr.mxu0 0.0
  %3648 = vmatpush2.msra.mxu0 0.0
  %3649 = vmatprep.subr.mxu0 0.0
  %3650 = vmatpush2.msra.mxu0 0.0
  %3651 = vmatprep.subr.mxu0 0.0
  %3652 = vmatpush2.msra.mxu0 0.0
  %3653 = vmatprep.subr.mxu0 0.0
  %3654 = vmatpush2.msra.mxu0 0.0
  %3655 = vmatprep.mubr.f32.mxu0 0.0
  %3656 = vmatmul.mubr.f32.gmra.mxu0 %v329
  %v3657 = vpop.f32.mrf.mxu0
  %v3658 = vadd.f32 0.0, %v3657
  %v3659 = vpop.f32.mrf.mxu0
  %3660 = vmatprep.mubr.f32.mxu0 0.0
  %3661 = vmatmul.mubr.f32.gmra.mxu0 %v332
  %v3662 = vpop.f32.mrf.mxu0
  %v3663 = vadd.f32 0.0, %v3662
  %v3664 = vpop.f32.mrf.mxu0
  %3665 = vmatprep.mubr.f32.mxu0 0.0
  %3666 = vmatmul.mubr.f32.gmra.mxu0 %v335
  %v3667 = vpop.f32.mrf.mxu0
  %v3668 = vadd.f32 0.0, %v3667
  %v3669 = vpop.f32.mrf.mxu0
  %3670 = vmatprep.mubr.f32.mxu0 0.0
  %3671 = vmatmul.mubr.f32.gmra.mxu0 %v338
  %v3672 = vpop.f32.mrf.mxu0
  %v3673 = vadd.f32 0.0, %v3672
  %v3674 = vpop.f32.mrf.mxu0
  %3675 = vmatprep.mubr.f32.mxu0 0.0
  %3676 = vmatmul.mubr.f32.gmra.mxu0 %v341
  %v3677 = vpop.f32.mrf.mxu0
  %v3678 = vadd.f32 0.0, %v3677
  %v3679 = vpop.f32.mrf.mxu0
  %3680 = vmatprep.mubr.f32.mxu0 0.0
  %3681 = vmatmul.mubr.f32.gmra.mxu0 %v1779
  %v3682 = vpop.f32.mrf.mxu0
  %v3683 = vadd.f32 0.0, %v3682
  %v3684 = vpop.f32.mrf.mxu0
  %3685 = vdwg.mxu0
  %v3686 = vadd.f32 %v3563, %v3658
  %v3687 = vadd.f32 %v3568, %v3663
  %v3688 = vadd.f32 %v3573, %v3668
  %v3689 = vadd.f32 %v3578, %v3673
  %v3690 = vadd.f32 %v3583, %v3678
  %v3691 = vadd.f32 %v3588, %v3683
  %3692 = vmatprep.subr.mxu0 0.0
  %3693 = vmatpush1.msra.mxu0 0.0
  %3694 = vmatprep.subr.mxu0 0.0
  %3695 = vmatpush1.msra.mxu0 0.0
  %3696 = vmatprep.subr.mxu0 0.0
  %3697 = vmatpush1.msra.mxu0 0.0
  %3698 = vmatprep.subr.mxu0 0.0
  %3699 = vmatpush1.msra.mxu0 0.0
  %3700 = vmatprep.subr.mxu0 0.0
  %3701 = vmatpush1.msra.mxu0 0.0
  %3702 = vmatprep.subr.mxu0 0.0
  %3703 = vmatpush1.msra.mxu0 0.0
  %3704 = vmatprep.subr.mxu0 0.0
  %3705 = vmatpush1.msra.mxu0 0.0
  %3706 = vmatprep.subr.mxu0 0.0
  %3707 = vmatpush1.msra.mxu0 0.0
  %3708 = vmatprep.subr.mxu0 0.0
  %3709 = vmatpush1.msra.mxu0 0.0
  %3710 = vmatprep.subr.mxu0 0.0
  %3711 = vmatpush1.msra.mxu0 0.0
  %3712 = vmatprep.subr.mxu0 0.0
  %3713 = vmatpush1.msra.mxu0 0.0
  %3714 = vmatprep.subr.mxu0 0.0
  %3715 = vmatpush1.msra.mxu0 0.0
  %3716 = vmatprep.subr.mxu0 0.0
  %3717 = vmatpush1.msra.mxu0 %v87
  %3718 = vmatprep.subr.mxu0 0.0
  %3719 = vmatpush1.msra.mxu0 %v86
  %3720 = vmatprep.subr.mxu0 0.0
  %3721 = vmatpush1.msra.mxu0 %v85
  %3722 = vmatprep.subr.mxu0 0.0
  %3723 = vmatpush1.msra.mxu0 %v84
  %3724 = vmatprep.subr.mxu0 0.0
  %3725 = vmatpush2.msra.mxu0 0.0
  %3726 = vmatprep.subr.mxu0 0.0
  %3727 = vmatpush2.msra.mxu0 0.0
  %3728 = vmatprep.subr.mxu0 0.0
  %3729 = vmatpush2.msra.mxu0 0.0
  %3730 = vmatprep.subr.mxu0 0.0
  %3731 = vmatpush2.msra.mxu0 0.0
  %3732 = vmatprep.subr.mxu0 0.0
  %3733 = vmatpush2.msra.mxu0 0.0
  %3734 = vmatprep.subr.mxu0 0.0
  %3735 = vmatpush2.msra.mxu0 0.0
  %3736 = vmatprep.subr.mxu0 0.0
  %3737 = vmatpush2.msra.mxu0 0.0
  %3738 = vmatprep.subr.mxu0 0.0
  %3739 = vmatpush2.msra.mxu0 0.0
  %3740 = vmatprep.subr.mxu0 0.0
  %3741 = vmatpush2.msra.mxu0 0.0
  %3742 = vmatprep.subr.mxu0 0.0
  %3743 = vmatpush2.msra.mxu0 0.0
  %3744 = vmatprep.subr.mxu0 0.0
  %3745 = vmatpush2.msra.mxu0 0.0
  %3746 = vmatprep.subr.mxu0 0.0
  %3747 = vmatpush2.msra.mxu0 0.0
  %3748 = vmatprep.subr.mxu0 0.0
  %3749 = vmatpush2.msra.mxu0 0.0
  %3750 = vmatprep.subr.mxu0 0.0
  %3751 = vmatpush2.msra.mxu0 0.0
  %3752 = vmatprep.subr.mxu0 0.0
  %3753 = vmatpush2.msra.mxu0 0.0
  %3754 = vmatprep.subr.mxu0 0.0
  %3755 = vmatpush2.msra.mxu0 0.0
  %3756 = vmatprep.mubr.f32.mxu0 0.0
  %3757 = vmatmul.mubr.f32.gmra.mxu0 %v555
  %v3758 = vpop.f32.mrf.mxu0
  %v3759 = vadd.f32 0.0, %v3758
  %v3760 = vpop.f32.mrf.mxu0
  %3761 = vmatprep.mubr.f32.mxu0 0.0
  %3762 = vmatmul.mubr.f32.gmra.mxu0 %v558
  %v3763 = vpop.f32.mrf.mxu0
  %v3764 = vadd.f32 0.0, %v3763
  %v3765 = vpop.f32.mrf.mxu0
  %3766 = vmatprep.mubr.f32.mxu0 0.0
  %3767 = vmatmul.mubr.f32.gmra.mxu0 %v561
  %v3768 = vpop.f32.mrf.mxu0
  %v3769 = vadd.f32 0.0, %v3768
  %v3770 = vpop.f32.mrf.mxu0
  %3771 = vmatprep.mubr.f32.mxu0 0.0
  %3772 = vmatmul.mubr.f32.gmra.mxu0 %v564
  %v3773 = vpop.f32.mrf.mxu0
  %v3774 = vadd.f32 0.0, %v3773
  %v3775 = vpop.f32.mrf.mxu0
  %3776 = vmatprep.mubr.f32.mxu0 0.0
  %3777 = vmatmul.mubr.f32.gmra.mxu0 %v567
  %v3778 = vpop.f32.mrf.mxu0
  %v3779 = vadd.f32 0.0, %v3778
  %v3780 = vpop.f32.mrf.mxu0
  %3781 = vmatprep.mubr.f32.mxu0 0.0
  %3782 = vmatmul.mubr.f32.gmra.mxu0 %v2805
  %v3783 = vpop.f32.mrf.mxu0
  %v3784 = vadd.f32 0.0, %v3783
  %v3785 = vpop.f32.mrf.mxu0
  %3786 = vdwg.mxu0
  %v3787 = vadd.f32 %v3686, %v3759
  %v3788 = vadd.f32 %v3687, %v3764
  %v3789 = vadd.f32 %v3688, %v3769
  %v3790 = vadd.f32 %v3689, %v3774
  %v3791 = vadd.f32 %v3690, %v3779
  %v3792 = vadd.f32 %v3691, %v3784
  %v3794 = vsel %vm324, %v59, 0
  %3796 = vmatprep.subr.mxu0 0.0
  %3797 = vmatpush1.msra.mxu0 0.0
  %3798 = vmatprep.subr.mxu0 0.0
  %3799 = vmatpush1.msra.mxu0 0.0
  %3800 = vmatprep.subr.mxu0 0.0
  %3801 = vmatpush1.msra.mxu0 0.0
  %3802 = vmatprep.subr.mxu0 0.0
  %3803 = vmatpush1.msra.mxu0 0.0
  %3804 = vmatprep.subr.mxu0 0.0
  %3805 = vmatpush1.msra.mxu0 0.0
  %3806 = vmatprep.subr.mxu0 0.0
  %3807 = vmatpush1.msra.mxu0 0.0
  %3808 = vmatprep.subr.mxu0 0.0
  %3809 = vmatpush1.msra.mxu0 0.0
  %3810 = vmatprep.subr.mxu0 0.0
  %3811 = vmatpush1.msra.mxu0 0.0
  %3812 = vmatprep.subr.mxu0 0.0
  %3813 = vmatpush1.msra.mxu0 0.0
  %3814 = vmatprep.subr.mxu0 0.0
  %3815 = vmatpush1.msra.mxu0 0.0
  %3816 = vmatprep.subr.mxu0 0.0
  %3817 = vmatpush1.msra.mxu0 0.0
  %3818 = vmatprep.subr.mxu0 0.0
  %3819 = vmatpush1.msra.mxu0 0.0
  %3820 = vmatprep.subr.mxu0 0.0
  %3821 = vmatpush1.msra.mxu0 %v95
  %3822 = vmatprep.subr.mxu0 0.0
  %3823 = vmatpush1.msra.mxu0 %v94
  %3824 = vmatprep.subr.mxu0 0.0
  %3825 = vmatpush1.msra.mxu0 %v93
  %3826 = vmatprep.subr.mxu0 0.0
  %3827 = vmatpush1.msra.mxu0 %v92
  %3828 = vmatprep.subr.mxu0 0.0
  %3829 = vmatpush2.msra.mxu0 0.0
  %3830 = vmatprep.subr.mxu0 0.0
  %3831 = vmatpush2.msra.mxu0 0.0
  %3832 = vmatprep.subr.mxu0 0.0
  %3833 = vmatpush2.msra.mxu0 0.0
  %3834 = vmatprep.subr.mxu0 0.0
  %3835 = vmatpush2.msra.mxu0 0.0
  %3836 = vmatprep.subr.mxu0 0.0
  %3837 = vmatpush2.msra.mxu0 0.0
  %3838 = vmatprep.subr.mxu0 0.0
  %3839 = vmatpush2.msra.mxu0 0.0
  %3840 = vmatprep.subr.mxu0 0.0
  %3841 = vmatpush2.msra.mxu0 0.0
  %3842 = vmatprep.subr.mxu0 0.0
  %3843 = vmatpush2.msra.mxu0 0.0
  %3844 = vmatprep.subr.mxu0 0.0
  %3845 = vmatpush2.msra.mxu0 0.0
  %3846 = vmatprep.subr.mxu0 0.0
  %3847 = vmatpush2.msra.mxu0 0.0
  %3848 = vmatprep.subr.mxu0 0.0
  %3849 = vmatpush2.msra.mxu0 0.0
  %3850 = vmatprep.subr.mxu0 0.0
  %3851 = vmatpush2.msra.mxu0 0.0
  %3852 = vmatprep.subr.mxu0 0.0
  %3853 = vmatpush2.msra.mxu0 0.0
  %3854 = vmatprep.subr.mxu0 0.0
  %3855 = vmatpush2.msra.mxu0 0.0
  %3856 = vmatprep.subr.mxu0 0.0
  %3857 = vmatpush2.msra.mxu0 0.0
  %3858 = vmatprep.subr.mxu0 0.0
  %3859 = vmatpush2.msra.mxu0 0.0
  %3860 = vmatprep.mubr.f32.mxu0 0.0
  %3861 = vmatmul.mubr.f32.gmra.mxu0 %v674
  %v3862 = vpop.f32.mrf.mxu0
  %v3863 = vadd.f32 0.0, %v3862
  %v3864 = vpop.f32.mrf.mxu0
  %3865 = vmatprep.mubr.f32.mxu0 0.0
  %3866 = vmatmul.mubr.f32.gmra.mxu0 %v677
  %v3867 = vpop.f32.mrf.mxu0
  %v3868 = vadd.f32 0.0, %v3867
  %v3869 = vpop.f32.mrf.mxu0
  %3870 = vmatprep.mubr.f32.mxu0 0.0
  %3871 = vmatmul.mubr.f32.gmra.mxu0 %v680
  %v3872 = vpop.f32.mrf.mxu0
  %v3873 = vadd.f32 0.0, %v3872
  %v3874 = vpop.f32.mrf.mxu0
  %3875 = vmatprep.mubr.f32.mxu0 0.0
  %3876 = vmatmul.mubr.f32.gmra.mxu0 %v683
  %v3877 = vpop.f32.mrf.mxu0
  %v3878 = vadd.f32 0.0, %v3877
  %v3879 = vpop.f32.mrf.mxu0
  %3880 = vmatprep.mubr.f32.mxu0 0.0
  %3881 = vmatmul.mubr.f32.gmra.mxu0 %v686
  %v3882 = vpop.f32.mrf.mxu0
  %v3883 = vadd.f32 0.0, %v3882
  %v3884 = vpop.f32.mrf.mxu0
  %3885 = vmatprep.mubr.f32.mxu0 0.0
  %3886 = vmatmul.mubr.f32.gmra.mxu0 %v3794
  %v3887 = vpop.f32.mrf.mxu0
  %v3888 = vadd.f32 0.0, %v3887
  %v3889 = vpop.f32.mrf.mxu0
  %3890 = vdwg.mxu0
  %v3891 = vadd.f32 %v3787, %v3863
  %v3892 = vadd.f32 %v3788, %v3868
  %v3893 = vadd.f32 %v3789, %v3873
  %v3894 = vadd.f32 %v3790, %v3878
  %v3895 = vadd.f32 %v3791, %v3883
  %v3896 = vadd.f32 %v3792, %v3888
  %3897 = vmatprep.subr.mxu0 0.0
  %3898 = vmatpush1.msra.mxu0 0.0
  %3899 = vmatprep.subr.mxu0 0.0
  %3900 = vmatpush1.msra.mxu0 0.0
  %3901 = vmatprep.subr.mxu0 0.0
  %3902 = vmatpush1.msra.mxu0 0.0
  %3903 = vmatprep.subr.mxu0 0.0
  %3904 = vmatpush1.msra.mxu0 0.0
  %3905 = vmatprep.subr.mxu0 0.0
  %3906 = vmatpush1.msra.mxu0 0.0
  %3907 = vmatprep.subr.mxu0 0.0
  %3908 = vmatpush1.msra.mxu0 0.0
  %3909 = vmatprep.subr.mxu0 0.0
  %3910 = vmatpush1.msra.mxu0 0.0
  %3911 = vmatprep.subr.mxu0 0.0
  %3912 = vmatpush1.msra.mxu0 0.0
  %3913 = vmatprep.subr.mxu0 0.0
  %3914 = vmatpush1.msra.mxu0 0.0
  %3915 = vmatprep.subr.mxu0 0.0
  %3916 = vmatpush1.msra.mxu0 0.0
  %3917 = vmatprep.subr.mxu0 0.0
  %3918 = vmatpush1.msra.mxu0 0.0
  %3919 = vmatprep.subr.mxu0 0.0
  %3920 = vmatpush1.msra.mxu0 0.0
  %3921 = vmatprep.subr.mxu0 0.0
  %3922 = vmatpush1.msra.mxu0 %v75
  %3923 = vmatprep.subr.mxu0 0.0
  %3924 = vmatpush1.msra.mxu0 %v74
  %3925 = vmatprep.subr.mxu0 0.0
  %3926 = vmatpush1.msra.mxu0 %v73
  %3927 = vmatprep.subr.mxu0 0.0
  %3928 = vmatpush1.msra.mxu0 %v72
  %3929 = vmatprep.subr.mxu0 0.0
  %3930 = vmatpush2.msra.mxu0 0.0
  %3931 = vmatprep.subr.mxu0 0.0
  %3932 = vmatpush2.msra.mxu0 0.0
  %3933 = vmatprep.subr.mxu0 0.0
  %3934 = vmatpush2.msra.mxu0 0.0
  %3935 = vmatprep.subr.mxu0 0.0
  %3936 = vmatpush2.msra.mxu0 0.0
  %3937 = vmatprep.subr.mxu0 0.0
  %3938 = vmatpush2.msra.mxu0 0.0
  %3939 = vmatprep.subr.mxu0 0.0
  %3940 = vmatpush2.msra.mxu0 0.0
  %3941 = vmatprep.subr.mxu0 0.0
  %3942 = vmatpush2.msra.mxu0 0.0
  %3943 = vmatprep.subr.mxu0 0.0
  %3944 = vmatpush2.msra.mxu0 0.0
  %3945 = vmatprep.subr.mxu0 0.0
  %3946 = vmatpush2.msra.mxu0 0.0
  %3947 = vmatprep.subr.mxu0 0.0
  %3948 = vmatpush2.msra.mxu0 0.0
  %3949 = vmatprep.subr.mxu0 0.0
  %3950 = vmatpush2.msra.mxu0 0.0
  %3951 = vmatprep.subr.mxu0 0.0
  %3952 = vmatpush2.msra.mxu0 0.0
  %3953 = vmatprep.subr.mxu0 0.0
  %3954 = vmatpush2.msra.mxu0 0.0
  %3955 = vmatprep.subr.mxu0 0.0
  %3956 = vmatpush2.msra.mxu0 0.0
  %3957 = vmatprep.subr.mxu0 0.0
  %3958 = vmatpush2.msra.mxu0 0.0
  %3959 = vmatprep.subr.mxu0 0.0
  %3960 = vmatpush2.msra.mxu0 0.0
  %3961 = vmatprep.mubr.f32.mxu0 0.0
  %3962 = vmatmul.mubr.f32.gmra.mxu0 %v442
  %v3963 = vpop.f32.mrf.mxu0
  %v3964 = vadd.f32 0.0, %v3963
  %v3965 = vpop.f32.mrf.mxu0
  %3966 = vmatprep.mubr.f32.mxu0 0.0
  %3967 = vmatmul.mubr.f32.gmra.mxu0 %v445
  %v3968 = vpop.f32.mrf.mxu0
  %v3969 = vadd.f32 0.0, %v3968
  %v3970 = vpop.f32.mrf.mxu0
  %3971 = vmatprep.mubr.f32.mxu0 0.0
  %3972 = vmatmul.mubr.f32.gmra.mxu0 %v448
  %v3973 = vpop.f32.mrf.mxu0
  %v3974 = vadd.f32 0.0, %v3973
  %v3975 = vpop.f32.mrf.mxu0
  %3976 = vmatprep.mubr.f32.mxu0 0.0
  %3977 = vmatmul.mubr.f32.gmra.mxu0 %v451
  %v3978 = vpop.f32.mrf.mxu0
  %v3979 = vadd.f32 0.0, %v3978
  %v3980 = vpop.f32.mrf.mxu0
  %3981 = vmatprep.mubr.f32.mxu0 0.0
  %3982 = vmatmul.mubr.f32.gmra.mxu0 %v454
  %v3983 = vpop.f32.mrf.mxu0
  %v3984 = vadd.f32 0.0, %v3983
  %v3985 = vpop.f32.mrf.mxu0
  %3986 = vmatprep.mubr.f32.mxu0 0.0
  %3987 = vmatmul.mubr.f32.gmra.mxu0 %v790
  %v3988 = vpop.f32.mrf.mxu0
  %v3989 = vadd.f32 0.0, %v3988
  %v3990 = vpop.f32.mrf.mxu0
  %3991 = vdwg.mxu0
  %3992 = vmatprep.subr.mxu0 0.0
  %3993 = vmatpush1.msra.mxu0 0.0
  %3994 = vmatprep.subr.mxu0 0.0
  %3995 = vmatpush1.msra.mxu0 0.0
  %3996 = vmatprep.subr.mxu0 0.0
  %3997 = vmatpush1.msra.mxu0 0.0
  %3998 = vmatprep.subr.mxu0 0.0
  %3999 = vmatpush1.msra.mxu0 0.0
  %4000 = vmatprep.subr.mxu0 0.0
  %4001 = vmatpush1.msra.mxu0 0.0
  %4002 = vmatprep.subr.mxu0 0.0
  %4003 = vmatpush1.msra.mxu0 0.0
  %4004 = vmatprep.subr.mxu0 0.0
  %4005 = vmatpush1.msra.mxu0 0.0
  %4006 = vmatprep.subr.mxu0 0.0
  %4007 = vmatpush1.msra.mxu0 0.0
  %4008 = vmatprep.subr.mxu0 0.0
  %4009 = vmatpush1.msra.mxu0 0.0
  %4010 = vmatprep.subr.mxu0 0.0
  %4011 = vmatpush1.msra.mxu0 0.0
  %4012 = vmatprep.subr.mxu0 0.0
  %4013 = vmatpush1.msra.mxu0 0.0
  %4014 = vmatprep.subr.mxu0 0.0
  %4015 = vmatpush1.msra.mxu0 0.0
  %4016 = vmatprep.subr.mxu0 0.0
  %4017 = vmatpush1.msra.mxu0 %v67
  %4018 = vmatprep.subr.mxu0 0.0
  %4019 = vmatpush1.msra.mxu0 %v66
  %4020 = vmatprep.subr.mxu0 0.0
  %4021 = vmatpush1.msra.mxu0 %v65
  %4022 = vmatprep.subr.mxu0 0.0
  %4023 = vmatpush1.msra.mxu0 %v64
  %4024 = vmatprep.subr.mxu0 0.0
  %4025 = vmatpush2.msra.mxu0 0.0
  %4026 = vmatprep.subr.mxu0 0.0
  %4027 = vmatpush2.msra.mxu0 0.0
  %4028 = vmatprep.subr.mxu0 0.0
  %4029 = vmatpush2.msra.mxu0 0.0
  %4030 = vmatprep.subr.mxu0 0.0
  %4031 = vmatpush2.msra.mxu0 0.0
  %4032 = vmatprep.subr.mxu0 0.0
  %4033 = vmatpush2.msra.mxu0 0.0
  %4034 = vmatprep.subr.mxu0 0.0
  %4035 = vmatpush2.msra.mxu0 0.0
  %4036 = vmatprep.subr.mxu0 0.0
  %4037 = vmatpush2.msra.mxu0 0.0
  %4038 = vmatprep.subr.mxu0 0.0
  %4039 = vmatpush2.msra.mxu0 0.0
  %4040 = vmatprep.subr.mxu0 0.0
  %4041 = vmatpush2.msra.mxu0 0.0
  %4042 = vmatprep.subr.mxu0 0.0
  %4043 = vmatpush2.msra.mxu0 0.0
  %4044 = vmatprep.subr.mxu0 0.0
  %4045 = vmatpush2.msra.mxu0 0.0
  %4046 = vmatprep.subr.mxu0 0.0
  %4047 = vmatpush2.msra.mxu0 0.0
  %4048 = vmatprep.subr.mxu0 0.0
  %4049 = vmatpush2.msra.mxu0 0.0
  %4050 = vmatprep.subr.mxu0 0.0
  %4051 = vmatpush2.msra.mxu0 0.0
  %4052 = vmatprep.subr.mxu0 0.0
  %4053 = vmatpush2.msra.mxu0 0.0
  %4054 = vmatprep.subr.mxu0 0.0
  %4055 = vmatpush2.msra.mxu0 0.0
  %4056 = vmatprep.mubr.f32.mxu0 0.0
  %4057 = vmatmul.mubr.f32.gmra.mxu0 %v671
  %v4058 = vpop.f32.mrf.mxu0
  %v4059 = vadd.f32 %v3964, %v4058
  %v4060 = vpop.f32.mrf.mxu0
  %4061 = vmatprep.mubr.f32.mxu0 0.0
  %4062 = vmatmul.mubr.f32.gmra.mxu0 %v674
  %v4063 = vpop.f32.mrf.mxu0
  %v4064 = vadd.f32 %v3969, %v4063
  %v4065 = vpop.f32.mrf.mxu0
  %4066 = vmatprep.mubr.f32.mxu0 0.0
  %4067 = vmatmul.mubr.f32.gmra.mxu0 %v677
  %v4068 = vpop.f32.mrf.mxu0
  %v4069 = vadd.f32 %v3974, %v4068
  %v4070 = vpop.f32.mrf.mxu0
  %4071 = vmatprep.mubr.f32.mxu0 0.0
  %4072 = vmatmul.mubr.f32.gmra.mxu0 %v680
  %v4073 = vpop.f32.mrf.mxu0
  %v4074 = vadd.f32 %v3979, %v4073
  %v4075 = vpop.f32.mrf.mxu0
  %4076 = vmatprep.mubr.f32.mxu0 0.0
  %4077 = vmatmul.mubr.f32.gmra.mxu0 %v683
  %v4078 = vpop.f32.mrf.mxu0
  %v4079 = vadd.f32 %v3984, %v4078
  %v4080 = vpop.f32.mrf.mxu0
  %4081 = vmatprep.mubr.f32.mxu0 0.0
  %4082 = vmatmul.mubr.f32.gmra.mxu0 %v686
  %v4083 = vpop.f32.mrf.mxu0
  %v4084 = vadd.f32 %v3989, %v4083
  %v4085 = vpop.f32.mrf.mxu0
  %4086 = vdwg.mxu0
  %4087 = vmatprep.subr.mxu0 0.0
  %4088 = vmatpush1.msra.mxu0 0.0
  %4089 = vmatprep.subr.mxu0 0.0
  %4090 = vmatpush1.msra.mxu0 0.0
  %4091 = vmatprep.subr.mxu0 0.0
  %4092 = vmatpush1.msra.mxu0 0.0
  %4093 = vmatprep.subr.mxu0 0.0
  %4094 = vmatpush1.msra.mxu0 0.0
  %4095 = vmatprep.subr.mxu0 0.0
  %4096 = vmatpush1.msra.mxu0 0.0
  %4097 = vmatprep.subr.mxu0 0.0
  %4098 = vmatpush1.msra.mxu0 0.0
  %4099 = vmatprep.subr.mxu0 0.0
  %4100 = vmatpush1.msra.mxu0 0.0
  %4101 = vmatprep.subr.mxu0 0.0
  %4102 = vmatpush1.msra.mxu0 0.0
  %4103 = vmatprep.subr.mxu0 0.0
  %4104 = vmatpush1.msra.mxu0 0.0
  %4105 = vmatprep.subr.mxu0 0.0
  %4106 = vmatpush1.msra.mxu0 0.0
  %4107 = vmatprep.subr.mxu0 0.0
  %4108 = vmatpush1.msra.mxu0 0.0
  %4109 = vmatprep.subr.mxu0 0.0
  %4110 = vmatpush1.msra.mxu0 0.0
  %4111 = vmatprep.subr.mxu0 0.0
  %4112 = vmatpush1.msra.mxu0 %v83
  %4113 = vmatprep.subr.mxu0 0.0
  %4114 = vmatpush1.msra.mxu0 %v82
  %4115 = vmatprep.subr.mxu0 0.0
  %4116 = vmatpush1.msra.mxu0 %v81
  %4117 = vmatprep.subr.mxu0 0.0
  %4118 = vmatpush1.msra.mxu0 %v80
  %4119 = vmatprep.subr.mxu0 0.0
  %4120 = vmatpush2.msra.mxu0 0.0
  %4121 = vmatprep.subr.mxu0 0.0
  %4122 = vmatpush2.msra.mxu0 0.0
  %4123 = vmatprep.subr.mxu0 0.0
  %4124 = vmatpush2.msra.mxu0 0.0
  %4125 = vmatprep.subr.mxu0 0.0
  %4126 = vmatpush2.msra.mxu0 0.0
  %4127 = vmatprep.subr.mxu0 0.0
  %4128 = vmatpush2.msra.mxu0 0.0
  %4129 = vmatprep.subr.mxu0 0.0
  %4130 = vmatpush2.msra.mxu0 0.0
  %4131 = vmatprep.subr.mxu0 0.0
  %4132 = vmatpush2.msra.mxu0 0.0
  %4133 = vmatprep.subr.mxu0 0.0
  %4134 = vmatpush2.msra.mxu0 0.0
  %4135 = vmatprep.subr.mxu0 0.0
  %4136 = vmatpush2.msra.mxu0 0.0
  %4137 = vmatprep.subr.mxu0 0.0
  %4138 = vmatpush2.msra.mxu0 0.0
  %4139 = vmatprep.subr.mxu0 0.0
  %4140 = vmatpush2.msra.mxu0 0.0
  %4141 = vmatprep.subr.mxu0 0.0
  %4142 = vmatpush2.msra.mxu0 0.0
  %4143 = vmatprep.subr.mxu0 0.0
  %4144 = vmatpush2.msra.mxu0 0.0
  %4145 = vmatprep.subr.mxu0 0.0
  %4146 = vmatpush2.msra.mxu0 0.0
  %4147 = vmatprep.subr.mxu0 0.0
  %4148 = vmatpush2.msra.mxu0 0.0
  %4149 = vmatprep.subr.mxu0 0.0
  %4150 = vmatpush2.msra.mxu0 0.0
  %4151 = vmatprep.mubr.f32.mxu0 0.0
  %4152 = vmatmul.mubr.f32.gmra.mxu0 %v329
  %v4153 = vpop.f32.mrf.mxu0
  %v4154 = vadd.f32 0.0, %v4153
  %v4155 = vpop.f32.mrf.mxu0
  %4156 = vmatprep.mubr.f32.mxu0 0.0
  %4157 = vmatmul.mubr.f32.gmra.mxu0 %v332
  %v4158 = vpop.f32.mrf.mxu0
  %v4159 = vadd.f32 0.0, %v4158
  %v4160 = vpop.f32.mrf.mxu0
  %4161 = vmatprep.mubr.f32.mxu0 0.0
  %4162 = vmatmul.mubr.f32.gmra.mxu0 %v335
  %v4163 = vpop.f32.mrf.mxu0
  %v4164 = vadd.f32 0.0, %v4163
  %v4165 = vpop.f32.mrf.mxu0
  %4166 = vmatprep.mubr.f32.mxu0 0.0
  %4167 = vmatmul.mubr.f32.gmra.mxu0 %v338
  %v4168 = vpop.f32.mrf.mxu0
  %v4169 = vadd.f32 0.0, %v4168
  %v4170 = vpop.f32.mrf.mxu0
  %4171 = vmatprep.mubr.f32.mxu0 0.0
  %4172 = vmatmul.mubr.f32.gmra.mxu0 %v341
  %v4173 = vpop.f32.mrf.mxu0
  %v4174 = vadd.f32 0.0, %v4173
  %v4175 = vpop.f32.mrf.mxu0
  %4176 = vmatprep.mubr.f32.mxu0 0.0
  %4177 = vmatmul.mubr.f32.gmra.mxu0 %v1779
  %v4178 = vpop.f32.mrf.mxu0
  %v4179 = vadd.f32 0.0, %v4178
  %v4180 = vpop.f32.mrf.mxu0
  %4181 = vdwg.mxu0
  %v4182 = vadd.f32 %v4059, %v4154
  %v4183 = vadd.f32 %v4064, %v4159
  %v4184 = vadd.f32 %v4069, %v4164
  %v4185 = vadd.f32 %v4074, %v4169
  %v4186 = vadd.f32 %v4079, %v4174
  %v4187 = vadd.f32 %v4084, %v4179
  %4188 = vmatprep.subr.mxu0 0.0
  %4189 = vmatpush1.msra.mxu0 0.0
  %4190 = vmatprep.subr.mxu0 0.0
  %4191 = vmatpush1.msra.mxu0 0.0
  %4192 = vmatprep.subr.mxu0 0.0
  %4193 = vmatpush1.msra.mxu0 0.0
  %4194 = vmatprep.subr.mxu0 0.0
  %4195 = vmatpush1.msra.mxu0 0.0
  %4196 = vmatprep.subr.mxu0 0.0
  %4197 = vmatpush1.msra.mxu0 0.0
  %4198 = vmatprep.subr.mxu0 0.0
  %4199 = vmatpush1.msra.mxu0 0.0
  %4200 = vmatprep.subr.mxu0 0.0
  %4201 = vmatpush1.msra.mxu0 0.0
  %4202 = vmatprep.subr.mxu0 0.0
  %4203 = vmatpush1.msra.mxu0 0.0
  %4204 = vmatprep.subr.mxu0 0.0
  %4205 = vmatpush1.msra.mxu0 0.0
  %4206 = vmatprep.subr.mxu0 0.0
  %4207 = vmatpush1.msra.mxu0 0.0
  %4208 = vmatprep.subr.mxu0 0.0
  %4209 = vmatpush1.msra.mxu0 0.0
  %4210 = vmatprep.subr.mxu0 0.0
  %4211 = vmatpush1.msra.mxu0 0.0
  %4212 = vmatprep.subr.mxu0 0.0
  %4213 = vmatpush1.msra.mxu0 %v91
  %4214 = vmatprep.subr.mxu0 0.0
  %4215 = vmatpush1.msra.mxu0 %v90
  %4216 = vmatprep.subr.mxu0 0.0
  %4217 = vmatpush1.msra.mxu0 %v89
  %4218 = vmatprep.subr.mxu0 0.0
  %4219 = vmatpush1.msra.mxu0 %v88
  %4220 = vmatprep.subr.mxu0 0.0
  %4221 = vmatpush2.msra.mxu0 0.0
  %4222 = vmatprep.subr.mxu0 0.0
  %4223 = vmatpush2.msra.mxu0 0.0
  %4224 = vmatprep.subr.mxu0 0.0
  %4225 = vmatpush2.msra.mxu0 0.0
  %4226 = vmatprep.subr.mxu0 0.0
  %4227 = vmatpush2.msra.mxu0 0.0
  %4228 = vmatprep.subr.mxu0 0.0
  %4229 = vmatpush2.msra.mxu0 0.0
  %4230 = vmatprep.subr.mxu0 0.0
  %4231 = vmatpush2.msra.mxu0 0.0
  %4232 = vmatprep.subr.mxu0 0.0
  %4233 = vmatpush2.msra.mxu0 0.0
  %4234 = vmatprep.subr.mxu0 0.0
  %4235 = vmatpush2.msra.mxu0 0.0
  %4236 = vmatprep.subr.mxu0 0.0
  %4237 = vmatpush2.msra.mxu0 0.0
  %4238 = vmatprep.subr.mxu0 0.0
  %4239 = vmatpush2.msra.mxu0 0.0
  %4240 = vmatprep.subr.mxu0 0.0
  %4241 = vmatpush2.msra.mxu0 0.0
  %4242 = vmatprep.subr.mxu0 0.0
  %4243 = vmatpush2.msra.mxu0 0.0
  %4244 = vmatprep.subr.mxu0 0.0
  %4245 = vmatpush2.msra.mxu0 0.0
  %4246 = vmatprep.subr.mxu0 0.0
  %4247 = vmatpush2.msra.mxu0 0.0
  %4248 = vmatprep.subr.mxu0 0.0
  %4249 = vmatpush2.msra.mxu0 0.0
  %4250 = vmatprep.subr.mxu0 0.0
  %4251 = vmatpush2.msra.mxu0 0.0
  %4252 = vmatprep.mubr.f32.mxu0 0.0
  %4253 = vmatmul.mubr.f32.gmra.mxu0 %v555
  %v4254 = vpop.f32.mrf.mxu0
  %v4255 = vadd.f32 0.0, %v4254
  %v4256 = vpop.f32.mrf.mxu0
  %4257 = vmatprep.mubr.f32.mxu0 0.0
  %4258 = vmatmul.mubr.f32.gmra.mxu0 %v558
  %v4259 = vpop.f32.mrf.mxu0
  %v4260 = vadd.f32 0.0, %v4259
  %v4261 = vpop.f32.mrf.mxu0
  %4262 = vmatprep.mubr.f32.mxu0 0.0
  %4263 = vmatmul.mubr.f32.gmra.mxu0 %v561
  %v4264 = vpop.f32.mrf.mxu0
  %v4265 = vadd.f32 0.0, %v4264
  %v4266 = vpop.f32.mrf.mxu0
  %4267 = vmatprep.mubr.f32.mxu0 0.0
  %4268 = vmatmul.mubr.f32.gmra.mxu0 %v564
  %v4269 = vpop.f32.mrf.mxu0
  %v4270 = vadd.f32 0.0, %v4269
  %v4271 = vpop.f32.mrf.mxu0
  %4272 = vmatprep.mubr.f32.mxu0 0.0
  %4273 = vmatmul.mubr.f32.gmra.mxu0 %v567
  %v4274 = vpop.f32.mrf.mxu0
  %v4275 = vadd.f32 0.0, %v4274
  %v4276 = vpop.f32.mrf.mxu0
  %4277 = vmatprep.mubr.f32.mxu0 0.0
  %4278 = vmatmul.mubr.f32.gmra.mxu0 %v2805
  %v4279 = vpop.f32.mrf.mxu0
  %v4280 = vadd.f32 0.0, %v4279
  %v4281 = vpop.f32.mrf.mxu0
  %4282 = vdwg.mxu0
  %v4283 = vadd.f32 %v4182, %v4255
  %v4284 = vadd.f32 %v4183, %v4260
  %v4285 = vadd.f32 %v4184, %v4265
  %v4286 = vadd.f32 %v4185, %v4270
  %v4287 = vadd.f32 %v4186, %v4275
  %v4288 = vadd.f32 %v4187, %v4280
  %4289 = vmatprep.subr.mxu0 0.0
  %4290 = vmatpush1.msra.mxu0 0.0
  %4291 = vmatprep.subr.mxu0 0.0
  %4292 = vmatpush1.msra.mxu0 0.0
  %4293 = vmatprep.subr.mxu0 0.0
  %4294 = vmatpush1.msra.mxu0 0.0
  %4295 = vmatprep.subr.mxu0 0.0
  %4296 = vmatpush1.msra.mxu0 0.0
  %4297 = vmatprep.subr.mxu0 0.0
  %4298 = vmatpush1.msra.mxu0 0.0
  %4299 = vmatprep.subr.mxu0 0.0
  %4300 = vmatpush1.msra.mxu0 0.0
  %4301 = vmatprep.subr.mxu0 0.0
  %4302 = vmatpush1.msra.mxu0 0.0
  %4303 = vmatprep.subr.mxu0 0.0
  %4304 = vmatpush1.msra.mxu0 0.0
  %4305 = vmatprep.subr.mxu0 0.0
  %4306 = vmatpush1.msra.mxu0 0.0
  %4307 = vmatprep.subr.mxu0 0.0
  %4308 = vmatpush1.msra.mxu0 0.0
  %4309 = vmatprep.subr.mxu0 0.0
  %4310 = vmatpush1.msra.mxu0 0.0
  %4311 = vmatprep.subr.mxu0 0.0
  %4312 = vmatpush1.msra.mxu0 0.0
  %4313 = vmatprep.subr.mxu0 0.0
  %4314 = vmatpush1.msra.mxu0 %v99
  %4315 = vmatprep.subr.mxu0 0.0
  %4316 = vmatpush1.msra.mxu0 %v98
  %4317 = vmatprep.subr.mxu0 0.0
  %4318 = vmatpush1.msra.mxu0 %v97
  %4319 = vmatprep.subr.mxu0 0.0
  %4320 = vmatpush1.msra.mxu0 %v96
  %4321 = vmatprep.subr.mxu0 0.0
  %4322 = vmatpush2.msra.mxu0 0.0
  %4323 = vmatprep.subr.mxu0 0.0
  %4324 = vmatpush2.msra.mxu0 0.0
  %4325 = vmatprep.subr.mxu0 0.0
  %4326 = vmatpush2.msra.mxu0 0.0
  %4327 = vmatprep.subr.mxu0 0.0
  %4328 = vmatpush2.msra.mxu0 0.0
  %4329 = vmatprep.subr.mxu0 0.0
  %4330 = vmatpush2.msra.mxu0 0.0
  %4331 = vmatprep.subr.mxu0 0.0
  %4332 = vmatpush2.msra.mxu0 0.0
  %4333 = vmatprep.subr.mxu0 0.0
  %4334 = vmatpush2.msra.mxu0 0.0
  %4335 = vmatprep.subr.mxu0 0.0
  %4336 = vmatpush2.msra.mxu0 0.0
  %4337 = vmatprep.subr.mxu0 0.0
  %4338 = vmatpush2.msra.mxu0 0.0
  %4339 = vmatprep.subr.mxu0 0.0
  %4340 = vmatpush2.msra.mxu0 0.0
  %4341 = vmatprep.subr.mxu0 0.0
  %4342 = vmatpush2.msra.mxu0 0.0
  %4343 = vmatprep.subr.mxu0 0.0
  %4344 = vmatpush2.msra.mxu0 0.0
  %4345 = vmatprep.subr.mxu0 0.0
  %4346 = vmatpush2.msra.mxu0 0.0
  %4347 = vmatprep.subr.mxu0 0.0
  %4348 = vmatpush2.msra.mxu0 0.0
  %4349 = vmatprep.subr.mxu0 0.0
  %4350 = vmatpush2.msra.mxu0 0.0
  %4351 = vmatprep.subr.mxu0 0.0
  %4352 = vmatpush2.msra.mxu0 0.0
  %4353 = vmatprep.mubr.f32.mxu0 0.0
  %4354 = vmatmul.mubr.f32.gmra.mxu0 %v674
  %v4355 = vpop.f32.mrf.mxu0
  %v4356 = vadd.f32 0.0, %v4355
  %v4357 = vpop.f32.mrf.mxu0
  %4358 = vmatprep.mubr.f32.mxu0 0.0
  %4359 = vmatmul.mubr.f32.gmra.mxu0 %v677
  %v4360 = vpop.f32.mrf.mxu0
  %v4361 = vadd.f32 0.0, %v4360
  %v4362 = vpop.f32.mrf.mxu0
  %4363 = vmatprep.mubr.f32.mxu0 0.0
  %4364 = vmatmul.mubr.f32.gmra.mxu0 %v680
  %v4365 = vpop.f32.mrf.mxu0
  %v4366 = vadd.f32 0.0, %v4365
  %v4367 = vpop.f32.mrf.mxu0
  %4368 = vmatprep.mubr.f32.mxu0 0.0
  %4369 = vmatmul.mubr.f32.gmra.mxu0 %v683
  %v4370 = vpop.f32.mrf.mxu0
  %v4371 = vadd.f32 0.0, %v4370
  %v4372 = vpop.f32.mrf.mxu0
  %4373 = vmatprep.mubr.f32.mxu0 0.0
  %4374 = vmatmul.mubr.f32.gmra.mxu0 %v686
  %v4375 = vpop.f32.mrf.mxu0
  %v4376 = vadd.f32 0.0, %v4375
  %v4377 = vpop.f32.mrf.mxu0
  %4378 = vmatprep.mubr.f32.mxu0 0.0
  %4379 = vmatmul.mubr.f32.gmra.mxu0 %v3794
  %v4380 = vpop.f32.mrf.mxu0
  %v4381 = vadd.f32 0.0, %v4380
  %v4382 = vpop.f32.mrf.mxu0
  %4383 = vdwg.mxu0
  %v4384 = vadd.f32 %v4283, %v4356
  %v4385 = vadd.f32 %v4284, %v4361
  %v4386 = vadd.f32 %v4285, %v4366
  %v4387 = vadd.f32 %v4286, %v4371
  %v4388 = vadd.f32 %v4287, %v4376
  %v4389 = vadd.f32 %v4288, %v4381
  %v4390 = vmax.f32 %v2902, %v3395
  %v4391 = vmax.f32 %v2903, %v3396
  %v4392 = vmax.f32 %v2904, %v3397
  %v4393 = vmax.f32 %v2905, %v3398
  %v4394 = vmax.f32 %v2906, %v3399
  %v4395 = vmax.f32 %v2907, %v3400
  %v4396 = vmax.f32 %v3891, %v4384
  %v4397 = vmax.f32 %v3892, %v4385
  %v4398 = vmax.f32 %v3893, %v4386
  %v4399 = vmax.f32 %v3894, %v4387
  %v4400 = vmax.f32 %v3895, %v4388
  %v4401 = vmax.f32 %v3896, %v4389
  %v4402 = vmax.f32 %v4390, %v4396
  %v4403 = vmax.f32 %v4391, %v4397
  %v4404 = vmax.f32 %v4392, %v4398
  %v4405 = vmax.f32 %v4393, %v4399
  %v4406 = vmax.f32 %v4394, %v4400
  %v4407 = vmax.f32 %v4395, %v4401
  %v4408 = vadd.f32 %v4402, %v2398
  %v4409 = vadd.f32 %v4403, %v2398
  %v4410 = vadd.f32 %v4404, %v2398
  %v4411 = vadd.f32 %v4405, %v2398
  %v4412 = vadd.f32 %v4406, %v2398
  %v4413 = vadd.f32 %v4407, %v2398
  %v4414 = vmax.f32 %v4408, 0.0
  %v4415 = vmax.f32 %v4409, 0.0
  %v4416 = vmax.f32 %v4410, 0.0
  %v4417 = vmax.f32 %v4411, 0.0
  %v4418 = vmax.f32 %v4412, 0.0
  %v4419 = vmax.f32 %v4413, 0.0
  %4420 = vmatprep.subr.mxu0 0.0
  %4421 = vmatpush1.msra.mxu0 %v147
  %4422 = vmatprep.subr.mxu0 0.0
  %4423 = vmatpush1.msra.mxu0 %v146
  %4424 = vmatprep.subr.mxu0 0.0
  %4425 = vmatpush1.msra.mxu0 %v145
  %4426 = vmatprep.subr.mxu0 0.0
  %4427 = vmatpush1.msra.mxu0 %v144
  %4428 = vmatprep.subr.mxu0 0.0
  %4429 = vmatpush1.msra.mxu0 %v143
  %4430 = vmatprep.subr.mxu0 0.0
  %4431 = vmatpush1.msra.mxu0 %v142
  %4432 = vmatprep.subr.mxu0 0.0
  %4433 = vmatpush1.msra.mxu0 %v141
  %4434 = vmatprep.subr.mxu0 0.0
  %4435 = vmatpush1.msra.mxu0 %v140
  %4436 = vmatprep.subr.mxu0 0.0
  %4437 = vmatpush1.msra.mxu0 %v139
  %4438 = vmatprep.subr.mxu0 0.0
  %4439 = vmatpush1.msra.mxu0 %v138
  %4440 = vmatprep.subr.mxu0 0.0
  %4441 = vmatpush1.msra.mxu0 %v137
  %4442 = vmatprep.subr.mxu0 0.0
  %4443 = vmatpush1.msra.mxu0 %v136
  %4444 = vmatprep.subr.mxu0 0.0
  %4445 = vmatpush1.msra.mxu0 %v135
  %4446 = vmatprep.subr.mxu0 0.0
  %4447 = vmatpush1.msra.mxu0 %v134
  %4448 = vmatprep.subr.mxu0 0.0
  %4449 = vmatpush1.msra.mxu0 %v133
  %4450 = vmatprep.subr.mxu0 0.0
  %4451 = vmatpush1.msra.mxu0 %v132
  %4452 = vmatprep.subr.mxu0 0.0
  %4453 = vmatpush2.msra.mxu0 0.0
  %4454 = vmatprep.subr.mxu0 0.0
  %4455 = vmatpush2.msra.mxu0 0.0
  %4456 = vmatprep.subr.mxu0 0.0
  %4457 = vmatpush2.msra.mxu0 0.0
  %4458 = vmatprep.subr.mxu0 0.0
  %4459 = vmatpush2.msra.mxu0 0.0
  %4460 = vmatprep.subr.mxu0 0.0
  %4461 = vmatpush2.msra.mxu0 0.0
  %4462 = vmatprep.subr.mxu0 0.0
  %4463 = vmatpush2.msra.mxu0 0.0
  %4464 = vmatprep.subr.mxu0 0.0
  %4465 = vmatpush2.msra.mxu0 0.0
  %4466 = vmatprep.subr.mxu0 0.0
  %4467 = vmatpush2.msra.mxu0 0.0
  %4468 = vmatprep.subr.mxu0 0.0
  %4469 = vmatpush2.msra.mxu0 0.0
  %4470 = vmatprep.subr.mxu0 0.0
  %4471 = vmatpush2.msra.mxu0 0.0
  %4472 = vmatprep.subr.mxu0 0.0
  %4473 = vmatpush2.msra.mxu0 0.0
  %4474 = vmatprep.subr.mxu0 0.0
  %4475 = vmatpush2.msra.mxu0 0.0
  %4476 = vmatprep.subr.mxu0 0.0
  %4477 = vmatpush2.msra.mxu0 0.0
  %4478 = vmatprep.subr.mxu0 0.0
  %4479 = vmatpush2.msra.mxu0 0.0
  %4480 = vmatprep.subr.mxu0 0.0
  %4481 = vmatpush2.msra.mxu0 0.0
  %4482 = vmatprep.subr.mxu0 0.0
  %4483 = vmatpush2.msra.mxu0 0.0
  %4484 = vmatprep.mubr.f32.mxu0 0.0
  %4485 = vmatmul.mubr.f32.gmra.mxu0 %v4414
  %v4486 = vpop.f32.mrf.mxu0
  %v4487 = vadd.f32 0.0, %v4486
  %v4488 = vpop.f32.mrf.mxu0
  %4489 = vmatprep.mubr.f32.mxu0 0.0
  %4490 = vmatmul.mubr.f32.gmra.mxu0 %v4415
  %v4491 = vpop.f32.mrf.mxu0
  %v4492 = vadd.f32 0.0, %v4491
  %v4493 = vpop.f32.mrf.mxu0
  %4494 = vmatprep.mubr.f32.mxu0 0.0
  %4495 = vmatmul.mubr.f32.gmra.mxu0 %v4416
  %v4496 = vpop.f32.mrf.mxu0
  %v4497 = vadd.f32 0.0, %v4496
  %v4498 = vpop.f32.mrf.mxu0
  %4499 = vmatprep.mubr.f32.mxu0 0.0
  %4500 = vmatmul.mubr.f32.gmra.mxu0 %v4417
  %v4501 = vpop.f32.mrf.mxu0
  %v4502 = vadd.f32 0.0, %v4501
  %v4503 = vpop.f32.mrf.mxu0
  %4504 = vdwg.mxu0
  %4505 = vmatprep.subr.mxu0 0.0
  %4506 = vmatpush1.msra.mxu0 %v115
  %4507 = vmatprep.subr.mxu0 0.0
  %4508 = vmatpush1.msra.mxu0 %v114
  %4509 = vmatprep.subr.mxu0 0.0
  %4510 = vmatpush1.msra.mxu0 %v113
  %4511 = vmatprep.subr.mxu0 0.0
  %4512 = vmatpush1.msra.mxu0 %v112
  %4513 = vmatprep.subr.mxu0 0.0
  %4514 = vmatpush1.msra.mxu0 %v111
  %4515 = vmatprep.subr.mxu0 0.0
  %4516 = vmatpush1.msra.mxu0 %v110
  %4517 = vmatprep.subr.mxu0 0.0
  %4518 = vmatpush1.msra.mxu0 %v109
  %4519 = vmatprep.subr.mxu0 0.0
  %4520 = vmatpush1.msra.mxu0 %v108
  %4521 = vmatprep.subr.mxu0 0.0
  %4522 = vmatpush1.msra.mxu0 %v107
  %4523 = vmatprep.subr.mxu0 0.0
  %4524 = vmatpush1.msra.mxu0 %v106
  %4525 = vmatprep.subr.mxu0 0.0
  %4526 = vmatpush1.msra.mxu0 %v105
  %4527 = vmatprep.subr.mxu0 0.0
  %4528 = vmatpush1.msra.mxu0 %v104
  %4529 = vmatprep.subr.mxu0 0.0
  %4530 = vmatpush1.msra.mxu0 %v103
  %4531 = vmatprep.subr.mxu0 0.0
  %4532 = vmatpush1.msra.mxu0 %v102
  %4533 = vmatprep.subr.mxu0 0.0
  %4534 = vmatpush1.msra.mxu0 %v101
  %4535 = vmatprep.subr.mxu0 0.0
  %4536 = vmatpush1.msra.mxu0 %v100
  %4537 = vmatprep.subr.mxu0 0.0
  %4538 = vmatpush2.msra.mxu0 0.0
  %4539 = vmatprep.subr.mxu0 0.0
  %4540 = vmatpush2.msra.mxu0 0.0
  %4541 = vmatprep.subr.mxu0 0.0
  %4542 = vmatpush2.msra.mxu0 0.0
  %4543 = vmatprep.subr.mxu0 0.0
  %4544 = vmatpush2.msra.mxu0 0.0
  %4545 = vmatprep.subr.mxu0 0.0
  %4546 = vmatpush2.msra.mxu0 0.0
  %4547 = vmatprep.subr.mxu0 0.0
  %4548 = vmatpush2.msra.mxu0 0.0
  %4549 = vmatprep.subr.mxu0 0.0
  %4550 = vmatpush2.msra.mxu0 0.0
  %4551 = vmatprep.subr.mxu0 0.0
  %4552 = vmatpush2.msra.mxu0 0.0
  %4553 = vmatprep.subr.mxu0 0.0
  %4554 = vmatpush2.msra.mxu0 0.0
  %4555 = vmatprep.subr.mxu0 0.0
  %4556 = vmatpush2.msra.mxu0 0.0
  %4557 = vmatprep.subr.mxu0 0.0
  %4558 = vmatpush2.msra.mxu0 0.0
  %4559 = vmatprep.subr.mxu0 0.0
  %4560 = vmatpush2.msra.mxu0 0.0
  %4561 = vmatprep.subr.mxu0 0.0
  %4562 = vmatpush2.msra.mxu0 0.0
  %4563 = vmatprep.subr.mxu0 0.0
  %4564 = vmatpush2.msra.mxu0 0.0
  %4565 = vmatprep.subr.mxu0 0.0
  %4566 = vmatpush2.msra.mxu0 0.0
  %4567 = vmatprep.subr.mxu0 0.0
  %4568 = vmatpush2.msra.mxu0 0.0
  %4569 = vmatprep.mubr.f32.mxu0 0.0
  %4570 = vmatmul.mubr.f32.gmra.mxu0 %v2406
  %v4571 = vpop.f32.mrf.mxu0
  %v4572 = vadd.f32 %v4487, %v4571
  %v4573 = vpop.f32.mrf.mxu0
  %4574 = vmatprep.mubr.f32.mxu0 0.0
  %4575 = vmatmul.mubr.f32.gmra.mxu0 %v2407
  %v4576 = vpop.f32.mrf.mxu0
  %v4577 = vadd.f32 %v4492, %v4576
  %v4578 = vpop.f32.mrf.mxu0
  %4579 = vmatprep.mubr.f32.mxu0 0.0
  %4580 = vmatmul.mubr.f32.gmra.mxu0 %v2408
  %v4581 = vpop.f32.mrf.mxu0
  %v4582 = vadd.f32 %v4497, %v4581
  %v4583 = vpop.f32.mrf.mxu0
  %4584 = vmatprep.mubr.f32.mxu0 0.0
  %4585 = vmatmul.mubr.f32.gmra.mxu0 %v2409
  %v4586 = vpop.f32.mrf.mxu0
  %v4587 = vadd.f32 %v4502, %v4586
  %v4588 = vpop.f32.mrf.mxu0
  %4589 = vdwg.mxu0
  %4590 = vmatprep.subr.mxu0 0.0
  %4591 = vmatpush1.msra.mxu0 %v179
  %4592 = vmatprep.subr.mxu0 0.0
  %4593 = vmatpush1.msra.mxu0 %v178
  %4594 = vmatprep.subr.mxu0 0.0
  %4595 = vmatpush1.msra.mxu0 %v177
  %4596 = vmatprep.subr.mxu0 0.0
  %4597 = vmatpush1.msra.mxu0 %v176
  %4598 = vmatprep.subr.mxu0 0.0
  %4599 = vmatpush1.msra.mxu0 %v175
  %4600 = vmatprep.subr.mxu0 0.0
  %4601 = vmatpush1.msra.mxu0 %v174
  %4602 = vmatprep.subr.mxu0 0.0
  %4603 = vmatpush1.msra.mxu0 %v173
  %4604 = vmatprep.subr.mxu0 0.0
  %4605 = vmatpush1.msra.mxu0 %v172
  %4606 = vmatprep.subr.mxu0 0.0
  %4607 = vmatpush1.msra.mxu0 %v171
  %4608 = vmatprep.subr.mxu0 0.0
  %4609 = vmatpush1.msra.mxu0 %v170
  %4610 = vmatprep.subr.mxu0 0.0
  %4611 = vmatpush1.msra.mxu0 %v169
  %4612 = vmatprep.subr.mxu0 0.0
  %4613 = vmatpush1.msra.mxu0 %v168
  %4614 = vmatprep.subr.mxu0 0.0
  %4615 = vmatpush1.msra.mxu0 %v167
  %4616 = vmatprep.subr.mxu0 0.0
  %4617 = vmatpush1.msra.mxu0 %v166
  %4618 = vmatprep.subr.mxu0 0.0
  %4619 = vmatpush1.msra.mxu0 %v165
  %4620 = vmatprep.subr.mxu0 0.0
  %4621 = vmatpush1.msra.mxu0 %v164
  %4622 = vmatprep.subr.mxu0 0.0
  %4623 = vmatpush2.msra.mxu0 0.0
  %4624 = vmatprep.subr.mxu0 0.0
  %4625 = vmatpush2.msra.mxu0 0.0
  %4626 = vmatprep.subr.mxu0 0.0
  %4627 = vmatpush2.msra.mxu0 0.0
  %4628 = vmatprep.subr.mxu0 0.0
  %4629 = vmatpush2.msra.mxu0 0.0
  %4630 = vmatprep.subr.mxu0 0.0
  %4631 = vmatpush2.msra.mxu0 0.0
  %4632 = vmatprep.subr.mxu0 0.0
  %4633 = vmatpush2.msra.mxu0 0.0
  %4634 = vmatprep.subr.mxu0 0.0
  %4635 = vmatpush2.msra.mxu0 0.0
  %4636 = vmatprep.subr.mxu0 0.0
  %4637 = vmatpush2.msra.mxu0 0.0
  %4638 = vmatprep.subr.mxu0 0.0
  %4639 = vmatpush2.msra.mxu0 0.0
  %4640 = vmatprep.subr.mxu0 0.0
  %4641 = vmatpush2.msra.mxu0 0.0
  %4642 = vmatprep.subr.mxu0 0.0
  %4643 = vmatpush2.msra.mxu0 0.0
  %4644 = vmatprep.subr.mxu0 0.0
  %4645 = vmatpush2.msra.mxu0 0.0
  %4646 = vmatprep.subr.mxu0 0.0
  %4647 = vmatpush2.msra.mxu0 0.0
  %4648 = vmatprep.subr.mxu0 0.0
  %4649 = vmatpush2.msra.mxu0 0.0
  %4650 = vmatprep.subr.mxu0 0.0
  %4651 = vmatpush2.msra.mxu0 0.0
  %4652 = vmatprep.subr.mxu0 0.0
  %4653 = vmatpush2.msra.mxu0 0.0
  %4654 = vmatprep.mubr.f32.mxu0 0.0
  %4655 = vmatmul.mubr.f32.gmra.mxu0 %v2407
  %v4656 = vpop.f32.mrf.mxu0
  %v4657 = vadd.f32 0.0, %v4656
  %v4658 = vpop.f32.mrf.mxu0
  %4659 = vmatprep.mubr.f32.mxu0 0.0
  %4660 = vmatmul.mubr.f32.gmra.mxu0 %v2408
  %v4661 = vpop.f32.mrf.mxu0
  %v4662 = vadd.f32 0.0, %v4661
  %v4663 = vpop.f32.mrf.mxu0
  %4664 = vmatprep.mubr.f32.mxu0 0.0
  %4665 = vmatmul.mubr.f32.gmra.mxu0 %v2409
  %v4666 = vpop.f32.mrf.mxu0
  %v4667 = vadd.f32 0.0, %v4666
  %v4668 = vpop.f32.mrf.mxu0
  %4669 = vmatprep.mubr.f32.mxu0 0.0
  %4670 = vmatmul.mubr.f32.gmra.mxu0 %v2410
  %v4671 = vpop.f32.mrf.mxu0
  %v4672 = vadd.f32 0.0, %v4671
  %v4673 = vpop.f32.mrf.mxu0
  %4674 = vdwg.mxu0
  %v4675 = vadd.f32 %v4572, %v4657
  %v4676 = vadd.f32 %v4577, %v4662
  %v4677 = vadd.f32 %v4582, %v4667
  %v4678 = vadd.f32 %v4587, %v4672
  %4679 = vmatprep.subr.mxu0 0.0
  %4680 = vmatpush1.msra.mxu0 %v211
  %4681 = vmatprep.subr.mxu0 0.0
  %4682 = vmatpush1.msra.mxu0 %v210
  %4683 = vmatprep.subr.mxu0 0.0
  %4684 = vmatpush1.msra.mxu0 %v209
  %4685 = vmatprep.subr.mxu0 0.0
  %4686 = vmatpush1.msra.mxu0 %v208
  %4687 = vmatprep.subr.mxu0 0.0
  %4688 = vmatpush1.msra.mxu0 %v207
  %4689 = vmatprep.subr.mxu0 0.0
  %4690 = vmatpush1.msra.mxu0 %v206
  %4691 = vmatprep.subr.mxu0 0.0
  %4692 = vmatpush1.msra.mxu0 %v205
  %4693 = vmatprep.subr.mxu0 0.0
  %4694 = vmatpush1.msra.mxu0 %v204
  %4695 = vmatprep.subr.mxu0 0.0
  %4696 = vmatpush1.msra.mxu0 %v203
  %4697 = vmatprep.subr.mxu0 0.0
  %4698 = vmatpush1.msra.mxu0 %v202
  %4699 = vmatprep.subr.mxu0 0.0
  %4700 = vmatpush1.msra.mxu0 %v201
  %4701 = vmatprep.subr.mxu0 0.0
  %4702 = vmatpush1.msra.mxu0 %v200
  %4703 = vmatprep.subr.mxu0 0.0
  %4704 = vmatpush1.msra.mxu0 %v199
  %4705 = vmatprep.subr.mxu0 0.0
  %4706 = vmatpush1.msra.mxu0 %v198
  %4707 = vmatprep.subr.mxu0 0.0
  %4708 = vmatpush1.msra.mxu0 %v197
  %4709 = vmatprep.subr.mxu0 0.0
  %4710 = vmatpush1.msra.mxu0 %v196
  %4711 = vmatprep.subr.mxu0 0.0
  %4712 = vmatpush2.msra.mxu0 0.0
  %4713 = vmatprep.subr.mxu0 0.0
  %4714 = vmatpush2.msra.mxu0 0.0
  %4715 = vmatprep.subr.mxu0 0.0
  %4716 = vmatpush2.msra.mxu0 0.0
  %4717 = vmatprep.subr.mxu0 0.0
  %4718 = vmatpush2.msra.mxu0 0.0
  %4719 = vmatprep.subr.mxu0 0.0
  %4720 = vmatpush2.msra.mxu0 0.0
  %4721 = vmatprep.subr.mxu0 0.0
  %4722 = vmatpush2.msra.mxu0 0.0
  %4723 = vmatprep.subr.mxu0 0.0
  %4724 = vmatpush2.msra.mxu0 0.0
  %4725 = vmatprep.subr.mxu0 0.0
  %4726 = vmatpush2.msra.mxu0 0.0
  %4727 = vmatprep.subr.mxu0 0.0
  %4728 = vmatpush2.msra.mxu0 0.0
  %4729 = vmatprep.subr.mxu0 0.0
  %4730 = vmatpush2.msra.mxu0 0.0
  %4731 = vmatprep.subr.mxu0 0.0
  %4732 = vmatpush2.msra.mxu0 0.0
  %4733 = vmatprep.subr.mxu0 0.0
  %4734 = vmatpush2.msra.mxu0 0.0
  %4735 = vmatprep.subr.mxu0 0.0
  %4736 = vmatpush2.msra.mxu0 0.0
  %4737 = vmatprep.subr.mxu0 0.0
  %4738 = vmatpush2.msra.mxu0 0.0
  %4739 = vmatprep.subr.mxu0 0.0
  %4740 = vmatpush2.msra.mxu0 0.0
  %4741 = vmatprep.subr.mxu0 0.0
  %4742 = vmatpush2.msra.mxu0 0.0
  %4743 = vmatprep.mubr.f32.mxu0 0.0
  %4744 = vmatmul.mubr.f32.gmra.mxu0 %v4415
  %v4745 = vpop.f32.mrf.mxu0
  %v4746 = vadd.f32 0.0, %v4745
  %v4747 = vpop.f32.mrf.mxu0
  %4748 = vmatprep.mubr.f32.mxu0 0.0
  %4749 = vmatmul.mubr.f32.gmra.mxu0 %v4416
  %v4750 = vpop.f32.mrf.mxu0
  %v4751 = vadd.f32 0.0, %v4750
  %v4752 = vpop.f32.mrf.mxu0
  %4753 = vmatprep.mubr.f32.mxu0 0.0
  %4754 = vmatmul.mubr.f32.gmra.mxu0 %v4417
  %v4755 = vpop.f32.mrf.mxu0
  %v4756 = vadd.f32 0.0, %v4755
  %v4757 = vpop.f32.mrf.mxu0
  %4758 = vmatprep.mubr.f32.mxu0 0.0
  %4759 = vmatmul.mubr.f32.gmra.mxu0 %v4418
  %v4760 = vpop.f32.mrf.mxu0
  %v4761 = vadd.f32 0.0, %v4760
  %v4762 = vpop.f32.mrf.mxu0
  %4763 = vdwg.mxu0
  %v4764 = vadd.f32 %v4675, %v4746
  %v4765 = vadd.f32 %v4676, %v4751
  %v4766 = vadd.f32 %v4677, %v4756
  %v4767 = vadd.f32 %v4678, %v4761
  %4768 = vmatprep.subr.mxu0 0.0
  %4769 = vmatpush1.msra.mxu0 %v243
  %4770 = vmatprep.subr.mxu0 0.0
  %4771 = vmatpush1.msra.mxu0 %v242
  %4772 = vmatprep.subr.mxu0 0.0
  %4773 = vmatpush1.msra.mxu0 %v241
  %4774 = vmatprep.subr.mxu0 0.0
  %4775 = vmatpush1.msra.mxu0 %v240
  %4776 = vmatprep.subr.mxu0 0.0
  %4777 = vmatpush1.msra.mxu0 %v239
  %4778 = vmatprep.subr.mxu0 0.0
  %4779 = vmatpush1.msra.mxu0 %v238
  %4780 = vmatprep.subr.mxu0 0.0
  %4781 = vmatpush1.msra.mxu0 %v237
  %4782 = vmatprep.subr.mxu0 0.0
  %4783 = vmatpush1.msra.mxu0 %v236
  %4784 = vmatprep.subr.mxu0 0.0
  %4785 = vmatpush1.msra.mxu0 %v235
  %4786 = vmatprep.subr.mxu0 0.0
  %4787 = vmatpush1.msra.mxu0 %v234
  %4788 = vmatprep.subr.mxu0 0.0
  %4789 = vmatpush1.msra.mxu0 %v233
  %4790 = vmatprep.subr.mxu0 0.0
  %4791 = vmatpush1.msra.mxu0 %v232
  %4792 = vmatprep.subr.mxu0 0.0
  %4793 = vmatpush1.msra.mxu0 %v231
  %4794 = vmatprep.subr.mxu0 0.0
  %4795 = vmatpush1.msra.mxu0 %v230
  %4796 = vmatprep.subr.mxu0 0.0
  %4797 = vmatpush1.msra.mxu0 %v229
  %4798 = vmatprep.subr.mxu0 0.0
  %4799 = vmatpush1.msra.mxu0 %v228
  %4800 = vmatprep.subr.mxu0 0.0
  %4801 = vmatpush2.msra.mxu0 0.0
  %4802 = vmatprep.subr.mxu0 0.0
  %4803 = vmatpush2.msra.mxu0 0.0
  %4804 = vmatprep.subr.mxu0 0.0
  %4805 = vmatpush2.msra.mxu0 0.0
  %4806 = vmatprep.subr.mxu0 0.0
  %4807 = vmatpush2.msra.mxu0 0.0
  %4808 = vmatprep.subr.mxu0 0.0
  %4809 = vmatpush2.msra.mxu0 0.0
  %4810 = vmatprep.subr.mxu0 0.0
  %4811 = vmatpush2.msra.mxu0 0.0
  %4812 = vmatprep.subr.mxu0 0.0
  %4813 = vmatpush2.msra.mxu0 0.0
  %4814 = vmatprep.subr.mxu0 0.0
  %4815 = vmatpush2.msra.mxu0 0.0
  %4816 = vmatprep.subr.mxu0 0.0
  %4817 = vmatpush2.msra.mxu0 0.0
  %4818 = vmatprep.subr.mxu0 0.0
  %4819 = vmatpush2.msra.mxu0 0.0
  %4820 = vmatprep.subr.mxu0 0.0
  %4821 = vmatpush2.msra.mxu0 0.0
  %4822 = vmatprep.subr.mxu0 0.0
  %4823 = vmatpush2.msra.mxu0 0.0
  %4824 = vmatprep.subr.mxu0 0.0
  %4825 = vmatpush2.msra.mxu0 0.0
  %4826 = vmatprep.subr.mxu0 0.0
  %4827 = vmatpush2.msra.mxu0 0.0
  %4828 = vmatprep.subr.mxu0 0.0
  %4829 = vmatpush2.msra.mxu0 0.0
  %4830 = vmatprep.subr.mxu0 0.0
  %4831 = vmatpush2.msra.mxu0 0.0
  %4832 = vmatprep.mubr.f32.mxu0 0.0
  %4833 = vmatmul.mubr.f32.gmra.mxu0 %v2408
  %v4834 = vpop.f32.mrf.mxu0
  %v4835 = vadd.f32 0.0, %v4834
  %v4836 = vpop.f32.mrf.mxu0
  %4837 = vmatprep.mubr.f32.mxu0 0.0
  %4838 = vmatmul.mubr.f32.gmra.mxu0 %v2409
  %v4839 = vpop.f32.mrf.mxu0
  %v4840 = vadd.f32 0.0, %v4839
  %v4841 = vpop.f32.mrf.mxu0
  %4842 = vmatprep.mubr.f32.mxu0 0.0
  %4843 = vmatmul.mubr.f32.gmra.mxu0 %v2410
  %v4844 = vpop.f32.mrf.mxu0
  %v4845 = vadd.f32 0.0, %v4844
  %v4846 = vpop.f32.mrf.mxu0
  %4847 = vmatprep.mubr.f32.mxu0 0.0
  %4848 = vmatmul.mubr.f32.gmra.mxu0 %v2411
  %v4849 = vpop.f32.mrf.mxu0
  %v4850 = vadd.f32 0.0, %v4849
  %v4851 = vpop.f32.mrf.mxu0
  %4852 = vdwg.mxu0
  %v4853 = vadd.f32 %v4764, %v4835
  %v4854 = vadd.f32 %v4765, %v4840
  %v4855 = vadd.f32 %v4766, %v4845
  %v4856 = vadd.f32 %v4767, %v4850
  %4857 = vmatprep.subr.mxu0 0.0
  %4858 = vmatpush1.msra.mxu0 %v163
  %4859 = vmatprep.subr.mxu0 0.0
  %4860 = vmatpush1.msra.mxu0 %v162
  %4861 = vmatprep.subr.mxu0 0.0
  %4862 = vmatpush1.msra.mxu0 %v161
  %4863 = vmatprep.subr.mxu0 0.0
  %4864 = vmatpush1.msra.mxu0 %v160
  %4865 = vmatprep.subr.mxu0 0.0
  %4866 = vmatpush1.msra.mxu0 %v159
  %4867 = vmatprep.subr.mxu0 0.0
  %4868 = vmatpush1.msra.mxu0 %v158
  %4869 = vmatprep.subr.mxu0 0.0
  %4870 = vmatpush1.msra.mxu0 %v157
  %4871 = vmatprep.subr.mxu0 0.0
  %4872 = vmatpush1.msra.mxu0 %v156
  %4873 = vmatprep.subr.mxu0 0.0
  %4874 = vmatpush1.msra.mxu0 %v155
  %4875 = vmatprep.subr.mxu0 0.0
  %4876 = vmatpush1.msra.mxu0 %v154
  %4877 = vmatprep.subr.mxu0 0.0
  %4878 = vmatpush1.msra.mxu0 %v153
  %4879 = vmatprep.subr.mxu0 0.0
  %4880 = vmatpush1.msra.mxu0 %v152
  %4881 = vmatprep.subr.mxu0 0.0
  %4882 = vmatpush1.msra.mxu0 %v151
  %4883 = vmatprep.subr.mxu0 0.0
  %4884 = vmatpush1.msra.mxu0 %v150
  %4885 = vmatprep.subr.mxu0 0.0
  %4886 = vmatpush1.msra.mxu0 %v149
  %4887 = vmatprep.subr.mxu0 0.0
  %4888 = vmatpush1.msra.mxu0 %v148
  %4889 = vmatprep.subr.mxu0 0.0
  %4890 = vmatpush2.msra.mxu0 0.0
  %4891 = vmatprep.subr.mxu0 0.0
  %4892 = vmatpush2.msra.mxu0 0.0
  %4893 = vmatprep.subr.mxu0 0.0
  %4894 = vmatpush2.msra.mxu0 0.0
  %4895 = vmatprep.subr.mxu0 0.0
  %4896 = vmatpush2.msra.mxu0 0.0
  %4897 = vmatprep.subr.mxu0 0.0
  %4898 = vmatpush2.msra.mxu0 0.0
  %4899 = vmatprep.subr.mxu0 0.0
  %4900 = vmatpush2.msra.mxu0 0.0
  %4901 = vmatprep.subr.mxu0 0.0
  %4902 = vmatpush2.msra.mxu0 0.0
  %4903 = vmatprep.subr.mxu0 0.0
  %4904 = vmatpush2.msra.mxu0 0.0
  %4905 = vmatprep.subr.mxu0 0.0
  %4906 = vmatpush2.msra.mxu0 0.0
  %4907 = vmatprep.subr.mxu0 0.0
  %4908 = vmatpush2.msra.mxu0 0.0
  %4909 = vmatprep.subr.mxu0 0.0
  %4910 = vmatpush2.msra.mxu0 0.0
  %4911 = vmatprep.subr.mxu0 0.0
  %4912 = vmatpush2.msra.mxu0 0.0
  %4913 = vmatprep.subr.mxu0 0.0
  %4914 = vmatpush2.msra.mxu0 0.0
  %4915 = vmatprep.subr.mxu0 0.0
  %4916 = vmatpush2.msra.mxu0 0.0
  %4917 = vmatprep.subr.mxu0 0.0
  %4918 = vmatpush2.msra.mxu0 0.0
  %4919 = vmatprep.subr.mxu0 0.0
  %4920 = vmatpush2.msra.mxu0 0.0
  %4921 = vmatprep.mubr.f32.mxu0 0.0
  %4922 = vmatmul.mubr.f32.gmra.mxu0 %v4414
  %v4923 = vpop.f32.mrf.mxu0
  %v4924 = vadd.f32 0.0, %v4923
  %v4925 = vpop.f32.mrf.mxu0
  %4926 = vmatprep.mubr.f32.mxu0 0.0
  %4927 = vmatmul.mubr.f32.gmra.mxu0 %v4415
  %v4928 = vpop.f32.mrf.mxu0
  %v4929 = vadd.f32 0.0, %v4928
  %v4930 = vpop.f32.mrf.mxu0
  %4931 = vmatprep.mubr.f32.mxu0 0.0
  %4932 = vmatmul.mubr.f32.gmra.mxu0 %v4416
  %v4933 = vpop.f32.mrf.mxu0
  %v4934 = vadd.f32 0.0, %v4933
  %v4935 = vpop.f32.mrf.mxu0
  %4936 = vmatprep.mubr.f32.mxu0 0.0
  %4937 = vmatmul.mubr.f32.gmra.mxu0 %v4417
  %v4938 = vpop.f32.mrf.mxu0
  %v4939 = vadd.f32 0.0, %v4938
  %v4940 = vpop.f32.mrf.mxu0
  %4941 = vdwg.mxu0
  %4942 = vmatprep.subr.mxu0 0.0
  %4943 = vmatpush1.msra.mxu0 %v131
  %4944 = vmatprep.subr.mxu0 0.0
  %4945 = vmatpush1.msra.mxu0 %v130
  %4946 = vmatprep.subr.mxu0 0.0
  %4947 = vmatpush1.msra.mxu0 %v129
  %4948 = vmatprep.subr.mxu0 0.0
  %4949 = vmatpush1.msra.mxu0 %v128
  %4950 = vmatprep.subr.mxu0 0.0
  %4951 = vmatpush1.msra.mxu0 %v127
  %4952 = vmatprep.subr.mxu0 0.0
  %4953 = vmatpush1.msra.mxu0 %v126
  %4954 = vmatprep.subr.mxu0 0.0
  %4955 = vmatpush1.msra.mxu0 %v125
  %4956 = vmatprep.subr.mxu0 0.0
  %4957 = vmatpush1.msra.mxu0 %v124
  %4958 = vmatprep.subr.mxu0 0.0
  %4959 = vmatpush1.msra.mxu0 %v123
  %4960 = vmatprep.subr.mxu0 0.0
  %4961 = vmatpush1.msra.mxu0 %v122
  %4962 = vmatprep.subr.mxu0 0.0
  %4963 = vmatpush1.msra.mxu0 %v121
  %4964 = vmatprep.subr.mxu0 0.0
  %4965 = vmatpush1.msra.mxu0 %v120
  %4966 = vmatprep.subr.mxu0 0.0
  %4967 = vmatpush1.msra.mxu0 %v119
  %4968 = vmatprep.subr.mxu0 0.0
  %4969 = vmatpush1.msra.mxu0 %v118
  %4970 = vmatprep.subr.mxu0 0.0
  %4971 = vmatpush1.msra.mxu0 %v117
  %4972 = vmatprep.subr.mxu0 0.0
  %4973 = vmatpush1.msra.mxu0 %v116
  %4974 = vmatprep.subr.mxu0 0.0
  %4975 = vmatpush2.msra.mxu0 0.0
  %4976 = vmatprep.subr.mxu0 0.0
  %4977 = vmatpush2.msra.mxu0 0.0
  %4978 = vmatprep.subr.mxu0 0.0
  %4979 = vmatpush2.msra.mxu0 0.0
  %4980 = vmatprep.subr.mxu0 0.0
  %4981 = vmatpush2.msra.mxu0 0.0
  %4982 = vmatprep.subr.mxu0 0.0
  %4983 = vmatpush2.msra.mxu0 0.0
  %4984 = vmatprep.subr.mxu0 0.0
  %4985 = vmatpush2.msra.mxu0 0.0
  %4986 = vmatprep.subr.mxu0 0.0
  %4987 = vmatpush2.msra.mxu0 0.0
  %4988 = vmatprep.subr.mxu0 0.0
  %4989 = vmatpush2.msra.mxu0 0.0
  %4990 = vmatprep.subr.mxu0 0.0
  %4991 = vmatpush2.msra.mxu0 0.0
  %4992 = vmatprep.subr.mxu0 0.0
  %4993 = vmatpush2.msra.mxu0 0.0
  %4994 = vmatprep.subr.mxu0 0.0
  %4995 = vmatpush2.msra.mxu0 0.0
  %4996 = vmatprep.subr.mxu0 0.0
  %4997 = vmatpush2.msra.mxu0 0.0
  %4998 = vmatprep.subr.mxu0 0.0
  %4999 = vmatpush2.msra.mxu0 0.0
  %5000 = vmatprep.subr.mxu0 0.0
  %5001 = vmatpush2.msra.mxu0 0.0
  %5002 = vmatprep.subr.mxu0 0.0
  %5003 = vmatpush2.msra.mxu0 0.0
  %5004 = vmatprep.subr.mxu0 0.0
  %5005 = vmatpush2.msra.mxu0 0.0
  %5006 = vmatprep.mubr.f32.mxu0 0.0
  %5007 = vmatmul.mubr.f32.gmra.mxu0 %v2406
  %v5008 = vpop.f32.mrf.mxu0
  %v5009 = vadd.f32 %v4924, %v5008
  %v5010 = vpop.f32.mrf.mxu0
  %5011 = vmatprep.mubr.f32.mxu0 0.0
  %5012 = vmatmul.mubr.f32.gmra.mxu0 %v2407
  %v5013 = vpop.f32.mrf.mxu0
  %v5014 = vadd.f32 %v4929, %v5013
  %v5015 = vpop.f32.mrf.mxu0
  %5016 = vmatprep.mubr.f32.mxu0 0.0
  %5017 = vmatmul.mubr.f32.gmra.mxu0 %v2408
  %v5018 = vpop.f32.mrf.mxu0
  %v5019 = vadd.f32 %v4934, %v5018
  %v5020 = vpop.f32.mrf.mxu0
  %5021 = vmatprep.mubr.f32.mxu0 0.0
  %5022 = vmatmul.mubr.f32.gmra.mxu0 %v2409
  %v5023 = vpop.f32.mrf.mxu0
  %v5024 = vadd.f32 %v4939, %v5023
  %v5025 = vpop.f32.mrf.mxu0
  %5026 = vdwg.mxu0
  %5027 = vmatprep.subr.mxu0 0.0
  %5028 = vmatpush1.msra.mxu0 %v195
  %5029 = vmatprep.subr.mxu0 0.0
  %5030 = vmatpush1.msra.mxu0 %v194
  %5031 = vmatprep.subr.mxu0 0.0
  %5032 = vmatpush1.msra.mxu0 %v193
  %5033 = vmatprep.subr.mxu0 0.0
  %5034 = vmatpush1.msra.mxu0 %v192
  %5035 = vmatprep.subr.mxu0 0.0
  %5036 = vmatpush1.msra.mxu0 %v191
  %5037 = vmatprep.subr.mxu0 0.0
  %5038 = vmatpush1.msra.mxu0 %v190
  %5039 = vmatprep.subr.mxu0 0.0
  %5040 = vmatpush1.msra.mxu0 %v189
  %5041 = vmatprep.subr.mxu0 0.0
  %5042 = vmatpush1.msra.mxu0 %v188
  %5043 = vmatprep.subr.mxu0 0.0
  %5044 = vmatpush1.msra.mxu0 %v187
  %5045 = vmatprep.subr.mxu0 0.0
  %5046 = vmatpush1.msra.mxu0 %v186
  %5047 = vmatprep.subr.mxu0 0.0
  %5048 = vmatpush1.msra.mxu0 %v185
  %5049 = vmatprep.subr.mxu0 0.0
  %5050 = vmatpush1.msra.mxu0 %v184
  %5051 = vmatprep.subr.mxu0 0.0
  %5052 = vmatpush1.msra.mxu0 %v183
  %5053 = vmatprep.subr.mxu0 0.0
  %5054 = vmatpush1.msra.mxu0 %v182
  %5055 = vmatprep.subr.mxu0 0.0
  %5056 = vmatpush1.msra.mxu0 %v181
  %5057 = vmatprep.subr.mxu0 0.0
  %5058 = vmatpush1.msra.mxu0 %v180
  %5059 = vmatprep.subr.mxu0 0.0
  %5060 = vmatpush2.msra.mxu0 0.0
  %5061 = vmatprep.subr.mxu0 0.0
  %5062 = vmatpush2.msra.mxu0 0.0
  %5063 = vmatprep.subr.mxu0 0.0
  %5064 = vmatpush2.msra.mxu0 0.0
  %5065 = vmatprep.subr.mxu0 0.0
  %5066 = vmatpush2.msra.mxu0 0.0
  %5067 = vmatprep.subr.mxu0 0.0
  %5068 = vmatpush2.msra.mxu0 0.0
  %5069 = vmatprep.subr.mxu0 0.0
  %5070 = vmatpush2.msra.mxu0 0.0
  %5071 = vmatprep.subr.mxu0 0.0
  %5072 = vmatpush2.msra.mxu0 0.0
  %5073 = vmatprep.subr.mxu0 0.0
  %5074 = vmatpush2.msra.mxu0 0.0
  %5075 = vmatprep.subr.mxu0 0.0
  %5076 = vmatpush2.msra.mxu0 0.0
  %5077 = vmatprep.subr.mxu0 0.0
  %5078 = vmatpush2.msra.mxu0 0.0
  %5079 = vmatprep.subr.mxu0 0.0
  %5080 = vmatpush2.msra.mxu0 0.0
  %5081 = vmatprep.subr.mxu0 0.0
  %5082 = vmatpush2.msra.mxu0 0.0
  %5083 = vmatprep.subr.mxu0 0.0
  %5084 = vmatpush2.msra.mxu0 0.0
  %5085 = vmatprep.subr.mxu0 0.0
  %5086 = vmatpush2.msra.mxu0 0.0
  %5087 = vmatprep.subr.mxu0 0.0
  %5088 = vmatpush2.msra.mxu0 0.0
  %5089 = vmatprep.subr.mxu0 0.0
  %5090 = vmatpush2.msra.mxu0 0.0
  %5091 = vmatprep.mubr.f32.mxu0 0.0
  %5092 = vmatmul.mubr.f32.gmra.mxu0 %v2407
  %v5093 = vpop.f32.mrf.mxu0
  %v5094 = vadd.f32 0.0, %v5093
  %v5095 = vpop.f32.mrf.mxu0
  %5096 = vmatprep.mubr.f32.mxu0 0.0
  %5097 = vmatmul.mubr.f32.gmra.mxu0 %v2408
  %v5098 = vpop.f32.mrf.mxu0
  %v5099 = vadd.f32 0.0, %v5098
  %v5100 = vpop.f32.mrf.mxu0
  %5101 = vmatprep.mubr.f32.mxu0 0.0
  %5102 = vmatmul.mubr.f32.gmra.mxu0 %v2409
  %v5103 = vpop.f32.mrf.mxu0
  %v5104 = vadd.f32 0.0, %v5103
  %v5105 = vpop.f32.mrf.mxu0
  %5106 = vmatprep.mubr.f32.mxu0 0.0
  %5107 = vmatmul.mubr.f32.gmra.mxu0 %v2410
  %v5108 = vpop.f32.mrf.mxu0
  %v5109 = vadd.f32 0.0, %v5108
  %v5110 = vpop.f32.mrf.mxu0
  %5111 = vdwg.mxu0
  %v5112 = vadd.f32 %v5009, %v5094
  %v5113 = vadd.f32 %v5014, %v5099
  %v5114 = vadd.f32 %v5019, %v5104
  %v5115 = vadd.f32 %v5024, %v5109
  %5116 = vmatprep.subr.mxu0 0.0
  %5117 = vmatpush1.msra.mxu0 %v227
  %5118 = vmatprep.subr.mxu0 0.0
  %5119 = vmatpush1.msra.mxu0 %v226
  %5120 = vmatprep.subr.mxu0 0.0
  %5121 = vmatpush1.msra.mxu0 %v225
  %5122 = vmatprep.subr.mxu0 0.0
  %5123 = vmatpush1.msra.mxu0 %v224
  %5124 = vmatprep.subr.mxu0 0.0
  %5125 = vmatpush1.msra.mxu0 %v223
  %5126 = vmatprep.subr.mxu0 0.0
  %5127 = vmatpush1.msra.mxu0 %v222
  %5128 = vmatprep.subr.mxu0 0.0
  %5129 = vmatpush1.msra.mxu0 %v221
  %5130 = vmatprep.subr.mxu0 0.0
  %5131 = vmatpush1.msra.mxu0 %v220
  %5132 = vmatprep.subr.mxu0 0.0
  %5133 = vmatpush1.msra.mxu0 %v219
  %5134 = vmatprep.subr.mxu0 0.0
  %5135 = vmatpush1.msra.mxu0 %v218
  %5136 = vmatprep.subr.mxu0 0.0
  %5137 = vmatpush1.msra.mxu0 %v217
  %5138 = vmatprep.subr.mxu0 0.0
  %5139 = vmatpush1.msra.mxu0 %v216
  %5140 = vmatprep.subr.mxu0 0.0
  %5141 = vmatpush1.msra.mxu0 %v215
  %5142 = vmatprep.subr.mxu0 0.0
  %5143 = vmatpush1.msra.mxu0 %v214
  %5144 = vmatprep.subr.mxu0 0.0
  %5145 = vmatpush1.msra.mxu0 %v213
  %5146 = vmatprep.subr.mxu0 0.0
  %5147 = vmatpush1.msra.mxu0 %v212
  %5148 = vmatprep.subr.mxu0 0.0
  %5149 = vmatpush2.msra.mxu0 0.0
  %5150 = vmatprep.subr.mxu0 0.0
  %5151 = vmatpush2.msra.mxu0 0.0
  %5152 = vmatprep.subr.mxu0 0.0
  %5153 = vmatpush2.msra.mxu0 0.0
  %5154 = vmatprep.subr.mxu0 0.0
  %5155 = vmatpush2.msra.mxu0 0.0
  %5156 = vmatprep.subr.mxu0 0.0
  %5157 = vmatpush2.msra.mxu0 0.0
  %5158 = vmatprep.subr.mxu0 0.0
  %5159 = vmatpush2.msra.mxu0 0.0
  %5160 = vmatprep.subr.mxu0 0.0
  %5161 = vmatpush2.msra.mxu0 0.0
  %5162 = vmatprep.subr.mxu0 0.0
  %5163 = vmatpush2.msra.mxu0 0.0
  %5164 = vmatprep.subr.mxu0 0.0
  %5165 = vmatpush2.msra.mxu0 0.0
  %5166 = vmatprep.subr.mxu0 0.0
  %5167 = vmatpush2.msra.mxu0 0.0
  %5168 = vmatprep.subr.mxu0 0.0
  %5169 = vmatpush2.msra.mxu0 0.0
  %5170 = vmatprep.subr.mxu0 0.0
  %5171 = vmatpush2.msra.mxu0 0.0
  %5172 = vmatprep.subr.mxu0 0.0
  %5173 = vmatpush2.msra.mxu0 0.0
  %5174 = vmatprep.subr.mxu0 0.0
  %5175 = vmatpush2.msra.mxu0 0.0
  %5176 = vmatprep.subr.mxu0 0.0
  %5177 = vmatpush2.msra.mxu0 0.0
  %5178 = vmatprep.subr.mxu0 0.0
  %5179 = vmatpush2.msra.mxu0 0.0
  %5180 = vmatprep.mubr.f32.mxu0 0.0
  %5181 = vmatmul.mubr.f32.gmra.mxu0 %v4415
  %v5182 = vpop.f32.mrf.mxu0
  %v5183 = vadd.f32 0.0, %v5182
  %v5184 = vpop.f32.mrf.mxu0
  %5185 = vmatprep.mubr.f32.mxu0 0.0
  %5186 = vmatmul.mubr.f32.gmra.mxu0 %v4416
  %v5187 = vpop.f32.mrf.mxu0
  %v5188 = vadd.f32 0.0, %v5187
  %v5189 = vpop.f32.mrf.mxu0
  %5190 = vmatprep.mubr.f32.mxu0 0.0
  %5191 = vmatmul.mubr.f32.gmra.mxu0 %v4417
  %v5192 = vpop.f32.mrf.mxu0
  %v5193 = vadd.f32 0.0, %v5192
  %v5194 = vpop.f32.mrf.mxu0
  %5195 = vmatprep.mubr.f32.mxu0 0.0
  %5196 = vmatmul.mubr.f32.gmra.mxu0 %v4418
  %v5197 = vpop.f32.mrf.mxu0
  %v5198 = vadd.f32 0.0, %v5197
  %v5199 = vpop.f32.mrf.mxu0
  %5200 = vdwg.mxu0
  %v5201 = vadd.f32 %v5112, %v5183
  %v5202 = vadd.f32 %v5113, %v5188
  %v5203 = vadd.f32 %v5114, %v5193
  %v5204 = vadd.f32 %v5115, %v5198
  %5205 = vmatprep.subr.mxu0 0.0
  %5206 = vmatpush1.msra.mxu0 %v259
  %5207 = vmatprep.subr.mxu0 0.0
  %5208 = vmatpush1.msra.mxu0 %v258
  %5209 = vmatprep.subr.mxu0 0.0
  %5210 = vmatpush1.msra.mxu0 %v257
  %5211 = vmatprep.subr.mxu0 0.0
  %5212 = vmatpush1.msra.mxu0 %v256
  %5213 = vmatprep.subr.mxu0 0.0
  %5214 = vmatpush1.msra.mxu0 %v255
  %5215 = vmatprep.subr.mxu0 0.0
  %5216 = vmatpush1.msra.mxu0 %v254
  %5217 = vmatprep.subr.mxu0 0.0
  %5218 = vmatpush1.msra.mxu0 %v253
  %5219 = vmatprep.subr.mxu0 0.0
  %5220 = vmatpush1.msra.mxu0 %v252
  %5221 = vmatprep.subr.mxu0 0.0
  %5222 = vmatpush1.msra.mxu0 %v251
  %5223 = vmatprep.subr.mxu0 0.0
  %5224 = vmatpush1.msra.mxu0 %v250
  %5225 = vmatprep.subr.mxu0 0.0
  %5226 = vmatpush1.msra.mxu0 %v249
  %5227 = vmatprep.subr.mxu0 0.0
  %5228 = vmatpush1.msra.mxu0 %v248
  %5229 = vmatprep.subr.mxu0 0.0
  %5230 = vmatpush1.msra.mxu0 %v247
  %5231 = vmatprep.subr.mxu0 0.0
  %5232 = vmatpush1.msra.mxu0 %v246
  %5233 = vmatprep.subr.mxu0 0.0
  %5234 = vmatpush1.msra.mxu0 %v245
  %5235 = vmatprep.subr.mxu0 0.0
  %5236 = vmatpush1.msra.mxu0 %v244
  %5237 = vmatprep.subr.mxu0 0.0
  %5238 = vmatpush2.msra.mxu0 0.0
  %5239 = vmatprep.subr.mxu0 0.0
  %5240 = vmatpush2.msra.mxu0 0.0
  %5241 = vmatprep.subr.mxu0 0.0
  %5242 = vmatpush2.msra.mxu0 0.0
  %5243 = vmatprep.subr.mxu0 0.0
  %5244 = vmatpush2.msra.mxu0 0.0
  %5245 = vmatprep.subr.mxu0 0.0
  %5246 = vmatpush2.msra.mxu0 0.0
  %5247 = vmatprep.subr.mxu0 0.0
  %5248 = vmatpush2.msra.mxu0 0.0
  %5249 = vmatprep.subr.mxu0 0.0
  %5250 = vmatpush2.msra.mxu0 0.0
  %5251 = vmatprep.subr.mxu0 0.0
  %5252 = vmatpush2.msra.mxu0 0.0
  %5253 = vmatprep.subr.mxu0 0.0
  %5254 = vmatpush2.msra.mxu0 0.0
  %5255 = vmatprep.subr.mxu0 0.0
  %5256 = vmatpush2.msra.mxu0 0.0
  %5257 = vmatprep.subr.mxu0 0.0
  %5258 = vmatpush2.msra.mxu0 0.0
  %5259 = vmatprep.subr.mxu0 0.0
  %5260 = vmatpush2.msra.mxu0 0.0
  %5261 = vmatprep.subr.mxu0 0.0
  %5262 = vmatpush2.msra.mxu0 0.0
  %5263 = vmatprep.subr.mxu0 0.0
  %5264 = vmatpush2.msra.mxu0 0.0
  %5265 = vmatprep.subr.mxu0 0.0
  %5266 = vmatpush2.msra.mxu0 0.0
  %5267 = vmatprep.subr.mxu0 0.0
  %5268 = vmatpush2.msra.mxu0 0.0
  %5269 = vmatprep.mubr.f32.mxu0 0.0
  %5270 = vmatmul.mubr.f32.gmra.mxu0 %v2408
  %v5271 = vpop.f32.mrf.mxu0
  %v5272 = vadd.f32 0.0, %v5271
  %v5273 = vpop.f32.mrf.mxu0
  %5274 = vmatprep.mubr.f32.mxu0 0.0
  %5275 = vmatmul.mubr.f32.gmra.mxu0 %v2409
  %v5276 = vpop.f32.mrf.mxu0
  %v5277 = vadd.f32 0.0, %v5276
  %v5278 = vpop.f32.mrf.mxu0
  %5279 = vmatprep.mubr.f32.mxu0 0.0
  %5280 = vmatmul.mubr.f32.gmra.mxu0 %v2410
  %v5281 = vpop.f32.mrf.mxu0
  %v5282 = vadd.f32 0.0, %v5281
  %v5283 = vpop.f32.mrf.mxu0
  %5284 = vmatprep.mubr.f32.mxu0 0.0
  %5285 = vmatmul.mubr.f32.gmra.mxu0 %v2411
  %v5286 = vpop.f32.mrf.mxu0
  %v5287 = vadd.f32 0.0, %v5286
  %v5288 = vpop.f32.mrf.mxu0
  %5289 = vdwg.mxu0
  %v5290 = vadd.f32 %v5201, %v5272
  %v5291 = vadd.f32 %v5202, %v5277
  %v5292 = vadd.f32 %v5203, %v5282
  %v5293 = vadd.f32 %v5204, %v5287
  %5294 = vmatprep.subr.mxu0 0.0
  %5295 = vmatpush1.msra.mxu0 %v147
  %5296 = vmatprep.subr.mxu0 0.0
  %5297 = vmatpush1.msra.mxu0 %v146
  %5298 = vmatprep.subr.mxu0 0.0
  %5299 = vmatpush1.msra.mxu0 %v145
  %5300 = vmatprep.subr.mxu0 0.0
  %5301 = vmatpush1.msra.mxu0 %v144
  %5302 = vmatprep.subr.mxu0 0.0
  %5303 = vmatpush1.msra.mxu0 %v143
  %5304 = vmatprep.subr.mxu0 0.0
  %5305 = vmatpush1.msra.mxu0 %v142
  %5306 = vmatprep.subr.mxu0 0.0
  %5307 = vmatpush1.msra.mxu0 %v141
  %5308 = vmatprep.subr.mxu0 0.0
  %5309 = vmatpush1.msra.mxu0 %v140
  %5310 = vmatprep.subr.mxu0 0.0
  %5311 = vmatpush1.msra.mxu0 %v139
  %5312 = vmatprep.subr.mxu0 0.0
  %5313 = vmatpush1.msra.mxu0 %v138
  %5314 = vmatprep.subr.mxu0 0.0
  %5315 = vmatpush1.msra.mxu0 %v137
  %5316 = vmatprep.subr.mxu0 0.0
  %5317 = vmatpush1.msra.mxu0 %v136
  %5318 = vmatprep.subr.mxu0 0.0
  %5319 = vmatpush1.msra.mxu0 %v135
  %5320 = vmatprep.subr.mxu0 0.0
  %5321 = vmatpush1.msra.mxu0 %v134
  %5322 = vmatprep.subr.mxu0 0.0
  %5323 = vmatpush1.msra.mxu0 %v133
  %5324 = vmatprep.subr.mxu0 0.0
  %5325 = vmatpush1.msra.mxu0 %v132
  %5326 = vmatprep.subr.mxu0 0.0
  %5327 = vmatpush2.msra.mxu0 0.0
  %5328 = vmatprep.subr.mxu0 0.0
  %5329 = vmatpush2.msra.mxu0 0.0
  %5330 = vmatprep.subr.mxu0 0.0
  %5331 = vmatpush2.msra.mxu0 0.0
  %5332 = vmatprep.subr.mxu0 0.0
  %5333 = vmatpush2.msra.mxu0 0.0
  %5334 = vmatprep.subr.mxu0 0.0
  %5335 = vmatpush2.msra.mxu0 0.0
  %5336 = vmatprep.subr.mxu0 0.0
  %5337 = vmatpush2.msra.mxu0 0.0
  %5338 = vmatprep.subr.mxu0 0.0
  %5339 = vmatpush2.msra.mxu0 0.0
  %5340 = vmatprep.subr.mxu0 0.0
  %5341 = vmatpush2.msra.mxu0 0.0
  %5342 = vmatprep.subr.mxu0 0.0
  %5343 = vmatpush2.msra.mxu0 0.0
  %5344 = vmatprep.subr.mxu0 0.0
  %5345 = vmatpush2.msra.mxu0 0.0
  %5346 = vmatprep.subr.mxu0 0.0
  %5347 = vmatpush2.msra.mxu0 0.0
  %5348 = vmatprep.subr.mxu0 0.0
  %5349 = vmatpush2.msra.mxu0 0.0
  %5350 = vmatprep.subr.mxu0 0.0
  %5351 = vmatpush2.msra.mxu0 0.0
  %5352 = vmatprep.subr.mxu0 0.0
  %5353 = vmatpush2.msra.mxu0 0.0
  %5354 = vmatprep.subr.mxu0 0.0
  %5355 = vmatpush2.msra.mxu0 0.0
  %5356 = vmatprep.subr.mxu0 0.0
  %5357 = vmatpush2.msra.mxu0 0.0
  %5358 = vmatprep.mubr.f32.mxu0 0.0
  %5359 = vmatmul.mubr.f32.gmra.mxu0 %v2407
  %v5360 = vpop.f32.mrf.mxu0
  %v5361 = vadd.f32 0.0, %v5360
  %v5362 = vpop.f32.mrf.mxu0
  %5363 = vmatprep.mubr.f32.mxu0 0.0
  %5364 = vmatmul.mubr.f32.gmra.mxu0 %v2408
  %v5365 = vpop.f32.mrf.mxu0
  %v5366 = vadd.f32 0.0, %v5365
  %v5367 = vpop.f32.mrf.mxu0
  %5368 = vmatprep.mubr.f32.mxu0 0.0
  %5369 = vmatmul.mubr.f32.gmra.mxu0 %v2409
  %v5370 = vpop.f32.mrf.mxu0
  %v5371 = vadd.f32 0.0, %v5370
  %v5372 = vpop.f32.mrf.mxu0
  %5373 = vmatprep.mubr.f32.mxu0 0.0
  %5374 = vmatmul.mubr.f32.gmra.mxu0 %v2410
  %v5375 = vpop.f32.mrf.mxu0
  %v5376 = vadd.f32 0.0, %v5375
  %v5377 = vpop.f32.mrf.mxu0
  %5378 = vdwg.mxu0
  %5379 = vmatprep.subr.mxu0 0.0
  %5380 = vmatpush1.msra.mxu0 %v115
  %5381 = vmatprep.subr.mxu0 0.0
  %5382 = vmatpush1.msra.mxu0 %v114
  %5383 = vmatprep.subr.mxu0 0.0
  %5384 = vmatpush1.msra.mxu0 %v113
  %5385 = vmatprep.subr.mxu0 0.0
  %5386 = vmatpush1.msra.mxu0 %v112
  %5387 = vmatprep.subr.mxu0 0.0
  %5388 = vmatpush1.msra.mxu0 %v111
  %5389 = vmatprep.subr.mxu0 0.0
  %5390 = vmatpush1.msra.mxu0 %v110
  %5391 = vmatprep.subr.mxu0 0.0
  %5392 = vmatpush1.msra.mxu0 %v109
  %5393 = vmatprep.subr.mxu0 0.0
  %5394 = vmatpush1.msra.mxu0 %v108
  %5395 = vmatprep.subr.mxu0 0.0
  %5396 = vmatpush1.msra.mxu0 %v107
  %5397 = vmatprep.subr.mxu0 0.0
  %5398 = vmatpush1.msra.mxu0 %v106
  %5399 = vmatprep.subr.mxu0 0.0
  %5400 = vmatpush1.msra.mxu0 %v105
  %5401 = vmatprep.subr.mxu0 0.0
  %5402 = vmatpush1.msra.mxu0 %v104
  %5403 = vmatprep.subr.mxu0 0.0
  %5404 = vmatpush1.msra.mxu0 %v103
  %5405 = vmatprep.subr.mxu0 0.0
  %5406 = vmatpush1.msra.mxu0 %v102
  %5407 = vmatprep.subr.mxu0 0.0
  %5408 = vmatpush1.msra.mxu0 %v101
  %5409 = vmatprep.subr.mxu0 0.0
  %5410 = vmatpush1.msra.mxu0 %v100
  %5411 = vmatprep.subr.mxu0 0.0
  %5412 = vmatpush2.msra.mxu0 0.0
  %5413 = vmatprep.subr.mxu0 0.0
  %5414 = vmatpush2.msra.mxu0 0.0
  %5415 = vmatprep.subr.mxu0 0.0
  %5416 = vmatpush2.msra.mxu0 0.0
  %5417 = vmatprep.subr.mxu0 0.0
  %5418 = vmatpush2.msra.mxu0 0.0
  %5419 = vmatprep.subr.mxu0 0.0
  %5420 = vmatpush2.msra.mxu0 0.0
  %5421 = vmatprep.subr.mxu0 0.0
  %5422 = vmatpush2.msra.mxu0 0.0
  %5423 = vmatprep.subr.mxu0 0.0
  %5424 = vmatpush2.msra.mxu0 0.0
  %5425 = vmatprep.subr.mxu0 0.0
  %5426 = vmatpush2.msra.mxu0 0.0
  %5427 = vmatprep.subr.mxu0 0.0
  %5428 = vmatpush2.msra.mxu0 0.0
  %5429 = vmatprep.subr.mxu0 0.0
  %5430 = vmatpush2.msra.mxu0 0.0
  %5431 = vmatprep.subr.mxu0 0.0
  %5432 = vmatpush2.msra.mxu0 0.0
  %5433 = vmatprep.subr.mxu0 0.0
  %5434 = vmatpush2.msra.mxu0 0.0
  %5435 = vmatprep.subr.mxu0 0.0
  %5436 = vmatpush2.msra.mxu0 0.0
  %5437 = vmatprep.subr.mxu0 0.0
  %5438 = vmatpush2.msra.mxu0 0.0
  %5439 = vmatprep.subr.mxu0 0.0
  %5440 = vmatpush2.msra.mxu0 0.0
  %5441 = vmatprep.subr.mxu0 0.0
  %5442 = vmatpush2.msra.mxu0 0.0
  %5443 = vmatprep.mubr.f32.mxu0 0.0
  %5444 = vmatmul.mubr.f32.gmra.mxu0 %v4414
  %v5445 = vpop.f32.mrf.mxu0
  %v5446 = vadd.f32 %v5361, %v5445
  %v5447 = vpop.f32.mrf.mxu0
  %5448 = vmatprep.mubr.f32.mxu0 0.0
  %5449 = vmatmul.mubr.f32.gmra.mxu0 %v4415
  %v5450 = vpop.f32.mrf.mxu0
  %v5451 = vadd.f32 %v5366, %v5450
  %v5452 = vpop.f32.mrf.mxu0
  %5453 = vmatprep.mubr.f32.mxu0 0.0
  %5454 = vmatmul.mubr.f32.gmra.mxu0 %v4416
  %v5455 = vpop.f32.mrf.mxu0
  %v5456 = vadd.f32 %v5371, %v5455
  %v5457 = vpop.f32.mrf.mxu0
  %5458 = vmatprep.mubr.f32.mxu0 0.0
  %5459 = vmatmul.mubr.f32.gmra.mxu0 %v4417
  %v5460 = vpop.f32.mrf.mxu0
  %v5461 = vadd.f32 %v5376, %v5460
  %v5462 = vpop.f32.mrf.mxu0
  %5463 = vdwg.mxu0
  %5464 = vmatprep.subr.mxu0 0.0
  %5465 = vmatpush1.msra.mxu0 %v179
  %5466 = vmatprep.subr.mxu0 0.0
  %5467 = vmatpush1.msra.mxu0 %v178
  %5468 = vmatprep.subr.mxu0 0.0
  %5469 = vmatpush1.msra.mxu0 %v177
  %5470 = vmatprep.subr.mxu0 0.0
  %5471 = vmatpush1.msra.mxu0 %v176
  %5472 = vmatprep.subr.mxu0 0.0
  %5473 = vmatpush1.msra.mxu0 %v175
  %5474 = vmatprep.subr.mxu0 0.0
  %5475 = vmatpush1.msra.mxu0 %v174
  %5476 = vmatprep.subr.mxu0 0.0
  %5477 = vmatpush1.msra.mxu0 %v173
  %5478 = vmatprep.subr.mxu0 0.0
  %5479 = vmatpush1.msra.mxu0 %v172
  %5480 = vmatprep.subr.mxu0 0.0
  %5481 = vmatpush1.msra.mxu0 %v171
  %5482 = vmatprep.subr.mxu0 0.0
  %5483 = vmatpush1.msra.mxu0 %v170
  %5484 = vmatprep.subr.mxu0 0.0
  %5485 = vmatpush1.msra.mxu0 %v169
  %5486 = vmatprep.subr.mxu0 0.0
  %5487 = vmatpush1.msra.mxu0 %v168
  %5488 = vmatprep.subr.mxu0 0.0
  %5489 = vmatpush1.msra.mxu0 %v167
  %5490 = vmatprep.subr.mxu0 0.0
  %5491 = vmatpush1.msra.mxu0 %v166
  %5492 = vmatprep.subr.mxu0 0.0
  %5493 = vmatpush1.msra.mxu0 %v165
  %5494 = vmatprep.subr.mxu0 0.0
  %5495 = vmatpush1.msra.mxu0 %v164
  %5496 = vmatprep.subr.mxu0 0.0
  %5497 = vmatpush2.msra.mxu0 0.0
  %5498 = vmatprep.subr.mxu0 0.0
  %5499 = vmatpush2.msra.mxu0 0.0
  %5500 = vmatprep.subr.mxu0 0.0
  %5501 = vmatpush2.msra.mxu0 0.0
  %5502 = vmatprep.subr.mxu0 0.0
  %5503 = vmatpush2.msra.mxu0 0.0
  %5504 = vmatprep.subr.mxu0 0.0
  %5505 = vmatpush2.msra.mxu0 0.0
  %5506 = vmatprep.subr.mxu0 0.0
  %5507 = vmatpush2.msra.mxu0 0.0
  %5508 = vmatprep.subr.mxu0 0.0
  %5509 = vmatpush2.msra.mxu0 0.0
  %5510 = vmatprep.subr.mxu0 0.0
  %5511 = vmatpush2.msra.mxu0 0.0
  %5512 = vmatprep.subr.mxu0 0.0
  %5513 = vmatpush2.msra.mxu0 0.0
  %5514 = vmatprep.subr.mxu0 0.0
  %5515 = vmatpush2.msra.mxu0 0.0
  %5516 = vmatprep.subr.mxu0 0.0
  %5517 = vmatpush2.msra.mxu0 0.0
  %5518 = vmatprep.subr.mxu0 0.0
  %5519 = vmatpush2.msra.mxu0 0.0
  %5520 = vmatprep.subr.mxu0 0.0
  %5521 = vmatpush2.msra.mxu0 0.0
  %5522 = vmatprep.subr.mxu0 0.0
  %5523 = vmatpush2.msra.mxu0 0.0
  %5524 = vmatprep.subr.mxu0 0.0
  %5525 = vmatpush2.msra.mxu0 0.0
  %5526 = vmatprep.subr.mxu0 0.0
  %5527 = vmatpush2.msra.mxu0 0.0
  %5528 = vmatprep.mubr.f32.mxu0 0.0
  %5529 = vmatmul.mubr.f32.gmra.mxu0 %v4415
  %v5530 = vpop.f32.mrf.mxu0
  %v5531 = vadd.f32 0.0, %v5530
  %v5532 = vpop.f32.mrf.mxu0
  %5533 = vmatprep.mubr.f32.mxu0 0.0
  %5534 = vmatmul.mubr.f32.gmra.mxu0 %v4416
  %v5535 = vpop.f32.mrf.mxu0
  %v5536 = vadd.f32 0.0, %v5535
  %v5537 = vpop.f32.mrf.mxu0
  %5538 = vmatprep.mubr.f32.mxu0 0.0
  %5539 = vmatmul.mubr.f32.gmra.mxu0 %v4417
  %v5540 = vpop.f32.mrf.mxu0
  %v5541 = vadd.f32 0.0, %v5540
  %v5542 = vpop.f32.mrf.mxu0
  %5543 = vmatprep.mubr.f32.mxu0 0.0
  %5544 = vmatmul.mubr.f32.gmra.mxu0 %v4418
  %v5545 = vpop.f32.mrf.mxu0
  %v5546 = vadd.f32 0.0, %v5545
  %v5547 = vpop.f32.mrf.mxu0
  %5548 = vdwg.mxu0
  %v5549 = vadd.f32 %v5446, %v5531
  %v5550 = vadd.f32 %v5451, %v5536
  %v5551 = vadd.f32 %v5456, %v5541
  %v5552 = vadd.f32 %v5461, %v5546
  %5553 = vmatprep.subr.mxu0 0.0
  %5554 = vmatpush1.msra.mxu0 %v211
  %5555 = vmatprep.subr.mxu0 0.0
  %5556 = vmatpush1.msra.mxu0 %v210
  %5557 = vmatprep.subr.mxu0 0.0
  %5558 = vmatpush1.msra.mxu0 %v209
  %5559 = vmatprep.subr.mxu0 0.0
  %5560 = vmatpush1.msra.mxu0 %v208
  %5561 = vmatprep.subr.mxu0 0.0
  %5562 = vmatpush1.msra.mxu0 %v207
  %5563 = vmatprep.subr.mxu0 0.0
  %5564 = vmatpush1.msra.mxu0 %v206
  %5565 = vmatprep.subr.mxu0 0.0
  %5566 = vmatpush1.msra.mxu0 %v205
  %5567 = vmatprep.subr.mxu0 0.0
  %5568 = vmatpush1.msra.mxu0 %v204
  %5569 = vmatprep.subr.mxu0 0.0
  %5570 = vmatpush1.msra.mxu0 %v203
  %5571 = vmatprep.subr.mxu0 0.0
  %5572 = vmatpush1.msra.mxu0 %v202
  %5573 = vmatprep.subr.mxu0 0.0
  %5574 = vmatpush1.msra.mxu0 %v201
  %5575 = vmatprep.subr.mxu0 0.0
  %5576 = vmatpush1.msra.mxu0 %v200
  %5577 = vmatprep.subr.mxu0 0.0
  %5578 = vmatpush1.msra.mxu0 %v199
  %5579 = vmatprep.subr.mxu0 0.0
  %5580 = vmatpush1.msra.mxu0 %v198
  %5581 = vmatprep.subr.mxu0 0.0
  %5582 = vmatpush1.msra.mxu0 %v197
  %5583 = vmatprep.subr.mxu0 0.0
  %5584 = vmatpush1.msra.mxu0 %v196
  %5585 = vmatprep.subr.mxu0 0.0
  %5586 = vmatpush2.msra.mxu0 0.0
  %5587 = vmatprep.subr.mxu0 0.0
  %5588 = vmatpush2.msra.mxu0 0.0
  %5589 = vmatprep.subr.mxu0 0.0
  %5590 = vmatpush2.msra.mxu0 0.0
  %5591 = vmatprep.subr.mxu0 0.0
  %5592 = vmatpush2.msra.mxu0 0.0
  %5593 = vmatprep.subr.mxu0 0.0
  %5594 = vmatpush2.msra.mxu0 0.0
  %5595 = vmatprep.subr.mxu0 0.0
  %5596 = vmatpush2.msra.mxu0 0.0
  %5597 = vmatprep.subr.mxu0 0.0
  %5598 = vmatpush2.msra.mxu0 0.0
  %5599 = vmatprep.subr.mxu0 0.0
  %5600 = vmatpush2.msra.mxu0 0.0
  %5601 = vmatprep.subr.mxu0 0.0
  %5602 = vmatpush2.msra.mxu0 0.0
  %5603 = vmatprep.subr.mxu0 0.0
  %5604 = vmatpush2.msra.mxu0 0.0
  %5605 = vmatprep.subr.mxu0 0.0
  %5606 = vmatpush2.msra.mxu0 0.0
  %5607 = vmatprep.subr.mxu0 0.0
  %5608 = vmatpush2.msra.mxu0 0.0
  %5609 = vmatprep.subr.mxu0 0.0
  %5610 = vmatpush2.msra.mxu0 0.0
  %5611 = vmatprep.subr.mxu0 0.0
  %5612 = vmatpush2.msra.mxu0 0.0
  %5613 = vmatprep.subr.mxu0 0.0
  %5614 = vmatpush2.msra.mxu0 0.0
  %5615 = vmatprep.subr.mxu0 0.0
  %5616 = vmatpush2.msra.mxu0 0.0
  %5617 = vmatprep.mubr.f32.mxu0 0.0
  %5618 = vmatmul.mubr.f32.gmra.mxu0 %v2408
  %v5619 = vpop.f32.mrf.mxu0
  %v5620 = vadd.f32 0.0, %v5619
  %v5621 = vpop.f32.mrf.mxu0
  %5622 = vmatprep.mubr.f32.mxu0 0.0
  %5623 = vmatmul.mubr.f32.gmra.mxu0 %v2409
  %v5624 = vpop.f32.mrf.mxu0
  %v5625 = vadd.f32 0.0, %v5624
  %v5626 = vpop.f32.mrf.mxu0
  %5627 = vmatprep.mubr.f32.mxu0 0.0
  %5628 = vmatmul.mubr.f32.gmra.mxu0 %v2410
  %v5629 = vpop.f32.mrf.mxu0
  %v5630 = vadd.f32 0.0, %v5629
  %v5631 = vpop.f32.mrf.mxu0
  %5632 = vmatprep.mubr.f32.mxu0 0.0
  %5633 = vmatmul.mubr.f32.gmra.mxu0 %v2411
  %v5634 = vpop.f32.mrf.mxu0
  %v5635 = vadd.f32 0.0, %v5634
  %v5636 = vpop.f32.mrf.mxu0
  %5637 = vdwg.mxu0
  %v5638 = vadd.f32 %v5549, %v5620
  %v5639 = vadd.f32 %v5550, %v5625
  %v5640 = vadd.f32 %v5551, %v5630
  %v5641 = vadd.f32 %v5552, %v5635
  %5642 = vmatprep.subr.mxu0 0.0
  %5643 = vmatpush1.msra.mxu0 %v243
  %5644 = vmatprep.subr.mxu0 0.0
  %5645 = vmatpush1.msra.mxu0 %v242
  %5646 = vmatprep.subr.mxu0 0.0
  %5647 = vmatpush1.msra.mxu0 %v241
  %5648 = vmatprep.subr.mxu0 0.0
  %5649 = vmatpush1.msra.mxu0 %v240
  %5650 = vmatprep.subr.mxu0 0.0
  %5651 = vmatpush1.msra.mxu0 %v239
  %5652 = vmatprep.subr.mxu0 0.0
  %5653 = vmatpush1.msra.mxu0 %v238
  %5654 = vmatprep.subr.mxu0 0.0
  %5655 = vmatpush1.msra.mxu0 %v237
  %5656 = vmatprep.subr.mxu0 0.0
  %5657 = vmatpush1.msra.mxu0 %v236
  %5658 = vmatprep.subr.mxu0 0.0
  %5659 = vmatpush1.msra.mxu0 %v235
  %5660 = vmatprep.subr.mxu0 0.0
  %5661 = vmatpush1.msra.mxu0 %v234
  %5662 = vmatprep.subr.mxu0 0.0
  %5663 = vmatpush1.msra.mxu0 %v233
  %5664 = vmatprep.subr.mxu0 0.0
  %5665 = vmatpush1.msra.mxu0 %v232
  %5666 = vmatprep.subr.mxu0 0.0
  %5667 = vmatpush1.msra.mxu0 %v231
  %5668 = vmatprep.subr.mxu0 0.0
  %5669 = vmatpush1.msra.mxu0 %v230
  %5670 = vmatprep.subr.mxu0 0.0
  %5671 = vmatpush1.msra.mxu0 %v229
  %5672 = vmatprep.subr.mxu0 0.0
  %5673 = vmatpush1.msra.mxu0 %v228
  %5674 = vmatprep.subr.mxu0 0.0
  %5675 = vmatpush2.msra.mxu0 0.0
  %5676 = vmatprep.subr.mxu0 0.0
  %5677 = vmatpush2.msra.mxu0 0.0
  %5678 = vmatprep.subr.mxu0 0.0
  %5679 = vmatpush2.msra.mxu0 0.0
  %5680 = vmatprep.subr.mxu0 0.0
  %5681 = vmatpush2.msra.mxu0 0.0
  %5682 = vmatprep.subr.mxu0 0.0
  %5683 = vmatpush2.msra.mxu0 0.0
  %5684 = vmatprep.subr.mxu0 0.0
  %5685 = vmatpush2.msra.mxu0 0.0
  %5686 = vmatprep.subr.mxu0 0.0
  %5687 = vmatpush2.msra.mxu0 0.0
  %5688 = vmatprep.subr.mxu0 0.0
  %5689 = vmatpush2.msra.mxu0 0.0
  %5690 = vmatprep.subr.mxu0 0.0
  %5691 = vmatpush2.msra.mxu0 0.0
  %5692 = vmatprep.subr.mxu0 0.0
  %5693 = vmatpush2.msra.mxu0 0.0
  %5694 = vmatprep.subr.mxu0 0.0
  %5695 = vmatpush2.msra.mxu0 0.0
  %5696 = vmatprep.subr.mxu0 0.0
  %5697 = vmatpush2.msra.mxu0 0.0
  %5698 = vmatprep.subr.mxu0 0.0
  %5699 = vmatpush2.msra.mxu0 0.0
  %5700 = vmatprep.subr.mxu0 0.0
  %5701 = vmatpush2.msra.mxu0 0.0
  %5702 = vmatprep.subr.mxu0 0.0
  %5703 = vmatpush2.msra.mxu0 0.0
  %5704 = vmatprep.subr.mxu0 0.0
  %5705 = vmatpush2.msra.mxu0 0.0
  %5706 = vmatprep.mubr.f32.mxu0 0.0
  %5707 = vmatmul.mubr.f32.gmra.mxu0 %v4416
  %v5708 = vpop.f32.mrf.mxu0
  %v5709 = vadd.f32 0.0, %v5708
  %v5710 = vpop.f32.mrf.mxu0
  %5711 = vmatprep.mubr.f32.mxu0 0.0
  %5712 = vmatmul.mubr.f32.gmra.mxu0 %v4417
  %v5713 = vpop.f32.mrf.mxu0
  %v5714 = vadd.f32 0.0, %v5713
  %v5715 = vpop.f32.mrf.mxu0
  %5716 = vmatprep.mubr.f32.mxu0 0.0
  %5717 = vmatmul.mubr.f32.gmra.mxu0 %v4418
  %v5718 = vpop.f32.mrf.mxu0
  %v5719 = vadd.f32 0.0, %v5718
  %v5720 = vpop.f32.mrf.mxu0
  %5721 = vmatprep.mubr.f32.mxu0 0.0
  %5722 = vmatmul.mubr.f32.gmra.mxu0 %v4419
  %v5723 = vpop.f32.mrf.mxu0
  %v5724 = vadd.f32 0.0, %v5723
  %v5725 = vpop.f32.mrf.mxu0
  %5726 = vdwg.mxu0
  %v5727 = vadd.f32 %v5638, %v5709
  %v5728 = vadd.f32 %v5639, %v5714
  %v5729 = vadd.f32 %v5640, %v5719
  %v5730 = vadd.f32 %v5641, %v5724
  %5731 = vmatprep.subr.mxu0 0.0
  %5732 = vmatpush1.msra.mxu0 %v163
  %5733 = vmatprep.subr.mxu0 0.0
  %5734 = vmatpush1.msra.mxu0 %v162
  %5735 = vmatprep.subr.mxu0 0.0
  %5736 = vmatpush1.msra.mxu0 %v161
  %5737 = vmatprep.subr.mxu0 0.0
  %5738 = vmatpush1.msra.mxu0 %v160
  %5739 = vmatprep.subr.mxu0 0.0
  %5740 = vmatpush1.msra.mxu0 %v159
  %5741 = vmatprep.subr.mxu0 0.0
  %5742 = vmatpush1.msra.mxu0 %v158
  %5743 = vmatprep.subr.mxu0 0.0
  %5744 = vmatpush1.msra.mxu0 %v157
  %5745 = vmatprep.subr.mxu0 0.0
  %5746 = vmatpush1.msra.mxu0 %v156
  %5747 = vmatprep.subr.mxu0 0.0
  %5748 = vmatpush1.msra.mxu0 %v155
  %5749 = vmatprep.subr.mxu0 0.0
  %5750 = vmatpush1.msra.mxu0 %v154
  %5751 = vmatprep.subr.mxu0 0.0
  %5752 = vmatpush1.msra.mxu0 %v153
  %5753 = vmatprep.subr.mxu0 0.0
  %5754 = vmatpush1.msra.mxu0 %v152
  %5755 = vmatprep.subr.mxu0 0.0
  %5756 = vmatpush1.msra.mxu0 %v151
  %5757 = vmatprep.subr.mxu0 0.0
  %5758 = vmatpush1.msra.mxu0 %v150
  %5759 = vmatprep.subr.mxu0 0.0
  %5760 = vmatpush1.msra.mxu0 %v149
  %5761 = vmatprep.subr.mxu0 0.0
  %5762 = vmatpush1.msra.mxu0 %v148
  %5763 = vmatprep.subr.mxu0 0.0
  %5764 = vmatpush2.msra.mxu0 0.0
  %5765 = vmatprep.subr.mxu0 0.0
  %5766 = vmatpush2.msra.mxu0 0.0
  %5767 = vmatprep.subr.mxu0 0.0
  %5768 = vmatpush2.msra.mxu0 0.0
  %5769 = vmatprep.subr.mxu0 0.0
  %5770 = vmatpush2.msra.mxu0 0.0
  %5771 = vmatprep.subr.mxu0 0.0
  %5772 = vmatpush2.msra.mxu0 0.0
  %5773 = vmatprep.subr.mxu0 0.0
  %5774 = vmatpush2.msra.mxu0 0.0
  %5775 = vmatprep.subr.mxu0 0.0
  %5776 = vmatpush2.msra.mxu0 0.0
  %5777 = vmatprep.subr.mxu0 0.0
  %5778 = vmatpush2.msra.mxu0 0.0
  %5779 = vmatprep.subr.mxu0 0.0
  %5780 = vmatpush2.msra.mxu0 0.0
  %5781 = vmatprep.subr.mxu0 0.0
  %5782 = vmatpush2.msra.mxu0 0.0
  %5783 = vmatprep.subr.mxu0 0.0
  %5784 = vmatpush2.msra.mxu0 0.0
  %5785 = vmatprep.subr.mxu0 0.0
  %5786 = vmatpush2.msra.mxu0 0.0
  %5787 = vmatprep.subr.mxu0 0.0
  %5788 = vmatpush2.msra.mxu0 0.0
  %5789 = vmatprep.subr.mxu0 0.0
  %5790 = vmatpush2.msra.mxu0 0.0
  %5791 = vmatprep.subr.mxu0 0.0
  %5792 = vmatpush2.msra.mxu0 0.0
  %5793 = vmatprep.subr.mxu0 0.0
  %5794 = vmatpush2.msra.mxu0 0.0
  %5795 = vmatprep.mubr.f32.mxu0 0.0
  %5796 = vmatmul.mubr.f32.gmra.mxu0 %v2407
  %v5797 = vpop.f32.mrf.mxu0
  %v5798 = vadd.f32 0.0, %v5797
  %v5799 = vpop.f32.mrf.mxu0
  %5800 = vmatprep.mubr.f32.mxu0 0.0
  %5801 = vmatmul.mubr.f32.gmra.mxu0 %v2408
  %v5802 = vpop.f32.mrf.mxu0
  %v5803 = vadd.f32 0.0, %v5802
  %v5804 = vpop.f32.mrf.mxu0
  %5805 = vmatprep.mubr.f32.mxu0 0.0
  %5806 = vmatmul.mubr.f32.gmra.mxu0 %v2409
  %v5807 = vpop.f32.mrf.mxu0
  %v5808 = vadd.f32 0.0, %v5807
  %v5809 = vpop.f32.mrf.mxu0
  %5810 = vmatprep.mubr.f32.mxu0 0.0
  %5811 = vmatmul.mubr.f32.gmra.mxu0 %v2410
  %v5812 = vpop.f32.mrf.mxu0
  %v5813 = vadd.f32 0.0, %v5812
  %v5814 = vpop.f32.mrf.mxu0
  %5815 = vdwg.mxu0
  %5816 = vmatprep.subr.mxu0 0.0
  %5817 = vmatpush1.msra.mxu0 %v131
  %5818 = vmatprep.subr.mxu0 0.0
  %5819 = vmatpush1.msra.mxu0 %v130
  %5820 = vmatprep.subr.mxu0 0.0
  %5821 = vmatpush1.msra.mxu0 %v129
  %5822 = vmatprep.subr.mxu0 0.0
  %5823 = vmatpush1.msra.mxu0 %v128
  %5824 = vmatprep.subr.mxu0 0.0
  %5825 = vmatpush1.msra.mxu0 %v127
  %5826 = vmatprep.subr.mxu0 0.0
  %5827 = vmatpush1.msra.mxu0 %v126
  %5828 = vmatprep.subr.mxu0 0.0
  %5829 = vmatpush1.msra.mxu0 %v125
  %5830 = vmatprep.subr.mxu0 0.0
  %5831 = vmatpush1.msra.mxu0 %v124
  %5832 = vmatprep.subr.mxu0 0.0
  %5833 = vmatpush1.msra.mxu0 %v123
  %5834 = vmatprep.subr.mxu0 0.0
  %5835 = vmatpush1.msra.mxu0 %v122
  %5836 = vmatprep.subr.mxu0 0.0
  %5837 = vmatpush1.msra.mxu0 %v121
  %5838 = vmatprep.subr.mxu0 0.0
  %5839 = vmatpush1.msra.mxu0 %v120
  %5840 = vmatprep.subr.mxu0 0.0
  %5841 = vmatpush1.msra.mxu0 %v119
  %5842 = vmatprep.subr.mxu0 0.0
  %5843 = vmatpush1.msra.mxu0 %v118
  %5844 = vmatprep.subr.mxu0 0.0
  %5845 = vmatpush1.msra.mxu0 %v117
  %5846 = vmatprep.subr.mxu0 0.0
  %5847 = vmatpush1.msra.mxu0 %v116
  %5848 = vmatprep.subr.mxu0 0.0
  %5849 = vmatpush2.msra.mxu0 0.0
  %5850 = vmatprep.subr.mxu0 0.0
  %5851 = vmatpush2.msra.mxu0 0.0
  %5852 = vmatprep.subr.mxu0 0.0
  %5853 = vmatpush2.msra.mxu0 0.0
  %5854 = vmatprep.subr.mxu0 0.0
  %5855 = vmatpush2.msra.mxu0 0.0
  %5856 = vmatprep.subr.mxu0 0.0
  %5857 = vmatpush2.msra.mxu0 0.0
  %5858 = vmatprep.subr.mxu0 0.0
  %5859 = vmatpush2.msra.mxu0 0.0
  %5860 = vmatprep.subr.mxu0 0.0
  %5861 = vmatpush2.msra.mxu0 0.0
  %5862 = vmatprep.subr.mxu0 0.0
  %5863 = vmatpush2.msra.mxu0 0.0
  %5864 = vmatprep.subr.mxu0 0.0
  %5865 = vmatpush2.msra.mxu0 0.0
  %5866 = vmatprep.subr.mxu0 0.0
  %5867 = vmatpush2.msra.mxu0 0.0
  %5868 = vmatprep.subr.mxu0 0.0
  %5869 = vmatpush2.msra.mxu0 0.0
  %5870 = vmatprep.subr.mxu0 0.0
  %5871 = vmatpush2.msra.mxu0 0.0
  %5872 = vmatprep.subr.mxu0 0.0
  %5873 = vmatpush2.msra.mxu0 0.0
  %5874 = vmatprep.subr.mxu0 0.0
  %5875 = vmatpush2.msra.mxu0 0.0
  %5876 = vmatprep.subr.mxu0 0.0
  %5877 = vmatpush2.msra.mxu0 0.0
  %5878 = vmatprep.subr.mxu0 0.0
  %5879 = vmatpush2.msra.mxu0 0.0
  %5880 = vmatprep.mubr.f32.mxu0 0.0
  %5881 = vmatmul.mubr.f32.gmra.mxu0 %v4414
  %v5882 = vpop.f32.mrf.mxu0
  %v5883 = vadd.f32 %v5798, %v5882
  %v5884 = vpop.f32.mrf.mxu0
  %5885 = vmatprep.mubr.f32.mxu0 0.0
  %5886 = vmatmul.mubr.f32.gmra.mxu0 %v4415
  %v5887 = vpop.f32.mrf.mxu0
  %v5888 = vadd.f32 %v5803, %v5887
  %v5889 = vpop.f32.mrf.mxu0
  %5890 = vmatprep.mubr.f32.mxu0 0.0
  %5891 = vmatmul.mubr.f32.gmra.mxu0 %v4416
  %v5892 = vpop.f32.mrf.mxu0
  %v5893 = vadd.f32 %v5808, %v5892
  %v5894 = vpop.f32.mrf.mxu0
  %5895 = vmatprep.mubr.f32.mxu0 0.0
  %5896 = vmatmul.mubr.f32.gmra.mxu0 %v4417
  %v5897 = vpop.f32.mrf.mxu0
  %v5898 = vadd.f32 %v5813, %v5897
  %v5899 = vpop.f32.mrf.mxu0
  %5900 = vdwg.mxu0
  %5901 = vmatprep.subr.mxu0 0.0
  %5902 = vmatpush1.msra.mxu0 %v195
  %5903 = vmatprep.subr.mxu0 0.0
  %5904 = vmatpush1.msra.mxu0 %v194
  %5905 = vmatprep.subr.mxu0 0.0
  %5906 = vmatpush1.msra.mxu0 %v193
  %5907 = vmatprep.subr.mxu0 0.0
  %5908 = vmatpush1.msra.mxu0 %v192
  %5909 = vmatprep.subr.mxu0 0.0
  %5910 = vmatpush1.msra.mxu0 %v191
  %5911 = vmatprep.subr.mxu0 0.0
  %5912 = vmatpush1.msra.mxu0 %v190
  %5913 = vmatprep.subr.mxu0 0.0
  %5914 = vmatpush1.msra.mxu0 %v189
  %5915 = vmatprep.subr.mxu0 0.0
  %5916 = vmatpush1.msra.mxu0 %v188
  %5917 = vmatprep.subr.mxu0 0.0
  %5918 = vmatpush1.msra.mxu0 %v187
  %5919 = vmatprep.subr.mxu0 0.0
  %5920 = vmatpush1.msra.mxu0 %v186
  %5921 = vmatprep.subr.mxu0 0.0
  %5922 = vmatpush1.msra.mxu0 %v185
  %5923 = vmatprep.subr.mxu0 0.0
  %5924 = vmatpush1.msra.mxu0 %v184
  %5925 = vmatprep.subr.mxu0 0.0
  %5926 = vmatpush1.msra.mxu0 %v183
  %5927 = vmatprep.subr.mxu0 0.0
  %5928 = vmatpush1.msra.mxu0 %v182
  %5929 = vmatprep.subr.mxu0 0.0
  %5930 = vmatpush1.msra.mxu0 %v181
  %5931 = vmatprep.subr.mxu0 0.0
  %5932 = vmatpush1.msra.mxu0 %v180
  %5933 = vmatprep.subr.mxu0 0.0
  %5934 = vmatpush2.msra.mxu0 0.0
  %5935 = vmatprep.subr.mxu0 0.0
  %5936 = vmatpush2.msra.mxu0 0.0
  %5937 = vmatprep.subr.mxu0 0.0
  %5938 = vmatpush2.msra.mxu0 0.0
  %5939 = vmatprep.subr.mxu0 0.0
  %5940 = vmatpush2.msra.mxu0 0.0
  %5941 = vmatprep.subr.mxu0 0.0
  %5942 = vmatpush2.msra.mxu0 0.0
  %5943 = vmatprep.subr.mxu0 0.0
  %5944 = vmatpush2.msra.mxu0 0.0
  %5945 = vmatprep.subr.mxu0 0.0
  %5946 = vmatpush2.msra.mxu0 0.0
  %5947 = vmatprep.subr.mxu0 0.0
  %5948 = vmatpush2.msra.mxu0 0.0
  %5949 = vmatprep.subr.mxu0 0.0
  %5950 = vmatpush2.msra.mxu0 0.0
  %5951 = vmatprep.subr.mxu0 0.0
  %5952 = vmatpush2.msra.mxu0 0.0
  %5953 = vmatprep.subr.mxu0 0.0
  %5954 = vmatpush2.msra.mxu0 0.0
  %5955 = vmatprep.subr.mxu0 0.0
  %5956 = vmatpush2.msra.mxu0 0.0
  %5957 = vmatprep.subr.mxu0 0.0
  %5958 = vmatpush2.msra.mxu0 0.0
  %5959 = vmatprep.subr.mxu0 0.0
  %5960 = vmatpush2.msra.mxu0 0.0
  %5961 = vmatprep.subr.mxu0 0.0
  %5962 = vmatpush2.msra.mxu0 0.0
  %5963 = vmatprep.subr.mxu0 0.0
  %5964 = vmatpush2.msra.mxu0 0.0
  %5965 = vmatprep.mubr.f32.mxu0 0.0
  %5966 = vmatmul.mubr.f32.gmra.mxu0 %v4415
  %v5967 = vpop.f32.mrf.mxu0
  %v5968 = vadd.f32 0.0, %v5967
  %v5969 = vpop.f32.mrf.mxu0
  %5970 = vmatprep.mubr.f32.mxu0 0.0
  %5971 = vmatmul.mubr.f32.gmra.mxu0 %v4416
  %v5972 = vpop.f32.mrf.mxu0
  %v5973 = vadd.f32 0.0, %v5972
  %v5974 = vpop.f32.mrf.mxu0
  %5975 = vmatprep.mubr.f32.mxu0 0.0
  %5976 = vmatmul.mubr.f32.gmra.mxu0 %v4417
  %v5977 = vpop.f32.mrf.mxu0
  %v5978 = vadd.f32 0.0, %v5977
  %v5979 = vpop.f32.mrf.mxu0
  %5980 = vmatprep.mubr.f32.mxu0 0.0
  %5981 = vmatmul.mubr.f32.gmra.mxu0 %v4418
  %v5982 = vpop.f32.mrf.mxu0
  %v5983 = vadd.f32 0.0, %v5982
  %v5984 = vpop.f32.mrf.mxu0
  %5985 = vdwg.mxu0
  %v5986 = vadd.f32 %v5883, %v5968
  %v5987 = vadd.f32 %v5888, %v5973
  %v5988 = vadd.f32 %v5893, %v5978
  %v5989 = vadd.f32 %v5898, %v5983
  %5990 = vmatprep.subr.mxu0 0.0
  %5991 = vmatpush1.msra.mxu0 %v227
  %5992 = vmatprep.subr.mxu0 0.0
  %5993 = vmatpush1.msra.mxu0 %v226
  %5994 = vmatprep.subr.mxu0 0.0
  %5995 = vmatpush1.msra.mxu0 %v225
  %5996 = vmatprep.subr.mxu0 0.0
  %5997 = vmatpush1.msra.mxu0 %v224
  %5998 = vmatprep.subr.mxu0 0.0
  %5999 = vmatpush1.msra.mxu0 %v223
  %6000 = vmatprep.subr.mxu0 0.0
  %6001 = vmatpush1.msra.mxu0 %v222
  %6002 = vmatprep.subr.mxu0 0.0
  %6003 = vmatpush1.msra.mxu0 %v221
  %6004 = vmatprep.subr.mxu0 0.0
  %6005 = vmatpush1.msra.mxu0 %v220
  %6006 = vmatprep.subr.mxu0 0.0
  %6007 = vmatpush1.msra.mxu0 %v219
  %6008 = vmatprep.subr.mxu0 0.0
  %6009 = vmatpush1.msra.mxu0 %v218
  %6010 = vmatprep.subr.mxu0 0.0
  %6011 = vmatpush1.msra.mxu0 %v217
  %6012 = vmatprep.subr.mxu0 0.0
  %6013 = vmatpush1.msra.mxu0 %v216
  %6014 = vmatprep.subr.mxu0 0.0
  %6015 = vmatpush1.msra.mxu0 %v215
  %6016 = vmatprep.subr.mxu0 0.0
  %6017 = vmatpush1.msra.mxu0 %v214
  %6018 = vmatprep.subr.mxu0 0.0
  %6019 = vmatpush1.msra.mxu0 %v213
  %6020 = vmatprep.subr.mxu0 0.0
  %6021 = vmatpush1.msra.mxu0 %v212
  %6022 = vmatprep.subr.mxu0 0.0
  %6023 = vmatpush2.msra.mxu0 0.0
  %6024 = vmatprep.subr.mxu0 0.0
  %6025 = vmatpush2.msra.mxu0 0.0
  %6026 = vmatprep.subr.mxu0 0.0
  %6027 = vmatpush2.msra.mxu0 0.0
  %6028 = vmatprep.subr.mxu0 0.0
  %6029 = vmatpush2.msra.mxu0 0.0
  %6030 = vmatprep.subr.mxu0 0.0
  %6031 = vmatpush2.msra.mxu0 0.0
  %6032 = vmatprep.subr.mxu0 0.0
  %6033 = vmatpush2.msra.mxu0 0.0
  %6034 = vmatprep.subr.mxu0 0.0
  %6035 = vmatpush2.msra.mxu0 0.0
  %6036 = vmatprep.subr.mxu0 0.0
  %6037 = vmatpush2.msra.mxu0 0.0
  %6038 = vmatprep.subr.mxu0 0.0
  %6039 = vmatpush2.msra.mxu0 0.0
  %6040 = vmatprep.subr.mxu0 0.0
  %6041 = vmatpush2.msra.mxu0 0.0
  %6042 = vmatprep.subr.mxu0 0.0
  %6043 = vmatpush2.msra.mxu0 0.0
  %6044 = vmatprep.subr.mxu0 0.0
  %6045 = vmatpush2.msra.mxu0 0.0
  %6046 = vmatprep.subr.mxu0 0.0
  %6047 = vmatpush2.msra.mxu0 0.0
  %6048 = vmatprep.subr.mxu0 0.0
  %6049 = vmatpush2.msra.mxu0 0.0
  %6050 = vmatprep.subr.mxu0 0.0
  %6051 = vmatpush2.msra.mxu0 0.0
  %6052 = vmatprep.subr.mxu0 0.0
  %6053 = vmatpush2.msra.mxu0 0.0
  %6054 = vmatprep.mubr.f32.mxu0 0.0
  %6055 = vmatmul.mubr.f32.gmra.mxu0 %v2408
  %v6056 = vpop.f32.mrf.mxu0
  %v6057 = vadd.f32 0.0, %v6056
  %v6058 = vpop.f32.mrf.mxu0
  %6059 = vmatprep.mubr.f32.mxu0 0.0
  %6060 = vmatmul.mubr.f32.gmra.mxu0 %v2409
  %v6061 = vpop.f32.mrf.mxu0
  %v6062 = vadd.f32 0.0, %v6061
  %v6063 = vpop.f32.mrf.mxu0
  %6064 = vmatprep.mubr.f32.mxu0 0.0
  %6065 = vmatmul.mubr.f32.gmra.mxu0 %v2410
  %v6066 = vpop.f32.mrf.mxu0
  %v6067 = vadd.f32 0.0, %v6066
  %v6068 = vpop.f32.mrf.mxu0
  %6069 = vmatprep.mubr.f32.mxu0 0.0
  %6070 = vmatmul.mubr.f32.gmra.mxu0 %v2411
  %v6071 = vpop.f32.mrf.mxu0
  %v6072 = vadd.f32 0.0, %v6071
  %v6073 = vpop.f32.mrf.mxu0
  %6074 = vdwg.mxu0
  %v6075 = vadd.f32 %v5986, %v6057
  %v6076 = vadd.f32 %v5987, %v6062
  %v6077 = vadd.f32 %v5988, %v6067
  %v6078 = vadd.f32 %v5989, %v6072
  %6079 = vmatprep.subr.mxu0 0.0
  %6080 = vmatpush1.msra.mxu0 %v259
  %6081 = vmatprep.subr.mxu0 0.0
  %6082 = vmatpush1.msra.mxu0 %v258
  %6083 = vmatprep.subr.mxu0 0.0
  %6084 = vmatpush1.msra.mxu0 %v257
  %6085 = vmatprep.subr.mxu0 0.0
  %6086 = vmatpush1.msra.mxu0 %v256
  %6087 = vmatprep.subr.mxu0 0.0
  %6088 = vmatpush1.msra.mxu0 %v255
  %6089 = vmatprep.subr.mxu0 0.0
  %6090 = vmatpush1.msra.mxu0 %v254
  %6091 = vmatprep.subr.mxu0 0.0
  %6092 = vmatpush1.msra.mxu0 %v253
  %6093 = vmatprep.subr.mxu0 0.0
  %6094 = vmatpush1.msra.mxu0 %v252
  %6095 = vmatprep.subr.mxu0 0.0
  %6096 = vmatpush1.msra.mxu0 %v251
  %6097 = vmatprep.subr.mxu0 0.0
  %6098 = vmatpush1.msra.mxu0 %v250
  %6099 = vmatprep.subr.mxu0 0.0
  %6100 = vmatpush1.msra.mxu0 %v249
  %6101 = vmatprep.subr.mxu0 0.0
  %6102 = vmatpush1.msra.mxu0 %v248
  %6103 = vmatprep.subr.mxu0 0.0
  %6104 = vmatpush1.msra.mxu0 %v247
  %6105 = vmatprep.subr.mxu0 0.0
  %6106 = vmatpush1.msra.mxu0 %v246
  %6107 = vmatprep.subr.mxu0 0.0
  %6108 = vmatpush1.msra.mxu0 %v245
  %6109 = vmatprep.subr.mxu0 0.0
  %6110 = vmatpush1.msra.mxu0 %v244
  %6111 = vmatprep.subr.mxu0 0.0
  %6112 = vmatpush2.msra.mxu0 0.0
  %6113 = vmatprep.subr.mxu0 0.0
  %6114 = vmatpush2.msra.mxu0 0.0
  %6115 = vmatprep.subr.mxu0 0.0
  %6116 = vmatpush2.msra.mxu0 0.0
  %6117 = vmatprep.subr.mxu0 0.0
  %6118 = vmatpush2.msra.mxu0 0.0
  %6119 = vmatprep.subr.mxu0 0.0
  %6120 = vmatpush2.msra.mxu0 0.0
  %6121 = vmatprep.subr.mxu0 0.0
  %6122 = vmatpush2.msra.mxu0 0.0
  %6123 = vmatprep.subr.mxu0 0.0
  %6124 = vmatpush2.msra.mxu0 0.0
  %6125 = vmatprep.subr.mxu0 0.0
  %6126 = vmatpush2.msra.mxu0 0.0
  %6127 = vmatprep.subr.mxu0 0.0
  %6128 = vmatpush2.msra.mxu0 0.0
  %6129 = vmatprep.subr.mxu0 0.0
  %6130 = vmatpush2.msra.mxu0 0.0
  %6131 = vmatprep.subr.mxu0 0.0
  %6132 = vmatpush2.msra.mxu0 0.0
  %6133 = vmatprep.subr.mxu0 0.0
  %6134 = vmatpush2.msra.mxu0 0.0
  %6135 = vmatprep.subr.mxu0 0.0
  %6136 = vmatpush2.msra.mxu0 0.0
  %6137 = vmatprep.subr.mxu0 0.0
  %6138 = vmatpush2.msra.mxu0 0.0
  %6139 = vmatprep.subr.mxu0 0.0
  %6140 = vmatpush2.msra.mxu0 0.0
  %6141 = vmatprep.subr.mxu0 0.0
  %6142 = vmatpush2.msra.mxu0 0.0
  %6143 = vmatprep.mubr.f32.mxu0 0.0
  %6144 = vmatmul.mubr.f32.gmra.mxu0 %v4416
  %v6145 = vpop.f32.mrf.mxu0
  %v6146 = vadd.f32 0.0, %v6145
  %v6147 = vpop.f32.mrf.mxu0
  %6148 = vmatprep.mubr.f32.mxu0 0.0
  %6149 = vmatmul.mubr.f32.gmra.mxu0 %v4417
  %v6150 = vpop.f32.mrf.mxu0
  %v6151 = vadd.f32 0.0, %v6150
  %v6152 = vpop.f32.mrf.mxu0
  %6153 = vmatprep.mubr.f32.mxu0 0.0
  %6154 = vmatmul.mubr.f32.gmra.mxu0 %v4418
  %v6155 = vpop.f32.mrf.mxu0
  %v6156 = vadd.f32 0.0, %v6155
  %v6157 = vpop.f32.mrf.mxu0
  %6158 = vmatprep.mubr.f32.mxu0 0.0
  %6159 = vmatmul.mubr.f32.gmra.mxu0 %v4419
  %v6160 = vpop.f32.mrf.mxu0
  %v6161 = vadd.f32 0.0, %v6160
  %v6162 = vpop.f32.mrf.mxu0
  %6163 = vdwg.mxu0
  %v6164 = vadd.f32 %v6075, %v6146
  %v6165 = vadd.f32 %v6076, %v6151
  %v6166 = vadd.f32 %v6077, %v6156
  %v6167 = vadd.f32 %v6078, %v6161
  %v6168 = vmax.f32 %v4853, %v5290
  %v6169 = vmax.f32 %v4854, %v5291
  %v6170 = vmax.f32 %v4855, %v5292
  %v6171 = vmax.f32 %v4856, %v5293
  %v6172 = vmax.f32 %v5727, %v6164
  %v6173 = vmax.f32 %v5728, %v6165
  %v6174 = vmax.f32 %v5729, %v6166
  %v6175 = vmax.f32 %v5730, %v6167
  %v6176 = vmax.f32 %v6168, %v6172
  %v6177 = vmax.f32 %v6169, %v6173
  %v6178 = vmax.f32 %v6170, %v6174
  %v6179 = vmax.f32 %v6171, %v6175
  %v6180 = vld [vmem:[%s4] sm:$0x1]
  %v6182 = vlaneseq
  %v6183 = vshrl.u32 %v6182, 7
  %v6184 = vsub.s32 0, %v6183
  %v6185 = vrot.slane %v6180, %v6184
  %v6187 = vadd.f32 %v6176, %v6185
  %v6188 = vadd.f32 %v6177, %v6185
  %v6189 = vadd.f32 %v6178, %v6185
  %v6190 = vadd.f32 %v6179, %v6185
  %v6191 = vmax.f32 %v6187, 0.0
  %v6192 = vmax.f32 %v6188, 0.0
  %v6193 = vmax.f32 %v6189, 0.0
  %v6194 = vmax.f32 %v6190, 0.0
  %6195 = vmatprep.subr.mxu0 0.0
  %6196 = vmatpush1.msra.mxu0 %v291
  %6197 = vmatprep.subr.mxu0 0.0
  %6198 = vmatpush1.msra.mxu0 %v290
  %6199 = vmatprep.subr.mxu0 0.0
  %6200 = vmatpush1.msra.mxu0 %v289
  %6201 = vmatprep.subr.mxu0 0.0
  %6202 = vmatpush1.msra.mxu0 %v288
  %6203 = vmatprep.subr.mxu0 0.0
  %6204 = vmatpush1.msra.mxu0 %v287
  %6205 = vmatprep.subr.mxu0 0.0
  %6206 = vmatpush1.msra.mxu0 %v286
  %6207 = vmatprep.subr.mxu0 0.0
  %6208 = vmatpush1.msra.mxu0 %v285
  %6209 = vmatprep.subr.mxu0 0.0
  %6210 = vmatpush1.msra.mxu0 %v284
  %6211 = vmatprep.subr.mxu0 0.0
  %6212 = vmatpush1.msra.mxu0 %v283
  %6213 = vmatprep.subr.mxu0 0.0
  %6214 = vmatpush1.msra.mxu0 %v282
  %6215 = vmatprep.subr.mxu0 0.0
  %6216 = vmatpush1.msra.mxu0 %v281
  %6217 = vmatprep.subr.mxu0 0.0
  %6218 = vmatpush1.msra.mxu0 %v280
  %6219 = vmatprep.subr.mxu0 0.0
  %6220 = vmatpush1.msra.mxu0 %v279
  %6221 = vmatprep.subr.mxu0 0.0
  %6222 = vmatpush1.msra.mxu0 %v278
  %6223 = vmatprep.subr.mxu0 0.0
  %6224 = vmatpush1.msra.mxu0 %v277
  %6225 = vmatprep.subr.mxu0 0.0
  %6226 = vmatpush1.msra.mxu0 %v276
  %6227 = vmatprep.subr.mxu0 0.0
  %6228 = vmatpush2.msra.mxu0 0.0
  %6229 = vmatprep.subr.mxu0 0.0
  %6230 = vmatpush2.msra.mxu0 0.0
  %6231 = vmatprep.subr.mxu0 0.0
  %6232 = vmatpush2.msra.mxu0 0.0
  %6233 = vmatprep.subr.mxu0 0.0
  %6234 = vmatpush2.msra.mxu0 0.0
  %6235 = vmatprep.subr.mxu0 0.0
  %6236 = vmatpush2.msra.mxu0 0.0
  %6237 = vmatprep.subr.mxu0 0.0
  %6238 = vmatpush2.msra.mxu0 0.0
  %6239 = vmatprep.subr.mxu0 0.0
  %6240 = vmatpush2.msra.mxu0 0.0
  %6241 = vmatprep.subr.mxu0 0.0
  %6242 = vmatpush2.msra.mxu0 0.0
  %6243 = vmatprep.subr.mxu0 0.0
  %6244 = vmatpush2.msra.mxu0 0.0
  %6245 = vmatprep.subr.mxu0 0.0
  %6246 = vmatpush2.msra.mxu0 0.0
  %6247 = vmatprep.subr.mxu0 0.0
  %6248 = vmatpush2.msra.mxu0 0.0
  %6249 = vmatprep.subr.mxu0 0.0
  %6250 = vmatpush2.msra.mxu0 0.0
  %6251 = vmatprep.subr.mxu0 0.0
  %6252 = vmatpush2.msra.mxu0 0.0
  %6253 = vmatprep.subr.mxu0 0.0
  %6254 = vmatpush2.msra.mxu0 0.0
  %6255 = vmatprep.subr.mxu0 0.0
  %6256 = vmatpush2.msra.mxu0 0.0
  %6257 = vmatprep.subr.mxu0 0.0
  %6258 = vmatpush2.msra.mxu0 0.0
  %6259 = vmatprep.mubr.f32.mxu0 0.0
  %6260 = vmatmul.mubr.f32.gmra.mxu0 %v6192
  %v6261 = vpop.f32.mrf.mxu0
  %v6262 = vadd.f32 0.0, %v6261
  %v6263 = vpop.f32.mrf.mxu0
  %6264 = vdwg.mxu0
  %6265 = vmatprep.subr.mxu0 0.0
  %6266 = vmatpush1.msra.mxu0 %v275
  %6267 = vmatprep.subr.mxu0 0.0
  %6268 = vmatpush1.msra.mxu0 %v274
  %6269 = vmatprep.subr.mxu0 0.0
  %6270 = vmatpush1.msra.mxu0 %v273
  %6271 = vmatprep.subr.mxu0 0.0
  %6272 = vmatpush1.msra.mxu0 %v272
  %6273 = vmatprep.subr.mxu0 0.0
  %6274 = vmatpush1.msra.mxu0 %v271
  %6275 = vmatprep.subr.mxu0 0.0
  %6276 = vmatpush1.msra.mxu0 %v270
  %6277 = vmatprep.subr.mxu0 0.0
  %6278 = vmatpush1.msra.mxu0 %v269
  %6279 = vmatprep.subr.mxu0 0.0
  %6280 = vmatpush1.msra.mxu0 %v268
  %6281 = vmatprep.subr.mxu0 0.0
  %6282 = vmatpush1.msra.mxu0 %v267
  %6283 = vmatprep.subr.mxu0 0.0
  %6284 = vmatpush1.msra.mxu0 %v266
  %6285 = vmatprep.subr.mxu0 0.0
  %6286 = vmatpush1.msra.mxu0 %v265
  %6287 = vmatprep.subr.mxu0 0.0
  %6288 = vmatpush1.msra.mxu0 %v264
  %6289 = vmatprep.subr.mxu0 0.0
  %6290 = vmatpush1.msra.mxu0 %v263
  %6291 = vmatprep.subr.mxu0 0.0
  %6292 = vmatpush1.msra.mxu0 %v262
  %6293 = vmatprep.subr.mxu0 0.0
  %6294 = vmatpush1.msra.mxu0 %v261
  %6295 = vmatprep.subr.mxu0 0.0
  %6296 = vmatpush1.msra.mxu0 %v260
  %6297 = vmatprep.subr.mxu0 0.0
  %6298 = vmatpush2.msra.mxu0 0.0
  %6299 = vmatprep.subr.mxu0 0.0
  %6300 = vmatpush2.msra.mxu0 0.0
  %6301 = vmatprep.subr.mxu0 0.0
  %6302 = vmatpush2.msra.mxu0 0.0
  %6303 = vmatprep.subr.mxu0 0.0
  %6304 = vmatpush2.msra.mxu0 0.0
  %6305 = vmatprep.subr.mxu0 0.0
  %6306 = vmatpush2.msra.mxu0 0.0
  %6307 = vmatprep.subr.mxu0 0.0
  %6308 = vmatpush2.msra.mxu0 0.0
  %6309 = vmatprep.subr.mxu0 0.0
  %6310 = vmatpush2.msra.mxu0 0.0
  %6311 = vmatprep.subr.mxu0 0.0
  %6312 = vmatpush2.msra.mxu0 0.0
  %6313 = vmatprep.subr.mxu0 0.0
  %6314 = vmatpush2.msra.mxu0 0.0
  %6315 = vmatprep.subr.mxu0 0.0
  %6316 = vmatpush2.msra.mxu0 0.0
  %6317 = vmatprep.subr.mxu0 0.0
  %6318 = vmatpush2.msra.mxu0 0.0
  %6319 = vmatprep.subr.mxu0 0.0
  %6320 = vmatpush2.msra.mxu0 0.0
  %6321 = vmatprep.subr.mxu0 0.0
  %6322 = vmatpush2.msra.mxu0 0.0
  %6323 = vmatprep.subr.mxu0 0.0
  %6324 = vmatpush2.msra.mxu0 0.0
  %6325 = vmatprep.subr.mxu0 0.0
  %6326 = vmatpush2.msra.mxu0 0.0
  %6327 = vmatprep.subr.mxu0 0.0
  %6328 = vmatpush2.msra.mxu0 0.0
  %6329 = vmatprep.mubr.f32.mxu0 0.0
  %6330 = vmatmul.mubr.f32.gmra.mxu0 %v6191
  %v6331 = vpop.f32.mrf.mxu0
  %v6332 = vadd.f32 %v6262, %v6331
  %v6333 = vpop.f32.mrf.mxu0
  %6334 = vdwg.mxu0
  %6335 = vmatprep.subr.mxu0 0.0
  %6336 = vmatpush1.msra.mxu0 %v307
  %6337 = vmatprep.subr.mxu0 0.0
  %6338 = vmatpush1.msra.mxu0 %v306
  %6339 = vmatprep.subr.mxu0 0.0
  %6340 = vmatpush1.msra.mxu0 %v305
  %6341 = vmatprep.subr.mxu0 0.0
  %6342 = vmatpush1.msra.mxu0 %v304
  %6343 = vmatprep.subr.mxu0 0.0
  %6344 = vmatpush1.msra.mxu0 %v303
  %6345 = vmatprep.subr.mxu0 0.0
  %6346 = vmatpush1.msra.mxu0 %v302
  %6347 = vmatprep.subr.mxu0 0.0
  %6348 = vmatpush1.msra.mxu0 %v301
  %6349 = vmatprep.subr.mxu0 0.0
  %6350 = vmatpush1.msra.mxu0 %v300
  %6351 = vmatprep.subr.mxu0 0.0
  %6352 = vmatpush1.msra.mxu0 %v299
  %6353 = vmatprep.subr.mxu0 0.0
  %6354 = vmatpush1.msra.mxu0 %v298
  %6355 = vmatprep.subr.mxu0 0.0
  %6356 = vmatpush1.msra.mxu0 %v297
  %6357 = vmatprep.subr.mxu0 0.0
  %6358 = vmatpush1.msra.mxu0 %v296
  %6359 = vmatprep.subr.mxu0 0.0
  %6360 = vmatpush1.msra.mxu0 %v295
  %6361 = vmatprep.subr.mxu0 0.0
  %6362 = vmatpush1.msra.mxu0 %v294
  %6363 = vmatprep.subr.mxu0 0.0
  %6364 = vmatpush1.msra.mxu0 %v293
  %6365 = vmatprep.subr.mxu0 0.0
  %6366 = vmatpush1.msra.mxu0 %v292
  %6367 = vmatprep.subr.mxu0 0.0
  %6368 = vmatpush2.msra.mxu0 0.0
  %6369 = vmatprep.subr.mxu0 0.0
  %6370 = vmatpush2.msra.mxu0 0.0
  %6371 = vmatprep.subr.mxu0 0.0
  %6372 = vmatpush2.msra.mxu0 0.0
  %6373 = vmatprep.subr.mxu0 0.0
  %6374 = vmatpush2.msra.mxu0 0.0
  %6375 = vmatprep.subr.mxu0 0.0
  %6376 = vmatpush2.msra.mxu0 0.0
  %6377 = vmatprep.subr.mxu0 0.0
  %6378 = vmatpush2.msra.mxu0 0.0
  %6379 = vmatprep.subr.mxu0 0.0
  %6380 = vmatpush2.msra.mxu0 0.0
  %6381 = vmatprep.subr.mxu0 0.0
  %6382 = vmatpush2.msra.mxu0 0.0
  %6383 = vmatprep.subr.mxu0 0.0
  %6384 = vmatpush2.msra.mxu0 0.0
  %6385 = vmatprep.subr.mxu0 0.0
  %6386 = vmatpush2.msra.mxu0 0.0
  %6387 = vmatprep.subr.mxu0 0.0
  %6388 = vmatpush2.msra.mxu0 0.0
  %6389 = vmatprep.subr.mxu0 0.0
  %6390 = vmatpush2.msra.mxu0 0.0
  %6391 = vmatprep.subr.mxu0 0.0
  %6392 = vmatpush2.msra.mxu0 0.0
  %6393 = vmatprep.subr.mxu0 0.0
  %6394 = vmatpush2.msra.mxu0 0.0
  %6395 = vmatprep.subr.mxu0 0.0
  %6396 = vmatpush2.msra.mxu0 0.0
  %6397 = vmatprep.subr.mxu0 0.0
  %6398 = vmatpush2.msra.mxu0 0.0
  %6399 = vmatprep.mubr.f32.mxu0 0.0
  %6400 = vmatmul.mubr.f32.gmra.mxu0 %v6193
  %v6401 = vpop.f32.mrf.mxu0
  %v6402 = vadd.f32 0.0, %v6401
  %v6403 = vpop.f32.mrf.mxu0
  %6404 = vdwg.mxu0
  %v6405 = vadd.f32 %v6332, %v6402
  %6406 = vmatprep.subr.mxu0 0.0
  %6407 = vmatpush1.msra.mxu0 %v323
  %6408 = vmatprep.subr.mxu0 0.0
  %6409 = vmatpush1.msra.mxu0 %v322
  %6410 = vmatprep.subr.mxu0 0.0
  %6411 = vmatpush1.msra.mxu0 %v321
  %6412 = vmatprep.subr.mxu0 0.0
  %6413 = vmatpush1.msra.mxu0 %v320
  %6414 = vmatprep.subr.mxu0 0.0
  %6415 = vmatpush1.msra.mxu0 %v319
  %6416 = vmatprep.subr.mxu0 0.0
  %6417 = vmatpush1.msra.mxu0 %v318
  %6418 = vmatprep.subr.mxu0 0.0
  %6419 = vmatpush1.msra.mxu0 %v317
  %6420 = vmatprep.subr.mxu0 0.0
  %6421 = vmatpush1.msra.mxu0 %v316
  %6422 = vmatprep.subr.mxu0 0.0
  %6423 = vmatpush1.msra.mxu0 %v315
  %6424 = vmatprep.subr.mxu0 0.0
  %6425 = vmatpush1.msra.mxu0 %v314
  %6426 = vmatprep.subr.mxu0 0.0
  %6427 = vmatpush1.msra.mxu0 %v313
  %6428 = vmatprep.subr.mxu0 0.0
  %6429 = vmatpush1.msra.mxu0 %v312
  %6430 = vmatprep.subr.mxu0 0.0
  %6431 = vmatpush1.msra.mxu0 %v311
  %6432 = vmatprep.subr.mxu0 0.0
  %6433 = vmatpush1.msra.mxu0 %v310
  %6434 = vmatprep.subr.mxu0 0.0
  %6435 = vmatpush1.msra.mxu0 %v309
  %6436 = vmatprep.subr.mxu0 0.0
  %6437 = vmatpush1.msra.mxu0 %v308
  %6438 = vmatprep.subr.mxu0 0.0
  %6439 = vmatpush2.msra.mxu0 0.0
  %6440 = vmatprep.subr.mxu0 0.0
  %6441 = vmatpush2.msra.mxu0 0.0
  %6442 = vmatprep.subr.mxu0 0.0
  %6443 = vmatpush2.msra.mxu0 0.0
  %6444 = vmatprep.subr.mxu0 0.0
  %6445 = vmatpush2.msra.mxu0 0.0
  %6446 = vmatprep.subr.mxu0 0.0
  %6447 = vmatpush2.msra.mxu0 0.0
  %6448 = vmatprep.subr.mxu0 0.0
  %6449 = vmatpush2.msra.mxu0 0.0
  %6450 = vmatprep.subr.mxu0 0.0
  %6451 = vmatpush2.msra.mxu0 0.0
  %6452 = vmatprep.subr.mxu0 0.0
  %6453 = vmatpush2.msra.mxu0 0.0
  %6454 = vmatprep.subr.mxu0 0.0
  %6455 = vmatpush2.msra.mxu0 0.0
  %6456 = vmatprep.subr.mxu0 0.0
  %6457 = vmatpush2.msra.mxu0 0.0
  %6458 = vmatprep.subr.mxu0 0.0
  %6459 = vmatpush2.msra.mxu0 0.0
  %6460 = vmatprep.subr.mxu0 0.0
  %6461 = vmatpush2.msra.mxu0 0.0
  %6462 = vmatprep.subr.mxu0 0.0
  %6463 = vmatpush2.msra.mxu0 0.0
  %6464 = vmatprep.subr.mxu0 0.0
  %6465 = vmatpush2.msra.mxu0 0.0
  %6466 = vmatprep.subr.mxu0 0.0
  %6467 = vmatpush2.msra.mxu0 0.0
  %6468 = vmatprep.subr.mxu0 0.0
  %6469 = vmatpush2.msra.mxu0 0.0
  %6470 = vmatprep.mubr.f32.mxu0 0.0
  %6471 = vmatmul.mubr.f32.gmra.mxu0 %v6194
  %v6472 = vpop.f32.mrf.mxu0
  %v6473 = vadd.f32 0.0, %v6472
  %v6474 = vpop.f32.mrf.mxu0
  %6475 = vdwg.mxu0
  %v6476 = vadd.f32 %v6405, %v6473
  %v6477 = vld [vmem:[%s6] sm:$0x1]
  %v6479 = vlaneseq
  %v6480 = vshrl.u32 %v6479, 7
  %v6481 = vsub.s32 0, %v6480
  %v6482 = vrot.slane %v6477, %v6481
  %v6484 = vadd.f32 %v6476, %v6482
  %v6485 = vmax.f32 %v6484, 0.0
  %v6486 = vld [vmem:[%s7] sm:$0xff]
  %v6487 = vld [vmem:[%s7 + $0x8] sm:$0xff]
  %v6488 = vld [vmem:[%s7 + $0x10] sm:$0xff]
  %v6489 = vld [vmem:[%s7 + $0x18] sm:$0xff]
  %v6490 = vld [vmem:[%s7 + $0x20] sm:$0xff]
  %v6491 = vld [vmem:[%s7 + $0x28] sm:$0xff]
  %v6492 = vld [vmem:[%s7 + $0x30] sm:$0xff]
  %v6493 = vld [vmem:[%s7 + $0x38] sm:$0xff]
  %v6494 = vld [vmem:[%s8] sm:$0x1]
  %v6496 = vlaneseq
  %v6497 = vshrl.u32 %v6496, 7
  %v6498 = vsub.s32 0, %v6497
  %v6499 = vrot.slane %v6494, %v6498
  %vm6501 = vcmask 523264
  %v6503 = vsel %vm6501, %v6485, 0
  %6505 = vmatprep.subr.mxu0 0.0
  %6506 = vmatpush1.msra.mxu0 0.0
  %6507 = vmatprep.subr.mxu0 0.0
  %6508 = vmatpush1.msra.mxu0 0.0
  %6509 = vmatprep.subr.mxu0 0.0
  %6510 = vmatpush1.msra.mxu0 0.0
  %6511 = vmatprep.subr.mxu0 0.0
  %6512 = vmatpush1.msra.mxu0 0.0
  %6513 = vmatprep.subr.mxu0 0.0
  %6514 = vmatpush1.msra.mxu0 0.0
  %6515 = vmatprep.subr.mxu0 0.0
  %6516 = vmatpush1.msra.mxu0 0.0
  %6517 = vmatprep.subr.mxu0 0.0
  %6518 = vmatpush1.msra.mxu0 0.0
  %6519 = vmatprep.subr.mxu0 0.0
  %6520 = vmatpush1.msra.mxu0 0.0
  %6521 = vmatprep.subr.mxu0 0.0
  %6522 = vmatpush1.msra.mxu0 %v6493
  %6523 = vmatprep.subr.mxu0 0.0
  %6524 = vmatpush1.msra.mxu0 %v6492
  %6525 = vmatprep.subr.mxu0 0.0
  %6526 = vmatpush1.msra.mxu0 %v6491
  %6527 = vmatprep.subr.mxu0 0.0
  %6528 = vmatpush1.msra.mxu0 %v6490
  %6529 = vmatprep.subr.mxu0 0.0
  %6530 = vmatpush1.msra.mxu0 %v6489
  %6531 = vmatprep.subr.mxu0 0.0
  %6532 = vmatpush1.msra.mxu0 %v6488
  %6533 = vmatprep.subr.mxu0 0.0
  %6534 = vmatpush1.msra.mxu0 %v6487
  %6535 = vmatprep.subr.mxu0 0.0
  %6536 = vmatpush1.msra.mxu0 %v6486
  %6537 = vmatprep.subr.mxu0 0.0
  %6538 = vmatpush2.msra.mxu0 0.0
  %6539 = vmatprep.subr.mxu0 0.0
  %6540 = vmatpush2.msra.mxu0 0.0
  %6541 = vmatprep.subr.mxu0 0.0
  %6542 = vmatpush2.msra.mxu0 0.0
  %6543 = vmatprep.subr.mxu0 0.0
  %6544 = vmatpush2.msra.mxu0 0.0
  %6545 = vmatprep.subr.mxu0 0.0
  %6546 = vmatpush2.msra.mxu0 0.0
  %6547 = vmatprep.subr.mxu0 0.0
  %6548 = vmatpush2.msra.mxu0 0.0
  %6549 = vmatprep.subr.mxu0 0.0
  %6550 = vmatpush2.msra.mxu0 0.0
  %6551 = vmatprep.subr.mxu0 0.0
  %6552 = vmatpush2.msra.mxu0 0.0
  %6553 = vmatprep.subr.mxu0 0.0
  %6554 = vmatpush2.msra.mxu0 0.0
  %6555 = vmatprep.subr.mxu0 0.0
  %6556 = vmatpush2.msra.mxu0 0.0
  %6557 = vmatprep.subr.mxu0 0.0
  %6558 = vmatpush2.msra.mxu0 0.0
  %6559 = vmatprep.subr.mxu0 0.0
  %6560 = vmatpush2.msra.mxu0 0.0
  %6561 = vmatprep.subr.mxu0 0.0
  %6562 = vmatpush2.msra.mxu0 0.0
  %6563 = vmatprep.subr.mxu0 0.0
  %6564 = vmatpush2.msra.mxu0 0.0
  %6565 = vmatprep.subr.mxu0 0.0
  %6566 = vmatpush2.msra.mxu0 0.0
  %6567 = vmatprep.subr.mxu0 0.0
  %6568 = vmatpush2.msra.mxu0 0.0
  %6569 = vmatprep.mubr.f32.mxu0 0.0
  %6570 = vmatmul.mubr.f32.gmra.mxu0 %v6503
  %v6571 = vpop.f32.mrf.mxu0
  %v6572 = vadd.f32 %v6499, %v6571
  %v6573 = vpop.f32.mrf.mxu0
  %6574 = vdwg.mxu0
  %vm6575 = vcmask 80896
  %v6576 = vsel %vm6575, %v6572, -inf
  %6577 = vmax.xlane.f32.xlu0 %v6576
  %v6578 = vpop.xlane.xlu0 %6577
  %v6579 = vsub.f32 %v6572, %v6578
  %v6580 = vmul.f32 %v6579, 1.442695
  %v6581 = vpow.pop %v6580
  %v6582 = vsel %vm6575, %v6581, 0.0
  %6583 = vadd.xlane.f32.xlu0 %v6582
  %v6584 = vpop.xlane.xlu0 %6583
  %v6585 = vlog2.pop %v6584
  %v6586 = vmul.f32 %v6585, 0.6931472
  %v6587 = vadd.f32 %v6586, %v6578
  %v6588 = vsub.f32 %v6572, %v6587
  %6589 = vst.msk [vmem:[%s9] sm:$0xff] %vm6575, %v6588
  // Predicated region
  $region38: #{net_forward.1} parent=0 // pred_check
    _
  $region39: #{net_forward.1} parent=0 // pred_check_branch
    %6591 = sbr.rel (0) target = $region41
  $region40: #{net_forward.1} parent=0 // pred_region
    _
  $region41: #{net_forward.1} parent=0 // pred_fallthru
    _
  // Predicated region
  $region42: #{net_forward.1} parent=0 // pred_check
    _
  $region43: #{net_forward.1} parent=0 // pred_check_branch
    %6593 = sbr.rel (0) target = $region45
  $region44: #{net_forward.1} parent=0 // pred_region
    _
  $region45: #{net_forward.1} parent=0 // pred_fallthru
    _

</llo_original>
